<compile_context>
chip_gen: v5e
topology: v5e:2x2
jax: 0.10.0
libtpu: 0.0.40
codegen_flags: <defaults>
</compile_context>

<pallas_src>
import functools

import jax
import jax.numpy as jnp
from jax import lax
from jax.experimental import pallas as pl
from jax.experimental.pallas import tpu as pltpu


def _rpn_kernel(xpad_ref, wc_ref, bc_ref, wh_ref, bh_ref, out_ref, conv_ref,
                *, num_anchors, row_tile, width, cin, out_cols):
    """One grid step == (batch element b, row-tile t).

    xpad_ref : (H+2, W+2, Cin)   zero-padded NHWC feature map of batch b (whole map)
    wc_ref   : (9, Cin, 512)     RPN_Conv weight, (ky, kx) major
    bc_ref   : (1, 512)          RPN_Conv bias (f32)
    wh_ref   : (512, out_cols)   fused [cls 2A | bbox 4A | zero pad] head weight
    bh_ref   : (1, out_cols)     fused head bias (f32)
    out_ref  : (TH*W, out_cols)  fused output slab [cls 2A | bbox 4A | prob 2A | pad]
    conv_ref : (TH*W, 512) f32   VMEM scratch accumulator for the 3x3 conv
    """
    A = num_anchors
    TH = row_tile
    W = width
    M = TH * W

    row0 = pl.multiple_of(pl.program_id(1) * TH, TH)

    # 3x3 conv (pad=1) as 9 accumulating MXU dots over shifted slices of the
    # padded feature tile already resident in VMEM.
    for k in range(9):
        ky, kx = divmod(k, 3)
        win = xpad_ref[pl.ds(row0 + ky, TH), pl.ds(kx, W), :]       # (TH, W, Cin)
        win = win.reshape(M, cin)
        contrib = jnp.dot(win, wc_ref[k], preferred_element_type=jnp.float32)
        if k == 0:
            conv_ref[...] = contrib
        else:
            conv_ref[...] += contrib

    conv1 = jnp.maximum(conv_ref[...] + bc_ref[...], 0.0)           # (M, 512) f32

    # Fused RPN_cls_score + RPN_bbox_pred: one lane-dense (512, out_cols) matmul.
    head = jnp.dot(conv1.astype(wh_ref.dtype), wh_ref[...],
                   preferred_element_type=jnp.float32) + bh_ref[...]  # (M, out_cols)

    # torch reshape(x,2) -> softmax(dim=1) -> reshape(x,2A)  ==  pairwise softmax
    # between logits a and a+A for every anchor a.
    s0 = head[:, :A]
    s1 = head[:, A:2 * A]
    mx = jnp.maximum(s0, s1)
    e0 = jnp.exp(s0 - mx)
    e1 = jnp.exp(s1 - mx)
    inv = pl.reciprocal(e0 + e1, approx=True)
    p0 = e0 * inv
    p1 = e1 * inv

    # Single lane-dense output slab: [cls 2A | bbox 4A | prob 2A | zero pad].
    pieces = [head[:, :6 * A], p0, p1]
    pad_cols = out_cols - 8 * A
    if pad_cols > 0:
        pieces.append(jnp.zeros((M, pad_cols), jnp.float32))
    out_ref[...] = jnp.concatenate(pieces, axis=-1)


def rpn_forward(base_feat_nchw, params, num_anchors, *, row_tile=8,
                compute_dtype=jnp.float32):
    """Eval-mode _RPN._forward_single_feature_maps hot path.

    base_feat_nchw : (B, Cin, H, W) float32 (PyTorch NCHW convention)
    compute_dtype  : jnp.float32 (default) or jnp.bfloat16 (recommended on v6e/v7x;
                     loosen tolerances to ~1e-2 if used).
    """
    A = num_anchors
    B, Cin, H, W = base_feat_nchw.shape
    HW = H * W

    # Pick a row tile that divides H and gives an 8-aligned (TH*W) output block.
    TH = min(row_tile, H)
    while TH > 1 and (H % TH != 0 or (TH * W) % 8 != 0):
        TH -= 1
    if H % TH != 0 or ((TH * W) % 8 != 0 and TH * W != HW):
        TH = H
    n_tiles = H // TH
    M = TH * W

    OUT_COLS = max(128, ((8 * A + 127) // 128) * 128)   # lane-dense output width

    # --- layout glue (zero-pad only; no im2col materialization) --------------
    x_nhwc = jnp.transpose(base_feat_nchw, (0, 2, 3, 1)).astype(compute_dtype)
    x_pad = jnp.pad(x_nhwc, ((0, 0), (1, 1), (1, 1), (0, 0)))       # (B,H+2,W+2,Cin)

    # torch RPN_Conv weight (512, Cin, 3, 3) -> (3,3,Cin,512) -> (9, Cin, 512)
    wc = jnp.transpose(params["w_conv"], (2, 3, 1, 0)).reshape(9, Cin, 512)
    wc = wc.astype(compute_dtype)
    bc = params["b_conv"].reshape(1, 512).astype(jnp.float32)

    # Fused head weight: [cls 2A | bbox 4A | zero pad] -> (512, OUT_COLS)
    wcls = jnp.transpose(params["w_cls"][:, :, 0, 0], (1, 0))        # (512, 2A)
    wbb = jnp.transpose(params["w_bbox"][:, :, 0, 0], (1, 0))        # (512, 4A)
    wh = jnp.concatenate(
        [wcls, wbb, jnp.zeros((512, OUT_COLS - 6 * A), wcls.dtype)], axis=1)
    wh = wh.astype(compute_dtype)
    bh = jnp.concatenate(
        [params["b_cls"], params["b_bbox"],
         jnp.zeros((OUT_COLS - 6 * A,), jnp.float32)]).reshape(1, OUT_COLS)
    bh = bh.astype(jnp.float32)

    kernel = functools.partial(
        _rpn_kernel, num_anchors=A, row_tile=TH, width=W, cin=Cin,
        out_cols=OUT_COLS)

    bytes_in = (x_pad.size * x_pad.dtype.itemsize
                + wc.size * wc.dtype.itemsize
                + wh.size * wh.dtype.itemsize)
    bytes_out = B * HW * OUT_COLS * 4
    cost = pl.CostEstimate(
        flops=2 * B * HW * (9 * Cin * 512 + 512 * OUT_COLS),
        transcendentals=3 * B * HW * A,
        bytes_accessed=bytes_in + bytes_out)

    fused = pl.pallas_call(
        kernel,
        out_shape=jax.ShapeDtypeStruct((B, HW, OUT_COLS), jnp.float32),
        grid_spec=pltpu.PrefetchScalarGridSpec(
            num_scalar_prefetch=0,
            grid=(B, n_tiles),
            in_specs=[
                # Padded feature: whole per-batch map; block index ignores t so it
                # is only re-DMA'd when the batch index changes.
                pl.BlockSpec((pl.Squeezed(), H + 2, W + 2, Cin),
                             lambda b, t: (b, 0, 0, 0)),
                pl.BlockSpec((9, Cin, 512), lambda b, t: (0, 0, 0)),
                pl.BlockSpec((1, 512), lambda b, t: (0, 0)),
                pl.BlockSpec((512, OUT_COLS), lambda b, t: (0, 0)),
                pl.BlockSpec((1, OUT_COLS), lambda b, t: (0, 0)),
            ],
            out_specs=pl.BlockSpec((pl.Squeezed(), M, OUT_COLS),
                                   lambda b, t: (b, t, 0)),
            scratch_shapes=[pltpu.VMEM((M, 512), jnp.float32)],
        ),
        compiler_params=pltpu.CompilerParams(
            dimension_semantics=("parallel", "parallel"),
            vmem_limit_bytes=48 * 1024 * 1024),   # sized against v7x's 64 MiB VMEM
        cost_estimate=cost,
    )(x_pad, wc, bc, wh, bh)

    # --- split the fused slab & return to PyTorch NCHW conventions -----------
    cls_score = fused[:, :, :2 * A]                                  # (B, HW, 2A)
    bbox = fused[:, :, 2 * A:6 * A]                                  # (B, HW, 4A)
    cls_prob = fused[:, :, 6 * A:8 * A]                              # (B, HW, 2A)

    rpn_cls_score = jnp.transpose(cls_score.reshape(B, H, W, 2 * A), (0, 3, 1, 2))
    rpn_cls_prob = jnp.transpose(cls_prob.reshape(B, H, W, 2 * A), (0, 3, 1, 2))
    rpn_bbox_pred = jnp.transpose(bbox.reshape(B, H, W, 4 * A), (0, 3, 1, 2))
    # rpn_bbox_pred.permute(0,2,3,1).view(B,-1,4) in torch == NHWC reshape:
    rpn_bbox_pred_reshape = bbox.reshape(B, HW * A, 4)

    # TODO(synk): _ProposalLayer (anchor generation + bbox decode + clip + top-k + NMS)
    #             and _AnchorTargetLayer have no clean Pallas equivalent; eval mode
    #             returns rpn_loss_cls = rpn_loss_box = 0.
    rpn_loss_cls = jnp.float32(0.0)
    rpn_loss_box = jnp.float32(0.0)

    return {
        "rpn_cls_score": rpn_cls_score,
        "rpn_cls_prob": rpn_cls_prob,
        "rpn_bbox_pred": rpn_bbox_pred,
        "rpn_bbox_pred_reshape": rpn_bbox_pred_reshape,
        "rpn_loss_cls": rpn_loss_cls,
        "rpn_loss_box": rpn_loss_box,
    }


def _reference_forward(x_nchw, params, num_anchors):
    """Pure-JAX reference mirroring the PyTorch ops (NCHW convs)."""
    A = num_anchors
    dn = ("NCHW", "OIHW", "NCHW")
    conv1 = lax.conv_general_dilated(x_nchw, params["w_conv"], (1, 1),
                                     ((1, 1), (1, 1)), dimension_numbers=dn)
    conv1 = jax.nn.relu(conv1 + params["b_conv"][None, :, None, None])
    cls = lax.conv_general_dilated(conv1, params["w_cls"], (1, 1),
                                   ((0, 0), (0, 0)), dimension_numbers=dn)
    cls = cls + params["b_cls"][None, :, None, None]
    bbox = lax.conv_general_dilated(conv1, params["w_bbox"], (1, 1),
                                    ((0, 0), (0, 0)), dimension_numbers=dn)
    bbox = bbox + params["b_bbox"][None, :, None, None]
    # reshape(x, 2) -> softmax(dim=1) -> reshape(x, 2A)
    B, C, H, W = cls.shape
    cls_r = cls.reshape(B, 2, A * H, W)
    prob_r = jax.nn.softmax(cls_r, axis=1)
    prob = prob_r.reshape(B, 2 * A, H, W)
    return cls, prob, bbox


if __name__ == "__main__":
    key = jax.random.PRNGKey(0)
    ks = jax.random.split(key, 8)

    # Small shapes consistent with the module: din=4 input channels, 16x16 feature map.
    B, Cin, H, W = 2, 4, 16, 16
    anchor_scales = [8, 16, 32]
    anchor_ratios = [0.5, 1.0, 2.0]
    A = len(anchor_scales) * len(anchor_ratios)          # 9 anchors
    feat_stride = 16

    # Deterministic synthetic parameters (shapes from _RPN.__init__).
    params = {
        "w_conv": (jax.random.normal(ks[1], (512, Cin, 3, 3), jnp.float32) * 0.05),
        "b_conv": (jax.random.normal(ks[2], (512,), jnp.float32) * 0.01),
        "w_cls": (jax.random.normal(ks[3], (2 * A, 512, 1, 1), jnp.float32) * 0.05),
        "b_cls": (jax.random.normal(ks[4], (2 * A,), jnp.float32) * 0.01),
        "w_bbox": (jax.random.normal(ks[5], (4 * A, 512, 1, 1), jnp.float32) * 0.05),
        "b_bbox": (jax.random.normal(ks[6], (4 * A,), jnp.float32) * 0.01),
    }

    base_feat = jax.random.normal(ks[0], (B, Cin, H, W), jnp.float32)   # NCHW input
    im_info = jnp.array([[H * feat_stride, W * feat_stride, 1.0]] * B,
                        dtype=jnp.float32)                               # unused in eval
    gt_boxes, num_boxes = None, None                                     # eval mode

    out = rpn_forward(base_feat, params, A)      # f32 compute; use bf16 on v6e/v7x
    jax.block_until_ready(out)

    # Correctness check against a pure-JAX (XLA conv) reference.
    ref_cls, ref_prob, ref_bbox = _reference_forward(base_feat, params, A)
    assert jnp.allclose(out["rpn_cls_score"], ref_cls, rtol=1e-4, atol=1e-4)
    # probabilities: slightly looser due to pl.reciprocal(approx=True)
    assert jnp.allclose(out["rpn_cls_prob"], ref_prob, rtol=1e-2, atol=1e-3)
    assert jnp.allclose(out["rpn_bbox_pred"], ref_bbox, rtol=1e-4, atol=1e-4)
    assert out["rpn_bbox_pred_reshape"].shape == (B, H * W * A, 4)

    print("KERNEL_OK")
</pallas_src>

<mosaic_0001>
module attributes {stable_mosaic.version = 11 : i64} {
  func.func @_rpn_kernel(%arg0: i32, %arg1: i32, %arg2: memref<1x18x18x4xf32, #tpu.memory_space<vmem>>, %arg3: memref<9x4x512xf32, #tpu.memory_space<vmem>>, %arg4: memref<1x512xf32, #tpu.memory_space<vmem>>, %arg5: memref<512x128xf32, #tpu.memory_space<vmem>>, %arg6: memref<1x128xf32, #tpu.memory_space<vmem>>, %arg7: memref<1x128x128xf32, #tpu.memory_space<vmem>>, %arg8: memref<128x512xf32, #tpu.memory_space<vmem>>) attributes {dimension_semantics = [#tpu.dimension_semantics<parallel>, #tpu.dimension_semantics<parallel>], iteration_bounds = array<i64: 2, 2>, scalar_prefetch = 0 : i64, scratch_operands = 1 : i64, tpu.core_type = #tpu.core_type<tc>, window_params = [{transform_indices = @transform_0, window_bounds = array<i64: 1, 18, 18, 4>}, {pipeline_mode = #tpu.pipeline_mode<synchronous>, transform_indices = @transform_1, window_bounds = array<i64: 9, 4, 512>}, {pipeline_mode = #tpu.pipeline_mode<synchronous>, transform_indices = @transform_2, window_bounds = array<i64: 1, 512>}, {pipeline_mode = #tpu.pipeline_mode<synchronous>, transform_indices = @transform_3, window_bounds = array<i64: 512, 128>}, {pipeline_mode = #tpu.pipeline_mode<synchronous>, transform_indices = @transform_4, window_bounds = array<i64: 1, 128>}, {transform_indices = @transform_5, window_bounds = array<i64: 1, 128, 128>}]} {
    %c8_i32 = arith.constant 8 : i32
    %0 = arith.muli %arg1, %c8_i32 : i32
    %1 = tpu.assume_multiple %0, 8 : i32
    %c0_i32 = arith.constant 0 : i32
    %2 = arith.addi %1, %c0_i32 : i32
    %c0 = arith.constant 0 : index
    %3 = arith.index_cast %2 : i32 to index
    %c0_0 = arith.constant 0 : index
    %c0_1 = arith.constant 0 : index
    %4 = vector.load %arg2[%c0, %3, %c0_0, %c0_1] : memref<1x18x18x4xf32, #tpu.memory_space<vmem>>, vector<1x8x16x4xf32>
    %5 = vector.shape_cast %4 : vector<1x8x16x4xf32> to vector<8x16x4xf32>
    %6 = vector.shape_cast %5 : vector<8x16x4xf32> to vector<128x4xf32>
    %c0_2 = arith.constant 0 : index
    %c0_3 = arith.constant 0 : index
    %c0_4 = arith.constant 0 : index
    %7 = vector.load %arg3[%c0_2, %c0_3, %c0_4] : memref<9x4x512xf32, #tpu.memory_space<vmem>>, vector<1x4x512xf32>
    %8 = vector.shape_cast %7 : vector<1x4x512xf32> to vector<4x512xf32>
    %cst = arith.constant dense<0.000000e+00> : vector<128x512xf32>
    %9 = tpu.matmul %6, %8, %cst {dimension_numbers = #tpu.dot_dimension_numbers<[1], [0], [0], [1], [0, 0, 1, 1], [], []>} : vector<128x4xf32>, vector<4x512xf32>, vector<128x512xf32> -> vector<128x512xf32>
    %c0_5 = arith.constant 0 : index
    %c0_6 = arith.constant 0 : index
    %10 = vector.load %arg8[%c0_5, %c0_6] : memref<128x512xf32, #tpu.memory_space<vmem>>, vector<128x512xf32>
    tpu.vector_store %arg8[%c0_5, %c0_6], %9 {strides = array<i32>} : memref<128x512xf32, #tpu.memory_space<vmem>>, vector<128x512xf32>,
    %c0_i32_7 = arith.constant 0 : i32
    %11 = arith.addi %1, %c0_i32_7 : i32
    %c0_8 = arith.constant 0 : index
    %12 = arith.index_cast %11 : i32 to index
    %c1 = arith.constant 1 : index
    %c0_9 = arith.constant 0 : index
    %13 = vector.load %arg2[%c0_8, %12, %c1, %c0_9] : memref<1x18x18x4xf32, #tpu.memory_space<vmem>>, vector<1x8x16x4xf32>
    %14 = vector.shape_cast %13 : vector<1x8x16x4xf32> to vector<8x16x4xf32>
    %15 = vector.shape_cast %14 : vector<8x16x4xf32> to vector<128x4xf32>
    %c1_10 = arith.constant 1 : index
    %c0_11 = arith.constant 0 : index
    %c0_12 = arith.constant 0 : index
    %16 = vector.load %arg3[%c1_10, %c0_11, %c0_12] : memref<9x4x512xf32, #tpu.memory_space<vmem>>, vector<1x4x512xf32>
    %17 = vector.shape_cast %16 : vector<1x4x512xf32> to vector<4x512xf32>
    %cst_13 = arith.constant dense<0.000000e+00> : vector<128x512xf32>
    %18 = tpu.matmul %15, %17, %cst_13 {dimension_numbers = #tpu.dot_dimension_numbers<[1], [0], [0], [1], [0, 0, 1, 1], [], []>} : vector<128x4xf32>, vector<4x512xf32>, vector<128x512xf32> -> vector<128x512xf32>
    %c0_14 = arith.constant 0 : index
    %c0_15 = arith.constant 0 : index
    %19 = vector.load %arg8[%c0_14, %c0_15] : memref<128x512xf32, #tpu.memory_space<vmem>>, vector<128x512xf32>
    %20 = arith.addf %19, %18 : vector<128x512xf32>
    %c0_16 = arith.constant 0 : index
    %c0_17 = arith.constant 0 : index
    %21 = vector.load %arg8[%c0_16, %c0_17] : memref<128x512xf32, #tpu.memory_space<vmem>>, vector<128x512xf32>
    tpu.vector_store %arg8[%c0_16, %c0_17], %20 {strides = array<i32>} : memref<128x512xf32, #tpu.memory_space<vmem>>, vector<128x512xf32>,
    %c0_i32_18 = arith.constant 0 : i32
    %22 = arith.addi %1, %c0_i32_18 : i32
    %c0_19 = arith.constant 0 : index
    %23 = arith.index_cast %22 : i32 to index
    %c2 = arith.constant 2 : index
    %c0_20 = arith.constant 0 : index
    %24 = vector.load %arg2[%c0_19, %23, %c2, %c0_20] : memref<1x18x18x4xf32, #tpu.memory_space<vmem>>, vector<1x8x16x4xf32>
    %25 = vector.shape_cast %24 : vector<1x8x16x4xf32> to vector<8x16x4xf32>
    %26 = vector.shape_cast %25 : vector<8x16x4xf32> to vector<128x4xf32>
    %c2_21 = arith.constant 2 : index
    %c0_22 = arith.constant 0 : index
    %c0_23 = arith.constant 0 : index
    %27 = vector.load %arg3[%c2_21, %c0_22, %c0_23] : memref<9x4x512xf32, #tpu.memory_space<vmem>>, vector<1x4x512xf32>
    %28 = vector.shape_cast %27 : vector<1x4x512xf32> to vector<4x512xf32>
    %cst_24 = arith.constant dense<0.000000e+00> : vector<128x512xf32>
    %29 = tpu.matmul %26, %28, %cst_24 {dimension_numbers = #tpu.dot_dimension_numbers<[1], [0], [0], [1], [0, 0, 1, 1], [], []>} : vector<128x4xf32>, vector<4x512xf32>, vector<128x512xf32> -> vector<128x512xf32>
    %c0_25 = arith.constant 0 : index
    %c0_26 = arith.constant 0 : index
    %30 = vector.load %arg8[%c0_25, %c0_26] : memref<128x512xf32, #tpu.memory_space<vmem>>, vector<128x512xf32>
    %31 = arith.addf %30, %29 : vector<128x512xf32>
    %c0_27 = arith.constant 0 : index
    %c0_28 = arith.constant 0 : index
    %32 = vector.load %arg8[%c0_27, %c0_28] : memref<128x512xf32, #tpu.memory_space<vmem>>, vector<128x512xf32>
    tpu.vector_store %arg8[%c0_27, %c0_28], %31 {strides = array<i32>} : memref<128x512xf32, #tpu.memory_space<vmem>>, vector<128x512xf32>,
    %c1_i32 = arith.constant 1 : i32
    %33 = arith.addi %1, %c1_i32 : i32
    %c0_29 = arith.constant 0 : index
    %34 = arith.index_cast %33 : i32 to index
    %c0_30 = arith.constant 0 : index
    %c0_31 = arith.constant 0 : index
    %35 = vector.load %arg2[%c0_29, %34, %c0_30, %c0_31] : memref<1x18x18x4xf32, #tpu.memory_space<vmem>>, vector<1x8x16x4xf32>
    %36 = vector.shape_cast %35 : vector<1x8x16x4xf32> to vector<8x16x4xf32>
    %37 = vector.shape_cast %36 : vector<8x16x4xf32> to vector<128x4xf32>
    %c3 = arith.constant 3 : index
    %c0_32 = arith.constant 0 : index
    %c0_33 = arith.constant 0 : index
    %38 = vector.load %arg3[%c3, %c0_32, %c0_33] : memref<9x4x512xf32, #tpu.memory_space<vmem>>, vector<1x4x512xf32>
    %39 = vector.shape_cast %38 : vector<1x4x512xf32> to vector<4x512xf32>
    %cst_34 = arith.constant dense<0.000000e+00> : vector<128x512xf32>
    %40 = tpu.matmul %37, %39, %cst_34 {dimension_numbers = #tpu.dot_dimension_numbers<[1], [0], [0], [1], [0, 0, 1, 1], [], []>} : vector<128x4xf32>, vector<4x512xf32>, vector<128x512xf32> -> vector<128x512xf32>
    %c0_35 = arith.constant 0 : index
    %c0_36 = arith.constant 0 : index
    %41 = vector.load %arg8[%c0_35, %c0_36] : memref<128x512xf32, #tpu.memory_space<vmem>>, vector<128x512xf32>
    %42 = arith.addf %41, %40 : vector<128x512xf32>
    %c0_37 = arith.constant 0 : index
    %c0_38 = arith.constant 0 : index
    %43 = vector.load %arg8[%c0_37, %c0_38] : memref<128x512xf32, #tpu.memory_space<vmem>>, vector<128x512xf32>
    tpu.vector_store %arg8[%c0_37, %c0_38], %42 {strides = array<i32>} : memref<128x512xf32, #tpu.memory_space<vmem>>, vector<128x512xf32>,
    %c1_i32_39 = arith.constant 1 : i32
    %44 = arith.addi %1, %c1_i32_39 : i32
    %c0_40 = arith.constant 0 : index
    %45 = arith.index_cast %44 : i32 to index
    %c1_41 = arith.constant 1 : index
    %c0_42 = arith.constant 0 : index
    %46 = vector.load %arg2[%c0_40, %45, %c1_41, %c0_42] : memref<1x18x18x4xf32, #tpu.memory_space<vmem>>, vector<1x8x16x4xf32>
    %47 = vector.shape_cast %46 : vector<1x8x16x4xf32> to vector<8x16x4xf32>
    %48 = vector.shape_cast %47 : vector<8x16x4xf32> to vector<128x4xf32>
    %c4 = arith.constant 4 : index
    %c0_43 = arith.constant 0 : index
    %c0_44 = arith.constant 0 : index
    %49 = vector.load %arg3[%c4, %c0_43, %c0_44] : memref<9x4x512xf32, #tpu.memory_space<vmem>>, vector<1x4x512xf32>
    %50 = vector.shape_cast %49 : vector<1x4x512xf32> to vector<4x512xf32>
    %cst_45 = arith.constant dense<0.000000e+00> : vector<128x512xf32>
    %51 = tpu.matmul %48, %50, %cst_45 {dimension_numbers = #tpu.dot_dimension_numbers<[1], [0], [0], [1], [0, 0, 1, 1], [], []>} : vector<128x4xf32>, vector<4x512xf32>, vector<128x512xf32> -> vector<128x512xf32>
    %c0_46 = arith.constant 0 : index
    %c0_47 = arith.constant 0 : index
    %52 = vector.load %arg8[%c0_46, %c0_47] : memref<128x512xf32, #tpu.memory_space<vmem>>, vector<128x512xf32>
    %53 = arith.addf %52, %51 : vector<128x512xf32>
    %c0_48 = arith.constant 0 : index
    %c0_49 = arith.constant 0 : index
    %54 = vector.load %arg8[%c0_48, %c0_49] : memref<128x512xf32, #tpu.memory_space<vmem>>, vector<128x512xf32>
    tpu.vector_store %arg8[%c0_48, %c0_49], %53 {strides = array<i32>} : memref<128x512xf32, #tpu.memory_space<vmem>>, vector<128x512xf32>,
    %c1_i32_50 = arith.constant 1 : i32
    %55 = arith.addi %1, %c1_i32_50 : i32
    %c0_51 = arith.constant 0 : index
    %56 = arith.index_cast %55 : i32 to index
    %c2_52 = arith.constant 2 : index
    %c0_53 = arith.constant 0 : index
    %57 = vector.load %arg2[%c0_51, %56, %c2_52, %c0_53] : memref<1x18x18x4xf32, #tpu.memory_space<vmem>>, vector<1x8x16x4xf32>
    %58 = vector.shape_cast %57 : vector<1x8x16x4xf32> to vector<8x16x4xf32>
    %59 = vector.shape_cast %58 : vector<8x16x4xf32> to vector<128x4xf32>
    %c5 = arith.constant 5 : index
    %c0_54 = arith.constant 0 : index
    %c0_55 = arith.constant 0 : index
    %60 = vector.load %arg3[%c5, %c0_54, %c0_55] : memref<9x4x512xf32, #tpu.memory_space<vmem>>, vector<1x4x512xf32>
    %61 = vector.shape_cast %60 : vector<1x4x512xf32> to vector<4x512xf32>
    %cst_56 = arith.constant dense<0.000000e+00> : vector<128x512xf32>
    %62 = tpu.matmul %59, %61, %cst_56 {dimension_numbers = #tpu.dot_dimension_numbers<[1], [0], [0], [1], [0, 0, 1, 1], [], []>} : vector<128x4xf32>, vector<4x512xf32>, vector<128x512xf32> -> vector<128x512xf32>
    %c0_57 = arith.constant 0 : index
    %c0_58 = arith.constant 0 : index
    %63 = vector.load %arg8[%c0_57, %c0_58] : memref<128x512xf32, #tpu.memory_space<vmem>>, vector<128x512xf32>
    %64 = arith.addf %63, %62 : vector<128x512xf32>
    %c0_59 = arith.constant 0 : index
    %c0_60 = arith.constant 0 : index
    %65 = vector.load %arg8[%c0_59, %c0_60] : memref<128x512xf32, #tpu.memory_space<vmem>>, vector<128x512xf32>
    tpu.vector_store %arg8[%c0_59, %c0_60], %64 {strides = array<i32>} : memref<128x512xf32, #tpu.memory_space<vmem>>, vector<128x512xf32>,
    %c2_i32 = arith.constant 2 : i32
    %66 = arith.addi %1, %c2_i32 : i32
    %c0_61 = arith.constant 0 : index
    %67 = arith.index_cast %66 : i32 to index
    %c0_62 = arith.constant 0 : index
    %c0_63 = arith.constant 0 : index
    %68 = vector.load %arg2[%c0_61, %67, %c0_62, %c0_63] : memref<1x18x18x4xf32, #tpu.memory_space<vmem>>, vector<1x8x16x4xf32>
    %69 = vector.shape_cast %68 : vector<1x8x16x4xf32> to vector<8x16x4xf32>
    %70 = vector.shape_cast %69 : vector<8x16x4xf32> to vector<128x4xf32>
    %c6 = arith.constant 6 : index
    %c0_64 = arith.constant 0 : index
    %c0_65 = arith.constant 0 : index
    %71 = vector.load %arg3[%c6, %c0_64, %c0_65] : memref<9x4x512xf32, #tpu.memory_space<vmem>>, vector<1x4x512xf32>
    %72 = vector.shape_cast %71 : vector<1x4x512xf32> to vector<4x512xf32>
    %cst_66 = arith.constant dense<0.000000e+00> : vector<128x512xf32>
    %73 = tpu.matmul %70, %72, %cst_66 {dimension_numbers = #tpu.dot_dimension_numbers<[1], [0], [0], [1], [0, 0, 1, 1], [], []>} : vector<128x4xf32>, vector<4x512xf32>, vector<128x512xf32> -> vector<128x512xf32>
    %c0_67 = arith.constant 0 : index
    %c0_68 = arith.constant 0 : index
    %74 = vector.load %arg8[%c0_67, %c0_68] : memref<128x512xf32, #tpu.memory_space<vmem>>, vector<128x512xf32>
    %75 = arith.addf %74, %73 : vector<128x512xf32>
    %c0_69 = arith.constant 0 : index
    %c0_70 = arith.constant 0 : index
    %76 = vector.load %arg8[%c0_69, %c0_70] : memref<128x512xf32, #tpu.memory_space<vmem>>, vector<128x512xf32>
    tpu.vector_store %arg8[%c0_69, %c0_70], %75 {strides = array<i32>} : memref<128x512xf32, #tpu.memory_space<vmem>>, vector<128x512xf32>,
    %c2_i32_71 = arith.constant 2 : i32
    %77 = arith.addi %1, %c2_i32_71 : i32
    %c0_72 = arith.constant 0 : index
    %78 = arith.index_cast %77 : i32 to index
    %c1_73 = arith.constant 1 : index
    %c0_74 = arith.constant 0 : index
    %79 = vector.load %arg2[%c0_72, %78, %c1_73, %c0_74] : memref<1x18x18x4xf32, #tpu.memory_space<vmem>>, vector<1x8x16x4xf32>
    %80 = vector.shape_cast %79 : vector<1x8x16x4xf32> to vector<8x16x4xf32>
    %81 = vector.shape_cast %80 : vector<8x16x4xf32> to vector<128x4xf32>
    %c7 = arith.constant 7 : index
    %c0_75 = arith.constant 0 : index
    %c0_76 = arith.constant 0 : index
    %82 = vector.load %arg3[%c7, %c0_75, %c0_76] : memref<9x4x512xf32, #tpu.memory_space<vmem>>, vector<1x4x512xf32>
    %83 = vector.shape_cast %82 : vector<1x4x512xf32> to vector<4x512xf32>
    %cst_77 = arith.constant dense<0.000000e+00> : vector<128x512xf32>
    %84 = tpu.matmul %81, %83, %cst_77 {dimension_numbers = #tpu.dot_dimension_numbers<[1], [0], [0], [1], [0, 0, 1, 1], [], []>} : vector<128x4xf32>, vector<4x512xf32>, vector<128x512xf32> -> vector<128x512xf32>
    %c0_78 = arith.constant 0 : index
    %c0_79 = arith.constant 0 : index
    %85 = vector.load %arg8[%c0_78, %c0_79] : memref<128x512xf32, #tpu.memory_space<vmem>>, vector<128x512xf32>
    %86 = arith.addf %85, %84 : vector<128x512xf32>
    %c0_80 = arith.constant 0 : index
    %c0_81 = arith.constant 0 : index
    %87 = vector.load %arg8[%c0_80, %c0_81] : memref<128x512xf32, #tpu.memory_space<vmem>>, vector<128x512xf32>
    tpu.vector_store %arg8[%c0_80, %c0_81], %86 {strides = array<i32>} : memref<128x512xf32, #tpu.memory_space<vmem>>, vector<128x512xf32>,
    %c2_i32_82 = arith.constant 2 : i32
    %88 = arith.addi %1, %c2_i32_82 : i32
    %c0_83 = arith.constant 0 : index
    %89 = arith.index_cast %88 : i32 to index
    %c2_84 = arith.constant 2 : index
    %c0_85 = arith.constant 0 : index
    %90 = vector.load %arg2[%c0_83, %89, %c2_84, %c0_85] : memref<1x18x18x4xf32, #tpu.memory_space<vmem>>, vector<1x8x16x4xf32>
    %91 = vector.shape_cast %90 : vector<1x8x16x4xf32> to vector<8x16x4xf32>
    %92 = vector.shape_cast %91 : vector<8x16x4xf32> to vector<128x4xf32>
    %c8 = arith.constant 8 : index
    %c0_86 = arith.constant 0 : index
    %c0_87 = arith.constant 0 : index
    %93 = vector.load %arg3[%c8, %c0_86, %c0_87] : memref<9x4x512xf32, #tpu.memory_space<vmem>>, vector<1x4x512xf32>
    %94 = vector.shape_cast %93 : vector<1x4x512xf32> to vector<4x512xf32>
    %cst_88 = arith.constant dense<0.000000e+00> : vector<128x512xf32>
    %95 = tpu.matmul %92, %94, %cst_88 {dimension_numbers = #tpu.dot_dimension_numbers<[1], [0], [0], [1], [0, 0, 1, 1], [], []>} : vector<128x4xf32>, vector<4x512xf32>, vector<128x512xf32> -> vector<128x512xf32>
    %c0_89 = arith.constant 0 : index
    %c0_90 = arith.constant 0 : index
    %96 = vector.load %arg8[%c0_89, %c0_90] : memref<128x512xf32, #tpu.memory_space<vmem>>, vector<128x512xf32>
    %97 = arith.addf %96, %95 : vector<128x512xf32>
    %c0_91 = arith.constant 0 : index
    %c0_92 = arith.constant 0 : index
    %98 = vector.load %arg8[%c0_91, %c0_92] : memref<128x512xf32, #tpu.memory_space<vmem>>, vector<128x512xf32>
    tpu.vector_store %arg8[%c0_91, %c0_92], %97 {strides = array<i32>} : memref<128x512xf32, #tpu.memory_space<vmem>>, vector<128x512xf32>,
    %c0_93 = arith.constant 0 : index
    %c0_94 = arith.constant 0 : index
    %99 = vector.load %arg8[%c0_93, %c0_94] : memref<128x512xf32, #tpu.memory_space<vmem>>, vector<128x512xf32>
    %c0_95 = arith.constant 0 : index
    %c0_96 = arith.constant 0 : index
    %100 = vector.load %arg4[%c0_95, %c0_96] : memref<1x512xf32, #tpu.memory_space<vmem>>, vector<1x512xf32>
    %101 = vector.broadcast %100 : vector<1x512xf32> to vector<128x512xf32>
    %102 = arith.addf %99, %101 : vector<128x512xf32>
    %cst_97 = arith.constant 0.000000e+00 : f32
    %103 = vector.broadcast %cst_97 : f32 to vector<128x512xf32>
    %104 = arith.maximumf %102, %103 : vector<128x512xf32>
    %c0_98 = arith.constant 0 : index
    %c0_99 = arith.constant 0 : index
    %105 = vector.load %arg5[%c0_98, %c0_99] : memref<512x128xf32, #tpu.memory_space<vmem>>, vector<512x128xf32>
    %cst_100 = arith.constant dense<0.000000e+00> : vector<128x128xf32>
    %106 = tpu.matmul %104, %105, %cst_100 {dimension_numbers = #tpu.dot_dimension_numbers<[1], [0], [0], [1], [0, 0, 1, 1], [], []>} : vector<128x512xf32>, vector<512x128xf32>, vector<128x128xf32> -> vector<128x128xf32>
    %c0_101 = arith.constant 0 : index
    %c0_102 = arith.constant 0 : index
    %107 = vector.load %arg6[%c0_101, %c0_102] : memref<1x128xf32, #tpu.memory_space<vmem>>, vector<1x128xf32>
    %108 = vector.broadcast %107 : vector<1x128xf32> to vector<128x128xf32>
    %109 = arith.addf %106, %108 : vector<128x128xf32>
    %110 = vector.extract_strided_slice %109 {offsets = [0, 0], sizes = [128, 9], strides = [1, 1]} : vector<128x128xf32> to vector<128x9xf32>
    %111 = vector.extract_strided_slice %109 {offsets = [0, 9], sizes = [128, 9], strides = [1, 1]} : vector<128x128xf32> to vector<128x9xf32>
    %112 = arith.maximumf %110, %111 : vector<128x9xf32>
    %113 = arith.subf %110, %112 : vector<128x9xf32>
    %114 = math.exp %113 : vector<128x9xf32>
    %115 = arith.subf %111, %112 : vector<128x9xf32>
    %116 = math.exp %115 : vector<128x9xf32>
    %117 = arith.addf %114, %116 : vector<128x9xf32>
    %118 = tpu.reciprocal %117 {approx = true} : vector<128x9xf32> -> vector<128x9xf32>
    %119 = arith.mulf %114, %118 : vector<128x9xf32>
    %120 = arith.mulf %116, %118 : vector<128x9xf32>
    %121 = vector.extract_strided_slice %109 {offsets = [0, 0], sizes = [128, 54], strides = [1, 1]} : vector<128x128xf32> to vector<128x54xf32>
    %cst_103 = arith.constant 0.000000e+00 : f32
    %122 = vector.broadcast %cst_103 : f32 to vector<128x56xf32>
    %123 = tpu.concatenate %121, %119, %120, %122 in 1 : vector<128x54xf32>, vector<128x9xf32>, vector<128x9xf32>, vector<128x56xf32> -> vector<128x128xf32>
    %c0_104 = arith.constant 0 : index
    %c0_105 = arith.constant 0 : index
    %c0_106 = arith.constant 0 : index
    %124 = vector.load %arg7[%c0_104, %c0_105, %c0_106] : memref<1x128x128xf32, #tpu.memory_space<vmem>>, vector<1x128x128xf32>
    %125 = vector.shape_cast %124 : vector<1x128x128xf32> to vector<128x128xf32>
    %126 = vector.shape_cast %123 : vector<128x128xf32> to vector<1x128x128xf32>
    tpu.vector_store %arg7[%c0_104, %c0_105, %c0_106], %126 {strides = array<i32>} : memref<1x128x128xf32, #tpu.memory_space<vmem>>, vector<1x128x128xf32>,
    return
  }
  func.func @transform_0(%arg0: i32, %arg1: i32) -> (i32, i32, i32, i32) {
    %c0_i32 = arith.constant 0 : i32
    %c0_i32_0 = arith.constant 0 : i32
    %c0_i32_1 = arith.constant 0 : i32
    %c0_i32_2 = arith.constant 0 : i32
    return %arg0, %c0_i32, %c0_i32_0, %c0_i32_1 : i32, i32, i32, i32
  }
  func.func @transform_1(%arg0: i32, %arg1: i32) -> (i32, i32, i32) {
    %c0_i32 = arith.constant 0 : i32
    %c0_i32_0 = arith.constant 0 : i32
    %c0_i32_1 = arith.constant 0 : i32
    %c0_i32_2 = arith.constant 0 : i32
    return %c0_i32, %c0_i32_0, %c0_i32_1 : i32, i32, i32
  }
  func.func @transform_2(%arg0: i32, %arg1: i32) -> (i32, i32) {
    %c0_i32 = arith.constant 0 : i32
    %c0_i32_0 = arith.constant 0 : i32
    %c0_i32_1 = arith.constant 0 : i32
    return %c0_i32, %c0_i32_0 : i32, i32
  }
  func.func @transform_3(%arg0: i32, %arg1: i32) -> (i32, i32) {
    %c0_i32 = arith.constant 0 : i32
    %c0_i32_0 = arith.constant 0 : i32
    %c0_i32_1 = arith.constant 0 : i32
    return %c0_i32, %c0_i32_0 : i32, i32
  }
  func.func @transform_4(%arg0: i32, %arg1: i32) -> (i32, i32) {
    %c0_i32 = arith.constant 0 : i32
    %c0_i32_0 = arith.constant 0 : i32
    %c0_i32_1 = arith.constant 0 : i32
    return %c0_i32, %c0_i32_0 : i32, i32
  }
  func.func @transform_5(%arg0: i32, %arg1: i32) -> (i32, i32, i32) {
    %c0_i32 = arith.constant 0 : i32
    %c0_i32_0 = arith.constant 0 : i32
    return %arg0, %arg1, %c0_i32 : i32, i32, i32
  }
}

</mosaic_0001>

<llo_original>
// kernel: tpu_custom_call.1
$region0: #{tpu_custom_call.1}
  #allocation0 [shape = 'u32[]', space=smem, size = 0x4, offset = 0x4, fixed_abs, tag = 'smem constant byte address 0x4 - core index']
  #allocation1 [shape = 'u32[72,128]{1,0:T(1,128)}', space=vmem, size = 0x9000, scoped, tag = 'internal scratch']
  #allocation2 [shape = 'f32[128,512]{1,0:T(8,128)}', space=vmem, size = 0x40000, scoped, tag = 'scratch operand']
  %s0 = inlined_call_operand.vmem [shape: f32[2,18,18,4], index: 0, kind: input, shape index: {}]
  %s1 = inlined_call_operand.vmem [shape: f32[9,4,512], index: 1, kind: input, shape index: {}]
  %s2 = inlined_call_operand.vmem [shape: f32[1,512], index: 2, kind: input, shape index: {}]
  %s3 = inlined_call_operand.vmem [shape: f32[512,128], index: 3, kind: input, shape index: {}]
  %s4 = inlined_call_operand.vmem [shape: f32[1,128], index: 4, kind: input, shape index: {}]
  %s5 = inlined_call_operand.hbm [shape: f32[2,256,128], index: 5, kind: output, shape index: {}]
  %s6 = sld [smem:[#allocation0]]
  $region53: #{tpu_custom_call.1} parent=0
    _
  %s8 = ssub.s32 1, %s6
  %s9 = scalar_select 0, %s8, %s6
  $region1: #{tpu_custom_call.1} parent=0
    #allocation3 [shape = 'u8[131072]{0}', space=vmem, size = 0x20000, scoped, tag = 'output window, operand 0']
    #allocation4 [shape = 's32[2]{0}', space=sflag, size = 0x8, scoped, tag = 'scoped memory for tpu_custom_call.1']
    %10 = vsyncpa [#allocation4], 0
    %s11 = scalar_lea.sflag [#allocation4], 1
    %12 = vsyncpa %s11, 0
    loop: start=0, step=1, limit=6
    $region2: #{tpu_custom_call.1} parent=1 // loop_pre_header
      _
    $region3: #{tpu_custom_call.1} parent=1 // loop_header
      %s14 = sphi 0, %s18
      %p15 = scmp.ge.s32.totalorder %s14, 6
      %s21 = sphi 0, %s33
      %s22 = sphi 0, %s29
      %s23 = sphi 0, %s21
      %s24 = sphi 0, %s22
      %s25 = sphi 0, %s23
      %s26 = sphi 0, %s24
      %s36 = sphi 0, %s38
      %s39 = sphi 0, %s36
      %s40 = sphi 0, %s39
      %s56 = sphi 0, %s40
      %s60 = sphi 0, %s60
      %s62 = sphi 0, %s60
      %s63 = sphi 0, %s62
      %s77 = sphi 0, %s63
      %s81 = sphi 0, %s81
      %s83 = sphi 0, %s81
      %s84 = sphi 0, %s83
      %s98 = sphi 0, %s84
      %s102 = sphi 0, %s102
      %s104 = sphi 0, %s102
      %s105 = sphi 0, %s104
      %s119 = sphi 0, %s105
      %s123 = sphi 0, %s123
      %s125 = sphi 0, %s123
      %s126 = sphi 0, %s125
      %s140 = sphi 0, %s126
      %s148 = sphi 0, %s150
      %s151 = sphi 0, %s148
      %s152 = sphi 0, %s151
      %s168 = sphi 0, %s152
    $region4: #{tpu_custom_call.1} parent=1 // loop_header_branch
      %17 = sbr.rel (%p15) target = $region8
    $region5: #{tpu_custom_call.1} parent=1 // loop_body
      %s19 = ssub.s32 %s14, 1
      %s20 = ssub.s32 %s14, 2
      %s27 = sadd.s32 1, %s22
      %p28 = scmp.ge.s32.totalorder %s27, 2
      %s29 = scalar_select %p28, 0, %s27
      %s30 = sadd.s32 1, %s21
      %s31 = scalar_select %p28, %s30, %s21
      %p32 = scmp.ge.s32.totalorder %s31, 2
      %s33 = scalar_select %p32, 0, %s31
      %s34 = ssub.s32 %s21, %s33
      %p35 = scmp.eq.s32.totalorder %s34, 0
      %s37 = sadd.s32 %s36, 1
      %s38 = scalar_select %p35, %s36, %s37
      %p41 = pneg %p35
      %p42 = scmp.eq.s32.totalorder %s14, 3
      %p43 = por %p41, %p42
      %p44 = scmp.ne.s32.totalorder %s36, %s39
      %p45 = scmp.eq.s32.totalorder %s14, 0
      %p46 = por %p44, %p45
      %p47 = scmp.ne.s32.totalorder %s36, %s39
      %p48 = scmp.eq.s32.totalorder %s19, 3
      %p49 = por %p47, %p48
      %p50 = scmp.ne.s32.totalorder %s39, %s40
      %p51 = scmp.eq.s32.totalorder %s19, 0
      %p52 = por %p50, %p51
      %p53 = scmp.ne.s32.totalorder %s39, %s40
      %p54 = scmp.eq.s32.totalorder %s20, 3
      %p55 = por %p53, %p54
      %p57 = scmp.ne.s32.totalorder %s40, %s56
      %p58 = scmp.eq.s32.totalorder %s20, 0
      %p59 = por %p57, %p58
      %s61 = sadd.s32 %s60, 1
      %p64 = scmp.eq.s32.totalorder %s14, 3
      %p65 = scmp.ne.s32.totalorder %s60, %s62
      %p66 = scmp.eq.s32.totalorder %s14, 0
      %p67 = por %p65, %p66
      %p68 = scmp.ne.s32.totalorder %s60, %s62
      %p69 = scmp.eq.s32.totalorder %s19, 3
      %p70 = por %p68, %p69
      %p71 = scmp.ne.s32.totalorder %s62, %s63
      %p72 = scmp.eq.s32.totalorder %s19, 0
      %p73 = por %p71, %p72
      %p74 = scmp.ne.s32.totalorder %s62, %s63
      %p75 = scmp.eq.s32.totalorder %s20, 3
      %p76 = por %p74, %p75
      %p78 = scmp.ne.s32.totalorder %s63, %s77
      %p79 = scmp.eq.s32.totalorder %s20, 0
      %p80 = por %p78, %p79
      %s82 = sadd.s32 %s81, 1
      %p85 = scmp.eq.s32.totalorder %s14, 3
      %p86 = scmp.ne.s32.totalorder %s81, %s83
      %p87 = scmp.eq.s32.totalorder %s14, 0
      %p88 = por %p86, %p87
      %p89 = scmp.ne.s32.totalorder %s81, %s83
      %p90 = scmp.eq.s32.totalorder %s19, 3
      %p91 = por %p89, %p90
      %p92 = scmp.ne.s32.totalorder %s83, %s84
      %p93 = scmp.eq.s32.totalorder %s19, 0
      %p94 = por %p92, %p93
      %p95 = scmp.ne.s32.totalorder %s83, %s84
      %p96 = scmp.eq.s32.totalorder %s20, 3
      %p97 = por %p95, %p96
      %p99 = scmp.ne.s32.totalorder %s84, %s98
      %p100 = scmp.eq.s32.totalorder %s20, 0
      %p101 = por %p99, %p100
      %s103 = sadd.s32 %s102, 1
      %p106 = scmp.eq.s32.totalorder %s14, 3
      %p107 = scmp.ne.s32.totalorder %s102, %s104
      %p108 = scmp.eq.s32.totalorder %s14, 0
      %p109 = por %p107, %p108
      %p110 = scmp.ne.s32.totalorder %s102, %s104
      %p111 = scmp.eq.s32.totalorder %s19, 3
      %p112 = por %p110, %p111
      %p113 = scmp.ne.s32.totalorder %s104, %s105
      %p114 = scmp.eq.s32.totalorder %s19, 0
      %p115 = por %p113, %p114
      %p116 = scmp.ne.s32.totalorder %s104, %s105
      %p117 = scmp.eq.s32.totalorder %s20, 3
      %p118 = por %p116, %p117
      %p120 = scmp.ne.s32.totalorder %s105, %s119
      %p121 = scmp.eq.s32.totalorder %s20, 0
      %p122 = por %p120, %p121
      %s124 = sadd.s32 %s123, 1
      %p127 = scmp.eq.s32.totalorder %s14, 3
      %p128 = scmp.ne.s32.totalorder %s123, %s125
      %p129 = scmp.eq.s32.totalorder %s14, 0
      %p130 = por %p128, %p129
      %p131 = scmp.ne.s32.totalorder %s123, %s125
      %p132 = scmp.eq.s32.totalorder %s19, 3
      %p133 = por %p131, %p132
      %p134 = scmp.ne.s32.totalorder %s125, %s126
      %p135 = scmp.eq.s32.totalorder %s19, 0
      %p136 = por %p134, %p135
      %p137 = scmp.ne.s32.totalorder %s125, %s126
      %p138 = scmp.eq.s32.totalorder %s20, 3
      %p139 = por %p137, %p138
      %p141 = scmp.ne.s32.totalorder %s126, %s140
      %p142 = scmp.eq.s32.totalorder %s20, 0
      %p143 = por %p141, %p142
      %s144 = ssub.s32 %s21, %s33
      %s145 = ssub.s32 %s22, %s29
      %s146 = sor.u32 %s144, %s145
      %p147 = scmp.eq.s32.totalorder %s146, 0
      %s149 = sadd.s32 %s148, 1
      %s150 = scalar_select %p147, %s148, %s149
      %p153 = pneg %p147
      %p154 = scmp.eq.s32.totalorder %s14, 3
      %p155 = por %p153, %p154
      %p156 = scmp.ne.s32.totalorder %s148, %s151
      %p157 = scmp.eq.s32.totalorder %s14, 0
      %p158 = por %p156, %p157
      %p159 = scmp.ne.s32.totalorder %s148, %s151
      %p160 = scmp.eq.s32.totalorder %s19, 3
      %p161 = por %p159, %p160
      %p162 = scmp.ne.s32.totalorder %s151, %s152
      %p163 = scmp.eq.s32.totalorder %s19, 0
      %p164 = por %p162, %p163
      %p165 = scmp.ne.s32.totalorder %s151, %s152
      %p166 = scmp.eq.s32.totalorder %s20, 3
      %p167 = por %p165, %p166
      %p169 = scmp.ne.s32.totalorder %s152, %s168
      %p170 = scmp.eq.s32.totalorder %s20, 0
      %p171 = por %p169, %p170
      %p172 = scmp.le.s32.totalorder 1, %s14
      %p173 = scmp.lt.s32.totalorder %s14, 5
      %p174 = pnand %p172, %p173
      %p175 = pneg %p174
      // Predicated region
      $region9: #{tpu_custom_call.1} parent=5 // pred_check
        _
      $region10: #{tpu_custom_call.1} parent=5 // pred_check_branch
        %177 = sbr.rel (%p174) target = $region12
      $region11: #{tpu_custom_call.1} parent=5 // pred_region
        %s178 = ssub.s32 %s14, 1
        // Predicated region
        $region13: #{tpu_custom_call.1} parent=11 // pred_check
          %p179 = pneg %p73
        $region14: #{tpu_custom_call.1} parent=11 // pred_check_branch
          %181 = sbr.rel (%p179) target = $region16
        $region15: #{tpu_custom_call.1} parent=11 // pred_region
          _
        $region16: #{tpu_custom_call.1} parent=11 // pred_fallthru
          _
        // Predicated region
        $region17: #{tpu_custom_call.1} parent=11 // pred_check
          %p182 = pneg %p94
        $region18: #{tpu_custom_call.1} parent=11 // pred_check_branch
          %184 = sbr.rel (%p182) target = $region20
        $region19: #{tpu_custom_call.1} parent=11 // pred_region
          _
        $region20: #{tpu_custom_call.1} parent=11 // pred_fallthru
          _
        // Predicated region
        $region21: #{tpu_custom_call.1} parent=11 // pred_check
          %p185 = pneg %p115
        $region22: #{tpu_custom_call.1} parent=11 // pred_check_branch
          %187 = sbr.rel (%p185) target = $region24
        $region23: #{tpu_custom_call.1} parent=11 // pred_region
          _
        $region24: #{tpu_custom_call.1} parent=11 // pred_fallthru
          _
        // Predicated region
        $region25: #{tpu_custom_call.1} parent=11 // pred_check
          %p188 = pneg %p136
        $region26: #{tpu_custom_call.1} parent=11 // pred_check_branch
          %190 = sbr.rel (%p188) target = $region28
        $region27: #{tpu_custom_call.1} parent=11 // pred_region
          _
        $region28: #{tpu_custom_call.1} parent=11 // pred_fallthru
          _
      $region12: #{tpu_custom_call.1} parent=5 // pred_fallthru
        _
      %p191 = scmp.lt.s32.totalorder %s14, 4
      // Predicated region
      $region29: #{tpu_custom_call.1} parent=5 // pred_check
        %p192 = pneg %p191
      $region30: #{tpu_custom_call.1} parent=5 // pred_check_branch
        %194 = sbr.rel (%p192) target = $region32
      $region31: #{tpu_custom_call.1} parent=5 // pred_region
        // Predicated region
        $region33: #{tpu_custom_call.1} parent=31 // pred_check
          %p195 = pneg %p46
        $region34: #{tpu_custom_call.1} parent=31 // pred_check_branch
          %197 = sbr.rel (%p195) target = $region36
        $region35: #{tpu_custom_call.1} parent=31 // pred_region
          %p198 = scmp.lt.s32.totalorder %s21, 1
          %s199 = scalar_select %p198, %s21, 1
          %s200 = smul.addr %s199, 54
          %s201 = smul.addr %s200, 8
          %s202 = scalar_lea.vmem %s0, %s201
        $region36: #{tpu_custom_call.1} parent=31 // pred_fallthru
          _
      $region32: #{tpu_custom_call.1} parent=5 // pred_fallthru
        _
      %p203 = scmp.le.s32.totalorder 1, %s14
      %p204 = scmp.lt.s32.totalorder %s14, 5
      %p205 = pnand %p203, %p204
      %p206 = pneg %p205
      // Predicated region
      $region37: #{tpu_custom_call.1} parent=5 // pred_check
        _
      $region38: #{tpu_custom_call.1} parent=5 // pred_check_branch
        %208 = sbr.rel (%p205) target = $region40
      $region39: #{tpu_custom_call.1} parent=5 // pred_region
        %s209 = ssub.s32 %s14, 1
        %p210 = scmp.lt.s32.totalorder %s23, 1
        %s211 = scalar_select %p210, %s23, 1
        %s212 = smul.addr %s211, 54
        %s213 = smul.addr %s212, 8
        %s214 = scalar_lea.vmem %s0, %s213
        %p215 = pneg %p52
        %p216 = pneg %p49
        %p217 = pneg %p73
        %p218 = pneg %p70
        %p219 = pneg %p94
        %p220 = pneg %p91
        %p221 = pneg %p115
        %p222 = pneg %p112
        %p223 = pneg %p136
        %p224 = pneg %p133
        %p225 = pneg %p164
        %p226 = pneg %p161
        %s227 = sand.u32 %s151, 1
        %s228 = scalar_lea.sflag [#allocation4], %s227
        %s229 = sand.u32 %s151, 1
        %s230 = smul.addr %s229, 128
        %s231 = scalar_lea.vmem [#allocation3], %s230
        %p232 = scmp.lt.s32.totalorder %s23, 1
        %s233 = scalar_select %p232, %s23, 1
        %s234 = smul.addr %s233, 54
        %s235 = smul.addr %s234, 8
        %s236 = scalar_lea.vmem %s0, %s235
        %s237 = smul.u32 16, %s24
        %s238 = smul.u32 %s24, 8
        %s239 = smul.u32 %s238, 24
        %s240 = scalar_lea.vmem %s236, %s239
        %v241 = vld [vmem:[%s240] sm:$0xff]
        %v242 = vld [vmem:[%s240 + $0x8] sm:$0xff]
        %v243 = vld [vmem:[%s240 + $0x18] sm:$0xff]
        %v244 = vld [vmem:[%s240 + $0x20] sm:$0xff]
        %v245 = vld [vmem:[%s240 + $0x30] sm:$0xff]
        %v246 = vld [vmem:[%s240 + $0x38] sm:$0xff]
        %v247 = vld [vmem:[%s240 + $0x48] sm:$0xff]
        %v248 = vld [vmem:[%s240 + $0x50] sm:$0xff]
        %v249 = vld [vmem:[%s240 + $0x60] sm:$0xff]
        %v250 = vld [vmem:[%s240 + $0x68] sm:$0xff]
        %v251 = vld [vmem:[%s240 + $0x78] sm:$0xff]
        %v252 = vld [vmem:[%s240 + $0x80] sm:$0xff]
        %v253 = vld [vmem:[%s240 + $0x90] sm:$0xff]
        %v254 = vld [vmem:[%s240 + $0x98] sm:$0xff]
        %v255 = vld [vmem:[%s240 + $0xa8] sm:$0xff]
        %v256 = vld [vmem:[%s240 + $0xb0] sm:$0xff]
        %v257 = vld [vmem:[%s1] sm:$0xff]
        %v258 = vld [vmem:[%s1 + $0x8] sm:$0xff]
        %261 = vst [vmem:[#allocation1] ss:$2 sm:$0xff] %v257
        %s262 = scalar_lea.vmem [#allocation1], 16
        %263 = vst [vmem:[%s262] ss:$2 sm:$0xff] %v258
        %v264 = vld.sshfl [vmem:[#allocation1] sm:$0xff pattern:$0x75316420]
        %v265 = vld.sshfl [vmem:[#allocation1 + $0x8] sm:$0xff pattern:$0x75316420]
        %v266 = vld.sshfl [vmem:[#allocation1 + $0x10] sm:$0xff pattern:$0x75316420]
        %v267 = vld.sshfl [vmem:[#allocation1 + $0x18] sm:$0xff pattern:$0x75316420]
        %vm268 = vcmask 31744
        %v270 = vsel %vm268, %v241, 0
        %v273 = vsel %vm268, %v242, 0
        %v276 = vsel %vm268, %v243, 0
        %v279 = vsel %vm268, %v244, 0
        %v282 = vsel %vm268, %v245, 0
        %v285 = vsel %vm268, %v246, 0
        %v288 = vsel %vm268, %v247, 0
        %v291 = vsel %vm268, %v248, 0
        %v294 = vsel %vm268, %v249, 0
        %v297 = vsel %vm268, %v250, 0
        %v300 = vsel %vm268, %v251, 0
        %v303 = vsel %vm268, %v252, 0
        %v306 = vsel %vm268, %v253, 0
        %v309 = vsel %vm268, %v254, 0
        %v312 = vsel %vm268, %v255, 0
        %v315 = vsel %vm268, %v256, 0
        %vm317 = vcmask 1043456
        %v318 = vsel %vm317, %v264, 0
        %v320 = vsel %vm317, %v265, 0
        %v322 = vsel %vm317, %v266, 0
        %v324 = vsel %vm317, %v267, 0
        %326 = vmatpush.msra.mxu0 0.0
        %327 = vmatpush.msra.mxu0 0.0
        %328 = vmatpush.msra.mxu0 0.0
        %329 = vmatpush.msra.mxu0 0.0
        %330 = vmatpush.msra.mxu0 0.0
        %331 = vmatpush.msra.mxu0 0.0
        %332 = vmatpush.msra.mxu0 0.0
        %333 = vmatpush.msra.mxu0 0.0
        %334 = vmatpush.msra.mxu0 0.0
        %335 = vmatpush.msra.mxu0 0.0
        %336 = vmatpush.msra.mxu0 0.0
        %337 = vmatpush.msra.mxu0 0.0
        %338 = vmatpush.msra.mxu0 0.0
        %339 = vmatpush.msra.mxu0 0.0
        %340 = vmatpush.msra.mxu0 0.0
        %341 = vmatpush.msra.mxu0 %v318
        %342 = vmatmul.f32.gmra.mxu0 %v270
        %v343 = vpop.f32.mrf.mxu0
        %v344 = vadd.f32 0.0, %v343
        %345 = vmatmul.f32.gmra.mxu0 %v273
        %v346 = vpop.f32.mrf.mxu0
        %v347 = vadd.f32 0.0, %v346
        %348 = vmatmul.f32.gmra.mxu0 %v276
        %v349 = vpop.f32.mrf.mxu0
        %v350 = vadd.f32 0.0, %v349
        %351 = vmatmul.f32.gmra.mxu0 %v279
        %v352 = vpop.f32.mrf.mxu0
        %v353 = vadd.f32 0.0, %v352
        %354 = vmatmul.f32.gmra.mxu0 %v282
        %v355 = vpop.f32.mrf.mxu0
        %v356 = vadd.f32 0.0, %v355
        %357 = vmatmul.f32.gmra.mxu0 %v285
        %v358 = vpop.f32.mrf.mxu0
        %v359 = vadd.f32 0.0, %v358
        %360 = vmatmul.f32.gmra.mxu0 %v288
        %v361 = vpop.f32.mrf.mxu0
        %v362 = vadd.f32 0.0, %v361
        %363 = vmatmul.f32.gmra.mxu0 %v291
        %v364 = vpop.f32.mrf.mxu0
        %v365 = vadd.f32 0.0, %v364
        %366 = vmatmul.f32.gmra.mxu0 %v294
        %v367 = vpop.f32.mrf.mxu0
        %v368 = vadd.f32 0.0, %v367
        %369 = vmatmul.f32.gmra.mxu0 %v297
        %v370 = vpop.f32.mrf.mxu0
        %v371 = vadd.f32 0.0, %v370
        %372 = vmatmul.f32.gmra.mxu0 %v300
        %v373 = vpop.f32.mrf.mxu0
        %v374 = vadd.f32 0.0, %v373
        %375 = vmatmul.f32.gmra.mxu0 %v303
        %v376 = vpop.f32.mrf.mxu0
        %v377 = vadd.f32 0.0, %v376
        %378 = vmatmul.f32.gmra.mxu0 %v306
        %v379 = vpop.f32.mrf.mxu0
        %v380 = vadd.f32 0.0, %v379
        %381 = vmatmul.f32.gmra.mxu0 %v309
        %v382 = vpop.f32.mrf.mxu0
        %v383 = vadd.f32 0.0, %v382
        %384 = vmatmul.f32.gmra.mxu0 %v312
        %v385 = vpop.f32.mrf.mxu0
        %v386 = vadd.f32 0.0, %v385
        %387 = vmatmul.f32.gmra.mxu0 %v315
        %v388 = vpop.f32.mrf.mxu0
        %v389 = vadd.f32 0.0, %v388
        %390 = vdwg.mxu0
        %391 = vmatpush.msra.mxu0 0.0
        %392 = vmatpush.msra.mxu0 0.0
        %393 = vmatpush.msra.mxu0 0.0
        %394 = vmatpush.msra.mxu0 0.0
        %395 = vmatpush.msra.mxu0 0.0
        %396 = vmatpush.msra.mxu0 0.0
        %397 = vmatpush.msra.mxu0 0.0
        %398 = vmatpush.msra.mxu0 0.0
        %399 = vmatpush.msra.mxu0 0.0
        %400 = vmatpush.msra.mxu0 0.0
        %401 = vmatpush.msra.mxu0 0.0
        %402 = vmatpush.msra.mxu0 0.0
        %403 = vmatpush.msra.mxu0 0.0
        %404 = vmatpush.msra.mxu0 0.0
        %405 = vmatpush.msra.mxu0 0.0
        %406 = vmatpush.msra.mxu0 %v320
        %407 = vmatmul.f32.gmra.mxu0 %v270
        %v408 = vpop.f32.mrf.mxu0
        %v409 = vadd.f32 0.0, %v408
        %410 = vmatmul.f32.gmra.mxu0 %v273
        %v411 = vpop.f32.mrf.mxu0
        %v412 = vadd.f32 0.0, %v411
        %413 = vmatmul.f32.gmra.mxu0 %v276
        %v414 = vpop.f32.mrf.mxu0
        %v415 = vadd.f32 0.0, %v414
        %416 = vmatmul.f32.gmra.mxu0 %v279
        %v417 = vpop.f32.mrf.mxu0
        %v418 = vadd.f32 0.0, %v417
        %419 = vmatmul.f32.gmra.mxu0 %v282
        %v420 = vpop.f32.mrf.mxu0
        %v421 = vadd.f32 0.0, %v420
        %422 = vmatmul.f32.gmra.mxu0 %v285
        %v423 = vpop.f32.mrf.mxu0
        %v424 = vadd.f32 0.0, %v423
        %425 = vmatmul.f32.gmra.mxu0 %v288
        %v426 = vpop.f32.mrf.mxu0
        %v427 = vadd.f32 0.0, %v426
        %428 = vmatmul.f32.gmra.mxu0 %v291
        %v429 = vpop.f32.mrf.mxu0
        %v430 = vadd.f32 0.0, %v429
        %431 = vmatmul.f32.gmra.mxu0 %v294
        %v432 = vpop.f32.mrf.mxu0
        %v433 = vadd.f32 0.0, %v432
        %434 = vmatmul.f32.gmra.mxu0 %v297
        %v435 = vpop.f32.mrf.mxu0
        %v436 = vadd.f32 0.0, %v435
        %437 = vmatmul.f32.gmra.mxu0 %v300
        %v438 = vpop.f32.mrf.mxu0
        %v439 = vadd.f32 0.0, %v438
        %440 = vmatmul.f32.gmra.mxu0 %v303
        %v441 = vpop.f32.mrf.mxu0
        %v442 = vadd.f32 0.0, %v441
        %443 = vmatmul.f32.gmra.mxu0 %v306
        %v444 = vpop.f32.mrf.mxu0
        %v445 = vadd.f32 0.0, %v444
        %446 = vmatmul.f32.gmra.mxu0 %v309
        %v447 = vpop.f32.mrf.mxu0
        %v448 = vadd.f32 0.0, %v447
        %449 = vmatmul.f32.gmra.mxu0 %v312
        %v450 = vpop.f32.mrf.mxu0
        %v451 = vadd.f32 0.0, %v450
        %452 = vmatmul.f32.gmra.mxu0 %v315
        %v453 = vpop.f32.mrf.mxu0
        %v454 = vadd.f32 0.0, %v453
        %455 = vdwg.mxu0
        %456 = vmatpush.msra.mxu0 0.0
        %457 = vmatpush.msra.mxu0 0.0
        %458 = vmatpush.msra.mxu0 0.0
        %459 = vmatpush.msra.mxu0 0.0
        %460 = vmatpush.msra.mxu0 0.0
        %461 = vmatpush.msra.mxu0 0.0
        %462 = vmatpush.msra.mxu0 0.0
        %463 = vmatpush.msra.mxu0 0.0
        %464 = vmatpush.msra.mxu0 0.0
        %465 = vmatpush.msra.mxu0 0.0
        %466 = vmatpush.msra.mxu0 0.0
        %467 = vmatpush.msra.mxu0 0.0
        %468 = vmatpush.msra.mxu0 0.0
        %469 = vmatpush.msra.mxu0 0.0
        %470 = vmatpush.msra.mxu0 0.0
        %471 = vmatpush.msra.mxu0 %v322
        %472 = vmatmul.f32.gmra.mxu0 %v270
        %v473 = vpop.f32.mrf.mxu0
        %v474 = vadd.f32 0.0, %v473
        %475 = vmatmul.f32.gmra.mxu0 %v273
        %v476 = vpop.f32.mrf.mxu0
        %v477 = vadd.f32 0.0, %v476
        %478 = vmatmul.f32.gmra.mxu0 %v276
        %v479 = vpop.f32.mrf.mxu0
        %v480 = vadd.f32 0.0, %v479
        %481 = vmatmul.f32.gmra.mxu0 %v279
        %v482 = vpop.f32.mrf.mxu0
        %v483 = vadd.f32 0.0, %v482
        %484 = vmatmul.f32.gmra.mxu0 %v282
        %v485 = vpop.f32.mrf.mxu0
        %v486 = vadd.f32 0.0, %v485
        %487 = vmatmul.f32.gmra.mxu0 %v285
        %v488 = vpop.f32.mrf.mxu0
        %v489 = vadd.f32 0.0, %v488
        %490 = vmatmul.f32.gmra.mxu0 %v288
        %v491 = vpop.f32.mrf.mxu0
        %v492 = vadd.f32 0.0, %v491
        %493 = vmatmul.f32.gmra.mxu0 %v291
        %v494 = vpop.f32.mrf.mxu0
        %v495 = vadd.f32 0.0, %v494
        %496 = vmatmul.f32.gmra.mxu0 %v294
        %v497 = vpop.f32.mrf.mxu0
        %v498 = vadd.f32 0.0, %v497
        %499 = vmatmul.f32.gmra.mxu0 %v297
        %v500 = vpop.f32.mrf.mxu0
        %v501 = vadd.f32 0.0, %v500
        %502 = vmatmul.f32.gmra.mxu0 %v300
        %v503 = vpop.f32.mrf.mxu0
        %v504 = vadd.f32 0.0, %v503
        %505 = vmatmul.f32.gmra.mxu0 %v303
        %v506 = vpop.f32.mrf.mxu0
        %v507 = vadd.f32 0.0, %v506
        %508 = vmatmul.f32.gmra.mxu0 %v306
        %v509 = vpop.f32.mrf.mxu0
        %v510 = vadd.f32 0.0, %v509
        %511 = vmatmul.f32.gmra.mxu0 %v309
        %v512 = vpop.f32.mrf.mxu0
        %v513 = vadd.f32 0.0, %v512
        %514 = vmatmul.f32.gmra.mxu0 %v312
        %v515 = vpop.f32.mrf.mxu0
        %v516 = vadd.f32 0.0, %v515
        %517 = vmatmul.f32.gmra.mxu0 %v315
        %v518 = vpop.f32.mrf.mxu0
        %v519 = vadd.f32 0.0, %v518
        %520 = vdwg.mxu0
        %521 = vmatpush.msra.mxu0 0.0
        %522 = vmatpush.msra.mxu0 0.0
        %523 = vmatpush.msra.mxu0 0.0
        %524 = vmatpush.msra.mxu0 0.0
        %525 = vmatpush.msra.mxu0 0.0
        %526 = vmatpush.msra.mxu0 0.0
        %527 = vmatpush.msra.mxu0 0.0
        %528 = vmatpush.msra.mxu0 0.0
        %529 = vmatpush.msra.mxu0 0.0
        %530 = vmatpush.msra.mxu0 0.0
        %531 = vmatpush.msra.mxu0 0.0
        %532 = vmatpush.msra.mxu0 0.0
        %533 = vmatpush.msra.mxu0 0.0
        %534 = vmatpush.msra.mxu0 0.0
        %535 = vmatpush.msra.mxu0 0.0
        %536 = vmatpush.msra.mxu0 %v324
        %537 = vmatmul.f32.gmra.mxu0 %v270
        %v538 = vpop.f32.mrf.mxu0
        %v539 = vadd.f32 0.0, %v538
        %540 = vmatmul.f32.gmra.mxu0 %v273
        %v541 = vpop.f32.mrf.mxu0
        %v542 = vadd.f32 0.0, %v541
        %543 = vmatmul.f32.gmra.mxu0 %v276
        %v544 = vpop.f32.mrf.mxu0
        %v545 = vadd.f32 0.0, %v544
        %546 = vmatmul.f32.gmra.mxu0 %v279
        %v547 = vpop.f32.mrf.mxu0
        %v548 = vadd.f32 0.0, %v547
        %549 = vmatmul.f32.gmra.mxu0 %v282
        %v550 = vpop.f32.mrf.mxu0
        %v551 = vadd.f32 0.0, %v550
        %552 = vmatmul.f32.gmra.mxu0 %v285
        %v553 = vpop.f32.mrf.mxu0
        %v554 = vadd.f32 0.0, %v553
        %555 = vmatmul.f32.gmra.mxu0 %v288
        %v556 = vpop.f32.mrf.mxu0
        %v557 = vadd.f32 0.0, %v556
        %558 = vmatmul.f32.gmra.mxu0 %v291
        %v559 = vpop.f32.mrf.mxu0
        %v560 = vadd.f32 0.0, %v559
        %561 = vmatmul.f32.gmra.mxu0 %v294
        %v562 = vpop.f32.mrf.mxu0
        %v563 = vadd.f32 0.0, %v562
        %564 = vmatmul.f32.gmra.mxu0 %v297
        %v565 = vpop.f32.mrf.mxu0
        %v566 = vadd.f32 0.0, %v565
        %567 = vmatmul.f32.gmra.mxu0 %v300
        %v568 = vpop.f32.mrf.mxu0
        %v569 = vadd.f32 0.0, %v568
        %570 = vmatmul.f32.gmra.mxu0 %v303
        %v571 = vpop.f32.mrf.mxu0
        %v572 = vadd.f32 0.0, %v571
        %573 = vmatmul.f32.gmra.mxu0 %v306
        %v574 = vpop.f32.mrf.mxu0
        %v575 = vadd.f32 0.0, %v574
        %576 = vmatmul.f32.gmra.mxu0 %v309
        %v577 = vpop.f32.mrf.mxu0
        %v578 = vadd.f32 0.0, %v577
        %579 = vmatmul.f32.gmra.mxu0 %v312
        %v580 = vpop.f32.mrf.mxu0
        %v581 = vadd.f32 0.0, %v580
        %582 = vmatmul.f32.gmra.mxu0 %v315
        %v583 = vpop.f32.mrf.mxu0
        %v584 = vadd.f32 0.0, %v583
        %585 = vdwg.mxu0
        %586 = vst [vmem:[#allocation2] sm:$0xff] %v344
        %587 = vst [vmem:[#allocation2 + $0x8] sm:$0xff] %v409
        %588 = vst [vmem:[#allocation2 + $0x10] sm:$0xff] %v474
        %589 = vst [vmem:[#allocation2 + $0x18] sm:$0xff] %v539
        %590 = vst [vmem:[#allocation2 + $0x20] sm:$0xff] %v347
        %591 = vst [vmem:[#allocation2 + $0x28] sm:$0xff] %v412
        %592 = vst [vmem:[#allocation2 + $0x30] sm:$0xff] %v477
        %593 = vst [vmem:[#allocation2 + $0x38] sm:$0xff] %v542
        %594 = vst [vmem:[#allocation2 + $0x40] sm:$0xff] %v350
        %595 = vst [vmem:[#allocation2 + $0x48] sm:$0xff] %v415
        %596 = vst [vmem:[#allocation2 + $0x50] sm:$0xff] %v480
        %597 = vst [vmem:[#allocation2 + $0x58] sm:$0xff] %v545
        %598 = vst [vmem:[#allocation2 + $0x60] sm:$0xff] %v353
        %599 = vst [vmem:[#allocation2 + $0x68] sm:$0xff] %v418
        %600 = vst [vmem:[#allocation2 + $0x70] sm:$0xff] %v483
        %601 = vst [vmem:[#allocation2 + $0x78] sm:$0xff] %v548
        %602 = vst [vmem:[#allocation2 + $0x80] sm:$0xff] %v356
        %603 = vst [vmem:[#allocation2 + $0x88] sm:$0xff] %v421
        %604 = vst [vmem:[#allocation2 + $0x90] sm:$0xff] %v486
        %605 = vst [vmem:[#allocation2 + $0x98] sm:$0xff] %v551
        %606 = vst [vmem:[#allocation2 + $0xa0] sm:$0xff] %v359
        %607 = vst [vmem:[#allocation2 + $0xa8] sm:$0xff] %v424
        %608 = vst [vmem:[#allocation2 + $0xb0] sm:$0xff] %v489
        %609 = vst [vmem:[#allocation2 + $0xb8] sm:$0xff] %v554
        %610 = vst [vmem:[#allocation2 + $0xc0] sm:$0xff] %v362
        %611 = vst [vmem:[#allocation2 + $0xc8] sm:$0xff] %v427
        %612 = vst [vmem:[#allocation2 + $0xd0] sm:$0xff] %v492
        %613 = vst [vmem:[#allocation2 + $0xd8] sm:$0xff] %v557
        %614 = vst [vmem:[#allocation2 + $0xe0] sm:$0xff] %v365
        %615 = vst [vmem:[#allocation2 + $0xe8] sm:$0xff] %v430
        %616 = vst [vmem:[#allocation2 + $0xf0] sm:$0xff] %v495
        %617 = vst [vmem:[#allocation2 + $0xf8] sm:$0xff] %v560
        %618 = vst [vmem:[#allocation2 + $0x100] sm:$0xff] %v368
        %619 = vst [vmem:[#allocation2 + $0x108] sm:$0xff] %v433
        %620 = vst [vmem:[#allocation2 + $0x110] sm:$0xff] %v498
        %621 = vst [vmem:[#allocation2 + $0x118] sm:$0xff] %v563
        %622 = vst [vmem:[#allocation2 + $0x120] sm:$0xff] %v371
        %623 = vst [vmem:[#allocation2 + $0x128] sm:$0xff] %v436
        %624 = vst [vmem:[#allocation2 + $0x130] sm:$0xff] %v501
        %625 = vst [vmem:[#allocation2 + $0x138] sm:$0xff] %v566
        %626 = vst [vmem:[#allocation2 + $0x140] sm:$0xff] %v374
        %627 = vst [vmem:[#allocation2 + $0x148] sm:$0xff] %v439
        %628 = vst [vmem:[#allocation2 + $0x150] sm:$0xff] %v504
        %629 = vst [vmem:[#allocation2 + $0x158] sm:$0xff] %v569
        %630 = vst [vmem:[#allocation2 + $0x160] sm:$0xff] %v377
        %631 = vst [vmem:[#allocation2 + $0x168] sm:$0xff] %v442
        %632 = vst [vmem:[#allocation2 + $0x170] sm:$0xff] %v507
        %633 = vst [vmem:[#allocation2 + $0x178] sm:$0xff] %v572
        %634 = vst [vmem:[#allocation2 + $0x180] sm:$0xff] %v380
        %635 = vst [vmem:[#allocation2 + $0x188] sm:$0xff] %v445
        %636 = vst [vmem:[#allocation2 + $0x190] sm:$0xff] %v510
        %637 = vst [vmem:[#allocation2 + $0x198] sm:$0xff] %v575
        %638 = vst [vmem:[#allocation2 + $0x1a0] sm:$0xff] %v383
        %639 = vst [vmem:[#allocation2 + $0x1a8] sm:$0xff] %v448
        %640 = vst [vmem:[#allocation2 + $0x1b0] sm:$0xff] %v513
        %641 = vst [vmem:[#allocation2 + $0x1b8] sm:$0xff] %v578
        %642 = vst [vmem:[#allocation2 + $0x1c0] sm:$0xff] %v386
        %643 = vst [vmem:[#allocation2 + $0x1c8] sm:$0xff] %v451
        %644 = vst [vmem:[#allocation2 + $0x1d0] sm:$0xff] %v516
        %645 = vst [vmem:[#allocation2 + $0x1d8] sm:$0xff] %v581
        %646 = vst [vmem:[#allocation2 + $0x1e0] sm:$0xff] %v389
        %647 = vst [vmem:[#allocation2 + $0x1e8] sm:$0xff] %v454
        %648 = vst [vmem:[#allocation2 + $0x1f0] sm:$0xff] %v519
        %649 = vst [vmem:[#allocation2 + $0x1f8] sm:$0xff] %v584
        %v650 = vld [vmem:[%s240 + $0x1] sm:$0xff]
        %v651 = vld [vmem:[%s240 + $0x9] sm:$0xff]
        %v652 = vld [vmem:[%s240 + $0x19] sm:$0xff]
        %v653 = vld [vmem:[%s240 + $0x21] sm:$0xff]
        %v654 = vld [vmem:[%s240 + $0x31] sm:$0xff]
        %v655 = vld [vmem:[%s240 + $0x39] sm:$0xff]
        %v656 = vld [vmem:[%s240 + $0x49] sm:$0xff]
        %v657 = vld [vmem:[%s240 + $0x51] sm:$0xff]
        %v658 = vld [vmem:[%s240 + $0x61] sm:$0xff]
        %v659 = vld [vmem:[%s240 + $0x69] sm:$0xff]
        %v660 = vld [vmem:[%s240 + $0x79] sm:$0xff]
        %v661 = vld [vmem:[%s240 + $0x81] sm:$0xff]
        %v662 = vld [vmem:[%s240 + $0x91] sm:$0xff]
        %v663 = vld [vmem:[%s240 + $0x99] sm:$0xff]
        %v664 = vld [vmem:[%s240 + $0xa9] sm:$0xff]
        %v665 = vld [vmem:[%s240 + $0xb1] sm:$0xff]
        %s666 = scalar_lea.vmem %s1, 16
        %v667 = vld [vmem:[%s666] sm:$0xff]
        %v668 = vld [vmem:[%s666 + $0x8] sm:$0xff]
        %671 = vst [vmem:[#allocation1] ss:$2 sm:$0xff] %v667
        %s672 = scalar_lea.vmem [#allocation1], 16
        %673 = vst [vmem:[%s672] ss:$2 sm:$0xff] %v668
        %v674 = vld.sshfl [vmem:[#allocation1] sm:$0xff pattern:$0x75316420]
        %v675 = vld.sshfl [vmem:[#allocation1 + $0x8] sm:$0xff pattern:$0x75316420]
        %v676 = vld.sshfl [vmem:[#allocation1 + $0x10] sm:$0xff pattern:$0x75316420]
        %v677 = vld.sshfl [vmem:[#allocation1 + $0x18] sm:$0xff pattern:$0x75316420]
        %v679 = vsel %vm268, %v650, 0
        %v682 = vsel %vm268, %v651, 0
        %v685 = vsel %vm268, %v652, 0
        %v688 = vsel %vm268, %v653, 0
        %v691 = vsel %vm268, %v654, 0
        %v694 = vsel %vm268, %v655, 0
        %v697 = vsel %vm268, %v656, 0
        %v700 = vsel %vm268, %v657, 0
        %v703 = vsel %vm268, %v658, 0
        %v706 = vsel %vm268, %v659, 0
        %v709 = vsel %vm268, %v660, 0
        %v712 = vsel %vm268, %v661, 0
        %v715 = vsel %vm268, %v662, 0
        %v718 = vsel %vm268, %v663, 0
        %v721 = vsel %vm268, %v664, 0
        %v724 = vsel %vm268, %v665, 0
        %v726 = vsel %vm317, %v674, 0
        %v728 = vsel %vm317, %v675, 0
        %v730 = vsel %vm317, %v676, 0
        %v732 = vsel %vm317, %v677, 0
        %734 = vmatpush.msra.mxu0 0.0
        %735 = vmatpush.msra.mxu0 0.0
        %736 = vmatpush.msra.mxu0 0.0
        %737 = vmatpush.msra.mxu0 0.0
        %738 = vmatpush.msra.mxu0 0.0
        %739 = vmatpush.msra.mxu0 0.0
        %740 = vmatpush.msra.mxu0 0.0
        %741 = vmatpush.msra.mxu0 0.0
        %742 = vmatpush.msra.mxu0 0.0
        %743 = vmatpush.msra.mxu0 0.0
        %744 = vmatpush.msra.mxu0 0.0
        %745 = vmatpush.msra.mxu0 0.0
        %746 = vmatpush.msra.mxu0 0.0
        %747 = vmatpush.msra.mxu0 0.0
        %748 = vmatpush.msra.mxu0 0.0
        %749 = vmatpush.msra.mxu0 %v726
        %750 = vmatmul.f32.gmra.mxu0 %v679
        %v751 = vpop.f32.mrf.mxu0
        %v752 = vadd.f32 0.0, %v751
        %753 = vmatmul.f32.gmra.mxu0 %v682
        %v754 = vpop.f32.mrf.mxu0
        %v755 = vadd.f32 0.0, %v754
        %756 = vmatmul.f32.gmra.mxu0 %v685
        %v757 = vpop.f32.mrf.mxu0
        %v758 = vadd.f32 0.0, %v757
        %759 = vmatmul.f32.gmra.mxu0 %v688
        %v760 = vpop.f32.mrf.mxu0
        %v761 = vadd.f32 0.0, %v760
        %762 = vmatmul.f32.gmra.mxu0 %v691
        %v763 = vpop.f32.mrf.mxu0
        %v764 = vadd.f32 0.0, %v763
        %765 = vmatmul.f32.gmra.mxu0 %v694
        %v766 = vpop.f32.mrf.mxu0
        %v767 = vadd.f32 0.0, %v766
        %768 = vmatmul.f32.gmra.mxu0 %v697
        %v769 = vpop.f32.mrf.mxu0
        %v770 = vadd.f32 0.0, %v769
        %771 = vmatmul.f32.gmra.mxu0 %v700
        %v772 = vpop.f32.mrf.mxu0
        %v773 = vadd.f32 0.0, %v772
        %774 = vmatmul.f32.gmra.mxu0 %v703
        %v775 = vpop.f32.mrf.mxu0
        %v776 = vadd.f32 0.0, %v775
        %777 = vmatmul.f32.gmra.mxu0 %v706
        %v778 = vpop.f32.mrf.mxu0
        %v779 = vadd.f32 0.0, %v778
        %780 = vmatmul.f32.gmra.mxu0 %v709
        %v781 = vpop.f32.mrf.mxu0
        %v782 = vadd.f32 0.0, %v781
        %783 = vmatmul.f32.gmra.mxu0 %v712
        %v784 = vpop.f32.mrf.mxu0
        %v785 = vadd.f32 0.0, %v784
        %786 = vmatmul.f32.gmra.mxu0 %v715
        %v787 = vpop.f32.mrf.mxu0
        %v788 = vadd.f32 0.0, %v787
        %789 = vmatmul.f32.gmra.mxu0 %v718
        %v790 = vpop.f32.mrf.mxu0
        %v791 = vadd.f32 0.0, %v790
        %792 = vmatmul.f32.gmra.mxu0 %v721
        %v793 = vpop.f32.mrf.mxu0
        %v794 = vadd.f32 0.0, %v793
        %795 = vmatmul.f32.gmra.mxu0 %v724
        %v796 = vpop.f32.mrf.mxu0
        %v797 = vadd.f32 0.0, %v796
        %798 = vdwg.mxu0
        %799 = vmatpush.msra.mxu0 0.0
        %800 = vmatpush.msra.mxu0 0.0
        %801 = vmatpush.msra.mxu0 0.0
        %802 = vmatpush.msra.mxu0 0.0
        %803 = vmatpush.msra.mxu0 0.0
        %804 = vmatpush.msra.mxu0 0.0
        %805 = vmatpush.msra.mxu0 0.0
        %806 = vmatpush.msra.mxu0 0.0
        %807 = vmatpush.msra.mxu0 0.0
        %808 = vmatpush.msra.mxu0 0.0
        %809 = vmatpush.msra.mxu0 0.0
        %810 = vmatpush.msra.mxu0 0.0
        %811 = vmatpush.msra.mxu0 0.0
        %812 = vmatpush.msra.mxu0 0.0
        %813 = vmatpush.msra.mxu0 0.0
        %814 = vmatpush.msra.mxu0 %v728
        %815 = vmatmul.f32.gmra.mxu0 %v679
        %v816 = vpop.f32.mrf.mxu0
        %v817 = vadd.f32 0.0, %v816
        %818 = vmatmul.f32.gmra.mxu0 %v682
        %v819 = vpop.f32.mrf.mxu0
        %v820 = vadd.f32 0.0, %v819
        %821 = vmatmul.f32.gmra.mxu0 %v685
        %v822 = vpop.f32.mrf.mxu0
        %v823 = vadd.f32 0.0, %v822
        %824 = vmatmul.f32.gmra.mxu0 %v688
        %v825 = vpop.f32.mrf.mxu0
        %v826 = vadd.f32 0.0, %v825
        %827 = vmatmul.f32.gmra.mxu0 %v691
        %v828 = vpop.f32.mrf.mxu0
        %v829 = vadd.f32 0.0, %v828
        %830 = vmatmul.f32.gmra.mxu0 %v694
        %v831 = vpop.f32.mrf.mxu0
        %v832 = vadd.f32 0.0, %v831
        %833 = vmatmul.f32.gmra.mxu0 %v697
        %v834 = vpop.f32.mrf.mxu0
        %v835 = vadd.f32 0.0, %v834
        %836 = vmatmul.f32.gmra.mxu0 %v700
        %v837 = vpop.f32.mrf.mxu0
        %v838 = vadd.f32 0.0, %v837
        %839 = vmatmul.f32.gmra.mxu0 %v703
        %v840 = vpop.f32.mrf.mxu0
        %v841 = vadd.f32 0.0, %v840
        %842 = vmatmul.f32.gmra.mxu0 %v706
        %v843 = vpop.f32.mrf.mxu0
        %v844 = vadd.f32 0.0, %v843
        %845 = vmatmul.f32.gmra.mxu0 %v709
        %v846 = vpop.f32.mrf.mxu0
        %v847 = vadd.f32 0.0, %v846
        %848 = vmatmul.f32.gmra.mxu0 %v712
        %v849 = vpop.f32.mrf.mxu0
        %v850 = vadd.f32 0.0, %v849
        %851 = vmatmul.f32.gmra.mxu0 %v715
        %v852 = vpop.f32.mrf.mxu0
        %v853 = vadd.f32 0.0, %v852
        %854 = vmatmul.f32.gmra.mxu0 %v718
        %v855 = vpop.f32.mrf.mxu0
        %v856 = vadd.f32 0.0, %v855
        %857 = vmatmul.f32.gmra.mxu0 %v721
        %v858 = vpop.f32.mrf.mxu0
        %v859 = vadd.f32 0.0, %v858
        %860 = vmatmul.f32.gmra.mxu0 %v724
        %v861 = vpop.f32.mrf.mxu0
        %v862 = vadd.f32 0.0, %v861
        %863 = vdwg.mxu0
        %864 = vmatpush.msra.mxu0 0.0
        %865 = vmatpush.msra.mxu0 0.0
        %866 = vmatpush.msra.mxu0 0.0
        %867 = vmatpush.msra.mxu0 0.0
        %868 = vmatpush.msra.mxu0 0.0
        %869 = vmatpush.msra.mxu0 0.0
        %870 = vmatpush.msra.mxu0 0.0
        %871 = vmatpush.msra.mxu0 0.0
        %872 = vmatpush.msra.mxu0 0.0
        %873 = vmatpush.msra.mxu0 0.0
        %874 = vmatpush.msra.mxu0 0.0
        %875 = vmatpush.msra.mxu0 0.0
        %876 = vmatpush.msra.mxu0 0.0
        %877 = vmatpush.msra.mxu0 0.0
        %878 = vmatpush.msra.mxu0 0.0
        %879 = vmatpush.msra.mxu0 %v730
        %880 = vmatmul.f32.gmra.mxu0 %v679
        %v881 = vpop.f32.mrf.mxu0
        %v882 = vadd.f32 0.0, %v881
        %883 = vmatmul.f32.gmra.mxu0 %v682
        %v884 = vpop.f32.mrf.mxu0
        %v885 = vadd.f32 0.0, %v884
        %886 = vmatmul.f32.gmra.mxu0 %v685
        %v887 = vpop.f32.mrf.mxu0
        %v888 = vadd.f32 0.0, %v887
        %889 = vmatmul.f32.gmra.mxu0 %v688
        %v890 = vpop.f32.mrf.mxu0
        %v891 = vadd.f32 0.0, %v890
        %892 = vmatmul.f32.gmra.mxu0 %v691
        %v893 = vpop.f32.mrf.mxu0
        %v894 = vadd.f32 0.0, %v893
        %895 = vmatmul.f32.gmra.mxu0 %v694
        %v896 = vpop.f32.mrf.mxu0
        %v897 = vadd.f32 0.0, %v896
        %898 = vmatmul.f32.gmra.mxu0 %v697
        %v899 = vpop.f32.mrf.mxu0
        %v900 = vadd.f32 0.0, %v899
        %901 = vmatmul.f32.gmra.mxu0 %v700
        %v902 = vpop.f32.mrf.mxu0
        %v903 = vadd.f32 0.0, %v902
        %904 = vmatmul.f32.gmra.mxu0 %v703
        %v905 = vpop.f32.mrf.mxu0
        %v906 = vadd.f32 0.0, %v905
        %907 = vmatmul.f32.gmra.mxu0 %v706
        %v908 = vpop.f32.mrf.mxu0
        %v909 = vadd.f32 0.0, %v908
        %910 = vmatmul.f32.gmra.mxu0 %v709
        %v911 = vpop.f32.mrf.mxu0
        %v912 = vadd.f32 0.0, %v911
        %913 = vmatmul.f32.gmra.mxu0 %v712
        %v914 = vpop.f32.mrf.mxu0
        %v915 = vadd.f32 0.0, %v914
        %916 = vmatmul.f32.gmra.mxu0 %v715
        %v917 = vpop.f32.mrf.mxu0
        %v918 = vadd.f32 0.0, %v917
        %919 = vmatmul.f32.gmra.mxu0 %v718
        %v920 = vpop.f32.mrf.mxu0
        %v921 = vadd.f32 0.0, %v920
        %922 = vmatmul.f32.gmra.mxu0 %v721
        %v923 = vpop.f32.mrf.mxu0
        %v924 = vadd.f32 0.0, %v923
        %925 = vmatmul.f32.gmra.mxu0 %v724
        %v926 = vpop.f32.mrf.mxu0
        %v927 = vadd.f32 0.0, %v926
        %928 = vdwg.mxu0
        %929 = vmatpush.msra.mxu0 0.0
        %930 = vmatpush.msra.mxu0 0.0
        %931 = vmatpush.msra.mxu0 0.0
        %932 = vmatpush.msra.mxu0 0.0
        %933 = vmatpush.msra.mxu0 0.0
        %934 = vmatpush.msra.mxu0 0.0
        %935 = vmatpush.msra.mxu0 0.0
        %936 = vmatpush.msra.mxu0 0.0
        %937 = vmatpush.msra.mxu0 0.0
        %938 = vmatpush.msra.mxu0 0.0
        %939 = vmatpush.msra.mxu0 0.0
        %940 = vmatpush.msra.mxu0 0.0
        %941 = vmatpush.msra.mxu0 0.0
        %942 = vmatpush.msra.mxu0 0.0
        %943 = vmatpush.msra.mxu0 0.0
        %944 = vmatpush.msra.mxu0 %v732
        %945 = vmatmul.f32.gmra.mxu0 %v679
        %v946 = vpop.f32.mrf.mxu0
        %v947 = vadd.f32 0.0, %v946
        %948 = vmatmul.f32.gmra.mxu0 %v682
        %v949 = vpop.f32.mrf.mxu0
        %v950 = vadd.f32 0.0, %v949
        %951 = vmatmul.f32.gmra.mxu0 %v685
        %v952 = vpop.f32.mrf.mxu0
        %v953 = vadd.f32 0.0, %v952
        %954 = vmatmul.f32.gmra.mxu0 %v688
        %v955 = vpop.f32.mrf.mxu0
        %v956 = vadd.f32 0.0, %v955
        %957 = vmatmul.f32.gmra.mxu0 %v691
        %v958 = vpop.f32.mrf.mxu0
        %v959 = vadd.f32 0.0, %v958
        %960 = vmatmul.f32.gmra.mxu0 %v694
        %v961 = vpop.f32.mrf.mxu0
        %v962 = vadd.f32 0.0, %v961
        %963 = vmatmul.f32.gmra.mxu0 %v697
        %v964 = vpop.f32.mrf.mxu0
        %v965 = vadd.f32 0.0, %v964
        %966 = vmatmul.f32.gmra.mxu0 %v700
        %v967 = vpop.f32.mrf.mxu0
        %v968 = vadd.f32 0.0, %v967
        %969 = vmatmul.f32.gmra.mxu0 %v703
        %v970 = vpop.f32.mrf.mxu0
        %v971 = vadd.f32 0.0, %v970
        %972 = vmatmul.f32.gmra.mxu0 %v706
        %v973 = vpop.f32.mrf.mxu0
        %v974 = vadd.f32 0.0, %v973
        %975 = vmatmul.f32.gmra.mxu0 %v709
        %v976 = vpop.f32.mrf.mxu0
        %v977 = vadd.f32 0.0, %v976
        %978 = vmatmul.f32.gmra.mxu0 %v712
        %v979 = vpop.f32.mrf.mxu0
        %v980 = vadd.f32 0.0, %v979
        %981 = vmatmul.f32.gmra.mxu0 %v715
        %v982 = vpop.f32.mrf.mxu0
        %v983 = vadd.f32 0.0, %v982
        %984 = vmatmul.f32.gmra.mxu0 %v718
        %v985 = vpop.f32.mrf.mxu0
        %v986 = vadd.f32 0.0, %v985
        %987 = vmatmul.f32.gmra.mxu0 %v721
        %v988 = vpop.f32.mrf.mxu0
        %v989 = vadd.f32 0.0, %v988
        %990 = vmatmul.f32.gmra.mxu0 %v724
        %v991 = vpop.f32.mrf.mxu0
        %v992 = vadd.f32 0.0, %v991
        %993 = vdwg.mxu0
        %v994 = vld [vmem:[#allocation2] sm:$0xff]
        %v995 = vld [vmem:[#allocation2 + $0x8] sm:$0xff]
        %v996 = vld [vmem:[#allocation2 + $0x10] sm:$0xff]
        %v997 = vld [vmem:[#allocation2 + $0x18] sm:$0xff]
        %v998 = vld [vmem:[#allocation2 + $0x20] sm:$0xff]
        %v999 = vld [vmem:[#allocation2 + $0x28] sm:$0xff]
        %v1000 = vld [vmem:[#allocation2 + $0x30] sm:$0xff]
        %v1001 = vld [vmem:[#allocation2 + $0x38] sm:$0xff]
        %v1002 = vld [vmem:[#allocation2 + $0x40] sm:$0xff]
        %v1003 = vld [vmem:[#allocation2 + $0x48] sm:$0xff]
        %v1004 = vld [vmem:[#allocation2 + $0x50] sm:$0xff]
        %v1005 = vld [vmem:[#allocation2 + $0x58] sm:$0xff]
        %v1006 = vld [vmem:[#allocation2 + $0x60] sm:$0xff]
        %v1007 = vld [vmem:[#allocation2 + $0x68] sm:$0xff]
        %v1008 = vld [vmem:[#allocation2 + $0x70] sm:$0xff]
        %v1009 = vld [vmem:[#allocation2 + $0x78] sm:$0xff]
        %v1010 = vld [vmem:[#allocation2 + $0x80] sm:$0xff]
        %v1011 = vld [vmem:[#allocation2 + $0x88] sm:$0xff]
        %v1012 = vld [vmem:[#allocation2 + $0x90] sm:$0xff]
        %v1013 = vld [vmem:[#allocation2 + $0x98] sm:$0xff]
        %v1014 = vld [vmem:[#allocation2 + $0xa0] sm:$0xff]
        %v1015 = vld [vmem:[#allocation2 + $0xa8] sm:$0xff]
        %v1016 = vld [vmem:[#allocation2 + $0xb0] sm:$0xff]
        %v1017 = vld [vmem:[#allocation2 + $0xb8] sm:$0xff]
        %v1018 = vld [vmem:[#allocation2 + $0xc0] sm:$0xff]
        %v1019 = vld [vmem:[#allocation2 + $0xc8] sm:$0xff]
        %v1020 = vld [vmem:[#allocation2 + $0xd0] sm:$0xff]
        %v1021 = vld [vmem:[#allocation2 + $0xd8] sm:$0xff]
        %v1022 = vld [vmem:[#allocation2 + $0xe0] sm:$0xff]
        %v1023 = vld [vmem:[#allocation2 + $0xe8] sm:$0xff]
        %v1024 = vld [vmem:[#allocation2 + $0xf0] sm:$0xff]
        %v1025 = vld [vmem:[#allocation2 + $0xf8] sm:$0xff]
        %v1026 = vld [vmem:[#allocation2 + $0x100] sm:$0xff]
        %v1027 = vld [vmem:[#allocation2 + $0x108] sm:$0xff]
        %v1028 = vld [vmem:[#allocation2 + $0x110] sm:$0xff]
        %v1029 = vld [vmem:[#allocation2 + $0x118] sm:$0xff]
        %v1030 = vld [vmem:[#allocation2 + $0x120] sm:$0xff]
        %v1031 = vld [vmem:[#allocation2 + $0x128] sm:$0xff]
        %v1032 = vld [vmem:[#allocation2 + $0x130] sm:$0xff]
        %v1033 = vld [vmem:[#allocation2 + $0x138] sm:$0xff]
        %v1034 = vld [vmem:[#allocation2 + $0x140] sm:$0xff]
        %v1035 = vld [vmem:[#allocation2 + $0x148] sm:$0xff]
        %v1036 = vld [vmem:[#allocation2 + $0x150] sm:$0xff]
        %v1037 = vld [vmem:[#allocation2 + $0x158] sm:$0xff]
        %v1038 = vld [vmem:[#allocation2 + $0x160] sm:$0xff]
        %v1039 = vld [vmem:[#allocation2 + $0x168] sm:$0xff]
        %v1040 = vld [vmem:[#allocation2 + $0x170] sm:$0xff]
        %v1041 = vld [vmem:[#allocation2 + $0x178] sm:$0xff]
        %v1042 = vld [vmem:[#allocation2 + $0x180] sm:$0xff]
        %v1043 = vld [vmem:[#allocation2 + $0x188] sm:$0xff]
        %v1044 = vld [vmem:[#allocation2 + $0x190] sm:$0xff]
        %v1045 = vld [vmem:[#allocation2 + $0x198] sm:$0xff]
        %v1046 = vld [vmem:[#allocation2 + $0x1a0] sm:$0xff]
        %v1047 = vld [vmem:[#allocation2 + $0x1a8] sm:$0xff]
        %v1048 = vld [vmem:[#allocation2 + $0x1b0] sm:$0xff]
        %v1049 = vld [vmem:[#allocation2 + $0x1b8] sm:$0xff]
        %v1050 = vld [vmem:[#allocation2 + $0x1c0] sm:$0xff]
        %v1051 = vld [vmem:[#allocation2 + $0x1c8] sm:$0xff]
        %v1052 = vld [vmem:[#allocation2 + $0x1d0] sm:$0xff]
        %v1053 = vld [vmem:[#allocation2 + $0x1d8] sm:$0xff]
        %v1054 = vld [vmem:[#allocation2 + $0x1e0] sm:$0xff]
        %v1055 = vld [vmem:[#allocation2 + $0x1e8] sm:$0xff]
        %v1056 = vld [vmem:[#allocation2 + $0x1f0] sm:$0xff]
        %v1057 = vld [vmem:[#allocation2 + $0x1f8] sm:$0xff]
        %v1058 = vadd.f32 %v994, %v752
        %v1059 = vadd.f32 %v995, %v817
        %v1060 = vadd.f32 %v996, %v882
        %v1061 = vadd.f32 %v997, %v947
        %v1062 = vadd.f32 %v998, %v755
        %v1063 = vadd.f32 %v999, %v820
        %v1064 = vadd.f32 %v1000, %v885
        %v1065 = vadd.f32 %v1001, %v950
        %v1066 = vadd.f32 %v1002, %v758
        %v1067 = vadd.f32 %v1003, %v823
        %v1068 = vadd.f32 %v1004, %v888
        %v1069 = vadd.f32 %v1005, %v953
        %v1070 = vadd.f32 %v1006, %v761
        %v1071 = vadd.f32 %v1007, %v826
        %v1072 = vadd.f32 %v1008, %v891
        %v1073 = vadd.f32 %v1009, %v956
        %v1074 = vadd.f32 %v1010, %v764
        %v1075 = vadd.f32 %v1011, %v829
        %v1076 = vadd.f32 %v1012, %v894
        %v1077 = vadd.f32 %v1013, %v959
        %v1078 = vadd.f32 %v1014, %v767
        %v1079 = vadd.f32 %v1015, %v832
        %v1080 = vadd.f32 %v1016, %v897
        %v1081 = vadd.f32 %v1017, %v962
        %v1082 = vadd.f32 %v1018, %v770
        %v1083 = vadd.f32 %v1019, %v835
        %v1084 = vadd.f32 %v1020, %v900
        %v1085 = vadd.f32 %v1021, %v965
        %v1086 = vadd.f32 %v1022, %v773
        %v1087 = vadd.f32 %v1023, %v838
        %v1088 = vadd.f32 %v1024, %v903
        %v1089 = vadd.f32 %v1025, %v968
        %v1090 = vadd.f32 %v1026, %v776
        %v1091 = vadd.f32 %v1027, %v841
        %v1092 = vadd.f32 %v1028, %v906
        %v1093 = vadd.f32 %v1029, %v971
        %v1094 = vadd.f32 %v1030, %v779
        %v1095 = vadd.f32 %v1031, %v844
        %v1096 = vadd.f32 %v1032, %v909
        %v1097 = vadd.f32 %v1033, %v974
        %v1098 = vadd.f32 %v1034, %v782
        %v1099 = vadd.f32 %v1035, %v847
        %v1100 = vadd.f32 %v1036, %v912
        %v1101 = vadd.f32 %v1037, %v977
        %v1102 = vadd.f32 %v1038, %v785
        %v1103 = vadd.f32 %v1039, %v850
        %v1104 = vadd.f32 %v1040, %v915
        %v1105 = vadd.f32 %v1041, %v980
        %v1106 = vadd.f32 %v1042, %v788
        %v1107 = vadd.f32 %v1043, %v853
        %v1108 = vadd.f32 %v1044, %v918
        %v1109 = vadd.f32 %v1045, %v983
        %v1110 = vadd.f32 %v1046, %v791
        %v1111 = vadd.f32 %v1047, %v856
        %v1112 = vadd.f32 %v1048, %v921
        %v1113 = vadd.f32 %v1049, %v986
        %v1114 = vadd.f32 %v1050, %v794
        %v1115 = vadd.f32 %v1051, %v859
        %v1116 = vadd.f32 %v1052, %v924
        %v1117 = vadd.f32 %v1053, %v989
        %v1118 = vadd.f32 %v1054, %v797
        %v1119 = vadd.f32 %v1055, %v862
        %v1120 = vadd.f32 %v1056, %v927
        %v1121 = vadd.f32 %v1057, %v992
        %1122 = vst [vmem:[#allocation2] sm:$0xff] %v1058
        %1123 = vst [vmem:[#allocation2 + $0x8] sm:$0xff] %v1059
        %1124 = vst [vmem:[#allocation2 + $0x10] sm:$0xff] %v1060
        %1125 = vst [vmem:[#allocation2 + $0x18] sm:$0xff] %v1061
        %1126 = vst [vmem:[#allocation2 + $0x20] sm:$0xff] %v1062
        %1127 = vst [vmem:[#allocation2 + $0x28] sm:$0xff] %v1063
        %1128 = vst [vmem:[#allocation2 + $0x30] sm:$0xff] %v1064
        %1129 = vst [vmem:[#allocation2 + $0x38] sm:$0xff] %v1065
        %1130 = vst [vmem:[#allocation2 + $0x40] sm:$0xff] %v1066
        %1131 = vst [vmem:[#allocation2 + $0x48] sm:$0xff] %v1067
        %1132 = vst [vmem:[#allocation2 + $0x50] sm:$0xff] %v1068
        %1133 = vst [vmem:[#allocation2 + $0x58] sm:$0xff] %v1069
        %1134 = vst [vmem:[#allocation2 + $0x60] sm:$0xff] %v1070
        %1135 = vst [vmem:[#allocation2 + $0x68] sm:$0xff] %v1071
        %1136 = vst [vmem:[#allocation2 + $0x70] sm:$0xff] %v1072
        %1137 = vst [vmem:[#allocation2 + $0x78] sm:$0xff] %v1073
        %1138 = vst [vmem:[#allocation2 + $0x80] sm:$0xff] %v1074
        %1139 = vst [vmem:[#allocation2 + $0x88] sm:$0xff] %v1075
        %1140 = vst [vmem:[#allocation2 + $0x90] sm:$0xff] %v1076
        %1141 = vst [vmem:[#allocation2 + $0x98] sm:$0xff] %v1077
        %1142 = vst [vmem:[#allocation2 + $0xa0] sm:$0xff] %v1078
        %1143 = vst [vmem:[#allocation2 + $0xa8] sm:$0xff] %v1079
        %1144 = vst [vmem:[#allocation2 + $0xb0] sm:$0xff] %v1080
        %1145 = vst [vmem:[#allocation2 + $0xb8] sm:$0xff] %v1081
        %1146 = vst [vmem:[#allocation2 + $0xc0] sm:$0xff] %v1082
        %1147 = vst [vmem:[#allocation2 + $0xc8] sm:$0xff] %v1083
        %1148 = vst [vmem:[#allocation2 + $0xd0] sm:$0xff] %v1084
        %1149 = vst [vmem:[#allocation2 + $0xd8] sm:$0xff] %v1085
        %1150 = vst [vmem:[#allocation2 + $0xe0] sm:$0xff] %v1086
        %1151 = vst [vmem:[#allocation2 + $0xe8] sm:$0xff] %v1087
        %1152 = vst [vmem:[#allocation2 + $0xf0] sm:$0xff] %v1088
        %1153 = vst [vmem:[#allocation2 + $0xf8] sm:$0xff] %v1089
        %1154 = vst [vmem:[#allocation2 + $0x100] sm:$0xff] %v1090
        %1155 = vst [vmem:[#allocation2 + $0x108] sm:$0xff] %v1091
        %1156 = vst [vmem:[#allocation2 + $0x110] sm:$0xff] %v1092
        %1157 = vst [vmem:[#allocation2 + $0x118] sm:$0xff] %v1093
        %1158 = vst [vmem:[#allocation2 + $0x120] sm:$0xff] %v1094
        %1159 = vst [vmem:[#allocation2 + $0x128] sm:$0xff] %v1095
        %1160 = vst [vmem:[#allocation2 + $0x130] sm:$0xff] %v1096
        %1161 = vst [vmem:[#allocation2 + $0x138] sm:$0xff] %v1097
        %1162 = vst [vmem:[#allocation2 + $0x140] sm:$0xff] %v1098
        %1163 = vst [vmem:[#allocation2 + $0x148] sm:$0xff] %v1099
        %1164 = vst [vmem:[#allocation2 + $0x150] sm:$0xff] %v1100
        %1165 = vst [vmem:[#allocation2 + $0x158] sm:$0xff] %v1101
        %1166 = vst [vmem:[#allocation2 + $0x160] sm:$0xff] %v1102
        %1167 = vst [vmem:[#allocation2 + $0x168] sm:$0xff] %v1103
        %1168 = vst [vmem:[#allocation2 + $0x170] sm:$0xff] %v1104
        %1169 = vst [vmem:[#allocation2 + $0x178] sm:$0xff] %v1105
        %1170 = vst [vmem:[#allocation2 + $0x180] sm:$0xff] %v1106
        %1171 = vst [vmem:[#allocation2 + $0x188] sm:$0xff] %v1107
        %1172 = vst [vmem:[#allocation2 + $0x190] sm:$0xff] %v1108
        %1173 = vst [vmem:[#allocation2 + $0x198] sm:$0xff] %v1109
        %1174 = vst [vmem:[#allocation2 + $0x1a0] sm:$0xff] %v1110
        %1175 = vst [vmem:[#allocation2 + $0x1a8] sm:$0xff] %v1111
        %1176 = vst [vmem:[#allocation2 + $0x1b0] sm:$0xff] %v1112
        %1177 = vst [vmem:[#allocation2 + $0x1b8] sm:$0xff] %v1113
        %1178 = vst [vmem:[#allocation2 + $0x1c0] sm:$0xff] %v1114
        %1179 = vst [vmem:[#allocation2 + $0x1c8] sm:$0xff] %v1115
        %1180 = vst [vmem:[#allocation2 + $0x1d0] sm:$0xff] %v1116
        %1181 = vst [vmem:[#allocation2 + $0x1d8] sm:$0xff] %v1117
        %1182 = vst [vmem:[#allocation2 + $0x1e0] sm:$0xff] %v1118
        %1183 = vst [vmem:[#allocation2 + $0x1e8] sm:$0xff] %v1119
        %1184 = vst [vmem:[#allocation2 + $0x1f0] sm:$0xff] %v1120
        %1185 = vst [vmem:[#allocation2 + $0x1f8] sm:$0xff] %v1121
        %v1186 = vld [vmem:[%s240 + $0x2] sm:$0xff]
        %v1187 = vld [vmem:[%s240 + $0xa] sm:$0xff]
        %v1188 = vld [vmem:[%s240 + $0x1a] sm:$0xff]
        %v1189 = vld [vmem:[%s240 + $0x22] sm:$0xff]
        %v1190 = vld [vmem:[%s240 + $0x32] sm:$0xff]
        %v1191 = vld [vmem:[%s240 + $0x3a] sm:$0xff]
        %v1192 = vld [vmem:[%s240 + $0x4a] sm:$0xff]
        %v1193 = vld [vmem:[%s240 + $0x52] sm:$0xff]
        %v1194 = vld [vmem:[%s240 + $0x62] sm:$0xff]
        %v1195 = vld [vmem:[%s240 + $0x6a] sm:$0xff]
        %v1196 = vld [vmem:[%s240 + $0x7a] sm:$0xff]
        %v1197 = vld [vmem:[%s240 + $0x82] sm:$0xff]
        %v1198 = vld [vmem:[%s240 + $0x92] sm:$0xff]
        %v1199 = vld [vmem:[%s240 + $0x9a] sm:$0xff]
        %v1200 = vld [vmem:[%s240 + $0xaa] sm:$0xff]
        %v1201 = vld [vmem:[%s240 + $0xb2] sm:$0xff]
        %s1202 = scalar_lea.vmem %s1, 32
        %v1203 = vld [vmem:[%s1202] sm:$0xff]
        %v1204 = vld [vmem:[%s1202 + $0x8] sm:$0xff]
        %1207 = vst [vmem:[#allocation1] ss:$2 sm:$0xff] %v1203
        %s1208 = scalar_lea.vmem [#allocation1], 16
        %1209 = vst [vmem:[%s1208] ss:$2 sm:$0xff] %v1204
        %v1210 = vld.sshfl [vmem:[#allocation1] sm:$0xff pattern:$0x75316420]
        %v1211 = vld.sshfl [vmem:[#allocation1 + $0x8] sm:$0xff pattern:$0x75316420]
        %v1212 = vld.sshfl [vmem:[#allocation1 + $0x10] sm:$0xff pattern:$0x75316420]
        %v1213 = vld.sshfl [vmem:[#allocation1 + $0x18] sm:$0xff pattern:$0x75316420]
        %v1215 = vsel %vm268, %v1186, 0
        %v1218 = vsel %vm268, %v1187, 0
        %v1221 = vsel %vm268, %v1188, 0
        %v1224 = vsel %vm268, %v1189, 0
        %v1227 = vsel %vm268, %v1190, 0
        %v1230 = vsel %vm268, %v1191, 0
        %v1233 = vsel %vm268, %v1192, 0
        %v1236 = vsel %vm268, %v1193, 0
        %v1239 = vsel %vm268, %v1194, 0
        %v1242 = vsel %vm268, %v1195, 0
        %v1245 = vsel %vm268, %v1196, 0
        %v1248 = vsel %vm268, %v1197, 0
        %v1251 = vsel %vm268, %v1198, 0
        %v1254 = vsel %vm268, %v1199, 0
        %v1257 = vsel %vm268, %v1200, 0
        %v1260 = vsel %vm268, %v1201, 0
        %v1262 = vsel %vm317, %v1210, 0
        %v1264 = vsel %vm317, %v1211, 0
        %v1266 = vsel %vm317, %v1212, 0
        %v1268 = vsel %vm317, %v1213, 0
        %1270 = vmatpush.msra.mxu0 0.0
        %1271 = vmatpush.msra.mxu0 0.0
        %1272 = vmatpush.msra.mxu0 0.0
        %1273 = vmatpush.msra.mxu0 0.0
        %1274 = vmatpush.msra.mxu0 0.0
        %1275 = vmatpush.msra.mxu0 0.0
        %1276 = vmatpush.msra.mxu0 0.0
        %1277 = vmatpush.msra.mxu0 0.0
        %1278 = vmatpush.msra.mxu0 0.0
        %1279 = vmatpush.msra.mxu0 0.0
        %1280 = vmatpush.msra.mxu0 0.0
        %1281 = vmatpush.msra.mxu0 0.0
        %1282 = vmatpush.msra.mxu0 0.0
        %1283 = vmatpush.msra.mxu0 0.0
        %1284 = vmatpush.msra.mxu0 0.0
        %1285 = vmatpush.msra.mxu0 %v1262
        %1286 = vmatmul.f32.gmra.mxu0 %v1215
        %v1287 = vpop.f32.mrf.mxu0
        %v1288 = vadd.f32 0.0, %v1287
        %1289 = vmatmul.f32.gmra.mxu0 %v1218
        %v1290 = vpop.f32.mrf.mxu0
        %v1291 = vadd.f32 0.0, %v1290
        %1292 = vmatmul.f32.gmra.mxu0 %v1221
        %v1293 = vpop.f32.mrf.mxu0
        %v1294 = vadd.f32 0.0, %v1293
        %1295 = vmatmul.f32.gmra.mxu0 %v1224
        %v1296 = vpop.f32.mrf.mxu0
        %v1297 = vadd.f32 0.0, %v1296
        %1298 = vmatmul.f32.gmra.mxu0 %v1227
        %v1299 = vpop.f32.mrf.mxu0
        %v1300 = vadd.f32 0.0, %v1299
        %1301 = vmatmul.f32.gmra.mxu0 %v1230
        %v1302 = vpop.f32.mrf.mxu0
        %v1303 = vadd.f32 0.0, %v1302
        %1304 = vmatmul.f32.gmra.mxu0 %v1233
        %v1305 = vpop.f32.mrf.mxu0
        %v1306 = vadd.f32 0.0, %v1305
        %1307 = vmatmul.f32.gmra.mxu0 %v1236
        %v1308 = vpop.f32.mrf.mxu0
        %v1309 = vadd.f32 0.0, %v1308
        %1310 = vmatmul.f32.gmra.mxu0 %v1239
        %v1311 = vpop.f32.mrf.mxu0
        %v1312 = vadd.f32 0.0, %v1311
        %1313 = vmatmul.f32.gmra.mxu0 %v1242
        %v1314 = vpop.f32.mrf.mxu0
        %v1315 = vadd.f32 0.0, %v1314
        %1316 = vmatmul.f32.gmra.mxu0 %v1245
        %v1317 = vpop.f32.mrf.mxu0
        %v1318 = vadd.f32 0.0, %v1317
        %1319 = vmatmul.f32.gmra.mxu0 %v1248
        %v1320 = vpop.f32.mrf.mxu0
        %v1321 = vadd.f32 0.0, %v1320
        %1322 = vmatmul.f32.gmra.mxu0 %v1251
        %v1323 = vpop.f32.mrf.mxu0
        %v1324 = vadd.f32 0.0, %v1323
        %1325 = vmatmul.f32.gmra.mxu0 %v1254
        %v1326 = vpop.f32.mrf.mxu0
        %v1327 = vadd.f32 0.0, %v1326
        %1328 = vmatmul.f32.gmra.mxu0 %v1257
        %v1329 = vpop.f32.mrf.mxu0
        %v1330 = vadd.f32 0.0, %v1329
        %1331 = vmatmul.f32.gmra.mxu0 %v1260
        %v1332 = vpop.f32.mrf.mxu0
        %v1333 = vadd.f32 0.0, %v1332
        %1334 = vdwg.mxu0
        %1335 = vmatpush.msra.mxu0 0.0
        %1336 = vmatpush.msra.mxu0 0.0
        %1337 = vmatpush.msra.mxu0 0.0
        %1338 = vmatpush.msra.mxu0 0.0
        %1339 = vmatpush.msra.mxu0 0.0
        %1340 = vmatpush.msra.mxu0 0.0
        %1341 = vmatpush.msra.mxu0 0.0
        %1342 = vmatpush.msra.mxu0 0.0
        %1343 = vmatpush.msra.mxu0 0.0
        %1344 = vmatpush.msra.mxu0 0.0
        %1345 = vmatpush.msra.mxu0 0.0
        %1346 = vmatpush.msra.mxu0 0.0
        %1347 = vmatpush.msra.mxu0 0.0
        %1348 = vmatpush.msra.mxu0 0.0
        %1349 = vmatpush.msra.mxu0 0.0
        %1350 = vmatpush.msra.mxu0 %v1264
        %1351 = vmatmul.f32.gmra.mxu0 %v1215
        %v1352 = vpop.f32.mrf.mxu0
        %v1353 = vadd.f32 0.0, %v1352
        %1354 = vmatmul.f32.gmra.mxu0 %v1218
        %v1355 = vpop.f32.mrf.mxu0
        %v1356 = vadd.f32 0.0, %v1355
        %1357 = vmatmul.f32.gmra.mxu0 %v1221
        %v1358 = vpop.f32.mrf.mxu0
        %v1359 = vadd.f32 0.0, %v1358
        %1360 = vmatmul.f32.gmra.mxu0 %v1224
        %v1361 = vpop.f32.mrf.mxu0
        %v1362 = vadd.f32 0.0, %v1361
        %1363 = vmatmul.f32.gmra.mxu0 %v1227
        %v1364 = vpop.f32.mrf.mxu0
        %v1365 = vadd.f32 0.0, %v1364
        %1366 = vmatmul.f32.gmra.mxu0 %v1230
        %v1367 = vpop.f32.mrf.mxu0
        %v1368 = vadd.f32 0.0, %v1367
        %1369 = vmatmul.f32.gmra.mxu0 %v1233
        %v1370 = vpop.f32.mrf.mxu0
        %v1371 = vadd.f32 0.0, %v1370
        %1372 = vmatmul.f32.gmra.mxu0 %v1236
        %v1373 = vpop.f32.mrf.mxu0
        %v1374 = vadd.f32 0.0, %v1373
        %1375 = vmatmul.f32.gmra.mxu0 %v1239
        %v1376 = vpop.f32.mrf.mxu0
        %v1377 = vadd.f32 0.0, %v1376
        %1378 = vmatmul.f32.gmra.mxu0 %v1242
        %v1379 = vpop.f32.mrf.mxu0
        %v1380 = vadd.f32 0.0, %v1379
        %1381 = vmatmul.f32.gmra.mxu0 %v1245
        %v1382 = vpop.f32.mrf.mxu0
        %v1383 = vadd.f32 0.0, %v1382
        %1384 = vmatmul.f32.gmra.mxu0 %v1248
        %v1385 = vpop.f32.mrf.mxu0
        %v1386 = vadd.f32 0.0, %v1385
        %1387 = vmatmul.f32.gmra.mxu0 %v1251
        %v1388 = vpop.f32.mrf.mxu0
        %v1389 = vadd.f32 0.0, %v1388
        %1390 = vmatmul.f32.gmra.mxu0 %v1254
        %v1391 = vpop.f32.mrf.mxu0
        %v1392 = vadd.f32 0.0, %v1391
        %1393 = vmatmul.f32.gmra.mxu0 %v1257
        %v1394 = vpop.f32.mrf.mxu0
        %v1395 = vadd.f32 0.0, %v1394
        %1396 = vmatmul.f32.gmra.mxu0 %v1260
        %v1397 = vpop.f32.mrf.mxu0
        %v1398 = vadd.f32 0.0, %v1397
        %1399 = vdwg.mxu0
        %1400 = vmatpush.msra.mxu0 0.0
        %1401 = vmatpush.msra.mxu0 0.0
        %1402 = vmatpush.msra.mxu0 0.0
        %1403 = vmatpush.msra.mxu0 0.0
        %1404 = vmatpush.msra.mxu0 0.0
        %1405 = vmatpush.msra.mxu0 0.0
        %1406 = vmatpush.msra.mxu0 0.0
        %1407 = vmatpush.msra.mxu0 0.0
        %1408 = vmatpush.msra.mxu0 0.0
        %1409 = vmatpush.msra.mxu0 0.0
        %1410 = vmatpush.msra.mxu0 0.0
        %1411 = vmatpush.msra.mxu0 0.0
        %1412 = vmatpush.msra.mxu0 0.0
        %1413 = vmatpush.msra.mxu0 0.0
        %1414 = vmatpush.msra.mxu0 0.0
        %1415 = vmatpush.msra.mxu0 %v1266
        %1416 = vmatmul.f32.gmra.mxu0 %v1215
        %v1417 = vpop.f32.mrf.mxu0
        %v1418 = vadd.f32 0.0, %v1417
        %1419 = vmatmul.f32.gmra.mxu0 %v1218
        %v1420 = vpop.f32.mrf.mxu0
        %v1421 = vadd.f32 0.0, %v1420
        %1422 = vmatmul.f32.gmra.mxu0 %v1221
        %v1423 = vpop.f32.mrf.mxu0
        %v1424 = vadd.f32 0.0, %v1423
        %1425 = vmatmul.f32.gmra.mxu0 %v1224
        %v1426 = vpop.f32.mrf.mxu0
        %v1427 = vadd.f32 0.0, %v1426
        %1428 = vmatmul.f32.gmra.mxu0 %v1227
        %v1429 = vpop.f32.mrf.mxu0
        %v1430 = vadd.f32 0.0, %v1429
        %1431 = vmatmul.f32.gmra.mxu0 %v1230
        %v1432 = vpop.f32.mrf.mxu0
        %v1433 = vadd.f32 0.0, %v1432
        %1434 = vmatmul.f32.gmra.mxu0 %v1233
        %v1435 = vpop.f32.mrf.mxu0
        %v1436 = vadd.f32 0.0, %v1435
        %1437 = vmatmul.f32.gmra.mxu0 %v1236
        %v1438 = vpop.f32.mrf.mxu0
        %v1439 = vadd.f32 0.0, %v1438
        %1440 = vmatmul.f32.gmra.mxu0 %v1239
        %v1441 = vpop.f32.mrf.mxu0
        %v1442 = vadd.f32 0.0, %v1441
        %1443 = vmatmul.f32.gmra.mxu0 %v1242
        %v1444 = vpop.f32.mrf.mxu0
        %v1445 = vadd.f32 0.0, %v1444
        %1446 = vmatmul.f32.gmra.mxu0 %v1245
        %v1447 = vpop.f32.mrf.mxu0
        %v1448 = vadd.f32 0.0, %v1447
        %1449 = vmatmul.f32.gmra.mxu0 %v1248
        %v1450 = vpop.f32.mrf.mxu0
        %v1451 = vadd.f32 0.0, %v1450
        %1452 = vmatmul.f32.gmra.mxu0 %v1251
        %v1453 = vpop.f32.mrf.mxu0
        %v1454 = vadd.f32 0.0, %v1453
        %1455 = vmatmul.f32.gmra.mxu0 %v1254
        %v1456 = vpop.f32.mrf.mxu0
        %v1457 = vadd.f32 0.0, %v1456
        %1458 = vmatmul.f32.gmra.mxu0 %v1257
        %v1459 = vpop.f32.mrf.mxu0
        %v1460 = vadd.f32 0.0, %v1459
        %1461 = vmatmul.f32.gmra.mxu0 %v1260
        %v1462 = vpop.f32.mrf.mxu0
        %v1463 = vadd.f32 0.0, %v1462
        %1464 = vdwg.mxu0
        %1465 = vmatpush.msra.mxu0 0.0
        %1466 = vmatpush.msra.mxu0 0.0
        %1467 = vmatpush.msra.mxu0 0.0
        %1468 = vmatpush.msra.mxu0 0.0
        %1469 = vmatpush.msra.mxu0 0.0
        %1470 = vmatpush.msra.mxu0 0.0
        %1471 = vmatpush.msra.mxu0 0.0
        %1472 = vmatpush.msra.mxu0 0.0
        %1473 = vmatpush.msra.mxu0 0.0
        %1474 = vmatpush.msra.mxu0 0.0
        %1475 = vmatpush.msra.mxu0 0.0
        %1476 = vmatpush.msra.mxu0 0.0
        %1477 = vmatpush.msra.mxu0 0.0
        %1478 = vmatpush.msra.mxu0 0.0
        %1479 = vmatpush.msra.mxu0 0.0
        %1480 = vmatpush.msra.mxu0 %v1268
        %1481 = vmatmul.f32.gmra.mxu0 %v1215
        %v1482 = vpop.f32.mrf.mxu0
        %v1483 = vadd.f32 0.0, %v1482
        %1484 = vmatmul.f32.gmra.mxu0 %v1218
        %v1485 = vpop.f32.mrf.mxu0
        %v1486 = vadd.f32 0.0, %v1485
        %1487 = vmatmul.f32.gmra.mxu0 %v1221
        %v1488 = vpop.f32.mrf.mxu0
        %v1489 = vadd.f32 0.0, %v1488
        %1490 = vmatmul.f32.gmra.mxu0 %v1224
        %v1491 = vpop.f32.mrf.mxu0
        %v1492 = vadd.f32 0.0, %v1491
        %1493 = vmatmul.f32.gmra.mxu0 %v1227
        %v1494 = vpop.f32.mrf.mxu0
        %v1495 = vadd.f32 0.0, %v1494
        %1496 = vmatmul.f32.gmra.mxu0 %v1230
        %v1497 = vpop.f32.mrf.mxu0
        %v1498 = vadd.f32 0.0, %v1497
        %1499 = vmatmul.f32.gmra.mxu0 %v1233
        %v1500 = vpop.f32.mrf.mxu0
        %v1501 = vadd.f32 0.0, %v1500
        %1502 = vmatmul.f32.gmra.mxu0 %v1236
        %v1503 = vpop.f32.mrf.mxu0
        %v1504 = vadd.f32 0.0, %v1503
        %1505 = vmatmul.f32.gmra.mxu0 %v1239
        %v1506 = vpop.f32.mrf.mxu0
        %v1507 = vadd.f32 0.0, %v1506
        %1508 = vmatmul.f32.gmra.mxu0 %v1242
        %v1509 = vpop.f32.mrf.mxu0
        %v1510 = vadd.f32 0.0, %v1509
        %1511 = vmatmul.f32.gmra.mxu0 %v1245
        %v1512 = vpop.f32.mrf.mxu0
        %v1513 = vadd.f32 0.0, %v1512
        %1514 = vmatmul.f32.gmra.mxu0 %v1248
        %v1515 = vpop.f32.mrf.mxu0
        %v1516 = vadd.f32 0.0, %v1515
        %1517 = vmatmul.f32.gmra.mxu0 %v1251
        %v1518 = vpop.f32.mrf.mxu0
        %v1519 = vadd.f32 0.0, %v1518
        %1520 = vmatmul.f32.gmra.mxu0 %v1254
        %v1521 = vpop.f32.mrf.mxu0
        %v1522 = vadd.f32 0.0, %v1521
        %1523 = vmatmul.f32.gmra.mxu0 %v1257
        %v1524 = vpop.f32.mrf.mxu0
        %v1525 = vadd.f32 0.0, %v1524
        %1526 = vmatmul.f32.gmra.mxu0 %v1260
        %v1527 = vpop.f32.mrf.mxu0
        %v1528 = vadd.f32 0.0, %v1527
        %1529 = vdwg.mxu0
        %v1530 = vld [vmem:[#allocation2] sm:$0xff]
        %v1531 = vld [vmem:[#allocation2 + $0x8] sm:$0xff]
        %v1532 = vld [vmem:[#allocation2 + $0x10] sm:$0xff]
        %v1533 = vld [vmem:[#allocation2 + $0x18] sm:$0xff]
        %v1534 = vld [vmem:[#allocation2 + $0x20] sm:$0xff]
        %v1535 = vld [vmem:[#allocation2 + $0x28] sm:$0xff]
        %v1536 = vld [vmem:[#allocation2 + $0x30] sm:$0xff]
        %v1537 = vld [vmem:[#allocation2 + $0x38] sm:$0xff]
        %v1538 = vld [vmem:[#allocation2 + $0x40] sm:$0xff]
        %v1539 = vld [vmem:[#allocation2 + $0x48] sm:$0xff]
        %v1540 = vld [vmem:[#allocation2 + $0x50] sm:$0xff]
        %v1541 = vld [vmem:[#allocation2 + $0x58] sm:$0xff]
        %v1542 = vld [vmem:[#allocation2 + $0x60] sm:$0xff]
        %v1543 = vld [vmem:[#allocation2 + $0x68] sm:$0xff]
        %v1544 = vld [vmem:[#allocation2 + $0x70] sm:$0xff]
        %v1545 = vld [vmem:[#allocation2 + $0x78] sm:$0xff]
        %v1546 = vld [vmem:[#allocation2 + $0x80] sm:$0xff]
        %v1547 = vld [vmem:[#allocation2 + $0x88] sm:$0xff]
        %v1548 = vld [vmem:[#allocation2 + $0x90] sm:$0xff]
        %v1549 = vld [vmem:[#allocation2 + $0x98] sm:$0xff]
        %v1550 = vld [vmem:[#allocation2 + $0xa0] sm:$0xff]
        %v1551 = vld [vmem:[#allocation2 + $0xa8] sm:$0xff]
        %v1552 = vld [vmem:[#allocation2 + $0xb0] sm:$0xff]
        %v1553 = vld [vmem:[#allocation2 + $0xb8] sm:$0xff]
        %v1554 = vld [vmem:[#allocation2 + $0xc0] sm:$0xff]
        %v1555 = vld [vmem:[#allocation2 + $0xc8] sm:$0xff]
        %v1556 = vld [vmem:[#allocation2 + $0xd0] sm:$0xff]
        %v1557 = vld [vmem:[#allocation2 + $0xd8] sm:$0xff]
        %v1558 = vld [vmem:[#allocation2 + $0xe0] sm:$0xff]
        %v1559 = vld [vmem:[#allocation2 + $0xe8] sm:$0xff]
        %v1560 = vld [vmem:[#allocation2 + $0xf0] sm:$0xff]
        %v1561 = vld [vmem:[#allocation2 + $0xf8] sm:$0xff]
        %v1562 = vld [vmem:[#allocation2 + $0x100] sm:$0xff]
        %v1563 = vld [vmem:[#allocation2 + $0x108] sm:$0xff]
        %v1564 = vld [vmem:[#allocation2 + $0x110] sm:$0xff]
        %v1565 = vld [vmem:[#allocation2 + $0x118] sm:$0xff]
        %v1566 = vld [vmem:[#allocation2 + $0x120] sm:$0xff]
        %v1567 = vld [vmem:[#allocation2 + $0x128] sm:$0xff]
        %v1568 = vld [vmem:[#allocation2 + $0x130] sm:$0xff]
        %v1569 = vld [vmem:[#allocation2 + $0x138] sm:$0xff]
        %v1570 = vld [vmem:[#allocation2 + $0x140] sm:$0xff]
        %v1571 = vld [vmem:[#allocation2 + $0x148] sm:$0xff]
        %v1572 = vld [vmem:[#allocation2 + $0x150] sm:$0xff]
        %v1573 = vld [vmem:[#allocation2 + $0x158] sm:$0xff]
        %v1574 = vld [vmem:[#allocation2 + $0x160] sm:$0xff]
        %v1575 = vld [vmem:[#allocation2 + $0x168] sm:$0xff]
        %v1576 = vld [vmem:[#allocation2 + $0x170] sm:$0xff]
        %v1577 = vld [vmem:[#allocation2 + $0x178] sm:$0xff]
        %v1578 = vld [vmem:[#allocation2 + $0x180] sm:$0xff]
        %v1579 = vld [vmem:[#allocation2 + $0x188] sm:$0xff]
        %v1580 = vld [vmem:[#allocation2 + $0x190] sm:$0xff]
        %v1581 = vld [vmem:[#allocation2 + $0x198] sm:$0xff]
        %v1582 = vld [vmem:[#allocation2 + $0x1a0] sm:$0xff]
        %v1583 = vld [vmem:[#allocation2 + $0x1a8] sm:$0xff]
        %v1584 = vld [vmem:[#allocation2 + $0x1b0] sm:$0xff]
        %v1585 = vld [vmem:[#allocation2 + $0x1b8] sm:$0xff]
        %v1586 = vld [vmem:[#allocation2 + $0x1c0] sm:$0xff]
        %v1587 = vld [vmem:[#allocation2 + $0x1c8] sm:$0xff]
        %v1588 = vld [vmem:[#allocation2 + $0x1d0] sm:$0xff]
        %v1589 = vld [vmem:[#allocation2 + $0x1d8] sm:$0xff]
        %v1590 = vld [vmem:[#allocation2 + $0x1e0] sm:$0xff]
        %v1591 = vld [vmem:[#allocation2 + $0x1e8] sm:$0xff]
        %v1592 = vld [vmem:[#allocation2 + $0x1f0] sm:$0xff]
        %v1593 = vld [vmem:[#allocation2 + $0x1f8] sm:$0xff]
        %v1594 = vadd.f32 %v1530, %v1288
        %v1595 = vadd.f32 %v1531, %v1353
        %v1596 = vadd.f32 %v1532, %v1418
        %v1597 = vadd.f32 %v1533, %v1483
        %v1598 = vadd.f32 %v1534, %v1291
        %v1599 = vadd.f32 %v1535, %v1356
        %v1600 = vadd.f32 %v1536, %v1421
        %v1601 = vadd.f32 %v1537, %v1486
        %v1602 = vadd.f32 %v1538, %v1294
        %v1603 = vadd.f32 %v1539, %v1359
        %v1604 = vadd.f32 %v1540, %v1424
        %v1605 = vadd.f32 %v1541, %v1489
        %v1606 = vadd.f32 %v1542, %v1297
        %v1607 = vadd.f32 %v1543, %v1362
        %v1608 = vadd.f32 %v1544, %v1427
        %v1609 = vadd.f32 %v1545, %v1492
        %v1610 = vadd.f32 %v1546, %v1300
        %v1611 = vadd.f32 %v1547, %v1365
        %v1612 = vadd.f32 %v1548, %v1430
        %v1613 = vadd.f32 %v1549, %v1495
        %v1614 = vadd.f32 %v1550, %v1303
        %v1615 = vadd.f32 %v1551, %v1368
        %v1616 = vadd.f32 %v1552, %v1433
        %v1617 = vadd.f32 %v1553, %v1498
        %v1618 = vadd.f32 %v1554, %v1306
        %v1619 = vadd.f32 %v1555, %v1371
        %v1620 = vadd.f32 %v1556, %v1436
        %v1621 = vadd.f32 %v1557, %v1501
        %v1622 = vadd.f32 %v1558, %v1309
        %v1623 = vadd.f32 %v1559, %v1374
        %v1624 = vadd.f32 %v1560, %v1439
        %v1625 = vadd.f32 %v1561, %v1504
        %v1626 = vadd.f32 %v1562, %v1312
        %v1627 = vadd.f32 %v1563, %v1377
        %v1628 = vadd.f32 %v1564, %v1442
        %v1629 = vadd.f32 %v1565, %v1507
        %v1630 = vadd.f32 %v1566, %v1315
        %v1631 = vadd.f32 %v1567, %v1380
        %v1632 = vadd.f32 %v1568, %v1445
        %v1633 = vadd.f32 %v1569, %v1510
        %v1634 = vadd.f32 %v1570, %v1318
        %v1635 = vadd.f32 %v1571, %v1383
        %v1636 = vadd.f32 %v1572, %v1448
        %v1637 = vadd.f32 %v1573, %v1513
        %v1638 = vadd.f32 %v1574, %v1321
        %v1639 = vadd.f32 %v1575, %v1386
        %v1640 = vadd.f32 %v1576, %v1451
        %v1641 = vadd.f32 %v1577, %v1516
        %v1642 = vadd.f32 %v1578, %v1324
        %v1643 = vadd.f32 %v1579, %v1389
        %v1644 = vadd.f32 %v1580, %v1454
        %v1645 = vadd.f32 %v1581, %v1519
        %v1646 = vadd.f32 %v1582, %v1327
        %v1647 = vadd.f32 %v1583, %v1392
        %v1648 = vadd.f32 %v1584, %v1457
        %v1649 = vadd.f32 %v1585, %v1522
        %v1650 = vadd.f32 %v1586, %v1330
        %v1651 = vadd.f32 %v1587, %v1395
        %v1652 = vadd.f32 %v1588, %v1460
        %v1653 = vadd.f32 %v1589, %v1525
        %v1654 = vadd.f32 %v1590, %v1333
        %v1655 = vadd.f32 %v1591, %v1398
        %v1656 = vadd.f32 %v1592, %v1463
        %v1657 = vadd.f32 %v1593, %v1528
        %1658 = vst [vmem:[#allocation2] sm:$0xff] %v1594
        %1659 = vst [vmem:[#allocation2 + $0x8] sm:$0xff] %v1595
        %1660 = vst [vmem:[#allocation2 + $0x10] sm:$0xff] %v1596
        %1661 = vst [vmem:[#allocation2 + $0x18] sm:$0xff] %v1597
        %1662 = vst [vmem:[#allocation2 + $0x20] sm:$0xff] %v1598
        %1663 = vst [vmem:[#allocation2 + $0x28] sm:$0xff] %v1599
        %1664 = vst [vmem:[#allocation2 + $0x30] sm:$0xff] %v1600
        %1665 = vst [vmem:[#allocation2 + $0x38] sm:$0xff] %v1601
        %1666 = vst [vmem:[#allocation2 + $0x40] sm:$0xff] %v1602
        %1667 = vst [vmem:[#allocation2 + $0x48] sm:$0xff] %v1603
        %1668 = vst [vmem:[#allocation2 + $0x50] sm:$0xff] %v1604
        %1669 = vst [vmem:[#allocation2 + $0x58] sm:$0xff] %v1605
        %1670 = vst [vmem:[#allocation2 + $0x60] sm:$0xff] %v1606
        %1671 = vst [vmem:[#allocation2 + $0x68] sm:$0xff] %v1607
        %1672 = vst [vmem:[#allocation2 + $0x70] sm:$0xff] %v1608
        %1673 = vst [vmem:[#allocation2 + $0x78] sm:$0xff] %v1609
        %1674 = vst [vmem:[#allocation2 + $0x80] sm:$0xff] %v1610
        %1675 = vst [vmem:[#allocation2 + $0x88] sm:$0xff] %v1611
        %1676 = vst [vmem:[#allocation2 + $0x90] sm:$0xff] %v1612
        %1677 = vst [vmem:[#allocation2 + $0x98] sm:$0xff] %v1613
        %1678 = vst [vmem:[#allocation2 + $0xa0] sm:$0xff] %v1614
        %1679 = vst [vmem:[#allocation2 + $0xa8] sm:$0xff] %v1615
        %1680 = vst [vmem:[#allocation2 + $0xb0] sm:$0xff] %v1616
        %1681 = vst [vmem:[#allocation2 + $0xb8] sm:$0xff] %v1617
        %1682 = vst [vmem:[#allocation2 + $0xc0] sm:$0xff] %v1618
        %1683 = vst [vmem:[#allocation2 + $0xc8] sm:$0xff] %v1619
        %1684 = vst [vmem:[#allocation2 + $0xd0] sm:$0xff] %v1620
        %1685 = vst [vmem:[#allocation2 + $0xd8] sm:$0xff] %v1621
        %1686 = vst [vmem:[#allocation2 + $0xe0] sm:$0xff] %v1622
        %1687 = vst [vmem:[#allocation2 + $0xe8] sm:$0xff] %v1623
        %1688 = vst [vmem:[#allocation2 + $0xf0] sm:$0xff] %v1624
        %1689 = vst [vmem:[#allocation2 + $0xf8] sm:$0xff] %v1625
        %1690 = vst [vmem:[#allocation2 + $0x100] sm:$0xff] %v1626
        %1691 = vst [vmem:[#allocation2 + $0x108] sm:$0xff] %v1627
        %1692 = vst [vmem:[#allocation2 + $0x110] sm:$0xff] %v1628
        %1693 = vst [vmem:[#allocation2 + $0x118] sm:$0xff] %v1629
        %1694 = vst [vmem:[#allocation2 + $0x120] sm:$0xff] %v1630
        %1695 = vst [vmem:[#allocation2 + $0x128] sm:$0xff] %v1631
        %1696 = vst [vmem:[#allocation2 + $0x130] sm:$0xff] %v1632
        %1697 = vst [vmem:[#allocation2 + $0x138] sm:$0xff] %v1633
        %1698 = vst [vmem:[#allocation2 + $0x140] sm:$0xff] %v1634
        %1699 = vst [vmem:[#allocation2 + $0x148] sm:$0xff] %v1635
        %1700 = vst [vmem:[#allocation2 + $0x150] sm:$0xff] %v1636
        %1701 = vst [vmem:[#allocation2 + $0x158] sm:$0xff] %v1637
        %1702 = vst [vmem:[#allocation2 + $0x160] sm:$0xff] %v1638
        %1703 = vst [vmem:[#allocation2 + $0x168] sm:$0xff] %v1639
        %1704 = vst [vmem:[#allocation2 + $0x170] sm:$0xff] %v1640
        %1705 = vst [vmem:[#allocation2 + $0x178] sm:$0xff] %v1641
        %1706 = vst [vmem:[#allocation2 + $0x180] sm:$0xff] %v1642
        %1707 = vst [vmem:[#allocation2 + $0x188] sm:$0xff] %v1643
        %1708 = vst [vmem:[#allocation2 + $0x190] sm:$0xff] %v1644
        %1709 = vst [vmem:[#allocation2 + $0x198] sm:$0xff] %v1645
        %1710 = vst [vmem:[#allocation2 + $0x1a0] sm:$0xff] %v1646
        %1711 = vst [vmem:[#allocation2 + $0x1a8] sm:$0xff] %v1647
        %1712 = vst [vmem:[#allocation2 + $0x1b0] sm:$0xff] %v1648
        %1713 = vst [vmem:[#allocation2 + $0x1b8] sm:$0xff] %v1649
        %1714 = vst [vmem:[#allocation2 + $0x1c0] sm:$0xff] %v1650
        %1715 = vst [vmem:[#allocation2 + $0x1c8] sm:$0xff] %v1651
        %1716 = vst [vmem:[#allocation2 + $0x1d0] sm:$0xff] %v1652
        %1717 = vst [vmem:[#allocation2 + $0x1d8] sm:$0xff] %v1653
        %1718 = vst [vmem:[#allocation2 + $0x1e0] sm:$0xff] %v1654
        %1719 = vst [vmem:[#allocation2 + $0x1e8] sm:$0xff] %v1655
        %1720 = vst [vmem:[#allocation2 + $0x1f0] sm:$0xff] %v1656
        %1721 = vst [vmem:[#allocation2 + $0x1f8] sm:$0xff] %v1657
        %s1722 = sadd.s32 %s238, 1
        %s1723 = smul.u32 %s1722, 24
        %s1724 = scalar_lea.vmem %s236, %s1723
        %v1725 = vld [vmem:[%s1724] sm:$0xff]
        %v1726 = vld [vmem:[%s1724 + $0x8] sm:$0xff]
        %v1727 = vld [vmem:[%s1724 + $0x18] sm:$0xff]
        %v1728 = vld [vmem:[%s1724 + $0x20] sm:$0xff]
        %v1729 = vld [vmem:[%s1724 + $0x30] sm:$0xff]
        %v1730 = vld [vmem:[%s1724 + $0x38] sm:$0xff]
        %v1731 = vld [vmem:[%s1724 + $0x48] sm:$0xff]
        %v1732 = vld [vmem:[%s1724 + $0x50] sm:$0xff]
        %v1733 = vld [vmem:[%s1724 + $0x60] sm:$0xff]
        %v1734 = vld [vmem:[%s1724 + $0x68] sm:$0xff]
        %v1735 = vld [vmem:[%s1724 + $0x78] sm:$0xff]
        %v1736 = vld [vmem:[%s1724 + $0x80] sm:$0xff]
        %v1737 = vld [vmem:[%s1724 + $0x90] sm:$0xff]
        %v1738 = vld [vmem:[%s1724 + $0x98] sm:$0xff]
        %v1739 = vld [vmem:[%s1724 + $0xa8] sm:$0xff]
        %v1740 = vld [vmem:[%s1724 + $0xb0] sm:$0xff]
        %s1741 = scalar_lea.vmem %s1, 48
        %v1742 = vld [vmem:[%s1741] sm:$0xff]
        %v1743 = vld [vmem:[%s1741 + $0x8] sm:$0xff]
        %1746 = vst [vmem:[#allocation1] ss:$2 sm:$0xff] %v1742
        %s1747 = scalar_lea.vmem [#allocation1], 16
        %1748 = vst [vmem:[%s1747] ss:$2 sm:$0xff] %v1743
        %v1749 = vld.sshfl [vmem:[#allocation1] sm:$0xff pattern:$0x75316420]
        %v1750 = vld.sshfl [vmem:[#allocation1 + $0x8] sm:$0xff pattern:$0x75316420]
        %v1751 = vld.sshfl [vmem:[#allocation1 + $0x10] sm:$0xff pattern:$0x75316420]
        %v1752 = vld.sshfl [vmem:[#allocation1 + $0x18] sm:$0xff pattern:$0x75316420]
        %v1754 = vsel %vm268, %v1725, 0
        %v1757 = vsel %vm268, %v1726, 0
        %v1760 = vsel %vm268, %v1727, 0
        %v1763 = vsel %vm268, %v1728, 0
        %v1766 = vsel %vm268, %v1729, 0
        %v1769 = vsel %vm268, %v1730, 0
        %v1772 = vsel %vm268, %v1731, 0
        %v1775 = vsel %vm268, %v1732, 0
        %v1778 = vsel %vm268, %v1733, 0
        %v1781 = vsel %vm268, %v1734, 0
        %v1784 = vsel %vm268, %v1735, 0
        %v1787 = vsel %vm268, %v1736, 0
        %v1790 = vsel %vm268, %v1737, 0
        %v1793 = vsel %vm268, %v1738, 0
        %v1796 = vsel %vm268, %v1739, 0
        %v1799 = vsel %vm268, %v1740, 0
        %v1801 = vsel %vm317, %v1749, 0
        %v1803 = vsel %vm317, %v1750, 0
        %v1805 = vsel %vm317, %v1751, 0
        %v1807 = vsel %vm317, %v1752, 0
        %1809 = vmatpush.msra.mxu0 0.0
        %1810 = vmatpush.msra.mxu0 0.0
        %1811 = vmatpush.msra.mxu0 0.0
        %1812 = vmatpush.msra.mxu0 0.0
        %1813 = vmatpush.msra.mxu0 0.0
        %1814 = vmatpush.msra.mxu0 0.0
        %1815 = vmatpush.msra.mxu0 0.0
        %1816 = vmatpush.msra.mxu0 0.0
        %1817 = vmatpush.msra.mxu0 0.0
        %1818 = vmatpush.msra.mxu0 0.0
        %1819 = vmatpush.msra.mxu0 0.0
        %1820 = vmatpush.msra.mxu0 0.0
        %1821 = vmatpush.msra.mxu0 0.0
        %1822 = vmatpush.msra.mxu0 0.0
        %1823 = vmatpush.msra.mxu0 0.0
        %1824 = vmatpush.msra.mxu0 %v1801
        %1825 = vmatmul.f32.gmra.mxu0 %v1754
        %v1826 = vpop.f32.mrf.mxu0
        %v1827 = vadd.f32 0.0, %v1826
        %1828 = vmatmul.f32.gmra.mxu0 %v1757
        %v1829 = vpop.f32.mrf.mxu0
        %v1830 = vadd.f32 0.0, %v1829
        %1831 = vmatmul.f32.gmra.mxu0 %v1760
        %v1832 = vpop.f32.mrf.mxu0
        %v1833 = vadd.f32 0.0, %v1832
        %1834 = vmatmul.f32.gmra.mxu0 %v1763
        %v1835 = vpop.f32.mrf.mxu0
        %v1836 = vadd.f32 0.0, %v1835
        %1837 = vmatmul.f32.gmra.mxu0 %v1766
        %v1838 = vpop.f32.mrf.mxu0
        %v1839 = vadd.f32 0.0, %v1838
        %1840 = vmatmul.f32.gmra.mxu0 %v1769
        %v1841 = vpop.f32.mrf.mxu0
        %v1842 = vadd.f32 0.0, %v1841
        %1843 = vmatmul.f32.gmra.mxu0 %v1772
        %v1844 = vpop.f32.mrf.mxu0
        %v1845 = vadd.f32 0.0, %v1844
        %1846 = vmatmul.f32.gmra.mxu0 %v1775
        %v1847 = vpop.f32.mrf.mxu0
        %v1848 = vadd.f32 0.0, %v1847
        %1849 = vmatmul.f32.gmra.mxu0 %v1778
        %v1850 = vpop.f32.mrf.mxu0
        %v1851 = vadd.f32 0.0, %v1850
        %1852 = vmatmul.f32.gmra.mxu0 %v1781
        %v1853 = vpop.f32.mrf.mxu0
        %v1854 = vadd.f32 0.0, %v1853
        %1855 = vmatmul.f32.gmra.mxu0 %v1784
        %v1856 = vpop.f32.mrf.mxu0
        %v1857 = vadd.f32 0.0, %v1856
        %1858 = vmatmul.f32.gmra.mxu0 %v1787
        %v1859 = vpop.f32.mrf.mxu0
        %v1860 = vadd.f32 0.0, %v1859
        %1861 = vmatmul.f32.gmra.mxu0 %v1790
        %v1862 = vpop.f32.mrf.mxu0
        %v1863 = vadd.f32 0.0, %v1862
        %1864 = vmatmul.f32.gmra.mxu0 %v1793
        %v1865 = vpop.f32.mrf.mxu0
        %v1866 = vadd.f32 0.0, %v1865
        %1867 = vmatmul.f32.gmra.mxu0 %v1796
        %v1868 = vpop.f32.mrf.mxu0
        %v1869 = vadd.f32 0.0, %v1868
        %1870 = vmatmul.f32.gmra.mxu0 %v1799
        %v1871 = vpop.f32.mrf.mxu0
        %v1872 = vadd.f32 0.0, %v1871
        %1873 = vdwg.mxu0
        %1874 = vmatpush.msra.mxu0 0.0
        %1875 = vmatpush.msra.mxu0 0.0
        %1876 = vmatpush.msra.mxu0 0.0
        %1877 = vmatpush.msra.mxu0 0.0
        %1878 = vmatpush.msra.mxu0 0.0
        %1879 = vmatpush.msra.mxu0 0.0
        %1880 = vmatpush.msra.mxu0 0.0
        %1881 = vmatpush.msra.mxu0 0.0
        %1882 = vmatpush.msra.mxu0 0.0
        %1883 = vmatpush.msra.mxu0 0.0
        %1884 = vmatpush.msra.mxu0 0.0
        %1885 = vmatpush.msra.mxu0 0.0
        %1886 = vmatpush.msra.mxu0 0.0
        %1887 = vmatpush.msra.mxu0 0.0
        %1888 = vmatpush.msra.mxu0 0.0
        %1889 = vmatpush.msra.mxu0 %v1803
        %1890 = vmatmul.f32.gmra.mxu0 %v1754
        %v1891 = vpop.f32.mrf.mxu0
        %v1892 = vadd.f32 0.0, %v1891
        %1893 = vmatmul.f32.gmra.mxu0 %v1757
        %v1894 = vpop.f32.mrf.mxu0
        %v1895 = vadd.f32 0.0, %v1894
        %1896 = vmatmul.f32.gmra.mxu0 %v1760
        %v1897 = vpop.f32.mrf.mxu0
        %v1898 = vadd.f32 0.0, %v1897
        %1899 = vmatmul.f32.gmra.mxu0 %v1763
        %v1900 = vpop.f32.mrf.mxu0
        %v1901 = vadd.f32 0.0, %v1900
        %1902 = vmatmul.f32.gmra.mxu0 %v1766
        %v1903 = vpop.f32.mrf.mxu0
        %v1904 = vadd.f32 0.0, %v1903
        %1905 = vmatmul.f32.gmra.mxu0 %v1769
        %v1906 = vpop.f32.mrf.mxu0
        %v1907 = vadd.f32 0.0, %v1906
        %1908 = vmatmul.f32.gmra.mxu0 %v1772
        %v1909 = vpop.f32.mrf.mxu0
        %v1910 = vadd.f32 0.0, %v1909
        %1911 = vmatmul.f32.gmra.mxu0 %v1775
        %v1912 = vpop.f32.mrf.mxu0
        %v1913 = vadd.f32 0.0, %v1912
        %1914 = vmatmul.f32.gmra.mxu0 %v1778
        %v1915 = vpop.f32.mrf.mxu0
        %v1916 = vadd.f32 0.0, %v1915
        %1917 = vmatmul.f32.gmra.mxu0 %v1781
        %v1918 = vpop.f32.mrf.mxu0
        %v1919 = vadd.f32 0.0, %v1918
        %1920 = vmatmul.f32.gmra.mxu0 %v1784
        %v1921 = vpop.f32.mrf.mxu0
        %v1922 = vadd.f32 0.0, %v1921
        %1923 = vmatmul.f32.gmra.mxu0 %v1787
        %v1924 = vpop.f32.mrf.mxu0
        %v1925 = vadd.f32 0.0, %v1924
        %1926 = vmatmul.f32.gmra.mxu0 %v1790
        %v1927 = vpop.f32.mrf.mxu0
        %v1928 = vadd.f32 0.0, %v1927
        %1929 = vmatmul.f32.gmra.mxu0 %v1793
        %v1930 = vpop.f32.mrf.mxu0
        %v1931 = vadd.f32 0.0, %v1930
        %1932 = vmatmul.f32.gmra.mxu0 %v1796
        %v1933 = vpop.f32.mrf.mxu0
        %v1934 = vadd.f32 0.0, %v1933
        %1935 = vmatmul.f32.gmra.mxu0 %v1799
        %v1936 = vpop.f32.mrf.mxu0
        %v1937 = vadd.f32 0.0, %v1936
        %1938 = vdwg.mxu0
        %1939 = vmatpush.msra.mxu0 0.0
        %1940 = vmatpush.msra.mxu0 0.0
        %1941 = vmatpush.msra.mxu0 0.0
        %1942 = vmatpush.msra.mxu0 0.0
        %1943 = vmatpush.msra.mxu0 0.0
        %1944 = vmatpush.msra.mxu0 0.0
        %1945 = vmatpush.msra.mxu0 0.0
        %1946 = vmatpush.msra.mxu0 0.0
        %1947 = vmatpush.msra.mxu0 0.0
        %1948 = vmatpush.msra.mxu0 0.0
        %1949 = vmatpush.msra.mxu0 0.0
        %1950 = vmatpush.msra.mxu0 0.0
        %1951 = vmatpush.msra.mxu0 0.0
        %1952 = vmatpush.msra.mxu0 0.0
        %1953 = vmatpush.msra.mxu0 0.0
        %1954 = vmatpush.msra.mxu0 %v1805
        %1955 = vmatmul.f32.gmra.mxu0 %v1754
        %v1956 = vpop.f32.mrf.mxu0
        %v1957 = vadd.f32 0.0, %v1956
        %1958 = vmatmul.f32.gmra.mxu0 %v1757
        %v1959 = vpop.f32.mrf.mxu0
        %v1960 = vadd.f32 0.0, %v1959
        %1961 = vmatmul.f32.gmra.mxu0 %v1760
        %v1962 = vpop.f32.mrf.mxu0
        %v1963 = vadd.f32 0.0, %v1962
        %1964 = vmatmul.f32.gmra.mxu0 %v1763
        %v1965 = vpop.f32.mrf.mxu0
        %v1966 = vadd.f32 0.0, %v1965
        %1967 = vmatmul.f32.gmra.mxu0 %v1766
        %v1968 = vpop.f32.mrf.mxu0
        %v1969 = vadd.f32 0.0, %v1968
        %1970 = vmatmul.f32.gmra.mxu0 %v1769
        %v1971 = vpop.f32.mrf.mxu0
        %v1972 = vadd.f32 0.0, %v1971
        %1973 = vmatmul.f32.gmra.mxu0 %v1772
        %v1974 = vpop.f32.mrf.mxu0
        %v1975 = vadd.f32 0.0, %v1974
        %1976 = vmatmul.f32.gmra.mxu0 %v1775
        %v1977 = vpop.f32.mrf.mxu0
        %v1978 = vadd.f32 0.0, %v1977
        %1979 = vmatmul.f32.gmra.mxu0 %v1778
        %v1980 = vpop.f32.mrf.mxu0
        %v1981 = vadd.f32 0.0, %v1980
        %1982 = vmatmul.f32.gmra.mxu0 %v1781
        %v1983 = vpop.f32.mrf.mxu0
        %v1984 = vadd.f32 0.0, %v1983
        %1985 = vmatmul.f32.gmra.mxu0 %v1784
        %v1986 = vpop.f32.mrf.mxu0
        %v1987 = vadd.f32 0.0, %v1986
        %1988 = vmatmul.f32.gmra.mxu0 %v1787
        %v1989 = vpop.f32.mrf.mxu0
        %v1990 = vadd.f32 0.0, %v1989
        %1991 = vmatmul.f32.gmra.mxu0 %v1790
        %v1992 = vpop.f32.mrf.mxu0
        %v1993 = vadd.f32 0.0, %v1992
        %1994 = vmatmul.f32.gmra.mxu0 %v1793
        %v1995 = vpop.f32.mrf.mxu0
        %v1996 = vadd.f32 0.0, %v1995
        %1997 = vmatmul.f32.gmra.mxu0 %v1796
        %v1998 = vpop.f32.mrf.mxu0
        %v1999 = vadd.f32 0.0, %v1998
        %2000 = vmatmul.f32.gmra.mxu0 %v1799
        %v2001 = vpop.f32.mrf.mxu0
        %v2002 = vadd.f32 0.0, %v2001
        %2003 = vdwg.mxu0
        %2004 = vmatpush.msra.mxu0 0.0
        %2005 = vmatpush.msra.mxu0 0.0
        %2006 = vmatpush.msra.mxu0 0.0
        %2007 = vmatpush.msra.mxu0 0.0
        %2008 = vmatpush.msra.mxu0 0.0
        %2009 = vmatpush.msra.mxu0 0.0
        %2010 = vmatpush.msra.mxu0 0.0
        %2011 = vmatpush.msra.mxu0 0.0
        %2012 = vmatpush.msra.mxu0 0.0
        %2013 = vmatpush.msra.mxu0 0.0
        %2014 = vmatpush.msra.mxu0 0.0
        %2015 = vmatpush.msra.mxu0 0.0
        %2016 = vmatpush.msra.mxu0 0.0
        %2017 = vmatpush.msra.mxu0 0.0
        %2018 = vmatpush.msra.mxu0 0.0
        %2019 = vmatpush.msra.mxu0 %v1807
        %2020 = vmatmul.f32.gmra.mxu0 %v1754
        %v2021 = vpop.f32.mrf.mxu0
        %v2022 = vadd.f32 0.0, %v2021
        %2023 = vmatmul.f32.gmra.mxu0 %v1757
        %v2024 = vpop.f32.mrf.mxu0
        %v2025 = vadd.f32 0.0, %v2024
        %2026 = vmatmul.f32.gmra.mxu0 %v1760
        %v2027 = vpop.f32.mrf.mxu0
        %v2028 = vadd.f32 0.0, %v2027
        %2029 = vmatmul.f32.gmra.mxu0 %v1763
        %v2030 = vpop.f32.mrf.mxu0
        %v2031 = vadd.f32 0.0, %v2030
        %2032 = vmatmul.f32.gmra.mxu0 %v1766
        %v2033 = vpop.f32.mrf.mxu0
        %v2034 = vadd.f32 0.0, %v2033
        %2035 = vmatmul.f32.gmra.mxu0 %v1769
        %v2036 = vpop.f32.mrf.mxu0
        %v2037 = vadd.f32 0.0, %v2036
        %2038 = vmatmul.f32.gmra.mxu0 %v1772
        %v2039 = vpop.f32.mrf.mxu0
        %v2040 = vadd.f32 0.0, %v2039
        %2041 = vmatmul.f32.gmra.mxu0 %v1775
        %v2042 = vpop.f32.mrf.mxu0
        %v2043 = vadd.f32 0.0, %v2042
        %2044 = vmatmul.f32.gmra.mxu0 %v1778
        %v2045 = vpop.f32.mrf.mxu0
        %v2046 = vadd.f32 0.0, %v2045
        %2047 = vmatmul.f32.gmra.mxu0 %v1781
        %v2048 = vpop.f32.mrf.mxu0
        %v2049 = vadd.f32 0.0, %v2048
        %2050 = vmatmul.f32.gmra.mxu0 %v1784
        %v2051 = vpop.f32.mrf.mxu0
        %v2052 = vadd.f32 0.0, %v2051
        %2053 = vmatmul.f32.gmra.mxu0 %v1787
        %v2054 = vpop.f32.mrf.mxu0
        %v2055 = vadd.f32 0.0, %v2054
        %2056 = vmatmul.f32.gmra.mxu0 %v1790
        %v2057 = vpop.f32.mrf.mxu0
        %v2058 = vadd.f32 0.0, %v2057
        %2059 = vmatmul.f32.gmra.mxu0 %v1793
        %v2060 = vpop.f32.mrf.mxu0
        %v2061 = vadd.f32 0.0, %v2060
        %2062 = vmatmul.f32.gmra.mxu0 %v1796
        %v2063 = vpop.f32.mrf.mxu0
        %v2064 = vadd.f32 0.0, %v2063
        %2065 = vmatmul.f32.gmra.mxu0 %v1799
        %v2066 = vpop.f32.mrf.mxu0
        %v2067 = vadd.f32 0.0, %v2066
        %2068 = vdwg.mxu0
        %v2069 = vld [vmem:[#allocation2] sm:$0xff]
        %v2070 = vld [vmem:[#allocation2 + $0x8] sm:$0xff]
        %v2071 = vld [vmem:[#allocation2 + $0x10] sm:$0xff]
        %v2072 = vld [vmem:[#allocation2 + $0x18] sm:$0xff]
        %v2073 = vld [vmem:[#allocation2 + $0x20] sm:$0xff]
        %v2074 = vld [vmem:[#allocation2 + $0x28] sm:$0xff]
        %v2075 = vld [vmem:[#allocation2 + $0x30] sm:$0xff]
        %v2076 = vld [vmem:[#allocation2 + $0x38] sm:$0xff]
        %v2077 = vld [vmem:[#allocation2 + $0x40] sm:$0xff]
        %v2078 = vld [vmem:[#allocation2 + $0x48] sm:$0xff]
        %v2079 = vld [vmem:[#allocation2 + $0x50] sm:$0xff]
        %v2080 = vld [vmem:[#allocation2 + $0x58] sm:$0xff]
        %v2081 = vld [vmem:[#allocation2 + $0x60] sm:$0xff]
        %v2082 = vld [vmem:[#allocation2 + $0x68] sm:$0xff]
        %v2083 = vld [vmem:[#allocation2 + $0x70] sm:$0xff]
        %v2084 = vld [vmem:[#allocation2 + $0x78] sm:$0xff]
        %v2085 = vld [vmem:[#allocation2 + $0x80] sm:$0xff]
        %v2086 = vld [vmem:[#allocation2 + $0x88] sm:$0xff]
        %v2087 = vld [vmem:[#allocation2 + $0x90] sm:$0xff]
        %v2088 = vld [vmem:[#allocation2 + $0x98] sm:$0xff]
        %v2089 = vld [vmem:[#allocation2 + $0xa0] sm:$0xff]
        %v2090 = vld [vmem:[#allocation2 + $0xa8] sm:$0xff]
        %v2091 = vld [vmem:[#allocation2 + $0xb0] sm:$0xff]
        %v2092 = vld [vmem:[#allocation2 + $0xb8] sm:$0xff]
        %v2093 = vld [vmem:[#allocation2 + $0xc0] sm:$0xff]
        %v2094 = vld [vmem:[#allocation2 + $0xc8] sm:$0xff]
        %v2095 = vld [vmem:[#allocation2 + $0xd0] sm:$0xff]
        %v2096 = vld [vmem:[#allocation2 + $0xd8] sm:$0xff]
        %v2097 = vld [vmem:[#allocation2 + $0xe0] sm:$0xff]
        %v2098 = vld [vmem:[#allocation2 + $0xe8] sm:$0xff]
        %v2099 = vld [vmem:[#allocation2 + $0xf0] sm:$0xff]
        %v2100 = vld [vmem:[#allocation2 + $0xf8] sm:$0xff]
        %v2101 = vld [vmem:[#allocation2 + $0x100] sm:$0xff]
        %v2102 = vld [vmem:[#allocation2 + $0x108] sm:$0xff]
        %v2103 = vld [vmem:[#allocation2 + $0x110] sm:$0xff]
        %v2104 = vld [vmem:[#allocation2 + $0x118] sm:$0xff]
        %v2105 = vld [vmem:[#allocation2 + $0x120] sm:$0xff]
        %v2106 = vld [vmem:[#allocation2 + $0x128] sm:$0xff]
        %v2107 = vld [vmem:[#allocation2 + $0x130] sm:$0xff]
        %v2108 = vld [vmem:[#allocation2 + $0x138] sm:$0xff]
        %v2109 = vld [vmem:[#allocation2 + $0x140] sm:$0xff]
        %v2110 = vld [vmem:[#allocation2 + $0x148] sm:$0xff]
        %v2111 = vld [vmem:[#allocation2 + $0x150] sm:$0xff]
        %v2112 = vld [vmem:[#allocation2 + $0x158] sm:$0xff]
        %v2113 = vld [vmem:[#allocation2 + $0x160] sm:$0xff]
        %v2114 = vld [vmem:[#allocation2 + $0x168] sm:$0xff]
        %v2115 = vld [vmem:[#allocation2 + $0x170] sm:$0xff]
        %v2116 = vld [vmem:[#allocation2 + $0x178] sm:$0xff]
        %v2117 = vld [vmem:[#allocation2 + $0x180] sm:$0xff]
        %v2118 = vld [vmem:[#allocation2 + $0x188] sm:$0xff]
        %v2119 = vld [vmem:[#allocation2 + $0x190] sm:$0xff]
        %v2120 = vld [vmem:[#allocation2 + $0x198] sm:$0xff]
        %v2121 = vld [vmem:[#allocation2 + $0x1a0] sm:$0xff]
        %v2122 = vld [vmem:[#allocation2 + $0x1a8] sm:$0xff]
        %v2123 = vld [vmem:[#allocation2 + $0x1b0] sm:$0xff]
        %v2124 = vld [vmem:[#allocation2 + $0x1b8] sm:$0xff]
        %v2125 = vld [vmem:[#allocation2 + $0x1c0] sm:$0xff]
        %v2126 = vld [vmem:[#allocation2 + $0x1c8] sm:$0xff]
        %v2127 = vld [vmem:[#allocation2 + $0x1d0] sm:$0xff]
        %v2128 = vld [vmem:[#allocation2 + $0x1d8] sm:$0xff]
        %v2129 = vld [vmem:[#allocation2 + $0x1e0] sm:$0xff]
        %v2130 = vld [vmem:[#allocation2 + $0x1e8] sm:$0xff]
        %v2131 = vld [vmem:[#allocation2 + $0x1f0] sm:$0xff]
        %v2132 = vld [vmem:[#allocation2 + $0x1f8] sm:$0xff]
        %v2133 = vadd.f32 %v2069, %v1827
        %v2134 = vadd.f32 %v2070, %v1892
        %v2135 = vadd.f32 %v2071, %v1957
        %v2136 = vadd.f32 %v2072, %v2022
        %v2137 = vadd.f32 %v2073, %v1830
        %v2138 = vadd.f32 %v2074, %v1895
        %v2139 = vadd.f32 %v2075, %v1960
        %v2140 = vadd.f32 %v2076, %v2025
        %v2141 = vadd.f32 %v2077, %v1833
        %v2142 = vadd.f32 %v2078, %v1898
        %v2143 = vadd.f32 %v2079, %v1963
        %v2144 = vadd.f32 %v2080, %v2028
        %v2145 = vadd.f32 %v2081, %v1836
        %v2146 = vadd.f32 %v2082, %v1901
        %v2147 = vadd.f32 %v2083, %v1966
        %v2148 = vadd.f32 %v2084, %v2031
        %v2149 = vadd.f32 %v2085, %v1839
        %v2150 = vadd.f32 %v2086, %v1904
        %v2151 = vadd.f32 %v2087, %v1969
        %v2152 = vadd.f32 %v2088, %v2034
        %v2153 = vadd.f32 %v2089, %v1842
        %v2154 = vadd.f32 %v2090, %v1907
        %v2155 = vadd.f32 %v2091, %v1972
        %v2156 = vadd.f32 %v2092, %v2037
        %v2157 = vadd.f32 %v2093, %v1845
        %v2158 = vadd.f32 %v2094, %v1910
        %v2159 = vadd.f32 %v2095, %v1975
        %v2160 = vadd.f32 %v2096, %v2040
        %v2161 = vadd.f32 %v2097, %v1848
        %v2162 = vadd.f32 %v2098, %v1913
        %v2163 = vadd.f32 %v2099, %v1978
        %v2164 = vadd.f32 %v2100, %v2043
        %v2165 = vadd.f32 %v2101, %v1851
        %v2166 = vadd.f32 %v2102, %v1916
        %v2167 = vadd.f32 %v2103, %v1981
        %v2168 = vadd.f32 %v2104, %v2046
        %v2169 = vadd.f32 %v2105, %v1854
        %v2170 = vadd.f32 %v2106, %v1919
        %v2171 = vadd.f32 %v2107, %v1984
        %v2172 = vadd.f32 %v2108, %v2049
        %v2173 = vadd.f32 %v2109, %v1857
        %v2174 = vadd.f32 %v2110, %v1922
        %v2175 = vadd.f32 %v2111, %v1987
        %v2176 = vadd.f32 %v2112, %v2052
        %v2177 = vadd.f32 %v2113, %v1860
        %v2178 = vadd.f32 %v2114, %v1925
        %v2179 = vadd.f32 %v2115, %v1990
        %v2180 = vadd.f32 %v2116, %v2055
        %v2181 = vadd.f32 %v2117, %v1863
        %v2182 = vadd.f32 %v2118, %v1928
        %v2183 = vadd.f32 %v2119, %v1993
        %v2184 = vadd.f32 %v2120, %v2058
        %v2185 = vadd.f32 %v2121, %v1866
        %v2186 = vadd.f32 %v2122, %v1931
        %v2187 = vadd.f32 %v2123, %v1996
        %v2188 = vadd.f32 %v2124, %v2061
        %v2189 = vadd.f32 %v2125, %v1869
        %v2190 = vadd.f32 %v2126, %v1934
        %v2191 = vadd.f32 %v2127, %v1999
        %v2192 = vadd.f32 %v2128, %v2064
        %v2193 = vadd.f32 %v2129, %v1872
        %v2194 = vadd.f32 %v2130, %v1937
        %v2195 = vadd.f32 %v2131, %v2002
        %v2196 = vadd.f32 %v2132, %v2067
        %2197 = vst [vmem:[#allocation2] sm:$0xff] %v2133
        %2198 = vst [vmem:[#allocation2 + $0x8] sm:$0xff] %v2134
        %2199 = vst [vmem:[#allocation2 + $0x10] sm:$0xff] %v2135
        %2200 = vst [vmem:[#allocation2 + $0x18] sm:$0xff] %v2136
        %2201 = vst [vmem:[#allocation2 + $0x20] sm:$0xff] %v2137
        %2202 = vst [vmem:[#allocation2 + $0x28] sm:$0xff] %v2138
        %2203 = vst [vmem:[#allocation2 + $0x30] sm:$0xff] %v2139
        %2204 = vst [vmem:[#allocation2 + $0x38] sm:$0xff] %v2140
        %2205 = vst [vmem:[#allocation2 + $0x40] sm:$0xff] %v2141
        %2206 = vst [vmem:[#allocation2 + $0x48] sm:$0xff] %v2142
        %2207 = vst [vmem:[#allocation2 + $0x50] sm:$0xff] %v2143
        %2208 = vst [vmem:[#allocation2 + $0x58] sm:$0xff] %v2144
        %2209 = vst [vmem:[#allocation2 + $0x60] sm:$0xff] %v2145
        %2210 = vst [vmem:[#allocation2 + $0x68] sm:$0xff] %v2146
        %2211 = vst [vmem:[#allocation2 + $0x70] sm:$0xff] %v2147
        %2212 = vst [vmem:[#allocation2 + $0x78] sm:$0xff] %v2148
        %2213 = vst [vmem:[#allocation2 + $0x80] sm:$0xff] %v2149
        %2214 = vst [vmem:[#allocation2 + $0x88] sm:$0xff] %v2150
        %2215 = vst [vmem:[#allocation2 + $0x90] sm:$0xff] %v2151
        %2216 = vst [vmem:[#allocation2 + $0x98] sm:$0xff] %v2152
        %2217 = vst [vmem:[#allocation2 + $0xa0] sm:$0xff] %v2153
        %2218 = vst [vmem:[#allocation2 + $0xa8] sm:$0xff] %v2154
        %2219 = vst [vmem:[#allocation2 + $0xb0] sm:$0xff] %v2155
        %2220 = vst [vmem:[#allocation2 + $0xb8] sm:$0xff] %v2156
        %2221 = vst [vmem:[#allocation2 + $0xc0] sm:$0xff] %v2157
        %2222 = vst [vmem:[#allocation2 + $0xc8] sm:$0xff] %v2158
        %2223 = vst [vmem:[#allocation2 + $0xd0] sm:$0xff] %v2159
        %2224 = vst [vmem:[#allocation2 + $0xd8] sm:$0xff] %v2160
        %2225 = vst [vmem:[#allocation2 + $0xe0] sm:$0xff] %v2161
        %2226 = vst [vmem:[#allocation2 + $0xe8] sm:$0xff] %v2162
        %2227 = vst [vmem:[#allocation2 + $0xf0] sm:$0xff] %v2163
        %2228 = vst [vmem:[#allocation2 + $0xf8] sm:$0xff] %v2164
        %2229 = vst [vmem:[#allocation2 + $0x100] sm:$0xff] %v2165
        %2230 = vst [vmem:[#allocation2 + $0x108] sm:$0xff] %v2166
        %2231 = vst [vmem:[#allocation2 + $0x110] sm:$0xff] %v2167
        %2232 = vst [vmem:[#allocation2 + $0x118] sm:$0xff] %v2168
        %2233 = vst [vmem:[#allocation2 + $0x120] sm:$0xff] %v2169
        %2234 = vst [vmem:[#allocation2 + $0x128] sm:$0xff] %v2170
        %2235 = vst [vmem:[#allocation2 + $0x130] sm:$0xff] %v2171
        %2236 = vst [vmem:[#allocation2 + $0x138] sm:$0xff] %v2172
        %2237 = vst [vmem:[#allocation2 + $0x140] sm:$0xff] %v2173
        %2238 = vst [vmem:[#allocation2 + $0x148] sm:$0xff] %v2174
        %2239 = vst [vmem:[#allocation2 + $0x150] sm:$0xff] %v2175
        %2240 = vst [vmem:[#allocation2 + $0x158] sm:$0xff] %v2176
        %2241 = vst [vmem:[#allocation2 + $0x160] sm:$0xff] %v2177
        %2242 = vst [vmem:[#allocation2 + $0x168] sm:$0xff] %v2178
        %2243 = vst [vmem:[#allocation2 + $0x170] sm:$0xff] %v2179
        %2244 = vst [vmem:[#allocation2 + $0x178] sm:$0xff] %v2180
        %2245 = vst [vmem:[#allocation2 + $0x180] sm:$0xff] %v2181
        %2246 = vst [vmem:[#allocation2 + $0x188] sm:$0xff] %v2182
        %2247 = vst [vmem:[#allocation2 + $0x190] sm:$0xff] %v2183
        %2248 = vst [vmem:[#allocation2 + $0x198] sm:$0xff] %v2184
        %2249 = vst [vmem:[#allocation2 + $0x1a0] sm:$0xff] %v2185
        %2250 = vst [vmem:[#allocation2 + $0x1a8] sm:$0xff] %v2186
        %2251 = vst [vmem:[#allocation2 + $0x1b0] sm:$0xff] %v2187
        %2252 = vst [vmem:[#allocation2 + $0x1b8] sm:$0xff] %v2188
        %2253 = vst [vmem:[#allocation2 + $0x1c0] sm:$0xff] %v2189
        %2254 = vst [vmem:[#allocation2 + $0x1c8] sm:$0xff] %v2190
        %2255 = vst [vmem:[#allocation2 + $0x1d0] sm:$0xff] %v2191
        %2256 = vst [vmem:[#allocation2 + $0x1d8] sm:$0xff] %v2192
        %2257 = vst [vmem:[#allocation2 + $0x1e0] sm:$0xff] %v2193
        %2258 = vst [vmem:[#allocation2 + $0x1e8] sm:$0xff] %v2194
        %2259 = vst [vmem:[#allocation2 + $0x1f0] sm:$0xff] %v2195
        %2260 = vst [vmem:[#allocation2 + $0x1f8] sm:$0xff] %v2196
        %v2261 = vld [vmem:[%s1724 + $0x1] sm:$0xff]
        %v2262 = vld [vmem:[%s1724 + $0x9] sm:$0xff]
        %v2263 = vld [vmem:[%s1724 + $0x19] sm:$0xff]
        %v2264 = vld [vmem:[%s1724 + $0x21] sm:$0xff]
        %v2265 = vld [vmem:[%s1724 + $0x31] sm:$0xff]
        %v2266 = vld [vmem:[%s1724 + $0x39] sm:$0xff]
        %v2267 = vld [vmem:[%s1724 + $0x49] sm:$0xff]
        %v2268 = vld [vmem:[%s1724 + $0x51] sm:$0xff]
        %v2269 = vld [vmem:[%s1724 + $0x61] sm:$0xff]
        %v2270 = vld [vmem:[%s1724 + $0x69] sm:$0xff]
        %v2271 = vld [vmem:[%s1724 + $0x79] sm:$0xff]
        %v2272 = vld [vmem:[%s1724 + $0x81] sm:$0xff]
        %v2273 = vld [vmem:[%s1724 + $0x91] sm:$0xff]
        %v2274 = vld [vmem:[%s1724 + $0x99] sm:$0xff]
        %v2275 = vld [vmem:[%s1724 + $0xa9] sm:$0xff]
        %v2276 = vld [vmem:[%s1724 + $0xb1] sm:$0xff]
        %s2277 = scalar_lea.vmem %s1, 64
        %v2278 = vld [vmem:[%s2277] sm:$0xff]
        %v2279 = vld [vmem:[%s2277 + $0x8] sm:$0xff]
        %2282 = vst [vmem:[#allocation1] ss:$2 sm:$0xff] %v2278
        %s2283 = scalar_lea.vmem [#allocation1], 16
        %2284 = vst [vmem:[%s2283] ss:$2 sm:$0xff] %v2279
        %v2285 = vld.sshfl [vmem:[#allocation1] sm:$0xff pattern:$0x75316420]
        %v2286 = vld.sshfl [vmem:[#allocation1 + $0x8] sm:$0xff pattern:$0x75316420]
        %v2287 = vld.sshfl [vmem:[#allocation1 + $0x10] sm:$0xff pattern:$0x75316420]
        %v2288 = vld.sshfl [vmem:[#allocation1 + $0x18] sm:$0xff pattern:$0x75316420]
        %v2290 = vsel %vm268, %v2261, 0
        %v2293 = vsel %vm268, %v2262, 0
        %v2296 = vsel %vm268, %v2263, 0
        %v2299 = vsel %vm268, %v2264, 0
        %v2302 = vsel %vm268, %v2265, 0
        %v2305 = vsel %vm268, %v2266, 0
        %v2308 = vsel %vm268, %v2267, 0
        %v2311 = vsel %vm268, %v2268, 0
        %v2314 = vsel %vm268, %v2269, 0
        %v2317 = vsel %vm268, %v2270, 0
        %v2320 = vsel %vm268, %v2271, 0
        %v2323 = vsel %vm268, %v2272, 0
        %v2326 = vsel %vm268, %v2273, 0
        %v2329 = vsel %vm268, %v2274, 0
        %v2332 = vsel %vm268, %v2275, 0
        %v2335 = vsel %vm268, %v2276, 0
        %v2337 = vsel %vm317, %v2285, 0
        %v2339 = vsel %vm317, %v2286, 0
        %v2341 = vsel %vm317, %v2287, 0
        %v2343 = vsel %vm317, %v2288, 0
        %2345 = vmatpush.msra.mxu0 0.0
        %2346 = vmatpush.msra.mxu0 0.0
        %2347 = vmatpush.msra.mxu0 0.0
        %2348 = vmatpush.msra.mxu0 0.0
        %2349 = vmatpush.msra.mxu0 0.0
        %2350 = vmatpush.msra.mxu0 0.0
        %2351 = vmatpush.msra.mxu0 0.0
        %2352 = vmatpush.msra.mxu0 0.0
        %2353 = vmatpush.msra.mxu0 0.0
        %2354 = vmatpush.msra.mxu0 0.0
        %2355 = vmatpush.msra.mxu0 0.0
        %2356 = vmatpush.msra.mxu0 0.0
        %2357 = vmatpush.msra.mxu0 0.0
        %2358 = vmatpush.msra.mxu0 0.0
        %2359 = vmatpush.msra.mxu0 0.0
        %2360 = vmatpush.msra.mxu0 %v2337
        %2361 = vmatmul.f32.gmra.mxu0 %v2290
        %v2362 = vpop.f32.mrf.mxu0
        %v2363 = vadd.f32 0.0, %v2362
        %2364 = vmatmul.f32.gmra.mxu0 %v2293
        %v2365 = vpop.f32.mrf.mxu0
        %v2366 = vadd.f32 0.0, %v2365
        %2367 = vmatmul.f32.gmra.mxu0 %v2296
        %v2368 = vpop.f32.mrf.mxu0
        %v2369 = vadd.f32 0.0, %v2368
        %2370 = vmatmul.f32.gmra.mxu0 %v2299
        %v2371 = vpop.f32.mrf.mxu0
        %v2372 = vadd.f32 0.0, %v2371
        %2373 = vmatmul.f32.gmra.mxu0 %v2302
        %v2374 = vpop.f32.mrf.mxu0
        %v2375 = vadd.f32 0.0, %v2374
        %2376 = vmatmul.f32.gmra.mxu0 %v2305
        %v2377 = vpop.f32.mrf.mxu0
        %v2378 = vadd.f32 0.0, %v2377
        %2379 = vmatmul.f32.gmra.mxu0 %v2308
        %v2380 = vpop.f32.mrf.mxu0
        %v2381 = vadd.f32 0.0, %v2380
        %2382 = vmatmul.f32.gmra.mxu0 %v2311
        %v2383 = vpop.f32.mrf.mxu0
        %v2384 = vadd.f32 0.0, %v2383
        %2385 = vmatmul.f32.gmra.mxu0 %v2314
        %v2386 = vpop.f32.mrf.mxu0
        %v2387 = vadd.f32 0.0, %v2386
        %2388 = vmatmul.f32.gmra.mxu0 %v2317
        %v2389 = vpop.f32.mrf.mxu0
        %v2390 = vadd.f32 0.0, %v2389
        %2391 = vmatmul.f32.gmra.mxu0 %v2320
        %v2392 = vpop.f32.mrf.mxu0
        %v2393 = vadd.f32 0.0, %v2392
        %2394 = vmatmul.f32.gmra.mxu0 %v2323
        %v2395 = vpop.f32.mrf.mxu0
        %v2396 = vadd.f32 0.0, %v2395
        %2397 = vmatmul.f32.gmra.mxu0 %v2326
        %v2398 = vpop.f32.mrf.mxu0
        %v2399 = vadd.f32 0.0, %v2398
        %2400 = vmatmul.f32.gmra.mxu0 %v2329
        %v2401 = vpop.f32.mrf.mxu0
        %v2402 = vadd.f32 0.0, %v2401
        %2403 = vmatmul.f32.gmra.mxu0 %v2332
        %v2404 = vpop.f32.mrf.mxu0
        %v2405 = vadd.f32 0.0, %v2404
        %2406 = vmatmul.f32.gmra.mxu0 %v2335
        %v2407 = vpop.f32.mrf.mxu0
        %v2408 = vadd.f32 0.0, %v2407
        %2409 = vdwg.mxu0
        %2410 = vmatpush.msra.mxu0 0.0
        %2411 = vmatpush.msra.mxu0 0.0
        %2412 = vmatpush.msra.mxu0 0.0
        %2413 = vmatpush.msra.mxu0 0.0
        %2414 = vmatpush.msra.mxu0 0.0
        %2415 = vmatpush.msra.mxu0 0.0
        %2416 = vmatpush.msra.mxu0 0.0
        %2417 = vmatpush.msra.mxu0 0.0
        %2418 = vmatpush.msra.mxu0 0.0
        %2419 = vmatpush.msra.mxu0 0.0
        %2420 = vmatpush.msra.mxu0 0.0
        %2421 = vmatpush.msra.mxu0 0.0
        %2422 = vmatpush.msra.mxu0 0.0
        %2423 = vmatpush.msra.mxu0 0.0
        %2424 = vmatpush.msra.mxu0 0.0
        %2425 = vmatpush.msra.mxu0 %v2339
        %2426 = vmatmul.f32.gmra.mxu0 %v2290
        %v2427 = vpop.f32.mrf.mxu0
        %v2428 = vadd.f32 0.0, %v2427
        %2429 = vmatmul.f32.gmra.mxu0 %v2293
        %v2430 = vpop.f32.mrf.mxu0
        %v2431 = vadd.f32 0.0, %v2430
        %2432 = vmatmul.f32.gmra.mxu0 %v2296
        %v2433 = vpop.f32.mrf.mxu0
        %v2434 = vadd.f32 0.0, %v2433
        %2435 = vmatmul.f32.gmra.mxu0 %v2299
        %v2436 = vpop.f32.mrf.mxu0
        %v2437 = vadd.f32 0.0, %v2436
        %2438 = vmatmul.f32.gmra.mxu0 %v2302
        %v2439 = vpop.f32.mrf.mxu0
        %v2440 = vadd.f32 0.0, %v2439
        %2441 = vmatmul.f32.gmra.mxu0 %v2305
        %v2442 = vpop.f32.mrf.mxu0
        %v2443 = vadd.f32 0.0, %v2442
        %2444 = vmatmul.f32.gmra.mxu0 %v2308
        %v2445 = vpop.f32.mrf.mxu0
        %v2446 = vadd.f32 0.0, %v2445
        %2447 = vmatmul.f32.gmra.mxu0 %v2311
        %v2448 = vpop.f32.mrf.mxu0
        %v2449 = vadd.f32 0.0, %v2448
        %2450 = vmatmul.f32.gmra.mxu0 %v2314
        %v2451 = vpop.f32.mrf.mxu0
        %v2452 = vadd.f32 0.0, %v2451
        %2453 = vmatmul.f32.gmra.mxu0 %v2317
        %v2454 = vpop.f32.mrf.mxu0
        %v2455 = vadd.f32 0.0, %v2454
        %2456 = vmatmul.f32.gmra.mxu0 %v2320
        %v2457 = vpop.f32.mrf.mxu0
        %v2458 = vadd.f32 0.0, %v2457
        %2459 = vmatmul.f32.gmra.mxu0 %v2323
        %v2460 = vpop.f32.mrf.mxu0
        %v2461 = vadd.f32 0.0, %v2460
        %2462 = vmatmul.f32.gmra.mxu0 %v2326
        %v2463 = vpop.f32.mrf.mxu0
        %v2464 = vadd.f32 0.0, %v2463
        %2465 = vmatmul.f32.gmra.mxu0 %v2329
        %v2466 = vpop.f32.mrf.mxu0
        %v2467 = vadd.f32 0.0, %v2466
        %2468 = vmatmul.f32.gmra.mxu0 %v2332
        %v2469 = vpop.f32.mrf.mxu0
        %v2470 = vadd.f32 0.0, %v2469
        %2471 = vmatmul.f32.gmra.mxu0 %v2335
        %v2472 = vpop.f32.mrf.mxu0
        %v2473 = vadd.f32 0.0, %v2472
        %2474 = vdwg.mxu0
        %2475 = vmatpush.msra.mxu0 0.0
        %2476 = vmatpush.msra.mxu0 0.0
        %2477 = vmatpush.msra.mxu0 0.0
        %2478 = vmatpush.msra.mxu0 0.0
        %2479 = vmatpush.msra.mxu0 0.0
        %2480 = vmatpush.msra.mxu0 0.0
        %2481 = vmatpush.msra.mxu0 0.0
        %2482 = vmatpush.msra.mxu0 0.0
        %2483 = vmatpush.msra.mxu0 0.0
        %2484 = vmatpush.msra.mxu0 0.0
        %2485 = vmatpush.msra.mxu0 0.0
        %2486 = vmatpush.msra.mxu0 0.0
        %2487 = vmatpush.msra.mxu0 0.0
        %2488 = vmatpush.msra.mxu0 0.0
        %2489 = vmatpush.msra.mxu0 0.0
        %2490 = vmatpush.msra.mxu0 %v2341
        %2491 = vmatmul.f32.gmra.mxu0 %v2290
        %v2492 = vpop.f32.mrf.mxu0
        %v2493 = vadd.f32 0.0, %v2492
        %2494 = vmatmul.f32.gmra.mxu0 %v2293
        %v2495 = vpop.f32.mrf.mxu0
        %v2496 = vadd.f32 0.0, %v2495
        %2497 = vmatmul.f32.gmra.mxu0 %v2296
        %v2498 = vpop.f32.mrf.mxu0
        %v2499 = vadd.f32 0.0, %v2498
        %2500 = vmatmul.f32.gmra.mxu0 %v2299
        %v2501 = vpop.f32.mrf.mxu0
        %v2502 = vadd.f32 0.0, %v2501
        %2503 = vmatmul.f32.gmra.mxu0 %v2302
        %v2504 = vpop.f32.mrf.mxu0
        %v2505 = vadd.f32 0.0, %v2504
        %2506 = vmatmul.f32.gmra.mxu0 %v2305
        %v2507 = vpop.f32.mrf.mxu0
        %v2508 = vadd.f32 0.0, %v2507
        %2509 = vmatmul.f32.gmra.mxu0 %v2308
        %v2510 = vpop.f32.mrf.mxu0
        %v2511 = vadd.f32 0.0, %v2510
        %2512 = vmatmul.f32.gmra.mxu0 %v2311
        %v2513 = vpop.f32.mrf.mxu0
        %v2514 = vadd.f32 0.0, %v2513
        %2515 = vmatmul.f32.gmra.mxu0 %v2314
        %v2516 = vpop.f32.mrf.mxu0
        %v2517 = vadd.f32 0.0, %v2516
        %2518 = vmatmul.f32.gmra.mxu0 %v2317
        %v2519 = vpop.f32.mrf.mxu0
        %v2520 = vadd.f32 0.0, %v2519
        %2521 = vmatmul.f32.gmra.mxu0 %v2320
        %v2522 = vpop.f32.mrf.mxu0
        %v2523 = vadd.f32 0.0, %v2522
        %2524 = vmatmul.f32.gmra.mxu0 %v2323
        %v2525 = vpop.f32.mrf.mxu0
        %v2526 = vadd.f32 0.0, %v2525
        %2527 = vmatmul.f32.gmra.mxu0 %v2326
        %v2528 = vpop.f32.mrf.mxu0
        %v2529 = vadd.f32 0.0, %v2528
        %2530 = vmatmul.f32.gmra.mxu0 %v2329
        %v2531 = vpop.f32.mrf.mxu0
        %v2532 = vadd.f32 0.0, %v2531
        %2533 = vmatmul.f32.gmra.mxu0 %v2332
        %v2534 = vpop.f32.mrf.mxu0
        %v2535 = vadd.f32 0.0, %v2534
        %2536 = vmatmul.f32.gmra.mxu0 %v2335
        %v2537 = vpop.f32.mrf.mxu0
        %v2538 = vadd.f32 0.0, %v2537
        %2539 = vdwg.mxu0
        %2540 = vmatpush.msra.mxu0 0.0
        %2541 = vmatpush.msra.mxu0 0.0
        %2542 = vmatpush.msra.mxu0 0.0
        %2543 = vmatpush.msra.mxu0 0.0
        %2544 = vmatpush.msra.mxu0 0.0
        %2545 = vmatpush.msra.mxu0 0.0
        %2546 = vmatpush.msra.mxu0 0.0
        %2547 = vmatpush.msra.mxu0 0.0
        %2548 = vmatpush.msra.mxu0 0.0
        %2549 = vmatpush.msra.mxu0 0.0
        %2550 = vmatpush.msra.mxu0 0.0
        %2551 = vmatpush.msra.mxu0 0.0
        %2552 = vmatpush.msra.mxu0 0.0
        %2553 = vmatpush.msra.mxu0 0.0
        %2554 = vmatpush.msra.mxu0 0.0
        %2555 = vmatpush.msra.mxu0 %v2343
        %2556 = vmatmul.f32.gmra.mxu0 %v2290
        %v2557 = vpop.f32.mrf.mxu0
        %v2558 = vadd.f32 0.0, %v2557
        %2559 = vmatmul.f32.gmra.mxu0 %v2293
        %v2560 = vpop.f32.mrf.mxu0
        %v2561 = vadd.f32 0.0, %v2560
        %2562 = vmatmul.f32.gmra.mxu0 %v2296
        %v2563 = vpop.f32.mrf.mxu0
        %v2564 = vadd.f32 0.0, %v2563
        %2565 = vmatmul.f32.gmra.mxu0 %v2299
        %v2566 = vpop.f32.mrf.mxu0
        %v2567 = vadd.f32 0.0, %v2566
        %2568 = vmatmul.f32.gmra.mxu0 %v2302
        %v2569 = vpop.f32.mrf.mxu0
        %v2570 = vadd.f32 0.0, %v2569
        %2571 = vmatmul.f32.gmra.mxu0 %v2305
        %v2572 = vpop.f32.mrf.mxu0
        %v2573 = vadd.f32 0.0, %v2572
        %2574 = vmatmul.f32.gmra.mxu0 %v2308
        %v2575 = vpop.f32.mrf.mxu0
        %v2576 = vadd.f32 0.0, %v2575
        %2577 = vmatmul.f32.gmra.mxu0 %v2311
        %v2578 = vpop.f32.mrf.mxu0
        %v2579 = vadd.f32 0.0, %v2578
        %2580 = vmatmul.f32.gmra.mxu0 %v2314
        %v2581 = vpop.f32.mrf.mxu0
        %v2582 = vadd.f32 0.0, %v2581
        %2583 = vmatmul.f32.gmra.mxu0 %v2317
        %v2584 = vpop.f32.mrf.mxu0
        %v2585 = vadd.f32 0.0, %v2584
        %2586 = vmatmul.f32.gmra.mxu0 %v2320
        %v2587 = vpop.f32.mrf.mxu0
        %v2588 = vadd.f32 0.0, %v2587
        %2589 = vmatmul.f32.gmra.mxu0 %v2323
        %v2590 = vpop.f32.mrf.mxu0
        %v2591 = vadd.f32 0.0, %v2590
        %2592 = vmatmul.f32.gmra.mxu0 %v2326
        %v2593 = vpop.f32.mrf.mxu0
        %v2594 = vadd.f32 0.0, %v2593
        %2595 = vmatmul.f32.gmra.mxu0 %v2329
        %v2596 = vpop.f32.mrf.mxu0
        %v2597 = vadd.f32 0.0, %v2596
        %2598 = vmatmul.f32.gmra.mxu0 %v2332
        %v2599 = vpop.f32.mrf.mxu0
        %v2600 = vadd.f32 0.0, %v2599
        %2601 = vmatmul.f32.gmra.mxu0 %v2335
        %v2602 = vpop.f32.mrf.mxu0
        %v2603 = vadd.f32 0.0, %v2602
        %2604 = vdwg.mxu0
        %v2605 = vld [vmem:[#allocation2] sm:$0xff]
        %v2606 = vld [vmem:[#allocation2 + $0x8] sm:$0xff]
        %v2607 = vld [vmem:[#allocation2 + $0x10] sm:$0xff]
        %v2608 = vld [vmem:[#allocation2 + $0x18] sm:$0xff]
        %v2609 = vld [vmem:[#allocation2 + $0x20] sm:$0xff]
        %v2610 = vld [vmem:[#allocation2 + $0x28] sm:$0xff]
        %v2611 = vld [vmem:[#allocation2 + $0x30] sm:$0xff]
        %v2612 = vld [vmem:[#allocation2 + $0x38] sm:$0xff]
        %v2613 = vld [vmem:[#allocation2 + $0x40] sm:$0xff]
        %v2614 = vld [vmem:[#allocation2 + $0x48] sm:$0xff]
        %v2615 = vld [vmem:[#allocation2 + $0x50] sm:$0xff]
        %v2616 = vld [vmem:[#allocation2 + $0x58] sm:$0xff]
        %v2617 = vld [vmem:[#allocation2 + $0x60] sm:$0xff]
        %v2618 = vld [vmem:[#allocation2 + $0x68] sm:$0xff]
        %v2619 = vld [vmem:[#allocation2 + $0x70] sm:$0xff]
        %v2620 = vld [vmem:[#allocation2 + $0x78] sm:$0xff]
        %v2621 = vld [vmem:[#allocation2 + $0x80] sm:$0xff]
        %v2622 = vld [vmem:[#allocation2 + $0x88] sm:$0xff]
        %v2623 = vld [vmem:[#allocation2 + $0x90] sm:$0xff]
        %v2624 = vld [vmem:[#allocation2 + $0x98] sm:$0xff]
        %v2625 = vld [vmem:[#allocation2 + $0xa0] sm:$0xff]
        %v2626 = vld [vmem:[#allocation2 + $0xa8] sm:$0xff]
        %v2627 = vld [vmem:[#allocation2 + $0xb0] sm:$0xff]
        %v2628 = vld [vmem:[#allocation2 + $0xb8] sm:$0xff]
        %v2629 = vld [vmem:[#allocation2 + $0xc0] sm:$0xff]
        %v2630 = vld [vmem:[#allocation2 + $0xc8] sm:$0xff]
        %v2631 = vld [vmem:[#allocation2 + $0xd0] sm:$0xff]
        %v2632 = vld [vmem:[#allocation2 + $0xd8] sm:$0xff]
        %v2633 = vld [vmem:[#allocation2 + $0xe0] sm:$0xff]
        %v2634 = vld [vmem:[#allocation2 + $0xe8] sm:$0xff]
        %v2635 = vld [vmem:[#allocation2 + $0xf0] sm:$0xff]
        %v2636 = vld [vmem:[#allocation2 + $0xf8] sm:$0xff]
        %v2637 = vld [vmem:[#allocation2 + $0x100] sm:$0xff]
        %v2638 = vld [vmem:[#allocation2 + $0x108] sm:$0xff]
        %v2639 = vld [vmem:[#allocation2 + $0x110] sm:$0xff]
        %v2640 = vld [vmem:[#allocation2 + $0x118] sm:$0xff]
        %v2641 = vld [vmem:[#allocation2 + $0x120] sm:$0xff]
        %v2642 = vld [vmem:[#allocation2 + $0x128] sm:$0xff]
        %v2643 = vld [vmem:[#allocation2 + $0x130] sm:$0xff]
        %v2644 = vld [vmem:[#allocation2 + $0x138] sm:$0xff]
        %v2645 = vld [vmem:[#allocation2 + $0x140] sm:$0xff]
        %v2646 = vld [vmem:[#allocation2 + $0x148] sm:$0xff]
        %v2647 = vld [vmem:[#allocation2 + $0x150] sm:$0xff]
        %v2648 = vld [vmem:[#allocation2 + $0x158] sm:$0xff]
        %v2649 = vld [vmem:[#allocation2 + $0x160] sm:$0xff]
        %v2650 = vld [vmem:[#allocation2 + $0x168] sm:$0xff]
        %v2651 = vld [vmem:[#allocation2 + $0x170] sm:$0xff]
        %v2652 = vld [vmem:[#allocation2 + $0x178] sm:$0xff]
        %v2653 = vld [vmem:[#allocation2 + $0x180] sm:$0xff]
        %v2654 = vld [vmem:[#allocation2 + $0x188] sm:$0xff]
        %v2655 = vld [vmem:[#allocation2 + $0x190] sm:$0xff]
        %v2656 = vld [vmem:[#allocation2 + $0x198] sm:$0xff]
        %v2657 = vld [vmem:[#allocation2 + $0x1a0] sm:$0xff]
        %v2658 = vld [vmem:[#allocation2 + $0x1a8] sm:$0xff]
        %v2659 = vld [vmem:[#allocation2 + $0x1b0] sm:$0xff]
        %v2660 = vld [vmem:[#allocation2 + $0x1b8] sm:$0xff]
        %v2661 = vld [vmem:[#allocation2 + $0x1c0] sm:$0xff]
        %v2662 = vld [vmem:[#allocation2 + $0x1c8] sm:$0xff]
        %v2663 = vld [vmem:[#allocation2 + $0x1d0] sm:$0xff]
        %v2664 = vld [vmem:[#allocation2 + $0x1d8] sm:$0xff]
        %v2665 = vld [vmem:[#allocation2 + $0x1e0] sm:$0xff]
        %v2666 = vld [vmem:[#allocation2 + $0x1e8] sm:$0xff]
        %v2667 = vld [vmem:[#allocation2 + $0x1f0] sm:$0xff]
        %v2668 = vld [vmem:[#allocation2 + $0x1f8] sm:$0xff]
        %v2669 = vadd.f32 %v2605, %v2363
        %v2670 = vadd.f32 %v2606, %v2428
        %v2671 = vadd.f32 %v2607, %v2493
        %v2672 = vadd.f32 %v2608, %v2558
        %v2673 = vadd.f32 %v2609, %v2366
        %v2674 = vadd.f32 %v2610, %v2431
        %v2675 = vadd.f32 %v2611, %v2496
        %v2676 = vadd.f32 %v2612, %v2561
        %v2677 = vadd.f32 %v2613, %v2369
        %v2678 = vadd.f32 %v2614, %v2434
        %v2679 = vadd.f32 %v2615, %v2499
        %v2680 = vadd.f32 %v2616, %v2564
        %v2681 = vadd.f32 %v2617, %v2372
        %v2682 = vadd.f32 %v2618, %v2437
        %v2683 = vadd.f32 %v2619, %v2502
        %v2684 = vadd.f32 %v2620, %v2567
        %v2685 = vadd.f32 %v2621, %v2375
        %v2686 = vadd.f32 %v2622, %v2440
        %v2687 = vadd.f32 %v2623, %v2505
        %v2688 = vadd.f32 %v2624, %v2570
        %v2689 = vadd.f32 %v2625, %v2378
        %v2690 = vadd.f32 %v2626, %v2443
        %v2691 = vadd.f32 %v2627, %v2508
        %v2692 = vadd.f32 %v2628, %v2573
        %v2693 = vadd.f32 %v2629, %v2381
        %v2694 = vadd.f32 %v2630, %v2446
        %v2695 = vadd.f32 %v2631, %v2511
        %v2696 = vadd.f32 %v2632, %v2576
        %v2697 = vadd.f32 %v2633, %v2384
        %v2698 = vadd.f32 %v2634, %v2449
        %v2699 = vadd.f32 %v2635, %v2514
        %v2700 = vadd.f32 %v2636, %v2579
        %v2701 = vadd.f32 %v2637, %v2387
        %v2702 = vadd.f32 %v2638, %v2452
        %v2703 = vadd.f32 %v2639, %v2517
        %v2704 = vadd.f32 %v2640, %v2582
        %v2705 = vadd.f32 %v2641, %v2390
        %v2706 = vadd.f32 %v2642, %v2455
        %v2707 = vadd.f32 %v2643, %v2520
        %v2708 = vadd.f32 %v2644, %v2585
        %v2709 = vadd.f32 %v2645, %v2393
        %v2710 = vadd.f32 %v2646, %v2458
        %v2711 = vadd.f32 %v2647, %v2523
        %v2712 = vadd.f32 %v2648, %v2588
        %v2713 = vadd.f32 %v2649, %v2396
        %v2714 = vadd.f32 %v2650, %v2461
        %v2715 = vadd.f32 %v2651, %v2526
        %v2716 = vadd.f32 %v2652, %v2591
        %v2717 = vadd.f32 %v2653, %v2399
        %v2718 = vadd.f32 %v2654, %v2464
        %v2719 = vadd.f32 %v2655, %v2529
        %v2720 = vadd.f32 %v2656, %v2594
        %v2721 = vadd.f32 %v2657, %v2402
        %v2722 = vadd.f32 %v2658, %v2467
        %v2723 = vadd.f32 %v2659, %v2532
        %v2724 = vadd.f32 %v2660, %v2597
        %v2725 = vadd.f32 %v2661, %v2405
        %v2726 = vadd.f32 %v2662, %v2470
        %v2727 = vadd.f32 %v2663, %v2535
        %v2728 = vadd.f32 %v2664, %v2600
        %v2729 = vadd.f32 %v2665, %v2408
        %v2730 = vadd.f32 %v2666, %v2473
        %v2731 = vadd.f32 %v2667, %v2538
        %v2732 = vadd.f32 %v2668, %v2603
        %2733 = vst [vmem:[#allocation2] sm:$0xff] %v2669
        %2734 = vst [vmem:[#allocation2 + $0x8] sm:$0xff] %v2670
        %2735 = vst [vmem:[#allocation2 + $0x10] sm:$0xff] %v2671
        %2736 = vst [vmem:[#allocation2 + $0x18] sm:$0xff] %v2672
        %2737 = vst [vmem:[#allocation2 + $0x20] sm:$0xff] %v2673
        %2738 = vst [vmem:[#allocation2 + $0x28] sm:$0xff] %v2674
        %2739 = vst [vmem:[#allocation2 + $0x30] sm:$0xff] %v2675
        %2740 = vst [vmem:[#allocation2 + $0x38] sm:$0xff] %v2676
        %2741 = vst [vmem:[#allocation2 + $0x40] sm:$0xff] %v2677
        %2742 = vst [vmem:[#allocation2 + $0x48] sm:$0xff] %v2678
        %2743 = vst [vmem:[#allocation2 + $0x50] sm:$0xff] %v2679
        %2744 = vst [vmem:[#allocation2 + $0x58] sm:$0xff] %v2680
        %2745 = vst [vmem:[#allocation2 + $0x60] sm:$0xff] %v2681
        %2746 = vst [vmem:[#allocation2 + $0x68] sm:$0xff] %v2682
        %2747 = vst [vmem:[#allocation2 + $0x70] sm:$0xff] %v2683
        %2748 = vst [vmem:[#allocation2 + $0x78] sm:$0xff] %v2684
        %2749 = vst [vmem:[#allocation2 + $0x80] sm:$0xff] %v2685
        %2750 = vst [vmem:[#allocation2 + $0x88] sm:$0xff] %v2686
        %2751 = vst [vmem:[#allocation2 + $0x90] sm:$0xff] %v2687
        %2752 = vst [vmem:[#allocation2 + $0x98] sm:$0xff] %v2688
        %2753 = vst [vmem:[#allocation2 + $0xa0] sm:$0xff] %v2689
        %2754 = vst [vmem:[#allocation2 + $0xa8] sm:$0xff] %v2690
        %2755 = vst [vmem:[#allocation2 + $0xb0] sm:$0xff] %v2691
        %2756 = vst [vmem:[#allocation2 + $0xb8] sm:$0xff] %v2692
        %2757 = vst [vmem:[#allocation2 + $0xc0] sm:$0xff] %v2693
        %2758 = vst [vmem:[#allocation2 + $0xc8] sm:$0xff] %v2694
        %2759 = vst [vmem:[#allocation2 + $0xd0] sm:$0xff] %v2695
        %2760 = vst [vmem:[#allocation2 + $0xd8] sm:$0xff] %v2696
        %2761 = vst [vmem:[#allocation2 + $0xe0] sm:$0xff] %v2697
        %2762 = vst [vmem:[#allocation2 + $0xe8] sm:$0xff] %v2698
        %2763 = vst [vmem:[#allocation2 + $0xf0] sm:$0xff] %v2699
        %2764 = vst [vmem:[#allocation2 + $0xf8] sm:$0xff] %v2700
        %2765 = vst [vmem:[#allocation2 + $0x100] sm:$0xff] %v2701
        %2766 = vst [vmem:[#allocation2 + $0x108] sm:$0xff] %v2702
        %2767 = vst [vmem:[#allocation2 + $0x110] sm:$0xff] %v2703
        %2768 = vst [vmem:[#allocation2 + $0x118] sm:$0xff] %v2704
        %2769 = vst [vmem:[#allocation2 + $0x120] sm:$0xff] %v2705
        %2770 = vst [vmem:[#allocation2 + $0x128] sm:$0xff] %v2706
        %2771 = vst [vmem:[#allocation2 + $0x130] sm:$0xff] %v2707
        %2772 = vst [vmem:[#allocation2 + $0x138] sm:$0xff] %v2708
        %2773 = vst [vmem:[#allocation2 + $0x140] sm:$0xff] %v2709
        %2774 = vst [vmem:[#allocation2 + $0x148] sm:$0xff] %v2710
        %2775 = vst [vmem:[#allocation2 + $0x150] sm:$0xff] %v2711
        %2776 = vst [vmem:[#allocation2 + $0x158] sm:$0xff] %v2712
        %2777 = vst [vmem:[#allocation2 + $0x160] sm:$0xff] %v2713
        %2778 = vst [vmem:[#allocation2 + $0x168] sm:$0xff] %v2714
        %2779 = vst [vmem:[#allocation2 + $0x170] sm:$0xff] %v2715
        %2780 = vst [vmem:[#allocation2 + $0x178] sm:$0xff] %v2716
        %2781 = vst [vmem:[#allocation2 + $0x180] sm:$0xff] %v2717
        %2782 = vst [vmem:[#allocation2 + $0x188] sm:$0xff] %v2718
        %2783 = vst [vmem:[#allocation2 + $0x190] sm:$0xff] %v2719
        %2784 = vst [vmem:[#allocation2 + $0x198] sm:$0xff] %v2720
        %2785 = vst [vmem:[#allocation2 + $0x1a0] sm:$0xff] %v2721
        %2786 = vst [vmem:[#allocation2 + $0x1a8] sm:$0xff] %v2722
        %2787 = vst [vmem:[#allocation2 + $0x1b0] sm:$0xff] %v2723
        %2788 = vst [vmem:[#allocation2 + $0x1b8] sm:$0xff] %v2724
        %2789 = vst [vmem:[#allocation2 + $0x1c0] sm:$0xff] %v2725
        %2790 = vst [vmem:[#allocation2 + $0x1c8] sm:$0xff] %v2726
        %2791 = vst [vmem:[#allocation2 + $0x1d0] sm:$0xff] %v2727
        %2792 = vst [vmem:[#allocation2 + $0x1d8] sm:$0xff] %v2728
        %2793 = vst [vmem:[#allocation2 + $0x1e0] sm:$0xff] %v2729
        %2794 = vst [vmem:[#allocation2 + $0x1e8] sm:$0xff] %v2730
        %2795 = vst [vmem:[#allocation2 + $0x1f0] sm:$0xff] %v2731
        %2796 = vst [vmem:[#allocation2 + $0x1f8] sm:$0xff] %v2732
        %v2797 = vld [vmem:[%s1724 + $0x2] sm:$0xff]
        %v2798 = vld [vmem:[%s1724 + $0xa] sm:$0xff]
        %v2799 = vld [vmem:[%s1724 + $0x1a] sm:$0xff]
        %v2800 = vld [vmem:[%s1724 + $0x22] sm:$0xff]
        %v2801 = vld [vmem:[%s1724 + $0x32] sm:$0xff]
        %v2802 = vld [vmem:[%s1724 + $0x3a] sm:$0xff]
        %v2803 = vld [vmem:[%s1724 + $0x4a] sm:$0xff]
        %v2804 = vld [vmem:[%s1724 + $0x52] sm:$0xff]
        %v2805 = vld [vmem:[%s1724 + $0x62] sm:$0xff]
        %v2806 = vld [vmem:[%s1724 + $0x6a] sm:$0xff]
        %v2807 = vld [vmem:[%s1724 + $0x7a] sm:$0xff]
        %v2808 = vld [vmem:[%s1724 + $0x82] sm:$0xff]
        %v2809 = vld [vmem:[%s1724 + $0x92] sm:$0xff]
        %v2810 = vld [vmem:[%s1724 + $0x9a] sm:$0xff]
        %v2811 = vld [vmem:[%s1724 + $0xaa] sm:$0xff]
        %v2812 = vld [vmem:[%s1724 + $0xb2] sm:$0xff]
        %s2813 = scalar_lea.vmem %s1, 80
        %v2814 = vld [vmem:[%s2813] sm:$0xff]
        %v2815 = vld [vmem:[%s2813 + $0x8] sm:$0xff]
        %2818 = vst [vmem:[#allocation1] ss:$2 sm:$0xff] %v2814
        %s2819 = scalar_lea.vmem [#allocation1], 16
        %2820 = vst [vmem:[%s2819] ss:$2 sm:$0xff] %v2815
        %v2821 = vld.sshfl [vmem:[#allocation1] sm:$0xff pattern:$0x75316420]
        %v2822 = vld.sshfl [vmem:[#allocation1 + $0x8] sm:$0xff pattern:$0x75316420]
        %v2823 = vld.sshfl [vmem:[#allocation1 + $0x10] sm:$0xff pattern:$0x75316420]
        %v2824 = vld.sshfl [vmem:[#allocation1 + $0x18] sm:$0xff pattern:$0x75316420]
        %v2826 = vsel %vm268, %v2797, 0
        %v2829 = vsel %vm268, %v2798, 0
        %v2832 = vsel %vm268, %v2799, 0
        %v2835 = vsel %vm268, %v2800, 0
        %v2838 = vsel %vm268, %v2801, 0
        %v2841 = vsel %vm268, %v2802, 0
        %v2844 = vsel %vm268, %v2803, 0
        %v2847 = vsel %vm268, %v2804, 0
        %v2850 = vsel %vm268, %v2805, 0
        %v2853 = vsel %vm268, %v2806, 0
        %v2856 = vsel %vm268, %v2807, 0
        %v2859 = vsel %vm268, %v2808, 0
        %v2862 = vsel %vm268, %v2809, 0
        %v2865 = vsel %vm268, %v2810, 0
        %v2868 = vsel %vm268, %v2811, 0
        %v2871 = vsel %vm268, %v2812, 0
        %v2873 = vsel %vm317, %v2821, 0
        %v2875 = vsel %vm317, %v2822, 0
        %v2877 = vsel %vm317, %v2823, 0
        %v2879 = vsel %vm317, %v2824, 0
        %2881 = vmatpush.msra.mxu0 0.0
        %2882 = vmatpush.msra.mxu0 0.0
        %2883 = vmatpush.msra.mxu0 0.0
        %2884 = vmatpush.msra.mxu0 0.0
        %2885 = vmatpush.msra.mxu0 0.0
        %2886 = vmatpush.msra.mxu0 0.0
        %2887 = vmatpush.msra.mxu0 0.0
        %2888 = vmatpush.msra.mxu0 0.0
        %2889 = vmatpush.msra.mxu0 0.0
        %2890 = vmatpush.msra.mxu0 0.0
        %2891 = vmatpush.msra.mxu0 0.0
        %2892 = vmatpush.msra.mxu0 0.0
        %2893 = vmatpush.msra.mxu0 0.0
        %2894 = vmatpush.msra.mxu0 0.0
        %2895 = vmatpush.msra.mxu0 0.0
        %2896 = vmatpush.msra.mxu0 %v2873
        %2897 = vmatmul.f32.gmra.mxu0 %v2826
        %v2898 = vpop.f32.mrf.mxu0
        %v2899 = vadd.f32 0.0, %v2898
        %2900 = vmatmul.f32.gmra.mxu0 %v2829
        %v2901 = vpop.f32.mrf.mxu0
        %v2902 = vadd.f32 0.0, %v2901
        %2903 = vmatmul.f32.gmra.mxu0 %v2832
        %v2904 = vpop.f32.mrf.mxu0
        %v2905 = vadd.f32 0.0, %v2904
        %2906 = vmatmul.f32.gmra.mxu0 %v2835
        %v2907 = vpop.f32.mrf.mxu0
        %v2908 = vadd.f32 0.0, %v2907
        %2909 = vmatmul.f32.gmra.mxu0 %v2838
        %v2910 = vpop.f32.mrf.mxu0
        %v2911 = vadd.f32 0.0, %v2910
        %2912 = vmatmul.f32.gmra.mxu0 %v2841
        %v2913 = vpop.f32.mrf.mxu0
        %v2914 = vadd.f32 0.0, %v2913
        %2915 = vmatmul.f32.gmra.mxu0 %v2844
        %v2916 = vpop.f32.mrf.mxu0
        %v2917 = vadd.f32 0.0, %v2916
        %2918 = vmatmul.f32.gmra.mxu0 %v2847
        %v2919 = vpop.f32.mrf.mxu0
        %v2920 = vadd.f32 0.0, %v2919
        %2921 = vmatmul.f32.gmra.mxu0 %v2850
        %v2922 = vpop.f32.mrf.mxu0
        %v2923 = vadd.f32 0.0, %v2922
        %2924 = vmatmul.f32.gmra.mxu0 %v2853
        %v2925 = vpop.f32.mrf.mxu0
        %v2926 = vadd.f32 0.0, %v2925
        %2927 = vmatmul.f32.gmra.mxu0 %v2856
        %v2928 = vpop.f32.mrf.mxu0
        %v2929 = vadd.f32 0.0, %v2928
        %2930 = vmatmul.f32.gmra.mxu0 %v2859
        %v2931 = vpop.f32.mrf.mxu0
        %v2932 = vadd.f32 0.0, %v2931
        %2933 = vmatmul.f32.gmra.mxu0 %v2862
        %v2934 = vpop.f32.mrf.mxu0
        %v2935 = vadd.f32 0.0, %v2934
        %2936 = vmatmul.f32.gmra.mxu0 %v2865
        %v2937 = vpop.f32.mrf.mxu0
        %v2938 = vadd.f32 0.0, %v2937
        %2939 = vmatmul.f32.gmra.mxu0 %v2868
        %v2940 = vpop.f32.mrf.mxu0
        %v2941 = vadd.f32 0.0, %v2940
        %2942 = vmatmul.f32.gmra.mxu0 %v2871
        %v2943 = vpop.f32.mrf.mxu0
        %v2944 = vadd.f32 0.0, %v2943
        %2945 = vdwg.mxu0
        %2946 = vmatpush.msra.mxu0 0.0
        %2947 = vmatpush.msra.mxu0 0.0
        %2948 = vmatpush.msra.mxu0 0.0
        %2949 = vmatpush.msra.mxu0 0.0
        %2950 = vmatpush.msra.mxu0 0.0
        %2951 = vmatpush.msra.mxu0 0.0
        %2952 = vmatpush.msra.mxu0 0.0
        %2953 = vmatpush.msra.mxu0 0.0
        %2954 = vmatpush.msra.mxu0 0.0
        %2955 = vmatpush.msra.mxu0 0.0
        %2956 = vmatpush.msra.mxu0 0.0
        %2957 = vmatpush.msra.mxu0 0.0
        %2958 = vmatpush.msra.mxu0 0.0
        %2959 = vmatpush.msra.mxu0 0.0
        %2960 = vmatpush.msra.mxu0 0.0
        %2961 = vmatpush.msra.mxu0 %v2875
        %2962 = vmatmul.f32.gmra.mxu0 %v2826
        %v2963 = vpop.f32.mrf.mxu0
        %v2964 = vadd.f32 0.0, %v2963
        %2965 = vmatmul.f32.gmra.mxu0 %v2829
        %v2966 = vpop.f32.mrf.mxu0
        %v2967 = vadd.f32 0.0, %v2966
        %2968 = vmatmul.f32.gmra.mxu0 %v2832
        %v2969 = vpop.f32.mrf.mxu0
        %v2970 = vadd.f32 0.0, %v2969
        %2971 = vmatmul.f32.gmra.mxu0 %v2835
        %v2972 = vpop.f32.mrf.mxu0
        %v2973 = vadd.f32 0.0, %v2972
        %2974 = vmatmul.f32.gmra.mxu0 %v2838
        %v2975 = vpop.f32.mrf.mxu0
        %v2976 = vadd.f32 0.0, %v2975
        %2977 = vmatmul.f32.gmra.mxu0 %v2841
        %v2978 = vpop.f32.mrf.mxu0
        %v2979 = vadd.f32 0.0, %v2978
        %2980 = vmatmul.f32.gmra.mxu0 %v2844
        %v2981 = vpop.f32.mrf.mxu0
        %v2982 = vadd.f32 0.0, %v2981
        %2983 = vmatmul.f32.gmra.mxu0 %v2847
        %v2984 = vpop.f32.mrf.mxu0
        %v2985 = vadd.f32 0.0, %v2984
        %2986 = vmatmul.f32.gmra.mxu0 %v2850
        %v2987 = vpop.f32.mrf.mxu0
        %v2988 = vadd.f32 0.0, %v2987
        %2989 = vmatmul.f32.gmra.mxu0 %v2853
        %v2990 = vpop.f32.mrf.mxu0
        %v2991 = vadd.f32 0.0, %v2990
        %2992 = vmatmul.f32.gmra.mxu0 %v2856
        %v2993 = vpop.f32.mrf.mxu0
        %v2994 = vadd.f32 0.0, %v2993
        %2995 = vmatmul.f32.gmra.mxu0 %v2859
        %v2996 = vpop.f32.mrf.mxu0
        %v2997 = vadd.f32 0.0, %v2996
        %2998 = vmatmul.f32.gmra.mxu0 %v2862
        %v2999 = vpop.f32.mrf.mxu0
        %v3000 = vadd.f32 0.0, %v2999
        %3001 = vmatmul.f32.gmra.mxu0 %v2865
        %v3002 = vpop.f32.mrf.mxu0
        %v3003 = vadd.f32 0.0, %v3002
        %3004 = vmatmul.f32.gmra.mxu0 %v2868
        %v3005 = vpop.f32.mrf.mxu0
        %v3006 = vadd.f32 0.0, %v3005
        %3007 = vmatmul.f32.gmra.mxu0 %v2871
        %v3008 = vpop.f32.mrf.mxu0
        %v3009 = vadd.f32 0.0, %v3008
        %3010 = vdwg.mxu0
        %3011 = vmatpush.msra.mxu0 0.0
        %3012 = vmatpush.msra.mxu0 0.0
        %3013 = vmatpush.msra.mxu0 0.0
        %3014 = vmatpush.msra.mxu0 0.0
        %3015 = vmatpush.msra.mxu0 0.0
        %3016 = vmatpush.msra.mxu0 0.0
        %3017 = vmatpush.msra.mxu0 0.0
        %3018 = vmatpush.msra.mxu0 0.0
        %3019 = vmatpush.msra.mxu0 0.0
        %3020 = vmatpush.msra.mxu0 0.0
        %3021 = vmatpush.msra.mxu0 0.0
        %3022 = vmatpush.msra.mxu0 0.0
        %3023 = vmatpush.msra.mxu0 0.0
        %3024 = vmatpush.msra.mxu0 0.0
        %3025 = vmatpush.msra.mxu0 0.0
        %3026 = vmatpush.msra.mxu0 %v2877
        %3027 = vmatmul.f32.gmra.mxu0 %v2826
        %v3028 = vpop.f32.mrf.mxu0
        %v3029 = vadd.f32 0.0, %v3028
        %3030 = vmatmul.f32.gmra.mxu0 %v2829
        %v3031 = vpop.f32.mrf.mxu0
        %v3032 = vadd.f32 0.0, %v3031
        %3033 = vmatmul.f32.gmra.mxu0 %v2832
        %v3034 = vpop.f32.mrf.mxu0
        %v3035 = vadd.f32 0.0, %v3034
        %3036 = vmatmul.f32.gmra.mxu0 %v2835
        %v3037 = vpop.f32.mrf.mxu0
        %v3038 = vadd.f32 0.0, %v3037
        %3039 = vmatmul.f32.gmra.mxu0 %v2838
        %v3040 = vpop.f32.mrf.mxu0
        %v3041 = vadd.f32 0.0, %v3040
        %3042 = vmatmul.f32.gmra.mxu0 %v2841
        %v3043 = vpop.f32.mrf.mxu0
        %v3044 = vadd.f32 0.0, %v3043
        %3045 = vmatmul.f32.gmra.mxu0 %v2844
        %v3046 = vpop.f32.mrf.mxu0
        %v3047 = vadd.f32 0.0, %v3046
        %3048 = vmatmul.f32.gmra.mxu0 %v2847
        %v3049 = vpop.f32.mrf.mxu0
        %v3050 = vadd.f32 0.0, %v3049
        %3051 = vmatmul.f32.gmra.mxu0 %v2850
        %v3052 = vpop.f32.mrf.mxu0
        %v3053 = vadd.f32 0.0, %v3052
        %3054 = vmatmul.f32.gmra.mxu0 %v2853
        %v3055 = vpop.f32.mrf.mxu0
        %v3056 = vadd.f32 0.0, %v3055
        %3057 = vmatmul.f32.gmra.mxu0 %v2856
        %v3058 = vpop.f32.mrf.mxu0
        %v3059 = vadd.f32 0.0, %v3058
        %3060 = vmatmul.f32.gmra.mxu0 %v2859
        %v3061 = vpop.f32.mrf.mxu0
        %v3062 = vadd.f32 0.0, %v3061
        %3063 = vmatmul.f32.gmra.mxu0 %v2862
        %v3064 = vpop.f32.mrf.mxu0
        %v3065 = vadd.f32 0.0, %v3064
        %3066 = vmatmul.f32.gmra.mxu0 %v2865
        %v3067 = vpop.f32.mrf.mxu0
        %v3068 = vadd.f32 0.0, %v3067
        %3069 = vmatmul.f32.gmra.mxu0 %v2868
        %v3070 = vpop.f32.mrf.mxu0
        %v3071 = vadd.f32 0.0, %v3070
        %3072 = vmatmul.f32.gmra.mxu0 %v2871
        %v3073 = vpop.f32.mrf.mxu0
        %v3074 = vadd.f32 0.0, %v3073
        %3075 = vdwg.mxu0
        %3076 = vmatpush.msra.mxu0 0.0
        %3077 = vmatpush.msra.mxu0 0.0
        %3078 = vmatpush.msra.mxu0 0.0
        %3079 = vmatpush.msra.mxu0 0.0
        %3080 = vmatpush.msra.mxu0 0.0
        %3081 = vmatpush.msra.mxu0 0.0
        %3082 = vmatpush.msra.mxu0 0.0
        %3083 = vmatpush.msra.mxu0 0.0
        %3084 = vmatpush.msra.mxu0 0.0
        %3085 = vmatpush.msra.mxu0 0.0
        %3086 = vmatpush.msra.mxu0 0.0
        %3087 = vmatpush.msra.mxu0 0.0
        %3088 = vmatpush.msra.mxu0 0.0
        %3089 = vmatpush.msra.mxu0 0.0
        %3090 = vmatpush.msra.mxu0 0.0
        %3091 = vmatpush.msra.mxu0 %v2879
        %3092 = vmatmul.f32.gmra.mxu0 %v2826
        %v3093 = vpop.f32.mrf.mxu0
        %v3094 = vadd.f32 0.0, %v3093
        %3095 = vmatmul.f32.gmra.mxu0 %v2829
        %v3096 = vpop.f32.mrf.mxu0
        %v3097 = vadd.f32 0.0, %v3096
        %3098 = vmatmul.f32.gmra.mxu0 %v2832
        %v3099 = vpop.f32.mrf.mxu0
        %v3100 = vadd.f32 0.0, %v3099
        %3101 = vmatmul.f32.gmra.mxu0 %v2835
        %v3102 = vpop.f32.mrf.mxu0
        %v3103 = vadd.f32 0.0, %v3102
        %3104 = vmatmul.f32.gmra.mxu0 %v2838
        %v3105 = vpop.f32.mrf.mxu0
        %v3106 = vadd.f32 0.0, %v3105
        %3107 = vmatmul.f32.gmra.mxu0 %v2841
        %v3108 = vpop.f32.mrf.mxu0
        %v3109 = vadd.f32 0.0, %v3108
        %3110 = vmatmul.f32.gmra.mxu0 %v2844
        %v3111 = vpop.f32.mrf.mxu0
        %v3112 = vadd.f32 0.0, %v3111
        %3113 = vmatmul.f32.gmra.mxu0 %v2847
        %v3114 = vpop.f32.mrf.mxu0
        %v3115 = vadd.f32 0.0, %v3114
        %3116 = vmatmul.f32.gmra.mxu0 %v2850
        %v3117 = vpop.f32.mrf.mxu0
        %v3118 = vadd.f32 0.0, %v3117
        %3119 = vmatmul.f32.gmra.mxu0 %v2853
        %v3120 = vpop.f32.mrf.mxu0
        %v3121 = vadd.f32 0.0, %v3120
        %3122 = vmatmul.f32.gmra.mxu0 %v2856
        %v3123 = vpop.f32.mrf.mxu0
        %v3124 = vadd.f32 0.0, %v3123
        %3125 = vmatmul.f32.gmra.mxu0 %v2859
        %v3126 = vpop.f32.mrf.mxu0
        %v3127 = vadd.f32 0.0, %v3126
        %3128 = vmatmul.f32.gmra.mxu0 %v2862
        %v3129 = vpop.f32.mrf.mxu0
        %v3130 = vadd.f32 0.0, %v3129
        %3131 = vmatmul.f32.gmra.mxu0 %v2865
        %v3132 = vpop.f32.mrf.mxu0
        %v3133 = vadd.f32 0.0, %v3132
        %3134 = vmatmul.f32.gmra.mxu0 %v2868
        %v3135 = vpop.f32.mrf.mxu0
        %v3136 = vadd.f32 0.0, %v3135
        %3137 = vmatmul.f32.gmra.mxu0 %v2871
        %v3138 = vpop.f32.mrf.mxu0
        %v3139 = vadd.f32 0.0, %v3138
        %3140 = vdwg.mxu0
        %v3141 = vld [vmem:[#allocation2] sm:$0xff]
        %v3142 = vld [vmem:[#allocation2 + $0x8] sm:$0xff]
        %v3143 = vld [vmem:[#allocation2 + $0x10] sm:$0xff]
        %v3144 = vld [vmem:[#allocation2 + $0x18] sm:$0xff]
        %v3145 = vld [vmem:[#allocation2 + $0x20] sm:$0xff]
        %v3146 = vld [vmem:[#allocation2 + $0x28] sm:$0xff]
        %v3147 = vld [vmem:[#allocation2 + $0x30] sm:$0xff]
        %v3148 = vld [vmem:[#allocation2 + $0x38] sm:$0xff]
        %v3149 = vld [vmem:[#allocation2 + $0x40] sm:$0xff]
        %v3150 = vld [vmem:[#allocation2 + $0x48] sm:$0xff]
        %v3151 = vld [vmem:[#allocation2 + $0x50] sm:$0xff]
        %v3152 = vld [vmem:[#allocation2 + $0x58] sm:$0xff]
        %v3153 = vld [vmem:[#allocation2 + $0x60] sm:$0xff]
        %v3154 = vld [vmem:[#allocation2 + $0x68] sm:$0xff]
        %v3155 = vld [vmem:[#allocation2 + $0x70] sm:$0xff]
        %v3156 = vld [vmem:[#allocation2 + $0x78] sm:$0xff]
        %v3157 = vld [vmem:[#allocation2 + $0x80] sm:$0xff]
        %v3158 = vld [vmem:[#allocation2 + $0x88] sm:$0xff]
        %v3159 = vld [vmem:[#allocation2 + $0x90] sm:$0xff]
        %v3160 = vld [vmem:[#allocation2 + $0x98] sm:$0xff]
        %v3161 = vld [vmem:[#allocation2 + $0xa0] sm:$0xff]
        %v3162 = vld [vmem:[#allocation2 + $0xa8] sm:$0xff]
        %v3163 = vld [vmem:[#allocation2 + $0xb0] sm:$0xff]
        %v3164 = vld [vmem:[#allocation2 + $0xb8] sm:$0xff]
        %v3165 = vld [vmem:[#allocation2 + $0xc0] sm:$0xff]
        %v3166 = vld [vmem:[#allocation2 + $0xc8] sm:$0xff]
        %v3167 = vld [vmem:[#allocation2 + $0xd0] sm:$0xff]
        %v3168 = vld [vmem:[#allocation2 + $0xd8] sm:$0xff]
        %v3169 = vld [vmem:[#allocation2 + $0xe0] sm:$0xff]
        %v3170 = vld [vmem:[#allocation2 + $0xe8] sm:$0xff]
        %v3171 = vld [vmem:[#allocation2 + $0xf0] sm:$0xff]
        %v3172 = vld [vmem:[#allocation2 + $0xf8] sm:$0xff]
        %v3173 = vld [vmem:[#allocation2 + $0x100] sm:$0xff]
        %v3174 = vld [vmem:[#allocation2 + $0x108] sm:$0xff]
        %v3175 = vld [vmem:[#allocation2 + $0x110] sm:$0xff]
        %v3176 = vld [vmem:[#allocation2 + $0x118] sm:$0xff]
        %v3177 = vld [vmem:[#allocation2 + $0x120] sm:$0xff]
        %v3178 = vld [vmem:[#allocation2 + $0x128] sm:$0xff]
        %v3179 = vld [vmem:[#allocation2 + $0x130] sm:$0xff]
        %v3180 = vld [vmem:[#allocation2 + $0x138] sm:$0xff]
        %v3181 = vld [vmem:[#allocation2 + $0x140] sm:$0xff]
        %v3182 = vld [vmem:[#allocation2 + $0x148] sm:$0xff]
        %v3183 = vld [vmem:[#allocation2 + $0x150] sm:$0xff]
        %v3184 = vld [vmem:[#allocation2 + $0x158] sm:$0xff]
        %v3185 = vld [vmem:[#allocation2 + $0x160] sm:$0xff]
        %v3186 = vld [vmem:[#allocation2 + $0x168] sm:$0xff]
        %v3187 = vld [vmem:[#allocation2 + $0x170] sm:$0xff]
        %v3188 = vld [vmem:[#allocation2 + $0x178] sm:$0xff]
        %v3189 = vld [vmem:[#allocation2 + $0x180] sm:$0xff]
        %v3190 = vld [vmem:[#allocation2 + $0x188] sm:$0xff]
        %v3191 = vld [vmem:[#allocation2 + $0x190] sm:$0xff]
        %v3192 = vld [vmem:[#allocation2 + $0x198] sm:$0xff]
        %v3193 = vld [vmem:[#allocation2 + $0x1a0] sm:$0xff]
        %v3194 = vld [vmem:[#allocation2 + $0x1a8] sm:$0xff]
        %v3195 = vld [vmem:[#allocation2 + $0x1b0] sm:$0xff]
        %v3196 = vld [vmem:[#allocation2 + $0x1b8] sm:$0xff]
        %v3197 = vld [vmem:[#allocation2 + $0x1c0] sm:$0xff]
        %v3198 = vld [vmem:[#allocation2 + $0x1c8] sm:$0xff]
        %v3199 = vld [vmem:[#allocation2 + $0x1d0] sm:$0xff]
        %v3200 = vld [vmem:[#allocation2 + $0x1d8] sm:$0xff]
        %v3201 = vld [vmem:[#allocation2 + $0x1e0] sm:$0xff]
        %v3202 = vld [vmem:[#allocation2 + $0x1e8] sm:$0xff]
        %v3203 = vld [vmem:[#allocation2 + $0x1f0] sm:$0xff]
        %v3204 = vld [vmem:[#allocation2 + $0x1f8] sm:$0xff]
        %v3205 = vadd.f32 %v3141, %v2899
        %v3206 = vadd.f32 %v3142, %v2964
        %v3207 = vadd.f32 %v3143, %v3029
        %v3208 = vadd.f32 %v3144, %v3094
        %v3209 = vadd.f32 %v3145, %v2902
        %v3210 = vadd.f32 %v3146, %v2967
        %v3211 = vadd.f32 %v3147, %v3032
        %v3212 = vadd.f32 %v3148, %v3097
        %v3213 = vadd.f32 %v3149, %v2905
        %v3214 = vadd.f32 %v3150, %v2970
        %v3215 = vadd.f32 %v3151, %v3035
        %v3216 = vadd.f32 %v3152, %v3100
        %v3217 = vadd.f32 %v3153, %v2908
        %v3218 = vadd.f32 %v3154, %v2973
        %v3219 = vadd.f32 %v3155, %v3038
        %v3220 = vadd.f32 %v3156, %v3103
        %v3221 = vadd.f32 %v3157, %v2911
        %v3222 = vadd.f32 %v3158, %v2976
        %v3223 = vadd.f32 %v3159, %v3041
        %v3224 = vadd.f32 %v3160, %v3106
        %v3225 = vadd.f32 %v3161, %v2914
        %v3226 = vadd.f32 %v3162, %v2979
        %v3227 = vadd.f32 %v3163, %v3044
        %v3228 = vadd.f32 %v3164, %v3109
        %v3229 = vadd.f32 %v3165, %v2917
        %v3230 = vadd.f32 %v3166, %v2982
        %v3231 = vadd.f32 %v3167, %v3047
        %v3232 = vadd.f32 %v3168, %v3112
        %v3233 = vadd.f32 %v3169, %v2920
        %v3234 = vadd.f32 %v3170, %v2985
        %v3235 = vadd.f32 %v3171, %v3050
        %v3236 = vadd.f32 %v3172, %v3115
        %v3237 = vadd.f32 %v3173, %v2923
        %v3238 = vadd.f32 %v3174, %v2988
        %v3239 = vadd.f32 %v3175, %v3053
        %v3240 = vadd.f32 %v3176, %v3118
        %v3241 = vadd.f32 %v3177, %v2926
        %v3242 = vadd.f32 %v3178, %v2991
        %v3243 = vadd.f32 %v3179, %v3056
        %v3244 = vadd.f32 %v3180, %v3121
        %v3245 = vadd.f32 %v3181, %v2929
        %v3246 = vadd.f32 %v3182, %v2994
        %v3247 = vadd.f32 %v3183, %v3059
        %v3248 = vadd.f32 %v3184, %v3124
        %v3249 = vadd.f32 %v3185, %v2932
        %v3250 = vadd.f32 %v3186, %v2997
        %v3251 = vadd.f32 %v3187, %v3062
        %v3252 = vadd.f32 %v3188, %v3127
        %v3253 = vadd.f32 %v3189, %v2935
        %v3254 = vadd.f32 %v3190, %v3000
        %v3255 = vadd.f32 %v3191, %v3065
        %v3256 = vadd.f32 %v3192, %v3130
        %v3257 = vadd.f32 %v3193, %v2938
        %v3258 = vadd.f32 %v3194, %v3003
        %v3259 = vadd.f32 %v3195, %v3068
        %v3260 = vadd.f32 %v3196, %v3133
        %v3261 = vadd.f32 %v3197, %v2941
        %v3262 = vadd.f32 %v3198, %v3006
        %v3263 = vadd.f32 %v3199, %v3071
        %v3264 = vadd.f32 %v3200, %v3136
        %v3265 = vadd.f32 %v3201, %v2944
        %v3266 = vadd.f32 %v3202, %v3009
        %v3267 = vadd.f32 %v3203, %v3074
        %v3268 = vadd.f32 %v3204, %v3139
        %3269 = vst [vmem:[#allocation2] sm:$0xff] %v3205
        %3270 = vst [vmem:[#allocation2 + $0x8] sm:$0xff] %v3206
        %3271 = vst [vmem:[#allocation2 + $0x10] sm:$0xff] %v3207
        %3272 = vst [vmem:[#allocation2 + $0x18] sm:$0xff] %v3208
        %3273 = vst [vmem:[#allocation2 + $0x20] sm:$0xff] %v3209
        %3274 = vst [vmem:[#allocation2 + $0x28] sm:$0xff] %v3210
        %3275 = vst [vmem:[#allocation2 + $0x30] sm:$0xff] %v3211
        %3276 = vst [vmem:[#allocation2 + $0x38] sm:$0xff] %v3212
        %3277 = vst [vmem:[#allocation2 + $0x40] sm:$0xff] %v3213
        %3278 = vst [vmem:[#allocation2 + $0x48] sm:$0xff] %v3214
        %3279 = vst [vmem:[#allocation2 + $0x50] sm:$0xff] %v3215
        %3280 = vst [vmem:[#allocation2 + $0x58] sm:$0xff] %v3216
        %3281 = vst [vmem:[#allocation2 + $0x60] sm:$0xff] %v3217
        %3282 = vst [vmem:[#allocation2 + $0x68] sm:$0xff] %v3218
        %3283 = vst [vmem:[#allocation2 + $0x70] sm:$0xff] %v3219
        %3284 = vst [vmem:[#allocation2 + $0x78] sm:$0xff] %v3220
        %3285 = vst [vmem:[#allocation2 + $0x80] sm:$0xff] %v3221
        %3286 = vst [vmem:[#allocation2 + $0x88] sm:$0xff] %v3222
        %3287 = vst [vmem:[#allocation2 + $0x90] sm:$0xff] %v3223
        %3288 = vst [vmem:[#allocation2 + $0x98] sm:$0xff] %v3224
        %3289 = vst [vmem:[#allocation2 + $0xa0] sm:$0xff] %v3225
        %3290 = vst [vmem:[#allocation2 + $0xa8] sm:$0xff] %v3226
        %3291 = vst [vmem:[#allocation2 + $0xb0] sm:$0xff] %v3227
        %3292 = vst [vmem:[#allocation2 + $0xb8] sm:$0xff] %v3228
        %3293 = vst [vmem:[#allocation2 + $0xc0] sm:$0xff] %v3229
        %3294 = vst [vmem:[#allocation2 + $0xc8] sm:$0xff] %v3230
        %3295 = vst [vmem:[#allocation2 + $0xd0] sm:$0xff] %v3231
        %3296 = vst [vmem:[#allocation2 + $0xd8] sm:$0xff] %v3232
        %3297 = vst [vmem:[#allocation2 + $0xe0] sm:$0xff] %v3233
        %3298 = vst [vmem:[#allocation2 + $0xe8] sm:$0xff] %v3234
        %3299 = vst [vmem:[#allocation2 + $0xf0] sm:$0xff] %v3235
        %3300 = vst [vmem:[#allocation2 + $0xf8] sm:$0xff] %v3236
        %3301 = vst [vmem:[#allocation2 + $0x100] sm:$0xff] %v3237
        %3302 = vst [vmem:[#allocation2 + $0x108] sm:$0xff] %v3238
        %3303 = vst [vmem:[#allocation2 + $0x110] sm:$0xff] %v3239
        %3304 = vst [vmem:[#allocation2 + $0x118] sm:$0xff] %v3240
        %3305 = vst [vmem:[#allocation2 + $0x120] sm:$0xff] %v3241
        %3306 = vst [vmem:[#allocation2 + $0x128] sm:$0xff] %v3242
        %3307 = vst [vmem:[#allocation2 + $0x130] sm:$0xff] %v3243
        %3308 = vst [vmem:[#allocation2 + $0x138] sm:$0xff] %v3244
        %3309 = vst [vmem:[#allocation2 + $0x140] sm:$0xff] %v3245
        %3310 = vst [vmem:[#allocation2 + $0x148] sm:$0xff] %v3246
        %3311 = vst [vmem:[#allocation2 + $0x150] sm:$0xff] %v3247
        %3312 = vst [vmem:[#allocation2 + $0x158] sm:$0xff] %v3248
        %3313 = vst [vmem:[#allocation2 + $0x160] sm:$0xff] %v3249
        %3314 = vst [vmem:[#allocation2 + $0x168] sm:$0xff] %v3250
        %3315 = vst [vmem:[#allocation2 + $0x170] sm:$0xff] %v3251
        %3316 = vst [vmem:[#allocation2 + $0x178] sm:$0xff] %v3252
        %3317 = vst [vmem:[#allocation2 + $0x180] sm:$0xff] %v3253
        %3318 = vst [vmem:[#allocation2 + $0x188] sm:$0xff] %v3254
        %3319 = vst [vmem:[#allocation2 + $0x190] sm:$0xff] %v3255
        %3320 = vst [vmem:[#allocation2 + $0x198] sm:$0xff] %v3256
        %3321 = vst [vmem:[#allocation2 + $0x1a0] sm:$0xff] %v3257
        %3322 = vst [vmem:[#allocation2 + $0x1a8] sm:$0xff] %v3258
        %3323 = vst [vmem:[#allocation2 + $0x1b0] sm:$0xff] %v3259
        %3324 = vst [vmem:[#allocation2 + $0x1b8] sm:$0xff] %v3260
        %3325 = vst [vmem:[#allocation2 + $0x1c0] sm:$0xff] %v3261
        %3326 = vst [vmem:[#allocation2 + $0x1c8] sm:$0xff] %v3262
        %3327 = vst [vmem:[#allocation2 + $0x1d0] sm:$0xff] %v3263
        %3328 = vst [vmem:[#allocation2 + $0x1d8] sm:$0xff] %v3264
        %3329 = vst [vmem:[#allocation2 + $0x1e0] sm:$0xff] %v3265
        %3330 = vst [vmem:[#allocation2 + $0x1e8] sm:$0xff] %v3266
        %3331 = vst [vmem:[#allocation2 + $0x1f0] sm:$0xff] %v3267
        %3332 = vst [vmem:[#allocation2 + $0x1f8] sm:$0xff] %v3268
        %s3333 = sadd.s32 %s238, 2
        %s3334 = smul.u32 %s3333, 24
        %s3335 = scalar_lea.vmem %s236, %s3334
        %v3336 = vld [vmem:[%s3335] sm:$0xff]
        %v3337 = vld [vmem:[%s3335 + $0x8] sm:$0xff]
        %v3338 = vld [vmem:[%s3335 + $0x18] sm:$0xff]
        %v3339 = vld [vmem:[%s3335 + $0x20] sm:$0xff]
        %v3340 = vld [vmem:[%s3335 + $0x30] sm:$0xff]
        %v3341 = vld [vmem:[%s3335 + $0x38] sm:$0xff]
        %v3342 = vld [vmem:[%s3335 + $0x48] sm:$0xff]
        %v3343 = vld [vmem:[%s3335 + $0x50] sm:$0xff]
        %v3344 = vld [vmem:[%s3335 + $0x60] sm:$0xff]
        %v3345 = vld [vmem:[%s3335 + $0x68] sm:$0xff]
        %v3346 = vld [vmem:[%s3335 + $0x78] sm:$0xff]
        %v3347 = vld [vmem:[%s3335 + $0x80] sm:$0xff]
        %v3348 = vld [vmem:[%s3335 + $0x90] sm:$0xff]
        %v3349 = vld [vmem:[%s3335 + $0x98] sm:$0xff]
        %v3350 = vld [vmem:[%s3335 + $0xa8] sm:$0xff]
        %v3351 = vld [vmem:[%s3335 + $0xb0] sm:$0xff]
        %s3352 = scalar_lea.vmem %s1, 96
        %v3353 = vld [vmem:[%s3352] sm:$0xff]
        %v3354 = vld [vmem:[%s3352 + $0x8] sm:$0xff]
        %3357 = vst [vmem:[#allocation1] ss:$2 sm:$0xff] %v3353
        %s3358 = scalar_lea.vmem [#allocation1], 16
        %3359 = vst [vmem:[%s3358] ss:$2 sm:$0xff] %v3354
        %v3360 = vld.sshfl [vmem:[#allocation1] sm:$0xff pattern:$0x75316420]
        %v3361 = vld.sshfl [vmem:[#allocation1 + $0x8] sm:$0xff pattern:$0x75316420]
        %v3362 = vld.sshfl [vmem:[#allocation1 + $0x10] sm:$0xff pattern:$0x75316420]
        %v3363 = vld.sshfl [vmem:[#allocation1 + $0x18] sm:$0xff pattern:$0x75316420]
        %v3365 = vsel %vm268, %v3336, 0
        %v3368 = vsel %vm268, %v3337, 0
        %v3371 = vsel %vm268, %v3338, 0
        %v3374 = vsel %vm268, %v3339, 0
        %v3377 = vsel %vm268, %v3340, 0
        %v3380 = vsel %vm268, %v3341, 0
        %v3383 = vsel %vm268, %v3342, 0
        %v3386 = vsel %vm268, %v3343, 0
        %v3389 = vsel %vm268, %v3344, 0
        %v3392 = vsel %vm268, %v3345, 0
        %v3395 = vsel %vm268, %v3346, 0
        %v3398 = vsel %vm268, %v3347, 0
        %v3401 = vsel %vm268, %v3348, 0
        %v3404 = vsel %vm268, %v3349, 0
        %v3407 = vsel %vm268, %v3350, 0
        %v3410 = vsel %vm268, %v3351, 0
        %v3412 = vsel %vm317, %v3360, 0
        %v3414 = vsel %vm317, %v3361, 0
        %v3416 = vsel %vm317, %v3362, 0
        %v3418 = vsel %vm317, %v3363, 0
        %3420 = vmatpush.msra.mxu0 0.0
        %3421 = vmatpush.msra.mxu0 0.0
        %3422 = vmatpush.msra.mxu0 0.0
        %3423 = vmatpush.msra.mxu0 0.0
        %3424 = vmatpush.msra.mxu0 0.0
        %3425 = vmatpush.msra.mxu0 0.0
        %3426 = vmatpush.msra.mxu0 0.0
        %3427 = vmatpush.msra.mxu0 0.0
        %3428 = vmatpush.msra.mxu0 0.0
        %3429 = vmatpush.msra.mxu0 0.0
        %3430 = vmatpush.msra.mxu0 0.0
        %3431 = vmatpush.msra.mxu0 0.0
        %3432 = vmatpush.msra.mxu0 0.0
        %3433 = vmatpush.msra.mxu0 0.0
        %3434 = vmatpush.msra.mxu0 0.0
        %3435 = vmatpush.msra.mxu0 %v3412
        %3436 = vmatmul.f32.gmra.mxu0 %v3365
        %v3437 = vpop.f32.mrf.mxu0
        %v3438 = vadd.f32 0.0, %v3437
        %3439 = vmatmul.f32.gmra.mxu0 %v3368
        %v3440 = vpop.f32.mrf.mxu0
        %v3441 = vadd.f32 0.0, %v3440
        %3442 = vmatmul.f32.gmra.mxu0 %v3371
        %v3443 = vpop.f32.mrf.mxu0
        %v3444 = vadd.f32 0.0, %v3443
        %3445 = vmatmul.f32.gmra.mxu0 %v3374
        %v3446 = vpop.f32.mrf.mxu0
        %v3447 = vadd.f32 0.0, %v3446
        %3448 = vmatmul.f32.gmra.mxu0 %v3377
        %v3449 = vpop.f32.mrf.mxu0
        %v3450 = vadd.f32 0.0, %v3449
        %3451 = vmatmul.f32.gmra.mxu0 %v3380
        %v3452 = vpop.f32.mrf.mxu0
        %v3453 = vadd.f32 0.0, %v3452
        %3454 = vmatmul.f32.gmra.mxu0 %v3383
        %v3455 = vpop.f32.mrf.mxu0
        %v3456 = vadd.f32 0.0, %v3455
        %3457 = vmatmul.f32.gmra.mxu0 %v3386
        %v3458 = vpop.f32.mrf.mxu0
        %v3459 = vadd.f32 0.0, %v3458
        %3460 = vmatmul.f32.gmra.mxu0 %v3389
        %v3461 = vpop.f32.mrf.mxu0
        %v3462 = vadd.f32 0.0, %v3461
        %3463 = vmatmul.f32.gmra.mxu0 %v3392
        %v3464 = vpop.f32.mrf.mxu0
        %v3465 = vadd.f32 0.0, %v3464
        %3466 = vmatmul.f32.gmra.mxu0 %v3395
        %v3467 = vpop.f32.mrf.mxu0
        %v3468 = vadd.f32 0.0, %v3467
        %3469 = vmatmul.f32.gmra.mxu0 %v3398
        %v3470 = vpop.f32.mrf.mxu0
        %v3471 = vadd.f32 0.0, %v3470
        %3472 = vmatmul.f32.gmra.mxu0 %v3401
        %v3473 = vpop.f32.mrf.mxu0
        %v3474 = vadd.f32 0.0, %v3473
        %3475 = vmatmul.f32.gmra.mxu0 %v3404
        %v3476 = vpop.f32.mrf.mxu0
        %v3477 = vadd.f32 0.0, %v3476
        %3478 = vmatmul.f32.gmra.mxu0 %v3407
        %v3479 = vpop.f32.mrf.mxu0
        %v3480 = vadd.f32 0.0, %v3479
        %3481 = vmatmul.f32.gmra.mxu0 %v3410
        %v3482 = vpop.f32.mrf.mxu0
        %v3483 = vadd.f32 0.0, %v3482
        %3484 = vdwg.mxu0
        %3485 = vmatpush.msra.mxu0 0.0
        %3486 = vmatpush.msra.mxu0 0.0
        %3487 = vmatpush.msra.mxu0 0.0
        %3488 = vmatpush.msra.mxu0 0.0
        %3489 = vmatpush.msra.mxu0 0.0
        %3490 = vmatpush.msra.mxu0 0.0
        %3491 = vmatpush.msra.mxu0 0.0
        %3492 = vmatpush.msra.mxu0 0.0
        %3493 = vmatpush.msra.mxu0 0.0
        %3494 = vmatpush.msra.mxu0 0.0
        %3495 = vmatpush.msra.mxu0 0.0
        %3496 = vmatpush.msra.mxu0 0.0
        %3497 = vmatpush.msra.mxu0 0.0
        %3498 = vmatpush.msra.mxu0 0.0
        %3499 = vmatpush.msra.mxu0 0.0
        %3500 = vmatpush.msra.mxu0 %v3414
        %3501 = vmatmul.f32.gmra.mxu0 %v3365
        %v3502 = vpop.f32.mrf.mxu0
        %v3503 = vadd.f32 0.0, %v3502
        %3504 = vmatmul.f32.gmra.mxu0 %v3368
        %v3505 = vpop.f32.mrf.mxu0
        %v3506 = vadd.f32 0.0, %v3505
        %3507 = vmatmul.f32.gmra.mxu0 %v3371
        %v3508 = vpop.f32.mrf.mxu0
        %v3509 = vadd.f32 0.0, %v3508
        %3510 = vmatmul.f32.gmra.mxu0 %v3374
        %v3511 = vpop.f32.mrf.mxu0
        %v3512 = vadd.f32 0.0, %v3511
        %3513 = vmatmul.f32.gmra.mxu0 %v3377
        %v3514 = vpop.f32.mrf.mxu0
        %v3515 = vadd.f32 0.0, %v3514
        %3516 = vmatmul.f32.gmra.mxu0 %v3380
        %v3517 = vpop.f32.mrf.mxu0
        %v3518 = vadd.f32 0.0, %v3517
        %3519 = vmatmul.f32.gmra.mxu0 %v3383
        %v3520 = vpop.f32.mrf.mxu0
        %v3521 = vadd.f32 0.0, %v3520
        %3522 = vmatmul.f32.gmra.mxu0 %v3386
        %v3523 = vpop.f32.mrf.mxu0
        %v3524 = vadd.f32 0.0, %v3523
        %3525 = vmatmul.f32.gmra.mxu0 %v3389
        %v3526 = vpop.f32.mrf.mxu0
        %v3527 = vadd.f32 0.0, %v3526
        %3528 = vmatmul.f32.gmra.mxu0 %v3392
        %v3529 = vpop.f32.mrf.mxu0
        %v3530 = vadd.f32 0.0, %v3529
        %3531 = vmatmul.f32.gmra.mxu0 %v3395
        %v3532 = vpop.f32.mrf.mxu0
        %v3533 = vadd.f32 0.0, %v3532
        %3534 = vmatmul.f32.gmra.mxu0 %v3398
        %v3535 = vpop.f32.mrf.mxu0
        %v3536 = vadd.f32 0.0, %v3535
        %3537 = vmatmul.f32.gmra.mxu0 %v3401
        %v3538 = vpop.f32.mrf.mxu0
        %v3539 = vadd.f32 0.0, %v3538
        %3540 = vmatmul.f32.gmra.mxu0 %v3404
        %v3541 = vpop.f32.mrf.mxu0
        %v3542 = vadd.f32 0.0, %v3541
        %3543 = vmatmul.f32.gmra.mxu0 %v3407
        %v3544 = vpop.f32.mrf.mxu0
        %v3545 = vadd.f32 0.0, %v3544
        %3546 = vmatmul.f32.gmra.mxu0 %v3410
        %v3547 = vpop.f32.mrf.mxu0
        %v3548 = vadd.f32 0.0, %v3547
        %3549 = vdwg.mxu0
        %3550 = vmatpush.msra.mxu0 0.0
        %3551 = vmatpush.msra.mxu0 0.0
        %3552 = vmatpush.msra.mxu0 0.0
        %3553 = vmatpush.msra.mxu0 0.0
        %3554 = vmatpush.msra.mxu0 0.0
        %3555 = vmatpush.msra.mxu0 0.0
        %3556 = vmatpush.msra.mxu0 0.0
        %3557 = vmatpush.msra.mxu0 0.0
        %3558 = vmatpush.msra.mxu0 0.0
        %3559 = vmatpush.msra.mxu0 0.0
        %3560 = vmatpush.msra.mxu0 0.0
        %3561 = vmatpush.msra.mxu0 0.0
        %3562 = vmatpush.msra.mxu0 0.0
        %3563 = vmatpush.msra.mxu0 0.0
        %3564 = vmatpush.msra.mxu0 0.0
        %3565 = vmatpush.msra.mxu0 %v3416
        %3566 = vmatmul.f32.gmra.mxu0 %v3365
        %v3567 = vpop.f32.mrf.mxu0
        %v3568 = vadd.f32 0.0, %v3567
        %3569 = vmatmul.f32.gmra.mxu0 %v3368
        %v3570 = vpop.f32.mrf.mxu0
        %v3571 = vadd.f32 0.0, %v3570
        %3572 = vmatmul.f32.gmra.mxu0 %v3371
        %v3573 = vpop.f32.mrf.mxu0
        %v3574 = vadd.f32 0.0, %v3573
        %3575 = vmatmul.f32.gmra.mxu0 %v3374
        %v3576 = vpop.f32.mrf.mxu0
        %v3577 = vadd.f32 0.0, %v3576
        %3578 = vmatmul.f32.gmra.mxu0 %v3377
        %v3579 = vpop.f32.mrf.mxu0
        %v3580 = vadd.f32 0.0, %v3579
        %3581 = vmatmul.f32.gmra.mxu0 %v3380
        %v3582 = vpop.f32.mrf.mxu0
        %v3583 = vadd.f32 0.0, %v3582
        %3584 = vmatmul.f32.gmra.mxu0 %v3383
        %v3585 = vpop.f32.mrf.mxu0
        %v3586 = vadd.f32 0.0, %v3585
        %3587 = vmatmul.f32.gmra.mxu0 %v3386
        %v3588 = vpop.f32.mrf.mxu0
        %v3589 = vadd.f32 0.0, %v3588
        %3590 = vmatmul.f32.gmra.mxu0 %v3389
        %v3591 = vpop.f32.mrf.mxu0
        %v3592 = vadd.f32 0.0, %v3591
        %3593 = vmatmul.f32.gmra.mxu0 %v3392
        %v3594 = vpop.f32.mrf.mxu0
        %v3595 = vadd.f32 0.0, %v3594
        %3596 = vmatmul.f32.gmra.mxu0 %v3395
        %v3597 = vpop.f32.mrf.mxu0
        %v3598 = vadd.f32 0.0, %v3597
        %3599 = vmatmul.f32.gmra.mxu0 %v3398
        %v3600 = vpop.f32.mrf.mxu0
        %v3601 = vadd.f32 0.0, %v3600
        %3602 = vmatmul.f32.gmra.mxu0 %v3401
        %v3603 = vpop.f32.mrf.mxu0
        %v3604 = vadd.f32 0.0, %v3603
        %3605 = vmatmul.f32.gmra.mxu0 %v3404
        %v3606 = vpop.f32.mrf.mxu0
        %v3607 = vadd.f32 0.0, %v3606
        %3608 = vmatmul.f32.gmra.mxu0 %v3407
        %v3609 = vpop.f32.mrf.mxu0
        %v3610 = vadd.f32 0.0, %v3609
        %3611 = vmatmul.f32.gmra.mxu0 %v3410
        %v3612 = vpop.f32.mrf.mxu0
        %v3613 = vadd.f32 0.0, %v3612
        %3614 = vdwg.mxu0
        %3615 = vmatpush.msra.mxu0 0.0
        %3616 = vmatpush.msra.mxu0 0.0
        %3617 = vmatpush.msra.mxu0 0.0
        %3618 = vmatpush.msra.mxu0 0.0
        %3619 = vmatpush.msra.mxu0 0.0
        %3620 = vmatpush.msra.mxu0 0.0
        %3621 = vmatpush.msra.mxu0 0.0
        %3622 = vmatpush.msra.mxu0 0.0
        %3623 = vmatpush.msra.mxu0 0.0
        %3624 = vmatpush.msra.mxu0 0.0
        %3625 = vmatpush.msra.mxu0 0.0
        %3626 = vmatpush.msra.mxu0 0.0
        %3627 = vmatpush.msra.mxu0 0.0
        %3628 = vmatpush.msra.mxu0 0.0
        %3629 = vmatpush.msra.mxu0 0.0
        %3630 = vmatpush.msra.mxu0 %v3418
        %3631 = vmatmul.f32.gmra.mxu0 %v3365
        %v3632 = vpop.f32.mrf.mxu0
        %v3633 = vadd.f32 0.0, %v3632
        %3634 = vmatmul.f32.gmra.mxu0 %v3368
        %v3635 = vpop.f32.mrf.mxu0
        %v3636 = vadd.f32 0.0, %v3635
        %3637 = vmatmul.f32.gmra.mxu0 %v3371
        %v3638 = vpop.f32.mrf.mxu0
        %v3639 = vadd.f32 0.0, %v3638
        %3640 = vmatmul.f32.gmra.mxu0 %v3374
        %v3641 = vpop.f32.mrf.mxu0
        %v3642 = vadd.f32 0.0, %v3641
        %3643 = vmatmul.f32.gmra.mxu0 %v3377
        %v3644 = vpop.f32.mrf.mxu0
        %v3645 = vadd.f32 0.0, %v3644
        %3646 = vmatmul.f32.gmra.mxu0 %v3380
        %v3647 = vpop.f32.mrf.mxu0
        %v3648 = vadd.f32 0.0, %v3647
        %3649 = vmatmul.f32.gmra.mxu0 %v3383
        %v3650 = vpop.f32.mrf.mxu0
        %v3651 = vadd.f32 0.0, %v3650
        %3652 = vmatmul.f32.gmra.mxu0 %v3386
        %v3653 = vpop.f32.mrf.mxu0
        %v3654 = vadd.f32 0.0, %v3653
        %3655 = vmatmul.f32.gmra.mxu0 %v3389
        %v3656 = vpop.f32.mrf.mxu0
        %v3657 = vadd.f32 0.0, %v3656
        %3658 = vmatmul.f32.gmra.mxu0 %v3392
        %v3659 = vpop.f32.mrf.mxu0
        %v3660 = vadd.f32 0.0, %v3659
        %3661 = vmatmul.f32.gmra.mxu0 %v3395
        %v3662 = vpop.f32.mrf.mxu0
        %v3663 = vadd.f32 0.0, %v3662
        %3664 = vmatmul.f32.gmra.mxu0 %v3398
        %v3665 = vpop.f32.mrf.mxu0
        %v3666 = vadd.f32 0.0, %v3665
        %3667 = vmatmul.f32.gmra.mxu0 %v3401
        %v3668 = vpop.f32.mrf.mxu0
        %v3669 = vadd.f32 0.0, %v3668
        %3670 = vmatmul.f32.gmra.mxu0 %v3404
        %v3671 = vpop.f32.mrf.mxu0
        %v3672 = vadd.f32 0.0, %v3671
        %3673 = vmatmul.f32.gmra.mxu0 %v3407
        %v3674 = vpop.f32.mrf.mxu0
        %v3675 = vadd.f32 0.0, %v3674
        %3676 = vmatmul.f32.gmra.mxu0 %v3410
        %v3677 = vpop.f32.mrf.mxu0
        %v3678 = vadd.f32 0.0, %v3677
        %3679 = vdwg.mxu0
        %v3680 = vld [vmem:[#allocation2] sm:$0xff]
        %v3681 = vld [vmem:[#allocation2 + $0x8] sm:$0xff]
        %v3682 = vld [vmem:[#allocation2 + $0x10] sm:$0xff]
        %v3683 = vld [vmem:[#allocation2 + $0x18] sm:$0xff]
        %v3684 = vld [vmem:[#allocation2 + $0x20] sm:$0xff]
        %v3685 = vld [vmem:[#allocation2 + $0x28] sm:$0xff]
        %v3686 = vld [vmem:[#allocation2 + $0x30] sm:$0xff]
        %v3687 = vld [vmem:[#allocation2 + $0x38] sm:$0xff]
        %v3688 = vld [vmem:[#allocation2 + $0x40] sm:$0xff]
        %v3689 = vld [vmem:[#allocation2 + $0x48] sm:$0xff]
        %v3690 = vld [vmem:[#allocation2 + $0x50] sm:$0xff]
        %v3691 = vld [vmem:[#allocation2 + $0x58] sm:$0xff]
        %v3692 = vld [vmem:[#allocation2 + $0x60] sm:$0xff]
        %v3693 = vld [vmem:[#allocation2 + $0x68] sm:$0xff]
        %v3694 = vld [vmem:[#allocation2 + $0x70] sm:$0xff]
        %v3695 = vld [vmem:[#allocation2 + $0x78] sm:$0xff]
        %v3696 = vld [vmem:[#allocation2 + $0x80] sm:$0xff]
        %v3697 = vld [vmem:[#allocation2 + $0x88] sm:$0xff]
        %v3698 = vld [vmem:[#allocation2 + $0x90] sm:$0xff]
        %v3699 = vld [vmem:[#allocation2 + $0x98] sm:$0xff]
        %v3700 = vld [vmem:[#allocation2 + $0xa0] sm:$0xff]
        %v3701 = vld [vmem:[#allocation2 + $0xa8] sm:$0xff]
        %v3702 = vld [vmem:[#allocation2 + $0xb0] sm:$0xff]
        %v3703 = vld [vmem:[#allocation2 + $0xb8] sm:$0xff]
        %v3704 = vld [vmem:[#allocation2 + $0xc0] sm:$0xff]
        %v3705 = vld [vmem:[#allocation2 + $0xc8] sm:$0xff]
        %v3706 = vld [vmem:[#allocation2 + $0xd0] sm:$0xff]
        %v3707 = vld [vmem:[#allocation2 + $0xd8] sm:$0xff]
        %v3708 = vld [vmem:[#allocation2 + $0xe0] sm:$0xff]
        %v3709 = vld [vmem:[#allocation2 + $0xe8] sm:$0xff]
        %v3710 = vld [vmem:[#allocation2 + $0xf0] sm:$0xff]
        %v3711 = vld [vmem:[#allocation2 + $0xf8] sm:$0xff]
        %v3712 = vld [vmem:[#allocation2 + $0x100] sm:$0xff]
        %v3713 = vld [vmem:[#allocation2 + $0x108] sm:$0xff]
        %v3714 = vld [vmem:[#allocation2 + $0x110] sm:$0xff]
        %v3715 = vld [vmem:[#allocation2 + $0x118] sm:$0xff]
        %v3716 = vld [vmem:[#allocation2 + $0x120] sm:$0xff]
        %v3717 = vld [vmem:[#allocation2 + $0x128] sm:$0xff]
        %v3718 = vld [vmem:[#allocation2 + $0x130] sm:$0xff]
        %v3719 = vld [vmem:[#allocation2 + $0x138] sm:$0xff]
        %v3720 = vld [vmem:[#allocation2 + $0x140] sm:$0xff]
        %v3721 = vld [vmem:[#allocation2 + $0x148] sm:$0xff]
        %v3722 = vld [vmem:[#allocation2 + $0x150] sm:$0xff]
        %v3723 = vld [vmem:[#allocation2 + $0x158] sm:$0xff]
        %v3724 = vld [vmem:[#allocation2 + $0x160] sm:$0xff]
        %v3725 = vld [vmem:[#allocation2 + $0x168] sm:$0xff]
        %v3726 = vld [vmem:[#allocation2 + $0x170] sm:$0xff]
        %v3727 = vld [vmem:[#allocation2 + $0x178] sm:$0xff]
        %v3728 = vld [vmem:[#allocation2 + $0x180] sm:$0xff]
        %v3729 = vld [vmem:[#allocation2 + $0x188] sm:$0xff]
        %v3730 = vld [vmem:[#allocation2 + $0x190] sm:$0xff]
        %v3731 = vld [vmem:[#allocation2 + $0x198] sm:$0xff]
        %v3732 = vld [vmem:[#allocation2 + $0x1a0] sm:$0xff]
        %v3733 = vld [vmem:[#allocation2 + $0x1a8] sm:$0xff]
        %v3734 = vld [vmem:[#allocation2 + $0x1b0] sm:$0xff]
        %v3735 = vld [vmem:[#allocation2 + $0x1b8] sm:$0xff]
        %v3736 = vld [vmem:[#allocation2 + $0x1c0] sm:$0xff]
        %v3737 = vld [vmem:[#allocation2 + $0x1c8] sm:$0xff]
        %v3738 = vld [vmem:[#allocation2 + $0x1d0] sm:$0xff]
        %v3739 = vld [vmem:[#allocation2 + $0x1d8] sm:$0xff]
        %v3740 = vld [vmem:[#allocation2 + $0x1e0] sm:$0xff]
        %v3741 = vld [vmem:[#allocation2 + $0x1e8] sm:$0xff]
        %v3742 = vld [vmem:[#allocation2 + $0x1f0] sm:$0xff]
        %v3743 = vld [vmem:[#allocation2 + $0x1f8] sm:$0xff]
        %v3744 = vadd.f32 %v3680, %v3438
        %v3745 = vadd.f32 %v3681, %v3503
        %v3746 = vadd.f32 %v3682, %v3568
        %v3747 = vadd.f32 %v3683, %v3633
        %v3748 = vadd.f32 %v3684, %v3441
        %v3749 = vadd.f32 %v3685, %v3506
        %v3750 = vadd.f32 %v3686, %v3571
        %v3751 = vadd.f32 %v3687, %v3636
        %v3752 = vadd.f32 %v3688, %v3444
        %v3753 = vadd.f32 %v3689, %v3509
        %v3754 = vadd.f32 %v3690, %v3574
        %v3755 = vadd.f32 %v3691, %v3639
        %v3756 = vadd.f32 %v3692, %v3447
        %v3757 = vadd.f32 %v3693, %v3512
        %v3758 = vadd.f32 %v3694, %v3577
        %v3759 = vadd.f32 %v3695, %v3642
        %v3760 = vadd.f32 %v3696, %v3450
        %v3761 = vadd.f32 %v3697, %v3515
        %v3762 = vadd.f32 %v3698, %v3580
        %v3763 = vadd.f32 %v3699, %v3645
        %v3764 = vadd.f32 %v3700, %v3453
        %v3765 = vadd.f32 %v3701, %v3518
        %v3766 = vadd.f32 %v3702, %v3583
        %v3767 = vadd.f32 %v3703, %v3648
        %v3768 = vadd.f32 %v3704, %v3456
        %v3769 = vadd.f32 %v3705, %v3521
        %v3770 = vadd.f32 %v3706, %v3586
        %v3771 = vadd.f32 %v3707, %v3651
        %v3772 = vadd.f32 %v3708, %v3459
        %v3773 = vadd.f32 %v3709, %v3524
        %v3774 = vadd.f32 %v3710, %v3589
        %v3775 = vadd.f32 %v3711, %v3654
        %v3776 = vadd.f32 %v3712, %v3462
        %v3777 = vadd.f32 %v3713, %v3527
        %v3778 = vadd.f32 %v3714, %v3592
        %v3779 = vadd.f32 %v3715, %v3657
        %v3780 = vadd.f32 %v3716, %v3465
        %v3781 = vadd.f32 %v3717, %v3530
        %v3782 = vadd.f32 %v3718, %v3595
        %v3783 = vadd.f32 %v3719, %v3660
        %v3784 = vadd.f32 %v3720, %v3468
        %v3785 = vadd.f32 %v3721, %v3533
        %v3786 = vadd.f32 %v3722, %v3598
        %v3787 = vadd.f32 %v3723, %v3663
        %v3788 = vadd.f32 %v3724, %v3471
        %v3789 = vadd.f32 %v3725, %v3536
        %v3790 = vadd.f32 %v3726, %v3601
        %v3791 = vadd.f32 %v3727, %v3666
        %v3792 = vadd.f32 %v3728, %v3474
        %v3793 = vadd.f32 %v3729, %v3539
        %v3794 = vadd.f32 %v3730, %v3604
        %v3795 = vadd.f32 %v3731, %v3669
        %v3796 = vadd.f32 %v3732, %v3477
        %v3797 = vadd.f32 %v3733, %v3542
        %v3798 = vadd.f32 %v3734, %v3607
        %v3799 = vadd.f32 %v3735, %v3672
        %v3800 = vadd.f32 %v3736, %v3480
        %v3801 = vadd.f32 %v3737, %v3545
        %v3802 = vadd.f32 %v3738, %v3610
        %v3803 = vadd.f32 %v3739, %v3675
        %v3804 = vadd.f32 %v3740, %v3483
        %v3805 = vadd.f32 %v3741, %v3548
        %v3806 = vadd.f32 %v3742, %v3613
        %v3807 = vadd.f32 %v3743, %v3678
        %3808 = vst [vmem:[#allocation2] sm:$0xff] %v3744
        %3809 = vst [vmem:[#allocation2 + $0x8] sm:$0xff] %v3745
        %3810 = vst [vmem:[#allocation2 + $0x10] sm:$0xff] %v3746
        %3811 = vst [vmem:[#allocation2 + $0x18] sm:$0xff] %v3747
        %3812 = vst [vmem:[#allocation2 + $0x20] sm:$0xff] %v3748
        %3813 = vst [vmem:[#allocation2 + $0x28] sm:$0xff] %v3749
        %3814 = vst [vmem:[#allocation2 + $0x30] sm:$0xff] %v3750
        %3815 = vst [vmem:[#allocation2 + $0x38] sm:$0xff] %v3751
        %3816 = vst [vmem:[#allocation2 + $0x40] sm:$0xff] %v3752
        %3817 = vst [vmem:[#allocation2 + $0x48] sm:$0xff] %v3753
        %3818 = vst [vmem:[#allocation2 + $0x50] sm:$0xff] %v3754
        %3819 = vst [vmem:[#allocation2 + $0x58] sm:$0xff] %v3755
        %3820 = vst [vmem:[#allocation2 + $0x60] sm:$0xff] %v3756
        %3821 = vst [vmem:[#allocation2 + $0x68] sm:$0xff] %v3757
        %3822 = vst [vmem:[#allocation2 + $0x70] sm:$0xff] %v3758
        %3823 = vst [vmem:[#allocation2 + $0x78] sm:$0xff] %v3759
        %3824 = vst [vmem:[#allocation2 + $0x80] sm:$0xff] %v3760
        %3825 = vst [vmem:[#allocation2 + $0x88] sm:$0xff] %v3761
        %3826 = vst [vmem:[#allocation2 + $0x90] sm:$0xff] %v3762
        %3827 = vst [vmem:[#allocation2 + $0x98] sm:$0xff] %v3763
        %3828 = vst [vmem:[#allocation2 + $0xa0] sm:$0xff] %v3764
        %3829 = vst [vmem:[#allocation2 + $0xa8] sm:$0xff] %v3765
        %3830 = vst [vmem:[#allocation2 + $0xb0] sm:$0xff] %v3766
        %3831 = vst [vmem:[#allocation2 + $0xb8] sm:$0xff] %v3767
        %3832 = vst [vmem:[#allocation2 + $0xc0] sm:$0xff] %v3768
        %3833 = vst [vmem:[#allocation2 + $0xc8] sm:$0xff] %v3769
        %3834 = vst [vmem:[#allocation2 + $0xd0] sm:$0xff] %v3770
        %3835 = vst [vmem:[#allocation2 + $0xd8] sm:$0xff] %v3771
        %3836 = vst [vmem:[#allocation2 + $0xe0] sm:$0xff] %v3772
        %3837 = vst [vmem:[#allocation2 + $0xe8] sm:$0xff] %v3773
        %3838 = vst [vmem:[#allocation2 + $0xf0] sm:$0xff] %v3774
        %3839 = vst [vmem:[#allocation2 + $0xf8] sm:$0xff] %v3775
        %3840 = vst [vmem:[#allocation2 + $0x100] sm:$0xff] %v3776
        %3841 = vst [vmem:[#allocation2 + $0x108] sm:$0xff] %v3777
        %3842 = vst [vmem:[#allocation2 + $0x110] sm:$0xff] %v3778
        %3843 = vst [vmem:[#allocation2 + $0x118] sm:$0xff] %v3779
        %3844 = vst [vmem:[#allocation2 + $0x120] sm:$0xff] %v3780
        %3845 = vst [vmem:[#allocation2 + $0x128] sm:$0xff] %v3781
        %3846 = vst [vmem:[#allocation2 + $0x130] sm:$0xff] %v3782
        %3847 = vst [vmem:[#allocation2 + $0x138] sm:$0xff] %v3783
        %3848 = vst [vmem:[#allocation2 + $0x140] sm:$0xff] %v3784
        %3849 = vst [vmem:[#allocation2 + $0x148] sm:$0xff] %v3785
        %3850 = vst [vmem:[#allocation2 + $0x150] sm:$0xff] %v3786
        %3851 = vst [vmem:[#allocation2 + $0x158] sm:$0xff] %v3787
        %3852 = vst [vmem:[#allocation2 + $0x160] sm:$0xff] %v3788
        %3853 = vst [vmem:[#allocation2 + $0x168] sm:$0xff] %v3789
        %3854 = vst [vmem:[#allocation2 + $0x170] sm:$0xff] %v3790
        %3855 = vst [vmem:[#allocation2 + $0x178] sm:$0xff] %v3791
        %3856 = vst [vmem:[#allocation2 + $0x180] sm:$0xff] %v3792
        %3857 = vst [vmem:[#allocation2 + $0x188] sm:$0xff] %v3793
        %3858 = vst [vmem:[#allocation2 + $0x190] sm:$0xff] %v3794
        %3859 = vst [vmem:[#allocation2 + $0x198] sm:$0xff] %v3795
        %3860 = vst [vmem:[#allocation2 + $0x1a0] sm:$0xff] %v3796
        %3861 = vst [vmem:[#allocation2 + $0x1a8] sm:$0xff] %v3797
        %3862 = vst [vmem:[#allocation2 + $0x1b0] sm:$0xff] %v3798
        %3863 = vst [vmem:[#allocation2 + $0x1b8] sm:$0xff] %v3799
        %3864 = vst [vmem:[#allocation2 + $0x1c0] sm:$0xff] %v3800
        %3865 = vst [vmem:[#allocation2 + $0x1c8] sm:$0xff] %v3801
        %3866 = vst [vmem:[#allocation2 + $0x1d0] sm:$0xff] %v3802
        %3867 = vst [vmem:[#allocation2 + $0x1d8] sm:$0xff] %v3803
        %3868 = vst [vmem:[#allocation2 + $0x1e0] sm:$0xff] %v3804
        %3869 = vst [vmem:[#allocation2 + $0x1e8] sm:$0xff] %v3805
        %3870 = vst [vmem:[#allocation2 + $0x1f0] sm:$0xff] %v3806
        %3871 = vst [vmem:[#allocation2 + $0x1f8] sm:$0xff] %v3807
        %v3872 = vld [vmem:[%s3335 + $0x1] sm:$0xff]
        %v3873 = vld [vmem:[%s3335 + $0x9] sm:$0xff]
        %v3874 = vld [vmem:[%s3335 + $0x19] sm:$0xff]
        %v3875 = vld [vmem:[%s3335 + $0x21] sm:$0xff]
        %v3876 = vld [vmem:[%s3335 + $0x31] sm:$0xff]
        %v3877 = vld [vmem:[%s3335 + $0x39] sm:$0xff]
        %v3878 = vld [vmem:[%s3335 + $0x49] sm:$0xff]
        %v3879 = vld [vmem:[%s3335 + $0x51] sm:$0xff]
        %v3880 = vld [vmem:[%s3335 + $0x61] sm:$0xff]
        %v3881 = vld [vmem:[%s3335 + $0x69] sm:$0xff]
        %v3882 = vld [vmem:[%s3335 + $0x79] sm:$0xff]
        %v3883 = vld [vmem:[%s3335 + $0x81] sm:$0xff]
        %v3884 = vld [vmem:[%s3335 + $0x91] sm:$0xff]
        %v3885 = vld [vmem:[%s3335 + $0x99] sm:$0xff]
        %v3886 = vld [vmem:[%s3335 + $0xa9] sm:$0xff]
        %v3887 = vld [vmem:[%s3335 + $0xb1] sm:$0xff]
        %s3888 = scalar_lea.vmem %s1, 112
        %v3889 = vld [vmem:[%s3888] sm:$0xff]
        %v3890 = vld [vmem:[%s3888 + $0x8] sm:$0xff]
        %3893 = vst [vmem:[#allocation1] ss:$2 sm:$0xff] %v3889
        %s3894 = scalar_lea.vmem [#allocation1], 16
        %3895 = vst [vmem:[%s3894] ss:$2 sm:$0xff] %v3890
        %v3896 = vld.sshfl [vmem:[#allocation1] sm:$0xff pattern:$0x75316420]
        %v3897 = vld.sshfl [vmem:[#allocation1 + $0x8] sm:$0xff pattern:$0x75316420]
        %v3898 = vld.sshfl [vmem:[#allocation1 + $0x10] sm:$0xff pattern:$0x75316420]
        %v3899 = vld.sshfl [vmem:[#allocation1 + $0x18] sm:$0xff pattern:$0x75316420]
        %v3901 = vsel %vm268, %v3872, 0
        %v3904 = vsel %vm268, %v3873, 0
        %v3907 = vsel %vm268, %v3874, 0
        %v3910 = vsel %vm268, %v3875, 0
        %v3913 = vsel %vm268, %v3876, 0
        %v3916 = vsel %vm268, %v3877, 0
        %v3919 = vsel %vm268, %v3878, 0
        %v3922 = vsel %vm268, %v3879, 0
        %v3925 = vsel %vm268, %v3880, 0
        %v3928 = vsel %vm268, %v3881, 0
        %v3931 = vsel %vm268, %v3882, 0
        %v3934 = vsel %vm268, %v3883, 0
        %v3937 = vsel %vm268, %v3884, 0
        %v3940 = vsel %vm268, %v3885, 0
        %v3943 = vsel %vm268, %v3886, 0
        %v3946 = vsel %vm268, %v3887, 0
        %v3948 = vsel %vm317, %v3896, 0
        %v3950 = vsel %vm317, %v3897, 0
        %v3952 = vsel %vm317, %v3898, 0
        %v3954 = vsel %vm317, %v3899, 0
        %3956 = vmatpush.msra.mxu0 0.0
        %3957 = vmatpush.msra.mxu0 0.0
        %3958 = vmatpush.msra.mxu0 0.0
        %3959 = vmatpush.msra.mxu0 0.0
        %3960 = vmatpush.msra.mxu0 0.0
        %3961 = vmatpush.msra.mxu0 0.0
        %3962 = vmatpush.msra.mxu0 0.0
        %3963 = vmatpush.msra.mxu0 0.0
        %3964 = vmatpush.msra.mxu0 0.0
        %3965 = vmatpush.msra.mxu0 0.0
        %3966 = vmatpush.msra.mxu0 0.0
        %3967 = vmatpush.msra.mxu0 0.0
        %3968 = vmatpush.msra.mxu0 0.0
        %3969 = vmatpush.msra.mxu0 0.0
        %3970 = vmatpush.msra.mxu0 0.0
        %3971 = vmatpush.msra.mxu0 %v3948
        %3972 = vmatmul.f32.gmra.mxu0 %v3901
        %v3973 = vpop.f32.mrf.mxu0
        %v3974 = vadd.f32 0.0, %v3973
        %3975 = vmatmul.f32.gmra.mxu0 %v3904
        %v3976 = vpop.f32.mrf.mxu0
        %v3977 = vadd.f32 0.0, %v3976
        %3978 = vmatmul.f32.gmra.mxu0 %v3907
        %v3979 = vpop.f32.mrf.mxu0
        %v3980 = vadd.f32 0.0, %v3979
        %3981 = vmatmul.f32.gmra.mxu0 %v3910
        %v3982 = vpop.f32.mrf.mxu0
        %v3983 = vadd.f32 0.0, %v3982
        %3984 = vmatmul.f32.gmra.mxu0 %v3913
        %v3985 = vpop.f32.mrf.mxu0
        %v3986 = vadd.f32 0.0, %v3985
        %3987 = vmatmul.f32.gmra.mxu0 %v3916
        %v3988 = vpop.f32.mrf.mxu0
        %v3989 = vadd.f32 0.0, %v3988
        %3990 = vmatmul.f32.gmra.mxu0 %v3919
        %v3991 = vpop.f32.mrf.mxu0
        %v3992 = vadd.f32 0.0, %v3991
        %3993 = vmatmul.f32.gmra.mxu0 %v3922
        %v3994 = vpop.f32.mrf.mxu0
        %v3995 = vadd.f32 0.0, %v3994
        %3996 = vmatmul.f32.gmra.mxu0 %v3925
        %v3997 = vpop.f32.mrf.mxu0
        %v3998 = vadd.f32 0.0, %v3997
        %3999 = vmatmul.f32.gmra.mxu0 %v3928
        %v4000 = vpop.f32.mrf.mxu0
        %v4001 = vadd.f32 0.0, %v4000
        %4002 = vmatmul.f32.gmra.mxu0 %v3931
        %v4003 = vpop.f32.mrf.mxu0
        %v4004 = vadd.f32 0.0, %v4003
        %4005 = vmatmul.f32.gmra.mxu0 %v3934
        %v4006 = vpop.f32.mrf.mxu0
        %v4007 = vadd.f32 0.0, %v4006
        %4008 = vmatmul.f32.gmra.mxu0 %v3937
        %v4009 = vpop.f32.mrf.mxu0
        %v4010 = vadd.f32 0.0, %v4009
        %4011 = vmatmul.f32.gmra.mxu0 %v3940
        %v4012 = vpop.f32.mrf.mxu0
        %v4013 = vadd.f32 0.0, %v4012
        %4014 = vmatmul.f32.gmra.mxu0 %v3943
        %v4015 = vpop.f32.mrf.mxu0
        %v4016 = vadd.f32 0.0, %v4015
        %4017 = vmatmul.f32.gmra.mxu0 %v3946
        %v4018 = vpop.f32.mrf.mxu0
        %v4019 = vadd.f32 0.0, %v4018
        %4020 = vdwg.mxu0
        %4021 = vmatpush.msra.mxu0 0.0
        %4022 = vmatpush.msra.mxu0 0.0
        %4023 = vmatpush.msra.mxu0 0.0
        %4024 = vmatpush.msra.mxu0 0.0
        %4025 = vmatpush.msra.mxu0 0.0
        %4026 = vmatpush.msra.mxu0 0.0
        %4027 = vmatpush.msra.mxu0 0.0
        %4028 = vmatpush.msra.mxu0 0.0
        %4029 = vmatpush.msra.mxu0 0.0
        %4030 = vmatpush.msra.mxu0 0.0
        %4031 = vmatpush.msra.mxu0 0.0
        %4032 = vmatpush.msra.mxu0 0.0
        %4033 = vmatpush.msra.mxu0 0.0
        %4034 = vmatpush.msra.mxu0 0.0
        %4035 = vmatpush.msra.mxu0 0.0
        %4036 = vmatpush.msra.mxu0 %v3950
        %4037 = vmatmul.f32.gmra.mxu0 %v3901
        %v4038 = vpop.f32.mrf.mxu0
        %v4039 = vadd.f32 0.0, %v4038
        %4040 = vmatmul.f32.gmra.mxu0 %v3904
        %v4041 = vpop.f32.mrf.mxu0
        %v4042 = vadd.f32 0.0, %v4041
        %4043 = vmatmul.f32.gmra.mxu0 %v3907
        %v4044 = vpop.f32.mrf.mxu0
        %v4045 = vadd.f32 0.0, %v4044
        %4046 = vmatmul.f32.gmra.mxu0 %v3910
        %v4047 = vpop.f32.mrf.mxu0
        %v4048 = vadd.f32 0.0, %v4047
        %4049 = vmatmul.f32.gmra.mxu0 %v3913
        %v4050 = vpop.f32.mrf.mxu0
        %v4051 = vadd.f32 0.0, %v4050
        %4052 = vmatmul.f32.gmra.mxu0 %v3916
        %v4053 = vpop.f32.mrf.mxu0
        %v4054 = vadd.f32 0.0, %v4053
        %4055 = vmatmul.f32.gmra.mxu0 %v3919
        %v4056 = vpop.f32.mrf.mxu0
        %v4057 = vadd.f32 0.0, %v4056
        %4058 = vmatmul.f32.gmra.mxu0 %v3922
        %v4059 = vpop.f32.mrf.mxu0
        %v4060 = vadd.f32 0.0, %v4059
        %4061 = vmatmul.f32.gmra.mxu0 %v3925
        %v4062 = vpop.f32.mrf.mxu0
        %v4063 = vadd.f32 0.0, %v4062
        %4064 = vmatmul.f32.gmra.mxu0 %v3928
        %v4065 = vpop.f32.mrf.mxu0
        %v4066 = vadd.f32 0.0, %v4065
        %4067 = vmatmul.f32.gmra.mxu0 %v3931
        %v4068 = vpop.f32.mrf.mxu0
        %v4069 = vadd.f32 0.0, %v4068
        %4070 = vmatmul.f32.gmra.mxu0 %v3934
        %v4071 = vpop.f32.mrf.mxu0
        %v4072 = vadd.f32 0.0, %v4071
        %4073 = vmatmul.f32.gmra.mxu0 %v3937
        %v4074 = vpop.f32.mrf.mxu0
        %v4075 = vadd.f32 0.0, %v4074
        %4076 = vmatmul.f32.gmra.mxu0 %v3940
        %v4077 = vpop.f32.mrf.mxu0
        %v4078 = vadd.f32 0.0, %v4077
        %4079 = vmatmul.f32.gmra.mxu0 %v3943
        %v4080 = vpop.f32.mrf.mxu0
        %v4081 = vadd.f32 0.0, %v4080
        %4082 = vmatmul.f32.gmra.mxu0 %v3946
        %v4083 = vpop.f32.mrf.mxu0
        %v4084 = vadd.f32 0.0, %v4083
        %4085 = vdwg.mxu0
        %4086 = vmatpush.msra.mxu0 0.0
        %4087 = vmatpush.msra.mxu0 0.0
        %4088 = vmatpush.msra.mxu0 0.0
        %4089 = vmatpush.msra.mxu0 0.0
        %4090 = vmatpush.msra.mxu0 0.0
        %4091 = vmatpush.msra.mxu0 0.0
        %4092 = vmatpush.msra.mxu0 0.0
        %4093 = vmatpush.msra.mxu0 0.0
        %4094 = vmatpush.msra.mxu0 0.0
        %4095 = vmatpush.msra.mxu0 0.0
        %4096 = vmatpush.msra.mxu0 0.0
        %4097 = vmatpush.msra.mxu0 0.0
        %4098 = vmatpush.msra.mxu0 0.0
        %4099 = vmatpush.msra.mxu0 0.0
        %4100 = vmatpush.msra.mxu0 0.0
        %4101 = vmatpush.msra.mxu0 %v3952
        %4102 = vmatmul.f32.gmra.mxu0 %v3901
        %v4103 = vpop.f32.mrf.mxu0
        %v4104 = vadd.f32 0.0, %v4103
        %4105 = vmatmul.f32.gmra.mxu0 %v3904
        %v4106 = vpop.f32.mrf.mxu0
        %v4107 = vadd.f32 0.0, %v4106
        %4108 = vmatmul.f32.gmra.mxu0 %v3907
        %v4109 = vpop.f32.mrf.mxu0
        %v4110 = vadd.f32 0.0, %v4109
        %4111 = vmatmul.f32.gmra.mxu0 %v3910
        %v4112 = vpop.f32.mrf.mxu0
        %v4113 = vadd.f32 0.0, %v4112
        %4114 = vmatmul.f32.gmra.mxu0 %v3913
        %v4115 = vpop.f32.mrf.mxu0
        %v4116 = vadd.f32 0.0, %v4115
        %4117 = vmatmul.f32.gmra.mxu0 %v3916
        %v4118 = vpop.f32.mrf.mxu0
        %v4119 = vadd.f32 0.0, %v4118
        %4120 = vmatmul.f32.gmra.mxu0 %v3919
        %v4121 = vpop.f32.mrf.mxu0
        %v4122 = vadd.f32 0.0, %v4121
        %4123 = vmatmul.f32.gmra.mxu0 %v3922
        %v4124 = vpop.f32.mrf.mxu0
        %v4125 = vadd.f32 0.0, %v4124
        %4126 = vmatmul.f32.gmra.mxu0 %v3925
        %v4127 = vpop.f32.mrf.mxu0
        %v4128 = vadd.f32 0.0, %v4127
        %4129 = vmatmul.f32.gmra.mxu0 %v3928
        %v4130 = vpop.f32.mrf.mxu0
        %v4131 = vadd.f32 0.0, %v4130
        %4132 = vmatmul.f32.gmra.mxu0 %v3931
        %v4133 = vpop.f32.mrf.mxu0
        %v4134 = vadd.f32 0.0, %v4133
        %4135 = vmatmul.f32.gmra.mxu0 %v3934
        %v4136 = vpop.f32.mrf.mxu0
        %v4137 = vadd.f32 0.0, %v4136
        %4138 = vmatmul.f32.gmra.mxu0 %v3937
        %v4139 = vpop.f32.mrf.mxu0
        %v4140 = vadd.f32 0.0, %v4139
        %4141 = vmatmul.f32.gmra.mxu0 %v3940
        %v4142 = vpop.f32.mrf.mxu0
        %v4143 = vadd.f32 0.0, %v4142
        %4144 = vmatmul.f32.gmra.mxu0 %v3943
        %v4145 = vpop.f32.mrf.mxu0
        %v4146 = vadd.f32 0.0, %v4145
        %4147 = vmatmul.f32.gmra.mxu0 %v3946
        %v4148 = vpop.f32.mrf.mxu0
        %v4149 = vadd.f32 0.0, %v4148
        %4150 = vdwg.mxu0
        %4151 = vmatpush.msra.mxu0 0.0
        %4152 = vmatpush.msra.mxu0 0.0
        %4153 = vmatpush.msra.mxu0 0.0
        %4154 = vmatpush.msra.mxu0 0.0
        %4155 = vmatpush.msra.mxu0 0.0
        %4156 = vmatpush.msra.mxu0 0.0
        %4157 = vmatpush.msra.mxu0 0.0
        %4158 = vmatpush.msra.mxu0 0.0
        %4159 = vmatpush.msra.mxu0 0.0
        %4160 = vmatpush.msra.mxu0 0.0
        %4161 = vmatpush.msra.mxu0 0.0
        %4162 = vmatpush.msra.mxu0 0.0
        %4163 = vmatpush.msra.mxu0 0.0
        %4164 = vmatpush.msra.mxu0 0.0
        %4165 = vmatpush.msra.mxu0 0.0
        %4166 = vmatpush.msra.mxu0 %v3954
        %4167 = vmatmul.f32.gmra.mxu0 %v3901
        %v4168 = vpop.f32.mrf.mxu0
        %v4169 = vadd.f32 0.0, %v4168
        %4170 = vmatmul.f32.gmra.mxu0 %v3904
        %v4171 = vpop.f32.mrf.mxu0
        %v4172 = vadd.f32 0.0, %v4171
        %4173 = vmatmul.f32.gmra.mxu0 %v3907
        %v4174 = vpop.f32.mrf.mxu0
        %v4175 = vadd.f32 0.0, %v4174
        %4176 = vmatmul.f32.gmra.mxu0 %v3910
        %v4177 = vpop.f32.mrf.mxu0
        %v4178 = vadd.f32 0.0, %v4177
        %4179 = vmatmul.f32.gmra.mxu0 %v3913
        %v4180 = vpop.f32.mrf.mxu0
        %v4181 = vadd.f32 0.0, %v4180
        %4182 = vmatmul.f32.gmra.mxu0 %v3916
        %v4183 = vpop.f32.mrf.mxu0
        %v4184 = vadd.f32 0.0, %v4183
        %4185 = vmatmul.f32.gmra.mxu0 %v3919
        %v4186 = vpop.f32.mrf.mxu0
        %v4187 = vadd.f32 0.0, %v4186
        %4188 = vmatmul.f32.gmra.mxu0 %v3922
        %v4189 = vpop.f32.mrf.mxu0
        %v4190 = vadd.f32 0.0, %v4189
        %4191 = vmatmul.f32.gmra.mxu0 %v3925
        %v4192 = vpop.f32.mrf.mxu0
        %v4193 = vadd.f32 0.0, %v4192
        %4194 = vmatmul.f32.gmra.mxu0 %v3928
        %v4195 = vpop.f32.mrf.mxu0
        %v4196 = vadd.f32 0.0, %v4195
        %4197 = vmatmul.f32.gmra.mxu0 %v3931
        %v4198 = vpop.f32.mrf.mxu0
        %v4199 = vadd.f32 0.0, %v4198
        %4200 = vmatmul.f32.gmra.mxu0 %v3934
        %v4201 = vpop.f32.mrf.mxu0
        %v4202 = vadd.f32 0.0, %v4201
        %4203 = vmatmul.f32.gmra.mxu0 %v3937
        %v4204 = vpop.f32.mrf.mxu0
        %v4205 = vadd.f32 0.0, %v4204
        %4206 = vmatmul.f32.gmra.mxu0 %v3940
        %v4207 = vpop.f32.mrf.mxu0
        %v4208 = vadd.f32 0.0, %v4207
        %4209 = vmatmul.f32.gmra.mxu0 %v3943
        %v4210 = vpop.f32.mrf.mxu0
        %v4211 = vadd.f32 0.0, %v4210
        %4212 = vmatmul.f32.gmra.mxu0 %v3946
        %v4213 = vpop.f32.mrf.mxu0
        %v4214 = vadd.f32 0.0, %v4213
        %4215 = vdwg.mxu0
        %v4216 = vld [vmem:[#allocation2] sm:$0xff]
        %v4217 = vld [vmem:[#allocation2 + $0x8] sm:$0xff]
        %v4218 = vld [vmem:[#allocation2 + $0x10] sm:$0xff]
        %v4219 = vld [vmem:[#allocation2 + $0x18] sm:$0xff]
        %v4220 = vld [vmem:[#allocation2 + $0x20] sm:$0xff]
        %v4221 = vld [vmem:[#allocation2 + $0x28] sm:$0xff]
        %v4222 = vld [vmem:[#allocation2 + $0x30] sm:$0xff]
        %v4223 = vld [vmem:[#allocation2 + $0x38] sm:$0xff]
        %v4224 = vld [vmem:[#allocation2 + $0x40] sm:$0xff]
        %v4225 = vld [vmem:[#allocation2 + $0x48] sm:$0xff]
        %v4226 = vld [vmem:[#allocation2 + $0x50] sm:$0xff]
        %v4227 = vld [vmem:[#allocation2 + $0x58] sm:$0xff]
        %v4228 = vld [vmem:[#allocation2 + $0x60] sm:$0xff]
        %v4229 = vld [vmem:[#allocation2 + $0x68] sm:$0xff]
        %v4230 = vld [vmem:[#allocation2 + $0x70] sm:$0xff]
        %v4231 = vld [vmem:[#allocation2 + $0x78] sm:$0xff]
        %v4232 = vld [vmem:[#allocation2 + $0x80] sm:$0xff]
        %v4233 = vld [vmem:[#allocation2 + $0x88] sm:$0xff]
        %v4234 = vld [vmem:[#allocation2 + $0x90] sm:$0xff]
        %v4235 = vld [vmem:[#allocation2 + $0x98] sm:$0xff]
        %v4236 = vld [vmem:[#allocation2 + $0xa0] sm:$0xff]
        %v4237 = vld [vmem:[#allocation2 + $0xa8] sm:$0xff]
        %v4238 = vld [vmem:[#allocation2 + $0xb0] sm:$0xff]
        %v4239 = vld [vmem:[#allocation2 + $0xb8] sm:$0xff]
        %v4240 = vld [vmem:[#allocation2 + $0xc0] sm:$0xff]
        %v4241 = vld [vmem:[#allocation2 + $0xc8] sm:$0xff]
        %v4242 = vld [vmem:[#allocation2 + $0xd0] sm:$0xff]
        %v4243 = vld [vmem:[#allocation2 + $0xd8] sm:$0xff]
        %v4244 = vld [vmem:[#allocation2 + $0xe0] sm:$0xff]
        %v4245 = vld [vmem:[#allocation2 + $0xe8] sm:$0xff]
        %v4246 = vld [vmem:[#allocation2 + $0xf0] sm:$0xff]
        %v4247 = vld [vmem:[#allocation2 + $0xf8] sm:$0xff]
        %v4248 = vld [vmem:[#allocation2 + $0x100] sm:$0xff]
        %v4249 = vld [vmem:[#allocation2 + $0x108] sm:$0xff]
        %v4250 = vld [vmem:[#allocation2 + $0x110] sm:$0xff]
        %v4251 = vld [vmem:[#allocation2 + $0x118] sm:$0xff]
        %v4252 = vld [vmem:[#allocation2 + $0x120] sm:$0xff]
        %v4253 = vld [vmem:[#allocation2 + $0x128] sm:$0xff]
        %v4254 = vld [vmem:[#allocation2 + $0x130] sm:$0xff]
        %v4255 = vld [vmem:[#allocation2 + $0x138] sm:$0xff]
        %v4256 = vld [vmem:[#allocation2 + $0x140] sm:$0xff]
        %v4257 = vld [vmem:[#allocation2 + $0x148] sm:$0xff]
        %v4258 = vld [vmem:[#allocation2 + $0x150] sm:$0xff]
        %v4259 = vld [vmem:[#allocation2 + $0x158] sm:$0xff]
        %v4260 = vld [vmem:[#allocation2 + $0x160] sm:$0xff]
        %v4261 = vld [vmem:[#allocation2 + $0x168] sm:$0xff]
        %v4262 = vld [vmem:[#allocation2 + $0x170] sm:$0xff]
        %v4263 = vld [vmem:[#allocation2 + $0x178] sm:$0xff]
        %v4264 = vld [vmem:[#allocation2 + $0x180] sm:$0xff]
        %v4265 = vld [vmem:[#allocation2 + $0x188] sm:$0xff]
        %v4266 = vld [vmem:[#allocation2 + $0x190] sm:$0xff]
        %v4267 = vld [vmem:[#allocation2 + $0x198] sm:$0xff]
        %v4268 = vld [vmem:[#allocation2 + $0x1a0] sm:$0xff]
        %v4269 = vld [vmem:[#allocation2 + $0x1a8] sm:$0xff]
        %v4270 = vld [vmem:[#allocation2 + $0x1b0] sm:$0xff]
        %v4271 = vld [vmem:[#allocation2 + $0x1b8] sm:$0xff]
        %v4272 = vld [vmem:[#allocation2 + $0x1c0] sm:$0xff]
        %v4273 = vld [vmem:[#allocation2 + $0x1c8] sm:$0xff]
        %v4274 = vld [vmem:[#allocation2 + $0x1d0] sm:$0xff]
        %v4275 = vld [vmem:[#allocation2 + $0x1d8] sm:$0xff]
        %v4276 = vld [vmem:[#allocation2 + $0x1e0] sm:$0xff]
        %v4277 = vld [vmem:[#allocation2 + $0x1e8] sm:$0xff]
        %v4278 = vld [vmem:[#allocation2 + $0x1f0] sm:$0xff]
        %v4279 = vld [vmem:[#allocation2 + $0x1f8] sm:$0xff]
        %v4280 = vadd.f32 %v4216, %v3974
        %v4281 = vadd.f32 %v4217, %v4039
        %v4282 = vadd.f32 %v4218, %v4104
        %v4283 = vadd.f32 %v4219, %v4169
        %v4284 = vadd.f32 %v4220, %v3977
        %v4285 = vadd.f32 %v4221, %v4042
        %v4286 = vadd.f32 %v4222, %v4107
        %v4287 = vadd.f32 %v4223, %v4172
        %v4288 = vadd.f32 %v4224, %v3980
        %v4289 = vadd.f32 %v4225, %v4045
        %v4290 = vadd.f32 %v4226, %v4110
        %v4291 = vadd.f32 %v4227, %v4175
        %v4292 = vadd.f32 %v4228, %v3983
        %v4293 = vadd.f32 %v4229, %v4048
        %v4294 = vadd.f32 %v4230, %v4113
        %v4295 = vadd.f32 %v4231, %v4178
        %v4296 = vadd.f32 %v4232, %v3986
        %v4297 = vadd.f32 %v4233, %v4051
        %v4298 = vadd.f32 %v4234, %v4116
        %v4299 = vadd.f32 %v4235, %v4181
        %v4300 = vadd.f32 %v4236, %v3989
        %v4301 = vadd.f32 %v4237, %v4054
        %v4302 = vadd.f32 %v4238, %v4119
        %v4303 = vadd.f32 %v4239, %v4184
        %v4304 = vadd.f32 %v4240, %v3992
        %v4305 = vadd.f32 %v4241, %v4057
        %v4306 = vadd.f32 %v4242, %v4122
        %v4307 = vadd.f32 %v4243, %v4187
        %v4308 = vadd.f32 %v4244, %v3995
        %v4309 = vadd.f32 %v4245, %v4060
        %v4310 = vadd.f32 %v4246, %v4125
        %v4311 = vadd.f32 %v4247, %v4190
        %v4312 = vadd.f32 %v4248, %v3998
        %v4313 = vadd.f32 %v4249, %v4063
        %v4314 = vadd.f32 %v4250, %v4128
        %v4315 = vadd.f32 %v4251, %v4193
        %v4316 = vadd.f32 %v4252, %v4001
        %v4317 = vadd.f32 %v4253, %v4066
        %v4318 = vadd.f32 %v4254, %v4131
        %v4319 = vadd.f32 %v4255, %v4196
        %v4320 = vadd.f32 %v4256, %v4004
        %v4321 = vadd.f32 %v4257, %v4069
        %v4322 = vadd.f32 %v4258, %v4134
        %v4323 = vadd.f32 %v4259, %v4199
        %v4324 = vadd.f32 %v4260, %v4007
        %v4325 = vadd.f32 %v4261, %v4072
        %v4326 = vadd.f32 %v4262, %v4137
        %v4327 = vadd.f32 %v4263, %v4202
        %v4328 = vadd.f32 %v4264, %v4010
        %v4329 = vadd.f32 %v4265, %v4075
        %v4330 = vadd.f32 %v4266, %v4140
        %v4331 = vadd.f32 %v4267, %v4205
        %v4332 = vadd.f32 %v4268, %v4013
        %v4333 = vadd.f32 %v4269, %v4078
        %v4334 = vadd.f32 %v4270, %v4143
        %v4335 = vadd.f32 %v4271, %v4208
        %v4336 = vadd.f32 %v4272, %v4016
        %v4337 = vadd.f32 %v4273, %v4081
        %v4338 = vadd.f32 %v4274, %v4146
        %v4339 = vadd.f32 %v4275, %v4211
        %v4340 = vadd.f32 %v4276, %v4019
        %v4341 = vadd.f32 %v4277, %v4084
        %v4342 = vadd.f32 %v4278, %v4149
        %v4343 = vadd.f32 %v4279, %v4214
        %4344 = vst [vmem:[#allocation2] sm:$0xff] %v4280
        %4345 = vst [vmem:[#allocation2 + $0x8] sm:$0xff] %v4281
        %4346 = vst [vmem:[#allocation2 + $0x10] sm:$0xff] %v4282
        %4347 = vst [vmem:[#allocation2 + $0x18] sm:$0xff] %v4283
        %4348 = vst [vmem:[#allocation2 + $0x20] sm:$0xff] %v4284
        %4349 = vst [vmem:[#allocation2 + $0x28] sm:$0xff] %v4285
        %4350 = vst [vmem:[#allocation2 + $0x30] sm:$0xff] %v4286
        %4351 = vst [vmem:[#allocation2 + $0x38] sm:$0xff] %v4287
        %4352 = vst [vmem:[#allocation2 + $0x40] sm:$0xff] %v4288
        %4353 = vst [vmem:[#allocation2 + $0x48] sm:$0xff] %v4289
        %4354 = vst [vmem:[#allocation2 + $0x50] sm:$0xff] %v4290
        %4355 = vst [vmem:[#allocation2 + $0x58] sm:$0xff] %v4291
        %4356 = vst [vmem:[#allocation2 + $0x60] sm:$0xff] %v4292
        %4357 = vst [vmem:[#allocation2 + $0x68] sm:$0xff] %v4293
        %4358 = vst [vmem:[#allocation2 + $0x70] sm:$0xff] %v4294
        %4359 = vst [vmem:[#allocation2 + $0x78] sm:$0xff] %v4295
        %4360 = vst [vmem:[#allocation2 + $0x80] sm:$0xff] %v4296
        %4361 = vst [vmem:[#allocation2 + $0x88] sm:$0xff] %v4297
        %4362 = vst [vmem:[#allocation2 + $0x90] sm:$0xff] %v4298
        %4363 = vst [vmem:[#allocation2 + $0x98] sm:$0xff] %v4299
        %4364 = vst [vmem:[#allocation2 + $0xa0] sm:$0xff] %v4300
        %4365 = vst [vmem:[#allocation2 + $0xa8] sm:$0xff] %v4301
        %4366 = vst [vmem:[#allocation2 + $0xb0] sm:$0xff] %v4302
        %4367 = vst [vmem:[#allocation2 + $0xb8] sm:$0xff] %v4303
        %4368 = vst [vmem:[#allocation2 + $0xc0] sm:$0xff] %v4304
        %4369 = vst [vmem:[#allocation2 + $0xc8] sm:$0xff] %v4305
        %4370 = vst [vmem:[#allocation2 + $0xd0] sm:$0xff] %v4306
        %4371 = vst [vmem:[#allocation2 + $0xd8] sm:$0xff] %v4307
        %4372 = vst [vmem:[#allocation2 + $0xe0] sm:$0xff] %v4308
        %4373 = vst [vmem:[#allocation2 + $0xe8] sm:$0xff] %v4309
        %4374 = vst [vmem:[#allocation2 + $0xf0] sm:$0xff] %v4310
        %4375 = vst [vmem:[#allocation2 + $0xf8] sm:$0xff] %v4311
        %4376 = vst [vmem:[#allocation2 + $0x100] sm:$0xff] %v4312
        %4377 = vst [vmem:[#allocation2 + $0x108] sm:$0xff] %v4313
        %4378 = vst [vmem:[#allocation2 + $0x110] sm:$0xff] %v4314
        %4379 = vst [vmem:[#allocation2 + $0x118] sm:$0xff] %v4315
        %4380 = vst [vmem:[#allocation2 + $0x120] sm:$0xff] %v4316
        %4381 = vst [vmem:[#allocation2 + $0x128] sm:$0xff] %v4317
        %4382 = vst [vmem:[#allocation2 + $0x130] sm:$0xff] %v4318
        %4383 = vst [vmem:[#allocation2 + $0x138] sm:$0xff] %v4319
        %4384 = vst [vmem:[#allocation2 + $0x140] sm:$0xff] %v4320
        %4385 = vst [vmem:[#allocation2 + $0x148] sm:$0xff] %v4321
        %4386 = vst [vmem:[#allocation2 + $0x150] sm:$0xff] %v4322
        %4387 = vst [vmem:[#allocation2 + $0x158] sm:$0xff] %v4323
        %4388 = vst [vmem:[#allocation2 + $0x160] sm:$0xff] %v4324
        %4389 = vst [vmem:[#allocation2 + $0x168] sm:$0xff] %v4325
        %4390 = vst [vmem:[#allocation2 + $0x170] sm:$0xff] %v4326
        %4391 = vst [vmem:[#allocation2 + $0x178] sm:$0xff] %v4327
        %4392 = vst [vmem:[#allocation2 + $0x180] sm:$0xff] %v4328
        %4393 = vst [vmem:[#allocation2 + $0x188] sm:$0xff] %v4329
        %4394 = vst [vmem:[#allocation2 + $0x190] sm:$0xff] %v4330
        %4395 = vst [vmem:[#allocation2 + $0x198] sm:$0xff] %v4331
        %4396 = vst [vmem:[#allocation2 + $0x1a0] sm:$0xff] %v4332
        %4397 = vst [vmem:[#allocation2 + $0x1a8] sm:$0xff] %v4333
        %4398 = vst [vmem:[#allocation2 + $0x1b0] sm:$0xff] %v4334
        %4399 = vst [vmem:[#allocation2 + $0x1b8] sm:$0xff] %v4335
        %4400 = vst [vmem:[#allocation2 + $0x1c0] sm:$0xff] %v4336
        %4401 = vst [vmem:[#allocation2 + $0x1c8] sm:$0xff] %v4337
        %4402 = vst [vmem:[#allocation2 + $0x1d0] sm:$0xff] %v4338
        %4403 = vst [vmem:[#allocation2 + $0x1d8] sm:$0xff] %v4339
        %4404 = vst [vmem:[#allocation2 + $0x1e0] sm:$0xff] %v4340
        %4405 = vst [vmem:[#allocation2 + $0x1e8] sm:$0xff] %v4341
        %4406 = vst [vmem:[#allocation2 + $0x1f0] sm:$0xff] %v4342
        %4407 = vst [vmem:[#allocation2 + $0x1f8] sm:$0xff] %v4343
        %v4408 = vld [vmem:[%s3335 + $0x2] sm:$0xff]
        %v4409 = vld [vmem:[%s3335 + $0xa] sm:$0xff]
        %v4410 = vld [vmem:[%s3335 + $0x1a] sm:$0xff]
        %v4411 = vld [vmem:[%s3335 + $0x22] sm:$0xff]
        %v4412 = vld [vmem:[%s3335 + $0x32] sm:$0xff]
        %v4413 = vld [vmem:[%s3335 + $0x3a] sm:$0xff]
        %v4414 = vld [vmem:[%s3335 + $0x4a] sm:$0xff]
        %v4415 = vld [vmem:[%s3335 + $0x52] sm:$0xff]
        %v4416 = vld [vmem:[%s3335 + $0x62] sm:$0xff]
        %v4417 = vld [vmem:[%s3335 + $0x6a] sm:$0xff]
        %v4418 = vld [vmem:[%s3335 + $0x7a] sm:$0xff]
        %v4419 = vld [vmem:[%s3335 + $0x82] sm:$0xff]
        %v4420 = vld [vmem:[%s3335 + $0x92] sm:$0xff]
        %v4421 = vld [vmem:[%s3335 + $0x9a] sm:$0xff]
        %v4422 = vld [vmem:[%s3335 + $0xaa] sm:$0xff]
        %v4423 = vld [vmem:[%s3335 + $0xb2] sm:$0xff]
        %s4424 = scalar_lea.vmem %s1, 128
        %v4425 = vld [vmem:[%s4424] sm:$0xff]
        %v4426 = vld [vmem:[%s4424 + $0x8] sm:$0xff]
        %4429 = vst [vmem:[#allocation1] ss:$2 sm:$0xff] %v4425
        %s4430 = scalar_lea.vmem [#allocation1], 16
        %4431 = vst [vmem:[%s4430] ss:$2 sm:$0xff] %v4426
        %v4432 = vld.sshfl [vmem:[#allocation1] sm:$0xff pattern:$0x75316420]
        %v4433 = vld.sshfl [vmem:[#allocation1 + $0x8] sm:$0xff pattern:$0x75316420]
        %v4434 = vld.sshfl [vmem:[#allocation1 + $0x10] sm:$0xff pattern:$0x75316420]
        %v4435 = vld.sshfl [vmem:[#allocation1 + $0x18] sm:$0xff pattern:$0x75316420]
        %v4437 = vsel %vm268, %v4408, 0
        %v4440 = vsel %vm268, %v4409, 0
        %v4443 = vsel %vm268, %v4410, 0
        %v4446 = vsel %vm268, %v4411, 0
        %v4449 = vsel %vm268, %v4412, 0
        %v4452 = vsel %vm268, %v4413, 0
        %v4455 = vsel %vm268, %v4414, 0
        %v4458 = vsel %vm268, %v4415, 0
        %v4461 = vsel %vm268, %v4416, 0
        %v4464 = vsel %vm268, %v4417, 0
        %v4467 = vsel %vm268, %v4418, 0
        %v4470 = vsel %vm268, %v4419, 0
        %v4473 = vsel %vm268, %v4420, 0
        %v4476 = vsel %vm268, %v4421, 0
        %v4479 = vsel %vm268, %v4422, 0
        %v4482 = vsel %vm268, %v4423, 0
        %v4484 = vsel %vm317, %v4432, 0
        %v4486 = vsel %vm317, %v4433, 0
        %v4488 = vsel %vm317, %v4434, 0
        %v4490 = vsel %vm317, %v4435, 0
        %4492 = vmatpush.msra.mxu0 0.0
        %4493 = vmatpush.msra.mxu0 0.0
        %4494 = vmatpush.msra.mxu0 0.0
        %4495 = vmatpush.msra.mxu0 0.0
        %4496 = vmatpush.msra.mxu0 0.0
        %4497 = vmatpush.msra.mxu0 0.0
        %4498 = vmatpush.msra.mxu0 0.0
        %4499 = vmatpush.msra.mxu0 0.0
        %4500 = vmatpush.msra.mxu0 0.0
        %4501 = vmatpush.msra.mxu0 0.0
        %4502 = vmatpush.msra.mxu0 0.0
        %4503 = vmatpush.msra.mxu0 0.0
        %4504 = vmatpush.msra.mxu0 0.0
        %4505 = vmatpush.msra.mxu0 0.0
        %4506 = vmatpush.msra.mxu0 0.0
        %4507 = vmatpush.msra.mxu0 %v4484
        %4508 = vmatmul.f32.gmra.mxu0 %v4437
        %v4509 = vpop.f32.mrf.mxu0
        %v4510 = vadd.f32 0.0, %v4509
        %4511 = vmatmul.f32.gmra.mxu0 %v4440
        %v4512 = vpop.f32.mrf.mxu0
        %v4513 = vadd.f32 0.0, %v4512
        %4514 = vmatmul.f32.gmra.mxu0 %v4443
        %v4515 = vpop.f32.mrf.mxu0
        %v4516 = vadd.f32 0.0, %v4515
        %4517 = vmatmul.f32.gmra.mxu0 %v4446
        %v4518 = vpop.f32.mrf.mxu0
        %v4519 = vadd.f32 0.0, %v4518
        %4520 = vmatmul.f32.gmra.mxu0 %v4449
        %v4521 = vpop.f32.mrf.mxu0
        %v4522 = vadd.f32 0.0, %v4521
        %4523 = vmatmul.f32.gmra.mxu0 %v4452
        %v4524 = vpop.f32.mrf.mxu0
        %v4525 = vadd.f32 0.0, %v4524
        %4526 = vmatmul.f32.gmra.mxu0 %v4455
        %v4527 = vpop.f32.mrf.mxu0
        %v4528 = vadd.f32 0.0, %v4527
        %4529 = vmatmul.f32.gmra.mxu0 %v4458
        %v4530 = vpop.f32.mrf.mxu0
        %v4531 = vadd.f32 0.0, %v4530
        %4532 = vmatmul.f32.gmra.mxu0 %v4461
        %v4533 = vpop.f32.mrf.mxu0
        %v4534 = vadd.f32 0.0, %v4533
        %4535 = vmatmul.f32.gmra.mxu0 %v4464
        %v4536 = vpop.f32.mrf.mxu0
        %v4537 = vadd.f32 0.0, %v4536
        %4538 = vmatmul.f32.gmra.mxu0 %v4467
        %v4539 = vpop.f32.mrf.mxu0
        %v4540 = vadd.f32 0.0, %v4539
        %4541 = vmatmul.f32.gmra.mxu0 %v4470
        %v4542 = vpop.f32.mrf.mxu0
        %v4543 = vadd.f32 0.0, %v4542
        %4544 = vmatmul.f32.gmra.mxu0 %v4473
        %v4545 = vpop.f32.mrf.mxu0
        %v4546 = vadd.f32 0.0, %v4545
        %4547 = vmatmul.f32.gmra.mxu0 %v4476
        %v4548 = vpop.f32.mrf.mxu0
        %v4549 = vadd.f32 0.0, %v4548
        %4550 = vmatmul.f32.gmra.mxu0 %v4479
        %v4551 = vpop.f32.mrf.mxu0
        %v4552 = vadd.f32 0.0, %v4551
        %4553 = vmatmul.f32.gmra.mxu0 %v4482
        %v4554 = vpop.f32.mrf.mxu0
        %v4555 = vadd.f32 0.0, %v4554
        %4556 = vdwg.mxu0
        %4557 = vmatpush.msra.mxu0 0.0
        %4558 = vmatpush.msra.mxu0 0.0
        %4559 = vmatpush.msra.mxu0 0.0
        %4560 = vmatpush.msra.mxu0 0.0
        %4561 = vmatpush.msra.mxu0 0.0
        %4562 = vmatpush.msra.mxu0 0.0
        %4563 = vmatpush.msra.mxu0 0.0
        %4564 = vmatpush.msra.mxu0 0.0
        %4565 = vmatpush.msra.mxu0 0.0
        %4566 = vmatpush.msra.mxu0 0.0
        %4567 = vmatpush.msra.mxu0 0.0
        %4568 = vmatpush.msra.mxu0 0.0
        %4569 = vmatpush.msra.mxu0 0.0
        %4570 = vmatpush.msra.mxu0 0.0
        %4571 = vmatpush.msra.mxu0 0.0
        %4572 = vmatpush.msra.mxu0 %v4486
        %4573 = vmatmul.f32.gmra.mxu0 %v4437
        %v4574 = vpop.f32.mrf.mxu0
        %v4575 = vadd.f32 0.0, %v4574
        %4576 = vmatmul.f32.gmra.mxu0 %v4440
        %v4577 = vpop.f32.mrf.mxu0
        %v4578 = vadd.f32 0.0, %v4577
        %4579 = vmatmul.f32.gmra.mxu0 %v4443
        %v4580 = vpop.f32.mrf.mxu0
        %v4581 = vadd.f32 0.0, %v4580
        %4582 = vmatmul.f32.gmra.mxu0 %v4446
        %v4583 = vpop.f32.mrf.mxu0
        %v4584 = vadd.f32 0.0, %v4583
        %4585 = vmatmul.f32.gmra.mxu0 %v4449
        %v4586 = vpop.f32.mrf.mxu0
        %v4587 = vadd.f32 0.0, %v4586
        %4588 = vmatmul.f32.gmra.mxu0 %v4452
        %v4589 = vpop.f32.mrf.mxu0
        %v4590 = vadd.f32 0.0, %v4589
        %4591 = vmatmul.f32.gmra.mxu0 %v4455
        %v4592 = vpop.f32.mrf.mxu0
        %v4593 = vadd.f32 0.0, %v4592
        %4594 = vmatmul.f32.gmra.mxu0 %v4458
        %v4595 = vpop.f32.mrf.mxu0
        %v4596 = vadd.f32 0.0, %v4595
        %4597 = vmatmul.f32.gmra.mxu0 %v4461
        %v4598 = vpop.f32.mrf.mxu0
        %v4599 = vadd.f32 0.0, %v4598
        %4600 = vmatmul.f32.gmra.mxu0 %v4464
        %v4601 = vpop.f32.mrf.mxu0
        %v4602 = vadd.f32 0.0, %v4601
        %4603 = vmatmul.f32.gmra.mxu0 %v4467
        %v4604 = vpop.f32.mrf.mxu0
        %v4605 = vadd.f32 0.0, %v4604
        %4606 = vmatmul.f32.gmra.mxu0 %v4470
        %v4607 = vpop.f32.mrf.mxu0
        %v4608 = vadd.f32 0.0, %v4607
        %4609 = vmatmul.f32.gmra.mxu0 %v4473
        %v4610 = vpop.f32.mrf.mxu0
        %v4611 = vadd.f32 0.0, %v4610
        %4612 = vmatmul.f32.gmra.mxu0 %v4476
        %v4613 = vpop.f32.mrf.mxu0
        %v4614 = vadd.f32 0.0, %v4613
        %4615 = vmatmul.f32.gmra.mxu0 %v4479
        %v4616 = vpop.f32.mrf.mxu0
        %v4617 = vadd.f32 0.0, %v4616
        %4618 = vmatmul.f32.gmra.mxu0 %v4482
        %v4619 = vpop.f32.mrf.mxu0
        %v4620 = vadd.f32 0.0, %v4619
        %4621 = vdwg.mxu0
        %4622 = vmatpush.msra.mxu0 0.0
        %4623 = vmatpush.msra.mxu0 0.0
        %4624 = vmatpush.msra.mxu0 0.0
        %4625 = vmatpush.msra.mxu0 0.0
        %4626 = vmatpush.msra.mxu0 0.0
        %4627 = vmatpush.msra.mxu0 0.0
        %4628 = vmatpush.msra.mxu0 0.0
        %4629 = vmatpush.msra.mxu0 0.0
        %4630 = vmatpush.msra.mxu0 0.0
        %4631 = vmatpush.msra.mxu0 0.0
        %4632 = vmatpush.msra.mxu0 0.0
        %4633 = vmatpush.msra.mxu0 0.0
        %4634 = vmatpush.msra.mxu0 0.0
        %4635 = vmatpush.msra.mxu0 0.0
        %4636 = vmatpush.msra.mxu0 0.0
        %4637 = vmatpush.msra.mxu0 %v4488
        %4638 = vmatmul.f32.gmra.mxu0 %v4437
        %v4639 = vpop.f32.mrf.mxu0
        %v4640 = vadd.f32 0.0, %v4639
        %4641 = vmatmul.f32.gmra.mxu0 %v4440
        %v4642 = vpop.f32.mrf.mxu0
        %v4643 = vadd.f32 0.0, %v4642
        %4644 = vmatmul.f32.gmra.mxu0 %v4443
        %v4645 = vpop.f32.mrf.mxu0
        %v4646 = vadd.f32 0.0, %v4645
        %4647 = vmatmul.f32.gmra.mxu0 %v4446
        %v4648 = vpop.f32.mrf.mxu0
        %v4649 = vadd.f32 0.0, %v4648
        %4650 = vmatmul.f32.gmra.mxu0 %v4449
        %v4651 = vpop.f32.mrf.mxu0
        %v4652 = vadd.f32 0.0, %v4651
        %4653 = vmatmul.f32.gmra.mxu0 %v4452
        %v4654 = vpop.f32.mrf.mxu0
        %v4655 = vadd.f32 0.0, %v4654
        %4656 = vmatmul.f32.gmra.mxu0 %v4455
        %v4657 = vpop.f32.mrf.mxu0
        %v4658 = vadd.f32 0.0, %v4657
        %4659 = vmatmul.f32.gmra.mxu0 %v4458
        %v4660 = vpop.f32.mrf.mxu0
        %v4661 = vadd.f32 0.0, %v4660
        %4662 = vmatmul.f32.gmra.mxu0 %v4461
        %v4663 = vpop.f32.mrf.mxu0
        %v4664 = vadd.f32 0.0, %v4663
        %4665 = vmatmul.f32.gmra.mxu0 %v4464
        %v4666 = vpop.f32.mrf.mxu0
        %v4667 = vadd.f32 0.0, %v4666
        %4668 = vmatmul.f32.gmra.mxu0 %v4467
        %v4669 = vpop.f32.mrf.mxu0
        %v4670 = vadd.f32 0.0, %v4669
        %4671 = vmatmul.f32.gmra.mxu0 %v4470
        %v4672 = vpop.f32.mrf.mxu0
        %v4673 = vadd.f32 0.0, %v4672
        %4674 = vmatmul.f32.gmra.mxu0 %v4473
        %v4675 = vpop.f32.mrf.mxu0
        %v4676 = vadd.f32 0.0, %v4675
        %4677 = vmatmul.f32.gmra.mxu0 %v4476
        %v4678 = vpop.f32.mrf.mxu0
        %v4679 = vadd.f32 0.0, %v4678
        %4680 = vmatmul.f32.gmra.mxu0 %v4479
        %v4681 = vpop.f32.mrf.mxu0
        %v4682 = vadd.f32 0.0, %v4681
        %4683 = vmatmul.f32.gmra.mxu0 %v4482
        %v4684 = vpop.f32.mrf.mxu0
        %v4685 = vadd.f32 0.0, %v4684
        %4686 = vdwg.mxu0
        %4687 = vmatpush.msra.mxu0 0.0
        %4688 = vmatpush.msra.mxu0 0.0
        %4689 = vmatpush.msra.mxu0 0.0
        %4690 = vmatpush.msra.mxu0 0.0
        %4691 = vmatpush.msra.mxu0 0.0
        %4692 = vmatpush.msra.mxu0 0.0
        %4693 = vmatpush.msra.mxu0 0.0
        %4694 = vmatpush.msra.mxu0 0.0
        %4695 = vmatpush.msra.mxu0 0.0
        %4696 = vmatpush.msra.mxu0 0.0
        %4697 = vmatpush.msra.mxu0 0.0
        %4698 = vmatpush.msra.mxu0 0.0
        %4699 = vmatpush.msra.mxu0 0.0
        %4700 = vmatpush.msra.mxu0 0.0
        %4701 = vmatpush.msra.mxu0 0.0
        %4702 = vmatpush.msra.mxu0 %v4490
        %4703 = vmatmul.f32.gmra.mxu0 %v4437
        %v4704 = vpop.f32.mrf.mxu0
        %v4705 = vadd.f32 0.0, %v4704
        %4706 = vmatmul.f32.gmra.mxu0 %v4440
        %v4707 = vpop.f32.mrf.mxu0
        %v4708 = vadd.f32 0.0, %v4707
        %4709 = vmatmul.f32.gmra.mxu0 %v4443
        %v4710 = vpop.f32.mrf.mxu0
        %v4711 = vadd.f32 0.0, %v4710
        %4712 = vmatmul.f32.gmra.mxu0 %v4446
        %v4713 = vpop.f32.mrf.mxu0
        %v4714 = vadd.f32 0.0, %v4713
        %4715 = vmatmul.f32.gmra.mxu0 %v4449
        %v4716 = vpop.f32.mrf.mxu0
        %v4717 = vadd.f32 0.0, %v4716
        %4718 = vmatmul.f32.gmra.mxu0 %v4452
        %v4719 = vpop.f32.mrf.mxu0
        %v4720 = vadd.f32 0.0, %v4719
        %4721 = vmatmul.f32.gmra.mxu0 %v4455
        %v4722 = vpop.f32.mrf.mxu0
        %v4723 = vadd.f32 0.0, %v4722
        %4724 = vmatmul.f32.gmra.mxu0 %v4458
        %v4725 = vpop.f32.mrf.mxu0
        %v4726 = vadd.f32 0.0, %v4725
        %4727 = vmatmul.f32.gmra.mxu0 %v4461
        %v4728 = vpop.f32.mrf.mxu0
        %v4729 = vadd.f32 0.0, %v4728
        %4730 = vmatmul.f32.gmra.mxu0 %v4464
        %v4731 = vpop.f32.mrf.mxu0
        %v4732 = vadd.f32 0.0, %v4731
        %4733 = vmatmul.f32.gmra.mxu0 %v4467
        %v4734 = vpop.f32.mrf.mxu0
        %v4735 = vadd.f32 0.0, %v4734
        %4736 = vmatmul.f32.gmra.mxu0 %v4470
        %v4737 = vpop.f32.mrf.mxu0
        %v4738 = vadd.f32 0.0, %v4737
        %4739 = vmatmul.f32.gmra.mxu0 %v4473
        %v4740 = vpop.f32.mrf.mxu0
        %v4741 = vadd.f32 0.0, %v4740
        %4742 = vmatmul.f32.gmra.mxu0 %v4476
        %v4743 = vpop.f32.mrf.mxu0
        %v4744 = vadd.f32 0.0, %v4743
        %4745 = vmatmul.f32.gmra.mxu0 %v4479
        %v4746 = vpop.f32.mrf.mxu0
        %v4747 = vadd.f32 0.0, %v4746
        %4748 = vmatmul.f32.gmra.mxu0 %v4482
        %v4749 = vpop.f32.mrf.mxu0
        %v4750 = vadd.f32 0.0, %v4749
        %4751 = vdwg.mxu0
        %v4752 = vld [vmem:[#allocation2] sm:$0xff]
        %v4753 = vld [vmem:[#allocation2 + $0x8] sm:$0xff]
        %v4754 = vld [vmem:[#allocation2 + $0x10] sm:$0xff]
        %v4755 = vld [vmem:[#allocation2 + $0x18] sm:$0xff]
        %v4756 = vld [vmem:[#allocation2 + $0x20] sm:$0xff]
        %v4757 = vld [vmem:[#allocation2 + $0x28] sm:$0xff]
        %v4758 = vld [vmem:[#allocation2 + $0x30] sm:$0xff]
        %v4759 = vld [vmem:[#allocation2 + $0x38] sm:$0xff]
        %v4760 = vld [vmem:[#allocation2 + $0x40] sm:$0xff]
        %v4761 = vld [vmem:[#allocation2 + $0x48] sm:$0xff]
        %v4762 = vld [vmem:[#allocation2 + $0x50] sm:$0xff]
        %v4763 = vld [vmem:[#allocation2 + $0x58] sm:$0xff]
        %v4764 = vld [vmem:[#allocation2 + $0x60] sm:$0xff]
        %v4765 = vld [vmem:[#allocation2 + $0x68] sm:$0xff]
        %v4766 = vld [vmem:[#allocation2 + $0x70] sm:$0xff]
        %v4767 = vld [vmem:[#allocation2 + $0x78] sm:$0xff]
        %v4768 = vld [vmem:[#allocation2 + $0x80] sm:$0xff]
        %v4769 = vld [vmem:[#allocation2 + $0x88] sm:$0xff]
        %v4770 = vld [vmem:[#allocation2 + $0x90] sm:$0xff]
        %v4771 = vld [vmem:[#allocation2 + $0x98] sm:$0xff]
        %v4772 = vld [vmem:[#allocation2 + $0xa0] sm:$0xff]
        %v4773 = vld [vmem:[#allocation2 + $0xa8] sm:$0xff]
        %v4774 = vld [vmem:[#allocation2 + $0xb0] sm:$0xff]
        %v4775 = vld [vmem:[#allocation2 + $0xb8] sm:$0xff]
        %v4776 = vld [vmem:[#allocation2 + $0xc0] sm:$0xff]
        %v4777 = vld [vmem:[#allocation2 + $0xc8] sm:$0xff]
        %v4778 = vld [vmem:[#allocation2 + $0xd0] sm:$0xff]
        %v4779 = vld [vmem:[#allocation2 + $0xd8] sm:$0xff]
        %v4780 = vld [vmem:[#allocation2 + $0xe0] sm:$0xff]
        %v4781 = vld [vmem:[#allocation2 + $0xe8] sm:$0xff]
        %v4782 = vld [vmem:[#allocation2 + $0xf0] sm:$0xff]
        %v4783 = vld [vmem:[#allocation2 + $0xf8] sm:$0xff]
        %v4784 = vld [vmem:[#allocation2 + $0x100] sm:$0xff]
        %v4785 = vld [vmem:[#allocation2 + $0x108] sm:$0xff]
        %v4786 = vld [vmem:[#allocation2 + $0x110] sm:$0xff]
        %v4787 = vld [vmem:[#allocation2 + $0x118] sm:$0xff]
        %v4788 = vld [vmem:[#allocation2 + $0x120] sm:$0xff]
        %v4789 = vld [vmem:[#allocation2 + $0x128] sm:$0xff]
        %v4790 = vld [vmem:[#allocation2 + $0x130] sm:$0xff]
        %v4791 = vld [vmem:[#allocation2 + $0x138] sm:$0xff]
        %v4792 = vld [vmem:[#allocation2 + $0x140] sm:$0xff]
        %v4793 = vld [vmem:[#allocation2 + $0x148] sm:$0xff]
        %v4794 = vld [vmem:[#allocation2 + $0x150] sm:$0xff]
        %v4795 = vld [vmem:[#allocation2 + $0x158] sm:$0xff]
        %v4796 = vld [vmem:[#allocation2 + $0x160] sm:$0xff]
        %v4797 = vld [vmem:[#allocation2 + $0x168] sm:$0xff]
        %v4798 = vld [vmem:[#allocation2 + $0x170] sm:$0xff]
        %v4799 = vld [vmem:[#allocation2 + $0x178] sm:$0xff]
        %v4800 = vld [vmem:[#allocation2 + $0x180] sm:$0xff]
        %v4801 = vld [vmem:[#allocation2 + $0x188] sm:$0xff]
        %v4802 = vld [vmem:[#allocation2 + $0x190] sm:$0xff]
        %v4803 = vld [vmem:[#allocation2 + $0x198] sm:$0xff]
        %v4804 = vld [vmem:[#allocation2 + $0x1a0] sm:$0xff]
        %v4805 = vld [vmem:[#allocation2 + $0x1a8] sm:$0xff]
        %v4806 = vld [vmem:[#allocation2 + $0x1b0] sm:$0xff]
        %v4807 = vld [vmem:[#allocation2 + $0x1b8] sm:$0xff]
        %v4808 = vld [vmem:[#allocation2 + $0x1c0] sm:$0xff]
        %v4809 = vld [vmem:[#allocation2 + $0x1c8] sm:$0xff]
        %v4810 = vld [vmem:[#allocation2 + $0x1d0] sm:$0xff]
        %v4811 = vld [vmem:[#allocation2 + $0x1d8] sm:$0xff]
        %v4812 = vld [vmem:[#allocation2 + $0x1e0] sm:$0xff]
        %v4813 = vld [vmem:[#allocation2 + $0x1e8] sm:$0xff]
        %v4814 = vld [vmem:[#allocation2 + $0x1f0] sm:$0xff]
        %v4815 = vld [vmem:[#allocation2 + $0x1f8] sm:$0xff]
        %v4816 = vadd.f32 %v4752, %v4510
        %v4817 = vadd.f32 %v4753, %v4575
        %v4818 = vadd.f32 %v4754, %v4640
        %v4819 = vadd.f32 %v4755, %v4705
        %v4820 = vadd.f32 %v4756, %v4513
        %v4821 = vadd.f32 %v4757, %v4578
        %v4822 = vadd.f32 %v4758, %v4643
        %v4823 = vadd.f32 %v4759, %v4708
        %v4824 = vadd.f32 %v4760, %v4516
        %v4825 = vadd.f32 %v4761, %v4581
        %v4826 = vadd.f32 %v4762, %v4646
        %v4827 = vadd.f32 %v4763, %v4711
        %v4828 = vadd.f32 %v4764, %v4519
        %v4829 = vadd.f32 %v4765, %v4584
        %v4830 = vadd.f32 %v4766, %v4649
        %v4831 = vadd.f32 %v4767, %v4714
        %v4832 = vadd.f32 %v4768, %v4522
        %v4833 = vadd.f32 %v4769, %v4587
        %v4834 = vadd.f32 %v4770, %v4652
        %v4835 = vadd.f32 %v4771, %v4717
        %v4836 = vadd.f32 %v4772, %v4525
        %v4837 = vadd.f32 %v4773, %v4590
        %v4838 = vadd.f32 %v4774, %v4655
        %v4839 = vadd.f32 %v4775, %v4720
        %v4840 = vadd.f32 %v4776, %v4528
        %v4841 = vadd.f32 %v4777, %v4593
        %v4842 = vadd.f32 %v4778, %v4658
        %v4843 = vadd.f32 %v4779, %v4723
        %v4844 = vadd.f32 %v4780, %v4531
        %v4845 = vadd.f32 %v4781, %v4596
        %v4846 = vadd.f32 %v4782, %v4661
        %v4847 = vadd.f32 %v4783, %v4726
        %v4848 = vadd.f32 %v4784, %v4534
        %v4849 = vadd.f32 %v4785, %v4599
        %v4850 = vadd.f32 %v4786, %v4664
        %v4851 = vadd.f32 %v4787, %v4729
        %v4852 = vadd.f32 %v4788, %v4537
        %v4853 = vadd.f32 %v4789, %v4602
        %v4854 = vadd.f32 %v4790, %v4667
        %v4855 = vadd.f32 %v4791, %v4732
        %v4856 = vadd.f32 %v4792, %v4540
        %v4857 = vadd.f32 %v4793, %v4605
        %v4858 = vadd.f32 %v4794, %v4670
        %v4859 = vadd.f32 %v4795, %v4735
        %v4860 = vadd.f32 %v4796, %v4543
        %v4861 = vadd.f32 %v4797, %v4608
        %v4862 = vadd.f32 %v4798, %v4673
        %v4863 = vadd.f32 %v4799, %v4738
        %v4864 = vadd.f32 %v4800, %v4546
        %v4865 = vadd.f32 %v4801, %v4611
        %v4866 = vadd.f32 %v4802, %v4676
        %v4867 = vadd.f32 %v4803, %v4741
        %v4868 = vadd.f32 %v4804, %v4549
        %v4869 = vadd.f32 %v4805, %v4614
        %v4870 = vadd.f32 %v4806, %v4679
        %v4871 = vadd.f32 %v4807, %v4744
        %v4872 = vadd.f32 %v4808, %v4552
        %v4873 = vadd.f32 %v4809, %v4617
        %v4874 = vadd.f32 %v4810, %v4682
        %v4875 = vadd.f32 %v4811, %v4747
        %v4876 = vadd.f32 %v4812, %v4555
        %v4877 = vadd.f32 %v4813, %v4620
        %v4878 = vadd.f32 %v4814, %v4685
        %v4879 = vadd.f32 %v4815, %v4750
        %4880 = vst [vmem:[#allocation2] sm:$0xff] %v4816
        %4881 = vst [vmem:[#allocation2 + $0x8] sm:$0xff] %v4817
        %4882 = vst [vmem:[#allocation2 + $0x10] sm:$0xff] %v4818
        %4883 = vst [vmem:[#allocation2 + $0x18] sm:$0xff] %v4819
        %4884 = vst [vmem:[#allocation2 + $0x20] sm:$0xff] %v4820
        %4885 = vst [vmem:[#allocation2 + $0x28] sm:$0xff] %v4821
        %4886 = vst [vmem:[#allocation2 + $0x30] sm:$0xff] %v4822
        %4887 = vst [vmem:[#allocation2 + $0x38] sm:$0xff] %v4823
        %4888 = vst [vmem:[#allocation2 + $0x40] sm:$0xff] %v4824
        %4889 = vst [vmem:[#allocation2 + $0x48] sm:$0xff] %v4825
        %4890 = vst [vmem:[#allocation2 + $0x50] sm:$0xff] %v4826
        %4891 = vst [vmem:[#allocation2 + $0x58] sm:$0xff] %v4827
        %4892 = vst [vmem:[#allocation2 + $0x60] sm:$0xff] %v4828
        %4893 = vst [vmem:[#allocation2 + $0x68] sm:$0xff] %v4829
        %4894 = vst [vmem:[#allocation2 + $0x70] sm:$0xff] %v4830
        %4895 = vst [vmem:[#allocation2 + $0x78] sm:$0xff] %v4831
        %4896 = vst [vmem:[#allocation2 + $0x80] sm:$0xff] %v4832
        %4897 = vst [vmem:[#allocation2 + $0x88] sm:$0xff] %v4833
        %4898 = vst [vmem:[#allocation2 + $0x90] sm:$0xff] %v4834
        %4899 = vst [vmem:[#allocation2 + $0x98] sm:$0xff] %v4835
        %4900 = vst [vmem:[#allocation2 + $0xa0] sm:$0xff] %v4836
        %4901 = vst [vmem:[#allocation2 + $0xa8] sm:$0xff] %v4837
        %4902 = vst [vmem:[#allocation2 + $0xb0] sm:$0xff] %v4838
        %4903 = vst [vmem:[#allocation2 + $0xb8] sm:$0xff] %v4839
        %4904 = vst [vmem:[#allocation2 + $0xc0] sm:$0xff] %v4840
        %4905 = vst [vmem:[#allocation2 + $0xc8] sm:$0xff] %v4841
        %4906 = vst [vmem:[#allocation2 + $0xd0] sm:$0xff] %v4842
        %4907 = vst [vmem:[#allocation2 + $0xd8] sm:$0xff] %v4843
        %4908 = vst [vmem:[#allocation2 + $0xe0] sm:$0xff] %v4844
        %4909 = vst [vmem:[#allocation2 + $0xe8] sm:$0xff] %v4845
        %4910 = vst [vmem:[#allocation2 + $0xf0] sm:$0xff] %v4846
        %4911 = vst [vmem:[#allocation2 + $0xf8] sm:$0xff] %v4847
        %4912 = vst [vmem:[#allocation2 + $0x100] sm:$0xff] %v4848
        %4913 = vst [vmem:[#allocation2 + $0x108] sm:$0xff] %v4849
        %4914 = vst [vmem:[#allocation2 + $0x110] sm:$0xff] %v4850
        %4915 = vst [vmem:[#allocation2 + $0x118] sm:$0xff] %v4851
        %4916 = vst [vmem:[#allocation2 + $0x120] sm:$0xff] %v4852
        %4917 = vst [vmem:[#allocation2 + $0x128] sm:$0xff] %v4853
        %4918 = vst [vmem:[#allocation2 + $0x130] sm:$0xff] %v4854
        %4919 = vst [vmem:[#allocation2 + $0x138] sm:$0xff] %v4855
        %4920 = vst [vmem:[#allocation2 + $0x140] sm:$0xff] %v4856
        %4921 = vst [vmem:[#allocation2 + $0x148] sm:$0xff] %v4857
        %4922 = vst [vmem:[#allocation2 + $0x150] sm:$0xff] %v4858
        %4923 = vst [vmem:[#allocation2 + $0x158] sm:$0xff] %v4859
        %4924 = vst [vmem:[#allocation2 + $0x160] sm:$0xff] %v4860
        %4925 = vst [vmem:[#allocation2 + $0x168] sm:$0xff] %v4861
        %4926 = vst [vmem:[#allocation2 + $0x170] sm:$0xff] %v4862
        %4927 = vst [vmem:[#allocation2 + $0x178] sm:$0xff] %v4863
        %4928 = vst [vmem:[#allocation2 + $0x180] sm:$0xff] %v4864
        %4929 = vst [vmem:[#allocation2 + $0x188] sm:$0xff] %v4865
        %4930 = vst [vmem:[#allocation2 + $0x190] sm:$0xff] %v4866
        %4931 = vst [vmem:[#allocation2 + $0x198] sm:$0xff] %v4867
        %4932 = vst [vmem:[#allocation2 + $0x1a0] sm:$0xff] %v4868
        %4933 = vst [vmem:[#allocation2 + $0x1a8] sm:$0xff] %v4869
        %4934 = vst [vmem:[#allocation2 + $0x1b0] sm:$0xff] %v4870
        %4935 = vst [vmem:[#allocation2 + $0x1b8] sm:$0xff] %v4871
        %4936 = vst [vmem:[#allocation2 + $0x1c0] sm:$0xff] %v4872
        %4937 = vst [vmem:[#allocation2 + $0x1c8] sm:$0xff] %v4873
        %4938 = vst [vmem:[#allocation2 + $0x1d0] sm:$0xff] %v4874
        %4939 = vst [vmem:[#allocation2 + $0x1d8] sm:$0xff] %v4875
        %4940 = vst [vmem:[#allocation2 + $0x1e0] sm:$0xff] %v4876
        %4941 = vst [vmem:[#allocation2 + $0x1e8] sm:$0xff] %v4877
        %4942 = vst [vmem:[#allocation2 + $0x1f0] sm:$0xff] %v4878
        %4943 = vst [vmem:[#allocation2 + $0x1f8] sm:$0xff] %v4879
        %v4944 = vld [vmem:[#allocation2] sm:$0xff]
        %v4945 = vld [vmem:[#allocation2 + $0x8] sm:$0xff]
        %v4946 = vld [vmem:[#allocation2 + $0x10] sm:$0xff]
        %v4947 = vld [vmem:[#allocation2 + $0x18] sm:$0xff]
        %v4948 = vld [vmem:[#allocation2 + $0x20] sm:$0xff]
        %v4949 = vld [vmem:[#allocation2 + $0x28] sm:$0xff]
        %v4950 = vld [vmem:[#allocation2 + $0x30] sm:$0xff]
        %v4951 = vld [vmem:[#allocation2 + $0x38] sm:$0xff]
        %v4952 = vld [vmem:[#allocation2 + $0x40] sm:$0xff]
        %v4953 = vld [vmem:[#allocation2 + $0x48] sm:$0xff]
        %v4954 = vld [vmem:[#allocation2 + $0x50] sm:$0xff]
        %v4955 = vld [vmem:[#allocation2 + $0x58] sm:$0xff]
        %v4956 = vld [vmem:[#allocation2 + $0x60] sm:$0xff]
        %v4957 = vld [vmem:[#allocation2 + $0x68] sm:$0xff]
        %v4958 = vld [vmem:[#allocation2 + $0x70] sm:$0xff]
        %v4959 = vld [vmem:[#allocation2 + $0x78] sm:$0xff]
        %v4960 = vld [vmem:[#allocation2 + $0x80] sm:$0xff]
        %v4961 = vld [vmem:[#allocation2 + $0x88] sm:$0xff]
        %v4962 = vld [vmem:[#allocation2 + $0x90] sm:$0xff]
        %v4963 = vld [vmem:[#allocation2 + $0x98] sm:$0xff]
        %v4964 = vld [vmem:[#allocation2 + $0xa0] sm:$0xff]
        %v4965 = vld [vmem:[#allocation2 + $0xa8] sm:$0xff]
        %v4966 = vld [vmem:[#allocation2 + $0xb0] sm:$0xff]
        %v4967 = vld [vmem:[#allocation2 + $0xb8] sm:$0xff]
        %v4968 = vld [vmem:[#allocation2 + $0xc0] sm:$0xff]
        %v4969 = vld [vmem:[#allocation2 + $0xc8] sm:$0xff]
        %v4970 = vld [vmem:[#allocation2 + $0xd0] sm:$0xff]
        %v4971 = vld [vmem:[#allocation2 + $0xd8] sm:$0xff]
        %v4972 = vld [vmem:[#allocation2 + $0xe0] sm:$0xff]
        %v4973 = vld [vmem:[#allocation2 + $0xe8] sm:$0xff]
        %v4974 = vld [vmem:[#allocation2 + $0xf0] sm:$0xff]
        %v4975 = vld [vmem:[#allocation2 + $0xf8] sm:$0xff]
        %v4976 = vld [vmem:[#allocation2 + $0x100] sm:$0xff]
        %v4977 = vld [vmem:[#allocation2 + $0x108] sm:$0xff]
        %v4978 = vld [vmem:[#allocation2 + $0x110] sm:$0xff]
        %v4979 = vld [vmem:[#allocation2 + $0x118] sm:$0xff]
        %v4980 = vld [vmem:[#allocation2 + $0x120] sm:$0xff]
        %v4981 = vld [vmem:[#allocation2 + $0x128] sm:$0xff]
        %v4982 = vld [vmem:[#allocation2 + $0x130] sm:$0xff]
        %v4983 = vld [vmem:[#allocation2 + $0x138] sm:$0xff]
        %v4984 = vld [vmem:[#allocation2 + $0x140] sm:$0xff]
        %v4985 = vld [vmem:[#allocation2 + $0x148] sm:$0xff]
        %v4986 = vld [vmem:[#allocation2 + $0x150] sm:$0xff]
        %v4987 = vld [vmem:[#allocation2 + $0x158] sm:$0xff]
        %v4988 = vld [vmem:[#allocation2 + $0x160] sm:$0xff]
        %v4989 = vld [vmem:[#allocation2 + $0x168] sm:$0xff]
        %v4990 = vld [vmem:[#allocation2 + $0x170] sm:$0xff]
        %v4991 = vld [vmem:[#allocation2 + $0x178] sm:$0xff]
        %v4992 = vld [vmem:[#allocation2 + $0x180] sm:$0xff]
        %v4993 = vld [vmem:[#allocation2 + $0x188] sm:$0xff]
        %v4994 = vld [vmem:[#allocation2 + $0x190] sm:$0xff]
        %v4995 = vld [vmem:[#allocation2 + $0x198] sm:$0xff]
        %v4996 = vld [vmem:[#allocation2 + $0x1a0] sm:$0xff]
        %v4997 = vld [vmem:[#allocation2 + $0x1a8] sm:$0xff]
        %v4998 = vld [vmem:[#allocation2 + $0x1b0] sm:$0xff]
        %v4999 = vld [vmem:[#allocation2 + $0x1b8] sm:$0xff]
        %v5000 = vld [vmem:[#allocation2 + $0x1c0] sm:$0xff]
        %v5001 = vld [vmem:[#allocation2 + $0x1c8] sm:$0xff]
        %v5002 = vld [vmem:[#allocation2 + $0x1d0] sm:$0xff]
        %v5003 = vld [vmem:[#allocation2 + $0x1d8] sm:$0xff]
        %v5004 = vld [vmem:[#allocation2 + $0x1e0] sm:$0xff]
        %v5005 = vld [vmem:[#allocation2 + $0x1e8] sm:$0xff]
        %v5006 = vld [vmem:[#allocation2 + $0x1f0] sm:$0xff]
        %v5007 = vld [vmem:[#allocation2 + $0x1f8] sm:$0xff]
        %v5008 = vld [vmem:[%s2] sm:$0xf]
        %v5010 = vperm.slane %v5008, 0
        %v5011 = vperm.slane %v5008, 1
        %v5012 = vperm.slane %v5008, 2
        %v5013 = vperm.slane %v5008, 3
        %v5018 = vadd.f32 %v4944, %v5010
        %v5019 = vadd.f32 %v4945, %v5011
        %v5020 = vadd.f32 %v4946, %v5012
        %v5021 = vadd.f32 %v4947, %v5013
        %v5022 = vadd.f32 %v4948, %v5010
        %v5023 = vadd.f32 %v4949, %v5011
        %v5024 = vadd.f32 %v4950, %v5012
        %v5025 = vadd.f32 %v4951, %v5013
        %v5026 = vadd.f32 %v4952, %v5010
        %v5027 = vadd.f32 %v4953, %v5011
        %v5028 = vadd.f32 %v4954, %v5012
        %v5029 = vadd.f32 %v4955, %v5013
        %v5030 = vadd.f32 %v4956, %v5010
        %v5031 = vadd.f32 %v4957, %v5011
        %v5032 = vadd.f32 %v4958, %v5012
        %v5033 = vadd.f32 %v4959, %v5013
        %v5034 = vadd.f32 %v4960, %v5010
        %v5035 = vadd.f32 %v4961, %v5011
        %v5036 = vadd.f32 %v4962, %v5012
        %v5037 = vadd.f32 %v4963, %v5013
        %v5038 = vadd.f32 %v4964, %v5010
        %v5039 = vadd.f32 %v4965, %v5011
        %v5040 = vadd.f32 %v4966, %v5012
        %v5041 = vadd.f32 %v4967, %v5013
        %v5042 = vadd.f32 %v4968, %v5010
        %v5043 = vadd.f32 %v4969, %v5011
        %v5044 = vadd.f32 %v4970, %v5012
        %v5045 = vadd.f32 %v4971, %v5013
        %v5046 = vadd.f32 %v4972, %v5010
        %v5047 = vadd.f32 %v4973, %v5011
        %v5048 = vadd.f32 %v4974, %v5012
        %v5049 = vadd.f32 %v4975, %v5013
        %v5050 = vadd.f32 %v4976, %v5010
        %v5051 = vadd.f32 %v4977, %v5011
        %v5052 = vadd.f32 %v4978, %v5012
        %v5053 = vadd.f32 %v4979, %v5013
        %v5054 = vadd.f32 %v4980, %v5010
        %v5055 = vadd.f32 %v4981, %v5011
        %v5056 = vadd.f32 %v4982, %v5012
        %v5057 = vadd.f32 %v4983, %v5013
        %v5058 = vadd.f32 %v4984, %v5010
        %v5059 = vadd.f32 %v4985, %v5011
        %v5060 = vadd.f32 %v4986, %v5012
        %v5061 = vadd.f32 %v4987, %v5013
        %v5062 = vadd.f32 %v4988, %v5010
        %v5063 = vadd.f32 %v4989, %v5011
        %v5064 = vadd.f32 %v4990, %v5012
        %v5065 = vadd.f32 %v4991, %v5013
        %v5066 = vadd.f32 %v4992, %v5010
        %v5067 = vadd.f32 %v4993, %v5011
        %v5068 = vadd.f32 %v4994, %v5012
        %v5069 = vadd.f32 %v4995, %v5013
        %v5070 = vadd.f32 %v4996, %v5010
        %v5071 = vadd.f32 %v4997, %v5011
        %v5072 = vadd.f32 %v4998, %v5012
        %v5073 = vadd.f32 %v4999, %v5013
        %v5074 = vadd.f32 %v5000, %v5010
        %v5075 = vadd.f32 %v5001, %v5011
        %v5076 = vadd.f32 %v5002, %v5012
        %v5077 = vadd.f32 %v5003, %v5013
        %v5078 = vadd.f32 %v5004, %v5010
        %v5079 = vadd.f32 %v5005, %v5011
        %v5080 = vadd.f32 %v5006, %v5012
        %v5081 = vadd.f32 %v5007, %v5013
        %v5082 = vmax.f32 %v5018, 0.0
        %v5083 = vmax.f32 %v5019, 0.0
        %v5084 = vmax.f32 %v5020, 0.0
        %v5085 = vmax.f32 %v5021, 0.0
        %v5086 = vmax.f32 %v5022, 0.0
        %v5087 = vmax.f32 %v5023, 0.0
        %v5088 = vmax.f32 %v5024, 0.0
        %v5089 = vmax.f32 %v5025, 0.0
        %v5090 = vmax.f32 %v5026, 0.0
        %v5091 = vmax.f32 %v5027, 0.0
        %v5092 = vmax.f32 %v5028, 0.0
        %v5093 = vmax.f32 %v5029, 0.0
        %v5094 = vmax.f32 %v5030, 0.0
        %v5095 = vmax.f32 %v5031, 0.0
        %v5096 = vmax.f32 %v5032, 0.0
        %v5097 = vmax.f32 %v5033, 0.0
        %v5098 = vmax.f32 %v5034, 0.0
        %v5099 = vmax.f32 %v5035, 0.0
        %v5100 = vmax.f32 %v5036, 0.0
        %v5101 = vmax.f32 %v5037, 0.0
        %v5102 = vmax.f32 %v5038, 0.0
        %v5103 = vmax.f32 %v5039, 0.0
        %v5104 = vmax.f32 %v5040, 0.0
        %v5105 = vmax.f32 %v5041, 0.0
        %v5106 = vmax.f32 %v5042, 0.0
        %v5107 = vmax.f32 %v5043, 0.0
        %v5108 = vmax.f32 %v5044, 0.0
        %v5109 = vmax.f32 %v5045, 0.0
        %v5110 = vmax.f32 %v5046, 0.0
        %v5111 = vmax.f32 %v5047, 0.0
        %v5112 = vmax.f32 %v5048, 0.0
        %v5113 = vmax.f32 %v5049, 0.0
        %v5114 = vmax.f32 %v5050, 0.0
        %v5115 = vmax.f32 %v5051, 0.0
        %v5116 = vmax.f32 %v5052, 0.0
        %v5117 = vmax.f32 %v5053, 0.0
        %v5118 = vmax.f32 %v5054, 0.0
        %v5119 = vmax.f32 %v5055, 0.0
        %v5120 = vmax.f32 %v5056, 0.0
        %v5121 = vmax.f32 %v5057, 0.0
        %v5122 = vmax.f32 %v5058, 0.0
        %v5123 = vmax.f32 %v5059, 0.0
        %v5124 = vmax.f32 %v5060, 0.0
        %v5125 = vmax.f32 %v5061, 0.0
        %v5126 = vmax.f32 %v5062, 0.0
        %v5127 = vmax.f32 %v5063, 0.0
        %v5128 = vmax.f32 %v5064, 0.0
        %v5129 = vmax.f32 %v5065, 0.0
        %v5130 = vmax.f32 %v5066, 0.0
        %v5131 = vmax.f32 %v5067, 0.0
        %v5132 = vmax.f32 %v5068, 0.0
        %v5133 = vmax.f32 %v5069, 0.0
        %v5134 = vmax.f32 %v5070, 0.0
        %v5135 = vmax.f32 %v5071, 0.0
        %v5136 = vmax.f32 %v5072, 0.0
        %v5137 = vmax.f32 %v5073, 0.0
        %v5138 = vmax.f32 %v5074, 0.0
        %v5139 = vmax.f32 %v5075, 0.0
        %v5140 = vmax.f32 %v5076, 0.0
        %v5141 = vmax.f32 %v5077, 0.0
        %v5142 = vmax.f32 %v5078, 0.0
        %v5143 = vmax.f32 %v5079, 0.0
        %v5144 = vmax.f32 %v5080, 0.0
        %v5145 = vmax.f32 %v5081, 0.0
        %v5146 = vld [vmem:[%s3] sm:$0xff]
        %v5147 = vld [vmem:[%s3 + $0x8] sm:$0xff]
        %v5148 = vld [vmem:[%s3 + $0x10] sm:$0xff]
        %v5149 = vld [vmem:[%s3 + $0x18] sm:$0xff]
        %v5150 = vld [vmem:[%s3 + $0x20] sm:$0xff]
        %v5151 = vld [vmem:[%s3 + $0x28] sm:$0xff]
        %v5152 = vld [vmem:[%s3 + $0x30] sm:$0xff]
        %v5153 = vld [vmem:[%s3 + $0x38] sm:$0xff]
        %v5154 = vld [vmem:[%s3 + $0x40] sm:$0xff]
        %v5155 = vld [vmem:[%s3 + $0x48] sm:$0xff]
        %v5156 = vld [vmem:[%s3 + $0x50] sm:$0xff]
        %v5157 = vld [vmem:[%s3 + $0x58] sm:$0xff]
        %v5158 = vld [vmem:[%s3 + $0x60] sm:$0xff]
        %v5159 = vld [vmem:[%s3 + $0x68] sm:$0xff]
        %v5160 = vld [vmem:[%s3 + $0x70] sm:$0xff]
        %v5161 = vld [vmem:[%s3 + $0x78] sm:$0xff]
        %v5162 = vld [vmem:[%s3 + $0x80] sm:$0xff]
        %v5163 = vld [vmem:[%s3 + $0x88] sm:$0xff]
        %v5164 = vld [vmem:[%s3 + $0x90] sm:$0xff]
        %v5165 = vld [vmem:[%s3 + $0x98] sm:$0xff]
        %v5166 = vld [vmem:[%s3 + $0xa0] sm:$0xff]
        %v5167 = vld [vmem:[%s3 + $0xa8] sm:$0xff]
        %v5168 = vld [vmem:[%s3 + $0xb0] sm:$0xff]
        %v5169 = vld [vmem:[%s3 + $0xb8] sm:$0xff]
        %v5170 = vld [vmem:[%s3 + $0xc0] sm:$0xff]
        %v5171 = vld [vmem:[%s3 + $0xc8] sm:$0xff]
        %v5172 = vld [vmem:[%s3 + $0xd0] sm:$0xff]
        %v5173 = vld [vmem:[%s3 + $0xd8] sm:$0xff]
        %v5174 = vld [vmem:[%s3 + $0xe0] sm:$0xff]
        %v5175 = vld [vmem:[%s3 + $0xe8] sm:$0xff]
        %v5176 = vld [vmem:[%s3 + $0xf0] sm:$0xff]
        %v5177 = vld [vmem:[%s3 + $0xf8] sm:$0xff]
        %v5178 = vld [vmem:[%s3 + $0x100] sm:$0xff]
        %v5179 = vld [vmem:[%s3 + $0x108] sm:$0xff]
        %v5180 = vld [vmem:[%s3 + $0x110] sm:$0xff]
        %v5181 = vld [vmem:[%s3 + $0x118] sm:$0xff]
        %v5182 = vld [vmem:[%s3 + $0x120] sm:$0xff]
        %v5183 = vld [vmem:[%s3 + $0x128] sm:$0xff]
        %v5184 = vld [vmem:[%s3 + $0x130] sm:$0xff]
        %v5185 = vld [vmem:[%s3 + $0x138] sm:$0xff]
        %v5186 = vld [vmem:[%s3 + $0x140] sm:$0xff]
        %v5187 = vld [vmem:[%s3 + $0x148] sm:$0xff]
        %v5188 = vld [vmem:[%s3 + $0x150] sm:$0xff]
        %v5189 = vld [vmem:[%s3 + $0x158] sm:$0xff]
        %v5190 = vld [vmem:[%s3 + $0x160] sm:$0xff]
        %v5191 = vld [vmem:[%s3 + $0x168] sm:$0xff]
        %v5192 = vld [vmem:[%s3 + $0x170] sm:$0xff]
        %v5193 = vld [vmem:[%s3 + $0x178] sm:$0xff]
        %v5194 = vld [vmem:[%s3 + $0x180] sm:$0xff]
        %v5195 = vld [vmem:[%s3 + $0x188] sm:$0xff]
        %v5196 = vld [vmem:[%s3 + $0x190] sm:$0xff]
        %v5197 = vld [vmem:[%s3 + $0x198] sm:$0xff]
        %v5198 = vld [vmem:[%s3 + $0x1a0] sm:$0xff]
        %v5199 = vld [vmem:[%s3 + $0x1a8] sm:$0xff]
        %v5200 = vld [vmem:[%s3 + $0x1b0] sm:$0xff]
        %v5201 = vld [vmem:[%s3 + $0x1b8] sm:$0xff]
        %v5202 = vld [vmem:[%s3 + $0x1c0] sm:$0xff]
        %v5203 = vld [vmem:[%s3 + $0x1c8] sm:$0xff]
        %v5204 = vld [vmem:[%s3 + $0x1d0] sm:$0xff]
        %v5205 = vld [vmem:[%s3 + $0x1d8] sm:$0xff]
        %v5206 = vld [vmem:[%s3 + $0x1e0] sm:$0xff]
        %v5207 = vld [vmem:[%s3 + $0x1e8] sm:$0xff]
        %v5208 = vld [vmem:[%s3 + $0x1f0] sm:$0xff]
        %v5209 = vld [vmem:[%s3 + $0x1f8] sm:$0xff]
        %v5210 = vld [vmem:[%s4] sm:$0x1]
        %v5212 = vperm.slane %v5210, 0
        %5214 = vmatpush.msra.mxu0 %v5161
        %5215 = vmatpush.msra.mxu0 %v5160
        %5216 = vmatpush.msra.mxu0 %v5159
        %5217 = vmatpush.msra.mxu0 %v5158
        %5218 = vmatpush.msra.mxu0 %v5157
        %5219 = vmatpush.msra.mxu0 %v5156
        %5220 = vmatpush.msra.mxu0 %v5155
        %5221 = vmatpush.msra.mxu0 %v5154
        %5222 = vmatpush.msra.mxu0 %v5153
        %5223 = vmatpush.msra.mxu0 %v5152
        %5224 = vmatpush.msra.mxu0 %v5151
        %5225 = vmatpush.msra.mxu0 %v5150
        %5226 = vmatpush.msra.mxu0 %v5149
        %5227 = vmatpush.msra.mxu0 %v5148
        %5228 = vmatpush.msra.mxu0 %v5147
        %5229 = vmatpush.msra.mxu0 %v5146
        %5230 = vmatmul.f32.gmra.mxu0 %v5082
        %v5231 = vpop.f32.mrf.mxu0
        %v5232 = vadd.f32 %v5212, %v5231
        %5233 = vmatmul.f32.gmra.mxu0 %v5086
        %v5234 = vpop.f32.mrf.mxu0
        %v5235 = vadd.f32 %v5212, %v5234
        %5236 = vmatmul.f32.gmra.mxu0 %v5090
        %v5237 = vpop.f32.mrf.mxu0
        %v5238 = vadd.f32 %v5212, %v5237
        %5239 = vmatmul.f32.gmra.mxu0 %v5094
        %v5240 = vpop.f32.mrf.mxu0
        %v5241 = vadd.f32 %v5212, %v5240
        %5242 = vmatmul.f32.gmra.mxu0 %v5098
        %v5243 = vpop.f32.mrf.mxu0
        %v5244 = vadd.f32 %v5212, %v5243
        %5245 = vmatmul.f32.gmra.mxu0 %v5102
        %v5246 = vpop.f32.mrf.mxu0
        %v5247 = vadd.f32 %v5212, %v5246
        %5248 = vmatmul.f32.gmra.mxu0 %v5106
        %v5249 = vpop.f32.mrf.mxu0
        %v5250 = vadd.f32 %v5212, %v5249
        %5251 = vmatmul.f32.gmra.mxu0 %v5110
        %v5252 = vpop.f32.mrf.mxu0
        %v5253 = vadd.f32 %v5212, %v5252
        %5254 = vmatmul.f32.gmra.mxu0 %v5114
        %v5255 = vpop.f32.mrf.mxu0
        %v5256 = vadd.f32 %v5212, %v5255
        %5257 = vmatmul.f32.gmra.mxu0 %v5118
        %v5258 = vpop.f32.mrf.mxu0
        %v5259 = vadd.f32 %v5212, %v5258
        %5260 = vmatmul.f32.gmra.mxu0 %v5122
        %v5261 = vpop.f32.mrf.mxu0
        %v5262 = vadd.f32 %v5212, %v5261
        %5263 = vmatmul.f32.gmra.mxu0 %v5126
        %v5264 = vpop.f32.mrf.mxu0
        %v5265 = vadd.f32 %v5212, %v5264
        %5266 = vmatmul.f32.gmra.mxu0 %v5130
        %v5267 = vpop.f32.mrf.mxu0
        %v5268 = vadd.f32 %v5212, %v5267
        %5269 = vmatmul.f32.gmra.mxu0 %v5134
        %v5270 = vpop.f32.mrf.mxu0
        %v5271 = vadd.f32 %v5212, %v5270
        %5272 = vmatmul.f32.gmra.mxu0 %v5138
        %v5273 = vpop.f32.mrf.mxu0
        %v5274 = vadd.f32 %v5212, %v5273
        %5275 = vmatmul.f32.gmra.mxu0 %v5142
        %v5276 = vpop.f32.mrf.mxu0
        %v5277 = vadd.f32 %v5212, %v5276
        %5278 = vdwg.mxu0
        %5279 = vmatpush.msra.mxu0 %v5177
        %5280 = vmatpush.msra.mxu0 %v5176
        %5281 = vmatpush.msra.mxu0 %v5175
        %5282 = vmatpush.msra.mxu0 %v5174
        %5283 = vmatpush.msra.mxu0 %v5173
        %5284 = vmatpush.msra.mxu0 %v5172
        %5285 = vmatpush.msra.mxu0 %v5171
        %5286 = vmatpush.msra.mxu0 %v5170
        %5287 = vmatpush.msra.mxu0 %v5169
        %5288 = vmatpush.msra.mxu0 %v5168
        %5289 = vmatpush.msra.mxu0 %v5167
        %5290 = vmatpush.msra.mxu0 %v5166
        %5291 = vmatpush.msra.mxu0 %v5165
        %5292 = vmatpush.msra.mxu0 %v5164
        %5293 = vmatpush.msra.mxu0 %v5163
        %5294 = vmatpush.msra.mxu0 %v5162
        %5295 = vmatmul.f32.gmra.mxu0 %v5083
        %v5296 = vpop.f32.mrf.mxu0
        %v5297 = vadd.f32 %v5232, %v5296
        %5298 = vmatmul.f32.gmra.mxu0 %v5087
        %v5299 = vpop.f32.mrf.mxu0
        %v5300 = vadd.f32 %v5235, %v5299
        %5301 = vmatmul.f32.gmra.mxu0 %v5091
        %v5302 = vpop.f32.mrf.mxu0
        %v5303 = vadd.f32 %v5238, %v5302
        %5304 = vmatmul.f32.gmra.mxu0 %v5095
        %v5305 = vpop.f32.mrf.mxu0
        %v5306 = vadd.f32 %v5241, %v5305
        %5307 = vmatmul.f32.gmra.mxu0 %v5099
        %v5308 = vpop.f32.mrf.mxu0
        %v5309 = vadd.f32 %v5244, %v5308
        %5310 = vmatmul.f32.gmra.mxu0 %v5103
        %v5311 = vpop.f32.mrf.mxu0
        %v5312 = vadd.f32 %v5247, %v5311
        %5313 = vmatmul.f32.gmra.mxu0 %v5107
        %v5314 = vpop.f32.mrf.mxu0
        %v5315 = vadd.f32 %v5250, %v5314
        %5316 = vmatmul.f32.gmra.mxu0 %v5111
        %v5317 = vpop.f32.mrf.mxu0
        %v5318 = vadd.f32 %v5253, %v5317
        %5319 = vmatmul.f32.gmra.mxu0 %v5115
        %v5320 = vpop.f32.mrf.mxu0
        %v5321 = vadd.f32 %v5256, %v5320
        %5322 = vmatmul.f32.gmra.mxu0 %v5119
        %v5323 = vpop.f32.mrf.mxu0
        %v5324 = vadd.f32 %v5259, %v5323
        %5325 = vmatmul.f32.gmra.mxu0 %v5123
        %v5326 = vpop.f32.mrf.mxu0
        %v5327 = vadd.f32 %v5262, %v5326
        %5328 = vmatmul.f32.gmra.mxu0 %v5127
        %v5329 = vpop.f32.mrf.mxu0
        %v5330 = vadd.f32 %v5265, %v5329
        %5331 = vmatmul.f32.gmra.mxu0 %v5131
        %v5332 = vpop.f32.mrf.mxu0
        %v5333 = vadd.f32 %v5268, %v5332
        %5334 = vmatmul.f32.gmra.mxu0 %v5135
        %v5335 = vpop.f32.mrf.mxu0
        %v5336 = vadd.f32 %v5271, %v5335
        %5337 = vmatmul.f32.gmra.mxu0 %v5139
        %v5338 = vpop.f32.mrf.mxu0
        %v5339 = vadd.f32 %v5274, %v5338
        %5340 = vmatmul.f32.gmra.mxu0 %v5143
        %v5341 = vpop.f32.mrf.mxu0
        %v5342 = vadd.f32 %v5277, %v5341
        %5343 = vdwg.mxu0
        %5344 = vmatpush.msra.mxu0 %v5193
        %5345 = vmatpush.msra.mxu0 %v5192
        %5346 = vmatpush.msra.mxu0 %v5191
        %5347 = vmatpush.msra.mxu0 %v5190
        %5348 = vmatpush.msra.mxu0 %v5189
        %5349 = vmatpush.msra.mxu0 %v5188
        %5350 = vmatpush.msra.mxu0 %v5187
        %5351 = vmatpush.msra.mxu0 %v5186
        %5352 = vmatpush.msra.mxu0 %v5185
        %5353 = vmatpush.msra.mxu0 %v5184
        %5354 = vmatpush.msra.mxu0 %v5183
        %5355 = vmatpush.msra.mxu0 %v5182
        %5356 = vmatpush.msra.mxu0 %v5181
        %5357 = vmatpush.msra.mxu0 %v5180
        %5358 = vmatpush.msra.mxu0 %v5179
        %5359 = vmatpush.msra.mxu0 %v5178
        %5360 = vmatmul.f32.gmra.mxu0 %v5084
        %v5361 = vpop.f32.mrf.mxu0
        %v5362 = vadd.f32 %v5297, %v5361
        %5363 = vmatmul.f32.gmra.mxu0 %v5088
        %v5364 = vpop.f32.mrf.mxu0
        %v5365 = vadd.f32 %v5300, %v5364
        %5366 = vmatmul.f32.gmra.mxu0 %v5092
        %v5367 = vpop.f32.mrf.mxu0
        %v5368 = vadd.f32 %v5303, %v5367
        %5369 = vmatmul.f32.gmra.mxu0 %v5096
        %v5370 = vpop.f32.mrf.mxu0
        %v5371 = vadd.f32 %v5306, %v5370
        %5372 = vmatmul.f32.gmra.mxu0 %v5100
        %v5373 = vpop.f32.mrf.mxu0
        %v5374 = vadd.f32 %v5309, %v5373
        %5375 = vmatmul.f32.gmra.mxu0 %v5104
        %v5376 = vpop.f32.mrf.mxu0
        %v5377 = vadd.f32 %v5312, %v5376
        %5378 = vmatmul.f32.gmra.mxu0 %v5108
        %v5379 = vpop.f32.mrf.mxu0
        %v5380 = vadd.f32 %v5315, %v5379
        %5381 = vmatmul.f32.gmra.mxu0 %v5112
        %v5382 = vpop.f32.mrf.mxu0
        %v5383 = vadd.f32 %v5318, %v5382
        %5384 = vmatmul.f32.gmra.mxu0 %v5116
        %v5385 = vpop.f32.mrf.mxu0
        %v5386 = vadd.f32 %v5321, %v5385
        %5387 = vmatmul.f32.gmra.mxu0 %v5120
        %v5388 = vpop.f32.mrf.mxu0
        %v5389 = vadd.f32 %v5324, %v5388
        %5390 = vmatmul.f32.gmra.mxu0 %v5124
        %v5391 = vpop.f32.mrf.mxu0
        %v5392 = vadd.f32 %v5327, %v5391
        %5393 = vmatmul.f32.gmra.mxu0 %v5128
        %v5394 = vpop.f32.mrf.mxu0
        %v5395 = vadd.f32 %v5330, %v5394
        %5396 = vmatmul.f32.gmra.mxu0 %v5132
        %v5397 = vpop.f32.mrf.mxu0
        %v5398 = vadd.f32 %v5333, %v5397
        %5399 = vmatmul.f32.gmra.mxu0 %v5136
        %v5400 = vpop.f32.mrf.mxu0
        %v5401 = vadd.f32 %v5336, %v5400
        %5402 = vmatmul.f32.gmra.mxu0 %v5140
        %v5403 = vpop.f32.mrf.mxu0
        %v5404 = vadd.f32 %v5339, %v5403
        %5405 = vmatmul.f32.gmra.mxu0 %v5144
        %v5406 = vpop.f32.mrf.mxu0
        %v5407 = vadd.f32 %v5342, %v5406
        %5408 = vdwg.mxu0
        %5409 = vmatpush.msra.mxu0 %v5209
        %5410 = vmatpush.msra.mxu0 %v5208
        %5411 = vmatpush.msra.mxu0 %v5207
        %5412 = vmatpush.msra.mxu0 %v5206
        %5413 = vmatpush.msra.mxu0 %v5205
        %5414 = vmatpush.msra.mxu0 %v5204
        %5415 = vmatpush.msra.mxu0 %v5203
        %5416 = vmatpush.msra.mxu0 %v5202
        %5417 = vmatpush.msra.mxu0 %v5201
        %5418 = vmatpush.msra.mxu0 %v5200
        %5419 = vmatpush.msra.mxu0 %v5199
        %5420 = vmatpush.msra.mxu0 %v5198
        %5421 = vmatpush.msra.mxu0 %v5197
        %5422 = vmatpush.msra.mxu0 %v5196
        %5423 = vmatpush.msra.mxu0 %v5195
        %5424 = vmatpush.msra.mxu0 %v5194
        %5425 = vmatmul.f32.gmra.mxu0 %v5085
        %v5426 = vpop.f32.mrf.mxu0
        %v5427 = vadd.f32 %v5362, %v5426
        %5428 = vmatmul.f32.gmra.mxu0 %v5089
        %v5429 = vpop.f32.mrf.mxu0
        %v5430 = vadd.f32 %v5365, %v5429
        %5431 = vmatmul.f32.gmra.mxu0 %v5093
        %v5432 = vpop.f32.mrf.mxu0
        %v5433 = vadd.f32 %v5368, %v5432
        %5434 = vmatmul.f32.gmra.mxu0 %v5097
        %v5435 = vpop.f32.mrf.mxu0
        %v5436 = vadd.f32 %v5371, %v5435
        %5437 = vmatmul.f32.gmra.mxu0 %v5101
        %v5438 = vpop.f32.mrf.mxu0
        %v5439 = vadd.f32 %v5374, %v5438
        %5440 = vmatmul.f32.gmra.mxu0 %v5105
        %v5441 = vpop.f32.mrf.mxu0
        %v5442 = vadd.f32 %v5377, %v5441
        %5443 = vmatmul.f32.gmra.mxu0 %v5109
        %v5444 = vpop.f32.mrf.mxu0
        %v5445 = vadd.f32 %v5380, %v5444
        %5446 = vmatmul.f32.gmra.mxu0 %v5113
        %v5447 = vpop.f32.mrf.mxu0
        %v5448 = vadd.f32 %v5383, %v5447
        %5449 = vmatmul.f32.gmra.mxu0 %v5117
        %v5450 = vpop.f32.mrf.mxu0
        %v5451 = vadd.f32 %v5386, %v5450
        %5452 = vmatmul.f32.gmra.mxu0 %v5121
        %v5453 = vpop.f32.mrf.mxu0
        %v5454 = vadd.f32 %v5389, %v5453
        %5455 = vmatmul.f32.gmra.mxu0 %v5125
        %v5456 = vpop.f32.mrf.mxu0
        %v5457 = vadd.f32 %v5392, %v5456
        %5458 = vmatmul.f32.gmra.mxu0 %v5129
        %v5459 = vpop.f32.mrf.mxu0
        %v5460 = vadd.f32 %v5395, %v5459
        %5461 = vmatmul.f32.gmra.mxu0 %v5133
        %v5462 = vpop.f32.mrf.mxu0
        %v5463 = vadd.f32 %v5398, %v5462
        %5464 = vmatmul.f32.gmra.mxu0 %v5137
        %v5465 = vpop.f32.mrf.mxu0
        %v5466 = vadd.f32 %v5401, %v5465
        %5467 = vmatmul.f32.gmra.mxu0 %v5141
        %v5468 = vpop.f32.mrf.mxu0
        %v5469 = vadd.f32 %v5404, %v5468
        %5470 = vmatmul.f32.gmra.mxu0 %v5145
        %v5471 = vpop.f32.mrf.mxu0
        %v5472 = vadd.f32 %v5407, %v5471
        %5473 = vdwg.mxu0
        %5490 = vrot.lane.b32.xlu0 %v5427, 119
        %v5491 = vpop.permute.xlu0 %5490
        %5492 = vrot.lane.b32.xlu0 %v5430, 119
        %v5493 = vpop.permute.xlu0 %5492
        %5494 = vrot.lane.b32.xlu0 %v5433, 119
        %v5495 = vpop.permute.xlu0 %5494
        %5496 = vrot.lane.b32.xlu0 %v5436, 119
        %v5497 = vpop.permute.xlu0 %5496
        %5498 = vrot.lane.b32.xlu0 %v5439, 119
        %v5499 = vpop.permute.xlu0 %5498
        %5500 = vrot.lane.b32.xlu0 %v5442, 119
        %v5501 = vpop.permute.xlu0 %5500
        %5502 = vrot.lane.b32.xlu0 %v5445, 119
        %v5503 = vpop.permute.xlu0 %5502
        %5504 = vrot.lane.b32.xlu0 %v5448, 119
        %v5505 = vpop.permute.xlu0 %5504
        %5506 = vrot.lane.b32.xlu0 %v5451, 119
        %v5507 = vpop.permute.xlu0 %5506
        %5508 = vrot.lane.b32.xlu0 %v5454, 119
        %v5509 = vpop.permute.xlu0 %5508
        %5510 = vrot.lane.b32.xlu0 %v5457, 119
        %v5511 = vpop.permute.xlu0 %5510
        %5512 = vrot.lane.b32.xlu0 %v5460, 119
        %v5513 = vpop.permute.xlu0 %5512
        %5514 = vrot.lane.b32.xlu0 %v5463, 119
        %v5515 = vpop.permute.xlu0 %5514
        %5516 = vrot.lane.b32.xlu0 %v5466, 119
        %v5517 = vpop.permute.xlu0 %5516
        %5518 = vrot.lane.b32.xlu0 %v5469, 119
        %v5519 = vpop.permute.xlu0 %5518
        %5520 = vrot.lane.b32.xlu0 %v5472, 119
        %v5521 = vpop.permute.xlu0 %5520
        %v5538 = vmax.f32 %v5427, %v5491
        %v5539 = vmax.f32 %v5430, %v5493
        %v5540 = vmax.f32 %v5433, %v5495
        %v5541 = vmax.f32 %v5436, %v5497
        %v5542 = vmax.f32 %v5439, %v5499
        %v5543 = vmax.f32 %v5442, %v5501
        %v5544 = vmax.f32 %v5445, %v5503
        %v5545 = vmax.f32 %v5448, %v5505
        %v5546 = vmax.f32 %v5451, %v5507
        %v5547 = vmax.f32 %v5454, %v5509
        %v5548 = vmax.f32 %v5457, %v5511
        %v5549 = vmax.f32 %v5460, %v5513
        %v5550 = vmax.f32 %v5463, %v5515
        %v5551 = vmax.f32 %v5466, %v5517
        %v5552 = vmax.f32 %v5469, %v5519
        %v5553 = vmax.f32 %v5472, %v5521
        %v5554 = vsub.f32 %v5427, %v5538
        %v5555 = vsub.f32 %v5430, %v5539
        %v5556 = vsub.f32 %v5433, %v5540
        %v5557 = vsub.f32 %v5436, %v5541
        %v5558 = vsub.f32 %v5439, %v5542
        %v5559 = vsub.f32 %v5442, %v5543
        %v5560 = vsub.f32 %v5445, %v5544
        %v5561 = vsub.f32 %v5448, %v5545
        %v5562 = vsub.f32 %v5451, %v5546
        %v5563 = vsub.f32 %v5454, %v5547
        %v5564 = vsub.f32 %v5457, %v5548
        %v5565 = vsub.f32 %v5460, %v5549
        %v5566 = vsub.f32 %v5463, %v5550
        %v5567 = vsub.f32 %v5466, %v5551
        %v5568 = vsub.f32 %v5469, %v5552
        %v5569 = vsub.f32 %v5472, %v5553
        %v5570 = vmul.f32 %v5554, 1.442695
        %v5571 = vpow.pop %v5570
        %v5572 = vmul.f32 %v5555, 1.442695
        %v5573 = vpow.pop %v5572
        %v5574 = vmul.f32 %v5556, 1.442695
        %v5575 = vpow.pop %v5574
        %v5576 = vmul.f32 %v5557, 1.442695
        %v5577 = vpow.pop %v5576
        %v5578 = vmul.f32 %v5558, 1.442695
        %v5579 = vpow.pop %v5578
        %v5580 = vmul.f32 %v5559, 1.442695
        %v5581 = vpow.pop %v5580
        %v5582 = vmul.f32 %v5560, 1.442695
        %v5583 = vpow.pop %v5582
        %v5584 = vmul.f32 %v5561, 1.442695
        %v5585 = vpow.pop %v5584
        %v5586 = vmul.f32 %v5562, 1.442695
        %v5587 = vpow.pop %v5586
        %v5588 = vmul.f32 %v5563, 1.442695
        %v5589 = vpow.pop %v5588
        %v5590 = vmul.f32 %v5564, 1.442695
        %v5591 = vpow.pop %v5590
        %v5592 = vmul.f32 %v5565, 1.442695
        %v5593 = vpow.pop %v5592
        %v5594 = vmul.f32 %v5566, 1.442695
        %v5595 = vpow.pop %v5594
        %v5596 = vmul.f32 %v5567, 1.442695
        %v5597 = vpow.pop %v5596
        %v5598 = vmul.f32 %v5568, 1.442695
        %v5599 = vpow.pop %v5598
        %v5600 = vmul.f32 %v5569, 1.442695
        %v5601 = vpow.pop %v5600
        %5618 = vrot.lane.b32.xlu0 %v5538, 9
        %v5619 = vpop.permute.xlu0 %5618
        %5620 = vrot.lane.b32.xlu0 %v5539, 9
        %v5621 = vpop.permute.xlu0 %5620
        %5622 = vrot.lane.b32.xlu0 %v5540, 9
        %v5623 = vpop.permute.xlu0 %5622
        %5624 = vrot.lane.b32.xlu0 %v5541, 9
        %v5625 = vpop.permute.xlu0 %5624
        %5626 = vrot.lane.b32.xlu0 %v5542, 9
        %v5627 = vpop.permute.xlu0 %5626
        %5628 = vrot.lane.b32.xlu0 %v5543, 9
        %v5629 = vpop.permute.xlu0 %5628
        %5630 = vrot.lane.b32.xlu0 %v5544, 9
        %v5631 = vpop.permute.xlu0 %5630
        %5632 = vrot.lane.b32.xlu0 %v5545, 9
        %v5633 = vpop.permute.xlu0 %5632
        %5634 = vrot.lane.b32.xlu0 %v5546, 9
        %v5635 = vpop.permute.xlu0 %5634
        %5636 = vrot.lane.b32.xlu0 %v5547, 9
        %v5637 = vpop.permute.xlu0 %5636
        %5638 = vrot.lane.b32.xlu0 %v5548, 9
        %v5639 = vpop.permute.xlu0 %5638
        %5640 = vrot.lane.b32.xlu0 %v5549, 9
        %v5641 = vpop.permute.xlu0 %5640
        %5642 = vrot.lane.b32.xlu0 %v5550, 9
        %v5643 = vpop.permute.xlu0 %5642
        %5644 = vrot.lane.b32.xlu0 %v5551, 9
        %v5645 = vpop.permute.xlu0 %5644
        %5646 = vrot.lane.b32.xlu0 %v5552, 9
        %v5647 = vpop.permute.xlu0 %5646
        %5648 = vrot.lane.b32.xlu0 %v5553, 9
        %v5649 = vpop.permute.xlu0 %5648
        %v5666 = vsub.f32 %v5427, %v5619
        %v5667 = vsub.f32 %v5430, %v5621
        %v5668 = vsub.f32 %v5433, %v5623
        %v5669 = vsub.f32 %v5436, %v5625
        %v5670 = vsub.f32 %v5439, %v5627
        %v5671 = vsub.f32 %v5442, %v5629
        %v5672 = vsub.f32 %v5445, %v5631
        %v5673 = vsub.f32 %v5448, %v5633
        %v5674 = vsub.f32 %v5451, %v5635
        %v5675 = vsub.f32 %v5454, %v5637
        %v5676 = vsub.f32 %v5457, %v5639
        %v5677 = vsub.f32 %v5460, %v5641
        %v5678 = vsub.f32 %v5463, %v5643
        %v5679 = vsub.f32 %v5466, %v5645
        %v5680 = vsub.f32 %v5469, %v5647
        %v5681 = vsub.f32 %v5472, %v5649
        %v5682 = vmul.f32 %v5666, 1.442695
        %v5683 = vpow.pop %v5682
        %v5684 = vmul.f32 %v5667, 1.442695
        %v5685 = vpow.pop %v5684
        %v5686 = vmul.f32 %v5668, 1.442695
        %v5687 = vpow.pop %v5686
        %v5688 = vmul.f32 %v5669, 1.442695
        %v5689 = vpow.pop %v5688
        %v5690 = vmul.f32 %v5670, 1.442695
        %v5691 = vpow.pop %v5690
        %v5692 = vmul.f32 %v5671, 1.442695
        %v5693 = vpow.pop %v5692
        %v5694 = vmul.f32 %v5672, 1.442695
        %v5695 = vpow.pop %v5694
        %v5696 = vmul.f32 %v5673, 1.442695
        %v5697 = vpow.pop %v5696
        %v5698 = vmul.f32 %v5674, 1.442695
        %v5699 = vpow.pop %v5698
        %v5700 = vmul.f32 %v5675, 1.442695
        %v5701 = vpow.pop %v5700
        %v5702 = vmul.f32 %v5676, 1.442695
        %v5703 = vpow.pop %v5702
        %v5704 = vmul.f32 %v5677, 1.442695
        %v5705 = vpow.pop %v5704
        %v5706 = vmul.f32 %v5678, 1.442695
        %v5707 = vpow.pop %v5706
        %v5708 = vmul.f32 %v5679, 1.442695
        %v5709 = vpow.pop %v5708
        %v5710 = vmul.f32 %v5680, 1.442695
        %v5711 = vpow.pop %v5710
        %v5712 = vmul.f32 %v5681, 1.442695
        %v5713 = vpow.pop %v5712
        %5730 = vrot.lane.b32.xlu0 %v5683, 119
        %v5731 = vpop.permute.xlu0 %5730
        %5732 = vrot.lane.b32.xlu0 %v5685, 119
        %v5733 = vpop.permute.xlu0 %5732
        %5734 = vrot.lane.b32.xlu0 %v5687, 119
        %v5735 = vpop.permute.xlu0 %5734
        %5736 = vrot.lane.b32.xlu0 %v5689, 119
        %v5737 = vpop.permute.xlu0 %5736
        %5738 = vrot.lane.b32.xlu0 %v5691, 119
        %v5739 = vpop.permute.xlu0 %5738
        %5740 = vrot.lane.b32.xlu0 %v5693, 119
        %v5741 = vpop.permute.xlu0 %5740
        %5742 = vrot.lane.b32.xlu0 %v5695, 119
        %v5743 = vpop.permute.xlu0 %5742
        %5744 = vrot.lane.b32.xlu0 %v5697, 119
        %v5745 = vpop.permute.xlu0 %5744
        %5746 = vrot.lane.b32.xlu0 %v5699, 119
        %v5747 = vpop.permute.xlu0 %5746
        %5748 = vrot.lane.b32.xlu0 %v5701, 119
        %v5749 = vpop.permute.xlu0 %5748
        %5750 = vrot.lane.b32.xlu0 %v5703, 119
        %v5751 = vpop.permute.xlu0 %5750
        %5752 = vrot.lane.b32.xlu0 %v5705, 119
        %v5753 = vpop.permute.xlu0 %5752
        %5754 = vrot.lane.b32.xlu0 %v5707, 119
        %v5755 = vpop.permute.xlu0 %5754
        %5756 = vrot.lane.b32.xlu0 %v5709, 119
        %v5757 = vpop.permute.xlu0 %5756
        %5758 = vrot.lane.b32.xlu0 %v5711, 119
        %v5759 = vpop.permute.xlu0 %5758
        %5760 = vrot.lane.b32.xlu0 %v5713, 119
        %v5761 = vpop.permute.xlu0 %5760
        %v5778 = vadd.f32 %v5571, %v5731
        %v5779 = vadd.f32 %v5573, %v5733
        %v5780 = vadd.f32 %v5575, %v5735
        %v5781 = vadd.f32 %v5577, %v5737
        %v5782 = vadd.f32 %v5579, %v5739
        %v5783 = vadd.f32 %v5581, %v5741
        %v5784 = vadd.f32 %v5583, %v5743
        %v5785 = vadd.f32 %v5585, %v5745
        %v5786 = vadd.f32 %v5587, %v5747
        %v5787 = vadd.f32 %v5589, %v5749
        %v5788 = vadd.f32 %v5591, %v5751
        %v5789 = vadd.f32 %v5593, %v5753
        %v5790 = vadd.f32 %v5595, %v5755
        %v5791 = vadd.f32 %v5597, %v5757
        %v5792 = vadd.f32 %v5599, %v5759
        %v5793 = vadd.f32 %v5601, %v5761
        %v5794 = vrcp.pop %v5778
        %v5795 = vrcp.pop %v5779
        %v5796 = vrcp.pop %v5780
        %v5797 = vrcp.pop %v5781
        %v5798 = vrcp.pop %v5782
        %v5799 = vrcp.pop %v5783
        %v5800 = vrcp.pop %v5784
        %v5801 = vrcp.pop %v5785
        %v5802 = vrcp.pop %v5786
        %v5803 = vrcp.pop %v5787
        %v5804 = vrcp.pop %v5788
        %v5805 = vrcp.pop %v5789
        %v5806 = vrcp.pop %v5790
        %v5807 = vrcp.pop %v5791
        %v5808 = vrcp.pop %v5792
        %v5809 = vrcp.pop %v5793
        %v5810 = vmul.f32 %v5571, %v5794
        %v5811 = vmul.f32 %v5573, %v5795
        %v5812 = vmul.f32 %v5575, %v5796
        %v5813 = vmul.f32 %v5577, %v5797
        %v5814 = vmul.f32 %v5579, %v5798
        %v5815 = vmul.f32 %v5581, %v5799
        %v5816 = vmul.f32 %v5583, %v5800
        %v5817 = vmul.f32 %v5585, %v5801
        %v5818 = vmul.f32 %v5587, %v5802
        %v5819 = vmul.f32 %v5589, %v5803
        %v5820 = vmul.f32 %v5591, %v5804
        %v5821 = vmul.f32 %v5593, %v5805
        %v5822 = vmul.f32 %v5595, %v5806
        %v5823 = vmul.f32 %v5597, %v5807
        %v5824 = vmul.f32 %v5599, %v5808
        %v5825 = vmul.f32 %v5601, %v5809
        %5842 = vrot.lane.b32.xlu0 %v5794, 9
        %v5843 = vpop.permute.xlu0 %5842
        %5844 = vrot.lane.b32.xlu0 %v5795, 9
        %v5845 = vpop.permute.xlu0 %5844
        %5846 = vrot.lane.b32.xlu0 %v5796, 9
        %v5847 = vpop.permute.xlu0 %5846
        %5848 = vrot.lane.b32.xlu0 %v5797, 9
        %v5849 = vpop.permute.xlu0 %5848
        %5850 = vrot.lane.b32.xlu0 %v5798, 9
        %v5851 = vpop.permute.xlu0 %5850
        %5852 = vrot.lane.b32.xlu0 %v5799, 9
        %v5853 = vpop.permute.xlu0 %5852
        %5854 = vrot.lane.b32.xlu0 %v5800, 9
        %v5855 = vpop.permute.xlu0 %5854
        %5856 = vrot.lane.b32.xlu0 %v5801, 9
        %v5857 = vpop.permute.xlu0 %5856
        %5858 = vrot.lane.b32.xlu0 %v5802, 9
        %v5859 = vpop.permute.xlu0 %5858
        %5860 = vrot.lane.b32.xlu0 %v5803, 9
        %v5861 = vpop.permute.xlu0 %5860
        %5862 = vrot.lane.b32.xlu0 %v5804, 9
        %v5863 = vpop.permute.xlu0 %5862
        %5864 = vrot.lane.b32.xlu0 %v5805, 9
        %v5865 = vpop.permute.xlu0 %5864
        %5866 = vrot.lane.b32.xlu0 %v5806, 9
        %v5867 = vpop.permute.xlu0 %5866
        %5868 = vrot.lane.b32.xlu0 %v5807, 9
        %v5869 = vpop.permute.xlu0 %5868
        %5870 = vrot.lane.b32.xlu0 %v5808, 9
        %v5871 = vpop.permute.xlu0 %5870
        %5872 = vrot.lane.b32.xlu0 %v5809, 9
        %v5873 = vpop.permute.xlu0 %5872
        %v5890 = vmul.f32 %v5683, %v5843
        %v5891 = vmul.f32 %v5685, %v5845
        %v5892 = vmul.f32 %v5687, %v5847
        %v5893 = vmul.f32 %v5689, %v5849
        %v5894 = vmul.f32 %v5691, %v5851
        %v5895 = vmul.f32 %v5693, %v5853
        %v5896 = vmul.f32 %v5695, %v5855
        %v5897 = vmul.f32 %v5697, %v5857
        %v5898 = vmul.f32 %v5699, %v5859
        %v5899 = vmul.f32 %v5701, %v5861
        %v5900 = vmul.f32 %v5703, %v5863
        %v5901 = vmul.f32 %v5705, %v5865
        %v5902 = vmul.f32 %v5707, %v5867
        %v5903 = vmul.f32 %v5709, %v5869
        %v5904 = vmul.f32 %v5711, %v5871
        %v5905 = vmul.f32 %v5713, %v5873
        %5922 = vrot.lane.b32.xlu0 %v5810, 54
        %v5923 = vpop.permute.xlu0 %5922
        %5924 = vrot.lane.b32.xlu0 %v5811, 54
        %v5925 = vpop.permute.xlu0 %5924
        %5926 = vrot.lane.b32.xlu0 %v5812, 54
        %v5927 = vpop.permute.xlu0 %5926
        %5928 = vrot.lane.b32.xlu0 %v5813, 54
        %v5929 = vpop.permute.xlu0 %5928
        %5930 = vrot.lane.b32.xlu0 %v5814, 54
        %v5931 = vpop.permute.xlu0 %5930
        %5932 = vrot.lane.b32.xlu0 %v5815, 54
        %v5933 = vpop.permute.xlu0 %5932
        %5934 = vrot.lane.b32.xlu0 %v5816, 54
        %v5935 = vpop.permute.xlu0 %5934
        %5936 = vrot.lane.b32.xlu0 %v5817, 54
        %v5937 = vpop.permute.xlu0 %5936
        %5938 = vrot.lane.b32.xlu0 %v5818, 54
        %v5939 = vpop.permute.xlu0 %5938
        %5940 = vrot.lane.b32.xlu0 %v5819, 54
        %v5941 = vpop.permute.xlu0 %5940
        %5942 = vrot.lane.b32.xlu0 %v5820, 54
        %v5943 = vpop.permute.xlu0 %5942
        %5944 = vrot.lane.b32.xlu0 %v5821, 54
        %v5945 = vpop.permute.xlu0 %5944
        %5946 = vrot.lane.b32.xlu0 %v5822, 54
        %v5947 = vpop.permute.xlu0 %5946
        %5948 = vrot.lane.b32.xlu0 %v5823, 54
        %v5949 = vpop.permute.xlu0 %5948
        %5950 = vrot.lane.b32.xlu0 %v5824, 54
        %v5951 = vpop.permute.xlu0 %5950
        %5952 = vrot.lane.b32.xlu0 %v5825, 54
        %v5953 = vpop.permute.xlu0 %5952
        %5986 = vrot.lane.b32.xlu0 %v5890, 54
        %v5987 = vpop.permute.xlu0 %5986
        %5988 = vrot.lane.b32.xlu0 %v5891, 54
        %v5989 = vpop.permute.xlu0 %5988
        %5990 = vrot.lane.b32.xlu0 %v5892, 54
        %v5991 = vpop.permute.xlu0 %5990
        %5992 = vrot.lane.b32.xlu0 %v5893, 54
        %v5993 = vpop.permute.xlu0 %5992
        %5994 = vrot.lane.b32.xlu0 %v5894, 54
        %v5995 = vpop.permute.xlu0 %5994
        %5996 = vrot.lane.b32.xlu0 %v5895, 54
        %v5997 = vpop.permute.xlu0 %5996
        %5998 = vrot.lane.b32.xlu0 %v5896, 54
        %v5999 = vpop.permute.xlu0 %5998
        %6000 = vrot.lane.b32.xlu0 %v5897, 54
        %v6001 = vpop.permute.xlu0 %6000
        %6002 = vrot.lane.b32.xlu0 %v5898, 54
        %v6003 = vpop.permute.xlu0 %6002
        %6004 = vrot.lane.b32.xlu0 %v5899, 54
        %v6005 = vpop.permute.xlu0 %6004
        %6006 = vrot.lane.b32.xlu0 %v5900, 54
        %v6007 = vpop.permute.xlu0 %6006
        %6008 = vrot.lane.b32.xlu0 %v5901, 54
        %v6009 = vpop.permute.xlu0 %6008
        %6010 = vrot.lane.b32.xlu0 %v5902, 54
        %v6011 = vpop.permute.xlu0 %6010
        %6012 = vrot.lane.b32.xlu0 %v5903, 54
        %v6013 = vpop.permute.xlu0 %6012
        %6014 = vrot.lane.b32.xlu0 %v5904, 54
        %v6015 = vpop.permute.xlu0 %6014
        %6016 = vrot.lane.b32.xlu0 %v5905, 54
        %v6017 = vpop.permute.xlu0 %6016
        %vm6034 = vcmask 441344
        %v6035 = vsel %vm6034, %v5427, %v5923
        %v6036 = vsel %vm6034, %v5430, %v5925
        %v6037 = vsel %vm6034, %v5433, %v5927
        %v6038 = vsel %vm6034, %v5436, %v5929
        %v6039 = vsel %vm6034, %v5439, %v5931
        %v6040 = vsel %vm6034, %v5442, %v5933
        %v6041 = vsel %vm6034, %v5445, %v5935
        %v6042 = vsel %vm6034, %v5448, %v5937
        %v6043 = vsel %vm6034, %v5451, %v5939
        %v6044 = vsel %vm6034, %v5454, %v5941
        %v6045 = vsel %vm6034, %v5457, %v5943
        %v6046 = vsel %vm6034, %v5460, %v5945
        %v6047 = vsel %vm6034, %v5463, %v5947
        %v6048 = vsel %vm6034, %v5466, %v5949
        %v6049 = vsel %vm6034, %v5469, %v5951
        %v6050 = vsel %vm6034, %v5472, %v5953
        %vm6051 = vcmask 515072
        %v6052 = vsel %vm6051, %v6035, %v5987
        %v6053 = vsel %vm6051, %v6036, %v5989
        %v6054 = vsel %vm6051, %v6037, %v5991
        %v6055 = vsel %vm6051, %v6038, %v5993
        %v6056 = vsel %vm6051, %v6039, %v5995
        %v6057 = vsel %vm6051, %v6040, %v5997
        %v6058 = vsel %vm6051, %v6041, %v5999
        %v6059 = vsel %vm6051, %v6042, %v6001
        %v6060 = vsel %vm6051, %v6043, %v6003
        %v6061 = vsel %vm6051, %v6044, %v6005
        %v6062 = vsel %vm6051, %v6045, %v6007
        %v6063 = vsel %vm6051, %v6046, %v6009
        %v6064 = vsel %vm6051, %v6047, %v6011
        %v6065 = vsel %vm6051, %v6048, %v6013
        %v6066 = vsel %vm6051, %v6049, %v6015
        %v6067 = vsel %vm6051, %v6050, %v6017
        %vm6068 = vcmask 588800
        %v6069 = vsel %vm6068, %v6052, 0.0
        %v6070 = vsel %vm6068, %v6053, 0.0
        %v6071 = vsel %vm6068, %v6054, 0.0
        %v6072 = vsel %vm6068, %v6055, 0.0
        %v6073 = vsel %vm6068, %v6056, 0.0
        %v6074 = vsel %vm6068, %v6057, 0.0
        %v6075 = vsel %vm6068, %v6058, 0.0
        %v6076 = vsel %vm6068, %v6059, 0.0
        %v6077 = vsel %vm6068, %v6060, 0.0
        %v6078 = vsel %vm6068, %v6061, 0.0
        %v6079 = vsel %vm6068, %v6062, 0.0
        %v6080 = vsel %vm6068, %v6063, 0.0
        %v6081 = vsel %vm6068, %v6064, 0.0
        %v6082 = vsel %vm6068, %v6065, 0.0
        %v6083 = vsel %vm6068, %v6066, 0.0
        %v6084 = vsel %vm6068, %v6067, 0.0
        %6085 = vst [vmem:[%s231] sm:$0xff] %v6069
        %6086 = vst [vmem:[%s231 + $0x8] sm:$0xff] %v6070
        %6087 = vst [vmem:[%s231 + $0x10] sm:$0xff] %v6071
        %6088 = vst [vmem:[%s231 + $0x18] sm:$0xff] %v6072
        %6089 = vst [vmem:[%s231 + $0x20] sm:$0xff] %v6073
        %6090 = vst [vmem:[%s231 + $0x28] sm:$0xff] %v6074
        %6091 = vst [vmem:[%s231 + $0x30] sm:$0xff] %v6075
        %6092 = vst [vmem:[%s231 + $0x38] sm:$0xff] %v6076
        %6093 = vst [vmem:[%s231 + $0x40] sm:$0xff] %v6077
        %6094 = vst [vmem:[%s231 + $0x48] sm:$0xff] %v6078
        %6095 = vst [vmem:[%s231 + $0x50] sm:$0xff] %v6079
        %6096 = vst [vmem:[%s231 + $0x58] sm:$0xff] %v6080
        %6097 = vst [vmem:[%s231 + $0x60] sm:$0xff] %v6081
        %6098 = vst [vmem:[%s231 + $0x68] sm:$0xff] %v6082
        %6099 = vst [vmem:[%s231 + $0x70] sm:$0xff] %v6083
        %6100 = vst [vmem:[%s231 + $0x78] sm:$0xff] %v6084
        %s6101 = sand.u32 %s151, 1
        %s6102 = scalar_lea.sflag [#allocation4], %s6101
        %s6103 = sand.u32 %s151, 1
        %s6104 = smul.addr %s6103, 128
        %s6105 = scalar_lea.vmem [#allocation3], %s6104
        // Predicated region
        $region41: #{tpu_custom_call.1} parent=39 // pred_check
          %p6106 = pneg %p161
        $region42: #{tpu_custom_call.1} parent=39 // pred_check_branch
          %6108 = sbr.rel (%p6106) target = $region44
        $region43: #{tpu_custom_call.1} parent=39 // pred_region
          %s6109 = smul.u32 16, %s24
          %6111 = vsyncadd %s6102, 0
          %s6112 = smul.addr %s23, 32
          %s6113 = sadd.s32 %s6109, %s6112
          %s6114 = smul.addr %s6113, 8
          %s6115 = scalar_lea.hbm %s5, %s6114
          %s6116 = sshll.u32 %s6105, 4
          %s6117 = int_to_ptr.vmem [resolvable:$true] %s6116
          %s6118 = sshll.u32 %s6115, 4
          %s6119 = int_to_ptr.hbm [resolvable:$true] %s6118
          %6124 = dma.vmem_to_hbm [thread:$0]  %s6117, 2048, %s6119, %s6102, 128, 128, 8
        $region44: #{tpu_custom_call.1} parent=39 // pred_fallthru
          _
      $region40: #{tpu_custom_call.1} parent=5 // pred_fallthru
        _
      %p6125 = scmp.le.s32.totalorder 2, %s14
      // Predicated region
      $region45: #{tpu_custom_call.1} parent=5 // pred_check
        %p6126 = pneg %p6125
      $region46: #{tpu_custom_call.1} parent=5 // pred_check_branch
        %6128 = sbr.rel (%p6126) target = $region48
      $region47: #{tpu_custom_call.1} parent=5 // pred_region
        %s6129 = ssub.s32 %s14, 2
        // Predicated region
        $region49: #{tpu_custom_call.1} parent=47 // pred_check
          %p6130 = pneg %p167
        $region50: #{tpu_custom_call.1} parent=47 // pred_check_branch
          %6132 = sbr.rel (%p6130) target = $region52
        $region51: #{tpu_custom_call.1} parent=47 // pred_region
          %s6133 = sand.u32 %s152, 1
          %s6134 = scalar_lea.sflag [#allocation4], %s6133
          %s6135 = sand.u32 %s152, 1
          %s6136 = smul.addr %s6135, 128
          %s6137 = scalar_lea.vmem [#allocation3], %s6136
          %6139 = dma.done %s6134, 2048
        $region52: #{tpu_custom_call.1} parent=47 // pred_fallthru
          _
      $region48: #{tpu_custom_call.1} parent=5 // pred_fallthru
        _
    $region6: #{tpu_custom_call.1} parent=1 // loop_footer
      %s18 = sadd.s32 1, %s14
    $region7: #{tpu_custom_call.1} parent=1 // loop_footer_branch
      %13 = sbr.rel target = $region3
    $region8: #{tpu_custom_call.1} parent=1 // loop_exit
      _
    %6140 = vsyncpa [#allocation4], 1
    %s6141 = scalar_lea.sflag [#allocation4], 1
    %6142 = vsyncpa %s6141, 1

</llo_original>
